<compile_context>
chip_gen: v5e
topology: v5e:2x2
jax: 0.10.0
libtpu: 0.0.40
codegen_flags: <defaults>
</compile_context>

<pallas_src>
import functools

import jax
import jax.numpy as jnp
from jax import lax
from jax.experimental import pallas as pl
from jax.experimental.pallas import tpu as pltpu


# --------------------------------------------------------------------------- constants / helpers
P_PAD = 2                         # left zero pad per sentence (covers K=5 'same' conv)
_VMEM = pl.BlockSpec(memory_space=pltpu.MemorySpace.VMEM)


def _vmem_limit_bytes():
    try:
        cap = int(pltpu.get_tpu_info().vmem_capacity_bytes)   # 128 MiB v5e/v6e, 64 MiB v7x
    except Exception:
        cap = 64 * 1024 * 1024
    return max(32 * 1024 * 1024, (cap * 3) // 4)


_VMEM_LIMIT = _vmem_limit_bytes()


def _cparams(n_parallel_dims=0):
    sem = ("parallel",) * n_parallel_dims if n_parallel_dims else None
    return pltpu.CompilerParams(dimension_semantics=sem, vmem_limit_bytes=_VMEM_LIMIT)


def _leaky(x):
    # nn.LeakyReLU default negative_slope = 0.01
    return jnp.where(x > 0, x, 0.01 * x)


# --------------------------------------------------------------------------- fused Inception stack
def _inception_stack_kernel(*refs, n_layers, NB, L, LP):
    """Whole inception stack + final max-pool for one block of NB sentences.

    refs = (x_ref, [w1, b1, w2b, b2b, w3b, b3b] * n_layers, o_ref)
      x_ref : (NB*LP, Cin) bf16 flat per-sentence-padded rows (pad rows are zero).
      w1    : (3*Cin, 4*Cos) bf16   fused stage-1 weight [br1(K=1,centre)|br2a(K=1)|br3a(K=3)|br4(K=3)]
      w2b   : (3*Cos, Cos)  bf16    branch2 second conv (im2col layout)
      w3b   : (5*Cos, Cos)  bf16    branch3 second conv (im2col layout)
      o_ref : (NB, 4*Cos_last) f32  per-sentence max over the L valid positions.
    """
    x_ref = refs[0]
    o_ref = refs[-1]
    prm = refs[1:-1]
    rows = NB * LP

    pos = lax.broadcasted_iota(jnp.int32, (rows, 1), 0) % LP
    valid = (pos >= P_PAD) & (pos < P_PAD + L)            # (rows, 1) bool
    maskf = valid.astype(jnp.float32)

    def conv_same(src_f32, w_ref, b_ref, K):
        # im2col via XLU sublane rolls -> ONE matmul per conv.
        p = K // 2
        taps = []
        for k in range(K):
            s = (p - k) % rows
            taps.append(src_f32 if s == 0 else pltpu.roll(src_f32, shift=s, axis=0))
        cols = jnp.concatenate(taps, axis=1).astype(jnp.bfloat16)     # (rows, K*Ci)
        return jnp.dot(cols, w_ref[...], preferred_element_type=jnp.float32) + b_ref[...]

    cur = x_ref[...].astype(jnp.float32)                  # (rows, Cin)
    for li in range(n_layers):
        w1, b1, w2b, b2b, w3b, b3b = prm[6 * li:6 * li + 6]
        cos = b2b.shape[1]
        # fused stage-1: [branch1 | branch2 pre-act | branch3 pre-act | branch4]
        s1 = conv_same(cur, w1, b1, 3) * maskf            # zero padding rows once
        br2 = conv_same(_leaky(s1[:, cos:2 * cos]), w2b, b2b, 3)
        br3 = conv_same(_leaky(s1[:, 2 * cos:3 * cos]), w3b, b3b, 5)
        act = _leaky(jnp.concatenate([s1[:, :cos], br2, br3, s1[:, 3 * cos:]], axis=1))
        if li + 1 < n_layers:
            cur = act * maskf
        else:
            co = 4 * cos
            NEG = jnp.float32(-3.0e38)
            # fused F.max_pool1d: layout-clean reshape (LP multiple of 8) + masked max
            a3 = jnp.where(valid, act, NEG).reshape(NB, LP, co)
            o_ref[...] = jnp.max(a3, axis=1)              # (NB, co)


def inception_stack_pooled(x, layers, *, NB=8):
    """x: (N, L, Cin) channels-last -> (N, Cout_last); full stack + max-pool in ONE call."""
    N, L, C = x.shape
    LP = ((L + 2 * P_PAD + 7) // 8) * 8                   # sublane-aligned per-sentence rows
    NPAD = ((N + NB - 1) // NB) * NB
    xp = jnp.pad(x, ((0, NPAD - N), (P_PAD, LP - L - P_PAD), (0, 0)))
    buf = xp.reshape(NPAD * LP, C).astype(jnp.bfloat16)   # bf16 flat buffer (halved HBM bytes)

    flat_params = []
    for lp in layers:
        flat_params += [lp["w1"], lp["b1"], lp["w2b"], lp["b2b"], lp["w3b"], lp["b3b"]]
    cout = 4 * layers[-1]["b2b"].shape[1]

    kern = functools.partial(_inception_stack_kernel,
                             n_layers=len(layers), NB=NB, L=L, LP=LP)
    out = pl.pallas_call(
        kern,
        grid=(NPAD // NB,),
        in_specs=[pl.BlockSpec((NB * LP, C), lambda i: (i, 0))] +
                 [pl.BlockSpec(p.shape, lambda i: (0, 0)) for p in flat_params],
        out_specs=pl.BlockSpec((NB, cout), lambda i: (i, 0)),
        out_shape=jax.ShapeDtypeStruct((NPAD, cout), jnp.float32),
        compiler_params=_cparams(1),
    )(buf, *flat_params)
    return out[:N]


# --------------------------------------------------------------------------- BiLSTM kernels
def _lstm_recurrence(gx_ref, m_ref, whh_ref, y_ref, *, T, B, H):
    """Bidirectional recurrence; gx_ref holds the hoisted input projection for both dirs.

    gx_ref : (T*B, 8H) f32  [fwd gates | bwd gates], row t*B+b.
    m_ref  : (T, B, 1) f32 validity mask (pack_padded emulation).
    whh_ref: (2H, 8H) bf16 block-diagonal [[whh_f, 0], [0, whh_b]]  -> ONE push per step.
    y_ref  : (T, B, 2H) output / scratch; padded steps emit zeros and hold state.
    Gate order (PyTorch): i, f, g, o.
    """
    H4 = 4 * H
    whh = whh_ref[...]

    def cell(g, c_prev):
        i = jax.nn.sigmoid(g[:, 0:H])
        f = jax.nn.sigmoid(g[:, H:2 * H])
        gg = jnp.tanh(g[:, 2 * H:3 * H])
        o = jax.nn.sigmoid(g[:, 3 * H:4 * H])
        c = f * c_prev + i * gg
        return o * jnp.tanh(c), c

    def step(t, carry):
        hf, cf, hb, cb = carry
        tb = T - 1 - t
        # fused recurrent matmul for both directions (block-diagonal weight)
        rec = jnp.dot(jnp.concatenate([hf, hb], axis=1).astype(jnp.bfloat16), whh,
                      preferred_element_type=jnp.float32)             # (B, 8H)
        mf = m_ref[t]
        mb = m_ref[tb]
        gf = gx_ref[pl.ds(t * B, B), 0:H4] + rec[:, 0:H4]
        gb = gx_ref[pl.ds(tb * B, B), H4:2 * H4] + rec[:, H4:2 * H4]
        hf_n, cf_n = cell(gf, cf)
        hb_n, cb_n = cell(gb, cb)
        y_ref[t, :, 0:H] = (mf * hf_n).astype(y_ref.dtype)
        y_ref[tb, :, H:2 * H] = (mb * hb_n).astype(y_ref.dtype)
        hf = mf * hf_n + (1.0 - mf) * hf
        cf = mf * cf_n + (1.0 - mf) * cf
        hb = mb * hb_n + (1.0 - mb) * hb
        cb = mb * cb_n + (1.0 - mb) * cb
        return hf, cf, hb, cb

    z = jnp.zeros((B, H), jnp.float32)
    lax.fori_loop(0, T, step, (z, z, z, z), unroll=2)


def _bilstm_layer_kernel(x_ref, m_ref, wih_ref, b_ref, whh_ref, y_ref, gx_ref, *, T, B, H):
    """One bidirectional layer -> fused (T, B, 2H) bf16 output."""
    # hoisted input projection for BOTH directions: one tall matmul outside the recurrence
    gx_ref[...] = jnp.dot(x_ref[...], wih_ref[...],
                          preferred_element_type=jnp.float32) + b_ref[...]
    _lstm_recurrence(gx_ref, m_ref, whh_ref, y_ref, T=T, B=B, H=H)


def _bilstm_final_kernel(x_ref, m_ref, wih_ref, b_ref, whh_ref, pfeat_ref,
                         fw1_ref, fb1_ref, fw2_ref, fb2_ref, fw3_ref, fb3_ref,
                         o_ref, gx_ref, y_scr, *, T, B, H, topk):
    """Second bidirectional layer + k-max pooling + FC head, all in one kernel."""
    gx_ref[...] = jnp.dot(x_ref[...], wih_ref[...],
                          preferred_element_type=jnp.float32) + b_ref[...]
    _lstm_recurrence(gx_ref, m_ref, whh_ref, y_scr, T=T, B=B, H=H)

    # ---- k-max pooling over time (torch: top-k values kept in temporal order) ----
    yv = y_scr[...]                                       # (T, B, 2H) f32; padded steps are 0
    C = 2 * H
    tidx = lax.broadcasted_iota(jnp.int32, (T, B, C), 0)
    avail = jnp.ones((T, B, C), dtype=jnp.bool_)
    NEG = jnp.float32(-3.0e38)
    sel = []
    for _ in range(topk):                                 # iterative max selection (topk small)
        masked = jnp.where(avail, yv, NEG)
        mx = jnp.max(masked, axis=0)                                  # (B, C)
        is_max = masked == mx[None, :, :]
        idx = jnp.min(jnp.where(is_max, tidx, T), axis=0)             # first argmax index
        avail = avail & (tidx != idx[None, :, :])
        sel.append((idx, mx))
    ordered = []
    items = sel
    for _ in range(topk):                                 # static selection sort by time index
        bi, bv = items[0]
        for ii, vv in items[1:]:
            take = ii < bi
            bv = jnp.where(take, vv, bv)
            bi = jnp.where(take, ii, bi)
        ordered.append(bv)
        items = [(jnp.where(ii == bi, jnp.int32(T + 1), ii), vv) for ii, vv in items]

    # ---- FC head fused in (dropout layers are inference-mode identities) ----
    feat = jnp.concatenate(ordered + [pfeat_ref[...]], axis=1)        # (B, 2H*topk + hidden1)
    h1 = _leaky(jnp.dot(feat.astype(jnp.bfloat16), fw1_ref[...],
                        preferred_element_type=jnp.float32) + fb1_ref[...])
    h2 = _leaky(jnp.dot(h1.astype(jnp.bfloat16), fw2_ref[...],
                        preferred_element_type=jnp.float32) + fb2_ref[...])
    logits = jnp.sum(h2 * fw3_ref[...], axis=1, keepdims=True) + fb3_ref[...]
    o_ref[...] = jax.nn.sigmoid(logits)


# --------------------------------------------------------------------------- full model
def essay_prompt_net(params, sens, prompts, lengths_list):
    emb = params["embedding"]
    topk = params["topk"]

    # prompt branch: 3 fused inception blocks + max-pool, one kernel
    p = jnp.take(emb, prompts, axis=0)                                 # (B, Lp, E)
    p_feat = inception_stack_pooled(p, params["prompt_inceptions"])    # (B, hidden_size1)

    # essay (sentence) branch: 2 fused inception blocks + max-pool, one kernel
    s = jnp.take(emb, sens, axis=0)                                    # (Ns, Ls, E)
    s_feat = inception_stack_pooled(s, params["essay_inceptions"])     # (Ns, inception_size)

    # pad_sequence: group sentence features into essays (time-major for the LSTM kernels)
    T = max(lengths_list)
    B = len(lengths_list)
    segs, off = [], 0
    for l in lengths_list:
        segs.append(jnp.pad(s_feat[off:off + l], ((0, T - l), (0, 0))))
        off += l
    essays = jnp.stack(segs, axis=0)                                   # (B, T, C)
    lengths = jnp.array(lengths_list, jnp.int32)
    mask_tb = (jnp.arange(T)[:, None] < lengths[None, :]).astype(jnp.float32)[:, :, None]
    x_tm = jnp.transpose(essays, (1, 0, 2)).reshape(T * B, -1).astype(jnp.bfloat16)

    lstm = params["lstm"]
    fc = params["fc"]
    H = lstm[0]["whh"].shape[0] // 2

    # ---- BiLSTM layer 1 (packed semantics via length mask) ----
    y1 = pl.pallas_call(
        functools.partial(_bilstm_layer_kernel, T=T, B=B, H=H),
        in_specs=[_VMEM] * 5,
        out_specs=_VMEM,
        out_shape=jax.ShapeDtypeStruct((T, B, 2 * H), jnp.bfloat16),
        scratch_shapes=[pltpu.VMEM((T * B, 8 * H), jnp.float32)],
        compiler_params=_cparams(),
    )(x_tm, mask_tb, lstm[0]["wih"], lstm[0]["b"], lstm[0]["whh"])
    # TODO(synk): inter-LSTM-layer dropout(0.5) skipped (inference mode).

    # ---- BiLSTM layer 2 + k-max pooling + FC head, one kernel ----
    x2 = y1.reshape(T * B, 2 * H)
    score = pl.pallas_call(
        functools.partial(_bilstm_final_kernel, T=T, B=B, H=H, topk=topk),
        in_specs=[_VMEM] * 12,
        out_specs=_VMEM,
        out_shape=jax.ShapeDtypeStruct((B, 1), jnp.float32),
        scratch_shapes=[pltpu.VMEM((T * B, 8 * H), jnp.float32),
                        pltpu.VMEM((T, B, 2 * H), jnp.float32)],
        compiler_params=_cparams(),
    )(x2, mask_tb, lstm[1]["wih"], lstm[1]["b"], lstm[1]["whh"],
      p_feat, fc["w1"], fc["b1"], fc["w2"], fc["b2"], fc["w3"], fc["b3"])
    return score[:, 0]


# --------------------------------------------------------------------------- parameter init
def _xavier(key, shape, fan_in, fan_out):
    std = (2.0 / (fan_in + fan_out)) ** 0.5
    return std * jax.random.normal(key, shape, dtype=jnp.float32)


def init_inception(key, cin, co):
    assert co % 4 == 0
    cos = co // 4
    ks = jax.random.split(key, 10)

    def w(k, K, ci, cf):
        return _xavier(k, (K, ci, cf), ci * K, cf * K)

    def b(k, cf):
        return 0.1 * jax.random.normal(k, (1, cf), dtype=jnp.float32)

    w1 = w(ks[0], 1, cin, cos);  b1 = b(ks[1], cos)
    w2a = w(ks[2], 1, cin, cos); b2a = jnp.zeros((1, cos), jnp.float32)   # torch: bias init 0
    w2b = w(ks[3], 3, cos, cos); b2b = b(ks[4], cos)
    w3a = w(ks[5], 3, cin, cos); b3a = jnp.zeros((1, cos), jnp.float32)   # torch: bias init 0
    w3b = w(ks[6], 5, cos, cos); b3b = b(ks[7], cos)
    w4 = w(ks[8], 3, cin, cos);  b4 = b(ks[9], cos)

    # fuse ALL stage-1 convs: zero-pad K=1 kernels to K=3 (centre tap) and concat along
    # output channels; store in im2col layout (K*Cin, Cout) for a single matmul.
    z = jnp.zeros((1, cin, cos), jnp.float32)
    w1_3 = jnp.concatenate([z, w1, z], axis=0)
    w2a_3 = jnp.concatenate([z, w2a, z], axis=0)
    wS = jnp.concatenate([w1_3, w2a_3, w3a, w4], axis=2)          # (3, cin, 4cos)
    bS = jnp.concatenate([b1, b2a, b3a, b4], axis=1)              # (1, 4cos)
    return dict(
        w1=wS.reshape(3 * cin, 4 * cos).astype(jnp.bfloat16),
        b1=bS,
        w2b=w2b.reshape(3 * cos, cos).astype(jnp.bfloat16),
        b2b=b2b,
        w3b=w3b.reshape(5 * cos, cos).astype(jnp.bfloat16),
        b3b=b3b,
    )


def init_lstm_layer(key, din, h):
    kf1, kf2, kf3, kb1, kb2, kb3 = jax.random.split(key, 6)
    s = 1.0 / (h ** 0.5)
    wih_f = s * jax.random.normal(kf1, (din, 4 * h), dtype=jnp.float32)
    whh_f = s * jax.random.normal(kf2, (h, 4 * h), dtype=jnp.float32)
    b_f = s * jax.random.normal(kf3, (1, 4 * h), dtype=jnp.float32)     # b_ih + b_hh combined
    wih_b = s * jax.random.normal(kb1, (din, 4 * h), dtype=jnp.float32)
    whh_b = s * jax.random.normal(kb2, (h, 4 * h), dtype=jnp.float32)
    b_b = s * jax.random.normal(kb3, (1, 4 * h), dtype=jnp.float32)
    z = jnp.zeros((h, 4 * h), jnp.float32)
    whh_blk = jnp.concatenate(
        [jnp.concatenate([whh_f, z], axis=1),
         jnp.concatenate([z, whh_b], axis=1)], axis=0)                   # (2h, 8h) block-diagonal
    return dict(
        wih=jnp.concatenate([wih_f, wih_b], axis=1).astype(jnp.bfloat16),  # (din, 8h)
        b=jnp.concatenate([b_f, b_b], axis=1),                             # (1, 8h)
        whh=whh_blk.astype(jnp.bfloat16),
    )


def init_fc(key, c2h, topk, hidden1, d1, d2):
    f_in = c2h * topk + hidden1
    ks = jax.random.split(key, 3)
    w1_torch = _xavier(ks[0], (f_in, d1), f_in, d1)
    # Kernel builds feat as [kmax_j0 (2H) | kmax_j1 (2H) | ... | prompt]; torch interleaves the
    # kmax part channel-major. Permute w1 rows once (zero runtime cost) so a torch checkpoint
    # would map exactly onto the kernel's feature layout.
    perm = jnp.concatenate([
        (jnp.arange(c2h)[None, :] * topk + jnp.arange(topk)[:, None]).reshape(-1),
        topk * c2h + jnp.arange(hidden1)])
    w1 = w1_torch[perm]
    return dict(
        w1=w1.astype(jnp.bfloat16),
        b1=jnp.zeros((1, d1), jnp.float32),
        w2=_xavier(ks[1], (d1, d2), d1, d2).astype(jnp.bfloat16),
        b2=jnp.zeros((1, d2), jnp.float32),
        w3=_xavier(ks[2], (1, d2), d2, 1),
        b3=jnp.zeros((1, 1), jnp.float32),
    )


# --------------------------------------------------------------------------- main
if __name__ == "__main__":
    # small shapes consistent with the module
    V, E = 50, 16                       # vocab, embedding_size
    inception_size1, hidden_size1 = 32, 32
    inception_size, hidden_size, topk = 32, 32, 2
    lengths_list = [4, 3]               # sentences per essay, sorted descending
    B = len(lengths_list)
    Ns = sum(lengths_list)              # total sentences
    Ls, Lp = 16, 16                     # tokens per sentence / per prompt

    key = jax.random.PRNGKey(0)
    (k_emb, k_sens, k_prom, k_p1, k_p2, k_p3,
     k_e1, k_e2, k_l0, k_l1, k_fc) = jax.random.split(key, 11)

    embedding = 0.5 * jax.random.normal(k_emb, (V, E), dtype=jnp.float32)
    sens = jax.random.randint(k_sens, (Ns, Ls), 0, V)
    prompts = jax.random.randint(k_prom, (B, Lp), 0, V)

    params = {
        "embedding": embedding,
        "topk": topk,
        "prompt_inceptions": [
            init_inception(k_p1, E, inception_size1),
            init_inception(k_p2, inception_size1, inception_size1),
            init_inception(k_p3, inception_size1, hidden_size1),
        ],
        "essay_inceptions": [
            init_inception(k_e1, E, inception_size),
            init_inception(k_e2, inception_size, inception_size),
        ],
        "lstm": [
            init_lstm_layer(k_l0, inception_size, hidden_size),
            init_lstm_layer(k_l1, 2 * hidden_size, hidden_size),
        ],
        "fc": init_fc(k_fc, 2 * hidden_size, topk, hidden_size1,
                      hidden_size * topk, hidden_size),
    }

    score = essay_prompt_net(params, sens, prompts, lengths_list)
    score = jax.block_until_ready(score)

    assert score.shape == (B,), score.shape
    assert bool(jnp.all(jnp.isfinite(score)))
    assert bool(jnp.all((score > 0.0) & (score < 1.0)))
    print("KERNEL_OK")
</pallas_src>

<mosaic_0001>
module attributes {stable_mosaic.version = 11 : i64} {
  func.func @_inception_stack_kernel(%arg0: i32, %arg1: memref<192x16xbf16, #tpu.memory_space<vmem>>, %arg2: memref<48x32xbf16, #tpu.memory_space<vmem>>, %arg3: memref<1x32xf32, #tpu.memory_space<vmem>>, %arg4: memref<24x8xbf16, #tpu.memory_space<vmem>>, %arg5: memref<1x8xf32, #tpu.memory_space<vmem>>, %arg6: memref<40x8xbf16, #tpu.memory_space<vmem>>, %arg7: memref<1x8xf32, #tpu.memory_space<vmem>>, %arg8: memref<96x32xbf16, #tpu.memory_space<vmem>>, %arg9: memref<1x32xf32, #tpu.memory_space<vmem>>, %arg10: memref<24x8xbf16, #tpu.memory_space<vmem>>, %arg11: memref<1x8xf32, #tpu.memory_space<vmem>>, %arg12: memref<40x8xbf16, #tpu.memory_space<vmem>>, %arg13: memref<1x8xf32, #tpu.memory_space<vmem>>, %arg14: memref<96x32xbf16, #tpu.memory_space<vmem>>, %arg15: memref<1x32xf32, #tpu.memory_space<vmem>>, %arg16: memref<24x8xbf16, #tpu.memory_space<vmem>>, %arg17: memref<1x8xf32, #tpu.memory_space<vmem>>, %arg18: memref<40x8xbf16, #tpu.memory_space<vmem>>, %arg19: memref<1x8xf32, #tpu.memory_space<vmem>>, %arg20: memref<8x32xf32, #tpu.memory_space<vmem>>) attributes {dimension_semantics = [#tpu.dimension_semantics<parallel>], iteration_bounds = array<i64: 1>, scalar_prefetch = 0 : i64, scratch_operands = 0 : i64, tpu.core_type = #tpu.core_type<tc>, window_params = [{transform_indices = @transform_0, window_bounds = array<i64: 192, 16>}, {pipeline_mode = #tpu.pipeline_mode<synchronous>, transform_indices = @transform_1, window_bounds = array<i64: 48, 32>}, {pipeline_mode = #tpu.pipeline_mode<synchronous>, transform_indices = @transform_2, window_bounds = array<i64: 1, 32>}, {pipeline_mode = #tpu.pipeline_mode<synchronous>, transform_indices = @transform_3, window_bounds = array<i64: 24, 8>}, {pipeline_mode = #tpu.pipeline_mode<synchronous>, transform_indices = @transform_4, window_bounds = array<i64: 1, 8>}, {pipeline_mode = #tpu.pipeline_mode<synchronous>, transform_indices = @transform_5, window_bounds = array<i64: 40, 8>}, {pipeline_mode = #tpu.pipeline_mode<synchronous>, transform_indices = @transform_6, window_bounds = array<i64: 1, 8>}, {pipeline_mode = #tpu.pipeline_mode<synchronous>, transform_indices = @transform_7, window_bounds = array<i64: 96, 32>}, {pipeline_mode = #tpu.pipeline_mode<synchronous>, transform_indices = @transform_8, window_bounds = array<i64: 1, 32>}, {pipeline_mode = #tpu.pipeline_mode<synchronous>, transform_indices = @transform_9, window_bounds = array<i64: 24, 8>}, {pipeline_mode = #tpu.pipeline_mode<synchronous>, transform_indices = @transform_10, window_bounds = array<i64: 1, 8>}, {pipeline_mode = #tpu.pipeline_mode<synchronous>, transform_indices = @transform_11, window_bounds = array<i64: 40, 8>}, {pipeline_mode = #tpu.pipeline_mode<synchronous>, transform_indices = @transform_12, window_bounds = array<i64: 1, 8>}, {pipeline_mode = #tpu.pipeline_mode<synchronous>, transform_indices = @transform_13, window_bounds = array<i64: 96, 32>}, {pipeline_mode = #tpu.pipeline_mode<synchronous>, transform_indices = @transform_14, window_bounds = array<i64: 1, 32>}, {pipeline_mode = #tpu.pipeline_mode<synchronous>, transform_indices = @transform_15, window_bounds = array<i64: 24, 8>}, {pipeline_mode = #tpu.pipeline_mode<synchronous>, transform_indices = @transform_16, window_bounds = array<i64: 1, 8>}, {pipeline_mode = #tpu.pipeline_mode<synchronous>, transform_indices = @transform_17, window_bounds = array<i64: 40, 8>}, {pipeline_mode = #tpu.pipeline_mode<synchronous>, transform_indices = @transform_18, window_bounds = array<i64: 1, 8>}, {transform_indices = @transform_19, window_bounds = array<i64: 8, 32>}]} {
    %0 = tpu.iota {dimensions = array<i32: 0>} : vector<192x1xi32>
    %c24_i32 = arith.constant 24 : i32
    %c0_i32 = arith.constant 0 : i32
    %1 = arith.cmpi eq, %c24_i32, %c0_i32 : i32
    %c1_i32 = arith.constant 1 : i32
    %2 = arith.select %1, %c1_i32, %c24_i32 : i32
    %3 = vector.broadcast %2 : i32 to vector<192x1xi32>
    %4 = arith.remsi %0, %3 : vector<192x1xi32>
    %c0_i32_0 = arith.constant 0 : i32
    %5 = vector.broadcast %c0_i32_0 : i32 to vector<192x1xi32>
    %6 = arith.cmpi ne, %4, %5 : vector<192x1xi32>
    %c0_i32_1 = arith.constant 0 : i32
    %7 = vector.broadcast %c0_i32_1 : i32 to vector<192x1xi32>
    %8 = arith.cmpi slt, %4, %7 : vector<192x1xi32>
    %c0_i32_2 = arith.constant 0 : i32
    %9 = arith.cmpi slt, %2, %c0_i32_2 : i32
    %10 = vector.broadcast %9 : i1 to vector<192x1xi1>
    %11 = vector.broadcast %10 : vector<192x1xi1> to vector<192x1xi1>
    %12 = arith.xori %8, %11 : vector<192x1xi1>
    %13 = arith.andi %12, %6 : vector<192x1xi1>
    %14 = vector.broadcast %2 : i32 to vector<192x1xi32>
    %15 = arith.addi %4, %14 : vector<192x1xi32>
    %16 = arith.select %13, %15, %4 : vector<192x1xi1>, vector<192x1xi32>
    %c2_i32 = arith.constant 2 : i32
    %17 = vector.broadcast %c2_i32 : i32 to vector<192x1xi32>
    %18 = arith.cmpi sge, %16, %17 : vector<192x1xi32>
    %c18_i32 = arith.constant 18 : i32
    %19 = vector.broadcast %c18_i32 : i32 to vector<192x1xi32>
    %20 = arith.cmpi slt, %16, %19 : vector<192x1xi32>
    %21 = arith.andi %18, %20 : vector<192x1xi1>
    %22 = arith.extui %21 : vector<192x1xi1> to vector<192x1xi32>
    %23 = arith.sitofp %22 : vector<192x1xi32> to vector<192x1xf32>
    %c0 = arith.constant 0 : index
    %c0_3 = arith.constant 0 : index
    %24 = vector.load %arg1[%c0, %c0_3] : memref<192x16xbf16, #tpu.memory_space<vmem>>, vector<192x16xbf16>
    %25 = arith.extf %24 : vector<192x16xbf16> to vector<192x16xf32>
    %c1_i32_4 = arith.constant 1 : i32
    %26 = tpu.dynamic_rotate %25 by %c1_i32_4 dim 0 : vector<192x16xf32>, i32 -> vector<192x16xf32>
    %c191_i32 = arith.constant 191 : i32
    %27 = tpu.dynamic_rotate %25 by %c191_i32 dim 0 : vector<192x16xf32>, i32 -> vector<192x16xf32>
    %28 = tpu.concatenate %26, %25, %27 in 1 : vector<192x16xf32>, vector<192x16xf32>, vector<192x16xf32> -> vector<192x48xf32>
    %29 = arith.truncf %28 : vector<192x48xf32> to vector<192x48xbf16>
    %c0_5 = arith.constant 0 : index
    %c0_6 = arith.constant 0 : index
    %30 = vector.load %arg2[%c0_5, %c0_6] : memref<48x32xbf16, #tpu.memory_space<vmem>>, vector<48x32xbf16>
    %cst = arith.constant dense<0.000000e+00> : vector<192x32xf32>
    %31 = tpu.matmul %29, %30, %cst {dimension_numbers = #tpu.dot_dimension_numbers<[1], [0], [0], [1], [0, 0, 1, 1], [], []>} : vector<192x48xbf16>, vector<48x32xbf16>, vector<192x32xf32> -> vector<192x32xf32>
    %c0_7 = arith.constant 0 : index
    %c0_8 = arith.constant 0 : index
    %32 = vector.load %arg3[%c0_7, %c0_8] : memref<1x32xf32, #tpu.memory_space<vmem>>, vector<1x32xf32>
    %33 = vector.broadcast %32 : vector<1x32xf32> to vector<192x32xf32>
    %34 = arith.addf %31, %33 : vector<192x32xf32>
    %35 = vector.broadcast %23 : vector<192x1xf32> to vector<192x32xf32>
    %36 = arith.mulf %34, %35 : vector<192x32xf32>
    %37 = vector.extract_strided_slice %36 {offsets = [0, 8], sizes = [192, 8], strides = [1, 1]} : vector<192x32xf32> to vector<192x8xf32>
    %cst_9 = arith.constant 0.000000e+00 : f32
    %38 = vector.broadcast %cst_9 : f32 to vector<192x8xf32>
    %39 = arith.cmpf ogt, %37, %38 : vector<192x8xf32>
    %cst_10 = arith.constant 0.00999999977 : f32
    %40 = vector.broadcast %cst_10 : f32 to vector<192x8xf32>
    %41 = arith.mulf %40, %37 : vector<192x8xf32>
    %42 = arith.select %39, %37, %41 : vector<192x8xi1>, vector<192x8xf32>
    %c1_i32_11 = arith.constant 1 : i32
    %43 = tpu.dynamic_rotate %42 by %c1_i32_11 dim 0 : vector<192x8xf32>, i32 -> vector<192x8xf32>
    %c191_i32_12 = arith.constant 191 : i32
    %44 = tpu.dynamic_rotate %42 by %c191_i32_12 dim 0 : vector<192x8xf32>, i32 -> vector<192x8xf32>
    %45 = tpu.concatenate %43, %42, %44 in 1 : vector<192x8xf32>, vector<192x8xf32>, vector<192x8xf32> -> vector<192x24xf32>
    %46 = arith.truncf %45 : vector<192x24xf32> to vector<192x24xbf16>
    %c0_13 = arith.constant 0 : index
    %c0_14 = arith.constant 0 : index
    %47 = vector.load %arg4[%c0_13, %c0_14] : memref<24x8xbf16, #tpu.memory_space<vmem>>, vector<24x8xbf16>
    %cst_15 = arith.constant dense<0.000000e+00> : vector<192x8xf32>
    %48 = tpu.matmul %46, %47, %cst_15 {dimension_numbers = #tpu.dot_dimension_numbers<[1], [0], [0], [1], [0, 0, 1, 1], [], []>} : vector<192x24xbf16>, vector<24x8xbf16>, vector<192x8xf32> -> vector<192x8xf32>
    %c0_16 = arith.constant 0 : index
    %c0_17 = arith.constant 0 : index
    %49 = vector.load %arg5[%c0_16, %c0_17] : memref<1x8xf32, #tpu.memory_space<vmem>>, vector<1x8xf32>
    %50 = vector.broadcast %49 : vector<1x8xf32> to vector<192x8xf32>
    %51 = arith.addf %48, %50 : vector<192x8xf32>
    %52 = vector.extract_strided_slice %36 {offsets = [0, 16], sizes = [192, 8], strides = [1, 1]} : vector<192x32xf32> to vector<192x8xf32>
    %cst_18 = arith.constant 0.000000e+00 : f32
    %53 = vector.broadcast %cst_18 : f32 to vector<192x8xf32>
    %54 = arith.cmpf ogt, %52, %53 : vector<192x8xf32>
    %cst_19 = arith.constant 0.00999999977 : f32
    %55 = vector.broadcast %cst_19 : f32 to vector<192x8xf32>
    %56 = arith.mulf %55, %52 : vector<192x8xf32>
    %57 = arith.select %54, %52, %56 : vector<192x8xi1>, vector<192x8xf32>
    %c2_i32_20 = arith.constant 2 : i32
    %58 = tpu.dynamic_rotate %57 by %c2_i32_20 dim 0 : vector<192x8xf32>, i32 -> vector<192x8xf32>
    %c1_i32_21 = arith.constant 1 : i32
    %59 = tpu.dynamic_rotate %57 by %c1_i32_21 dim 0 : vector<192x8xf32>, i32 -> vector<192x8xf32>
    %c191_i32_22 = arith.constant 191 : i32
    %60 = tpu.dynamic_rotate %57 by %c191_i32_22 dim 0 : vector<192x8xf32>, i32 -> vector<192x8xf32>
    %c190_i32 = arith.constant 190 : i32
    %61 = tpu.dynamic_rotate %57 by %c190_i32 dim 0 : vector<192x8xf32>, i32 -> vector<192x8xf32>
    %62 = tpu.concatenate %58, %59, %57, %60, %61 in 1 : vector<192x8xf32>, vector<192x8xf32>, vector<192x8xf32>, vector<192x8xf32>, vector<192x8xf32> -> vector<192x40xf32>
    %63 = arith.truncf %62 : vector<192x40xf32> to vector<192x40xbf16>
    %c0_23 = arith.constant 0 : index
    %c0_24 = arith.constant 0 : index
    %64 = vector.load %arg6[%c0_23, %c0_24] : memref<40x8xbf16, #tpu.memory_space<vmem>>, vector<40x8xbf16>
    %cst_25 = arith.constant dense<0.000000e+00> : vector<192x8xf32>
    %65 = tpu.matmul %63, %64, %cst_25 {dimension_numbers = #tpu.dot_dimension_numbers<[1], [0], [0], [1], [0, 0, 1, 1], [], []>} : vector<192x40xbf16>, vector<40x8xbf16>, vector<192x8xf32> -> vector<192x8xf32>
    %c0_26 = arith.constant 0 : index
    %c0_27 = arith.constant 0 : index
    %66 = vector.load %arg7[%c0_26, %c0_27] : memref<1x8xf32, #tpu.memory_space<vmem>>, vector<1x8xf32>
    %67 = vector.broadcast %66 : vector<1x8xf32> to vector<192x8xf32>
    %68 = arith.addf %65, %67 : vector<192x8xf32>
    %69 = vector.extract_strided_slice %36 {offsets = [0, 0], sizes = [192, 8], strides = [1, 1]} : vector<192x32xf32> to vector<192x8xf32>
    %70 = vector.extract_strided_slice %36 {offsets = [0, 24], sizes = [192, 8], strides = [1, 1]} : vector<192x32xf32> to vector<192x8xf32>
    %71 = tpu.concatenate %69, %51, %68, %70 in 1 : vector<192x8xf32>, vector<192x8xf32>, vector<192x8xf32>, vector<192x8xf32> -> vector<192x32xf32>
    %cst_28 = arith.constant 0.000000e+00 : f32
    %72 = vector.broadcast %cst_28 : f32 to vector<192x32xf32>
    %73 = arith.cmpf ogt, %71, %72 : vector<192x32xf32>
    %cst_29 = arith.constant 0.00999999977 : f32
    %74 = vector.broadcast %cst_29 : f32 to vector<192x32xf32>
    %75 = arith.mulf %74, %71 : vector<192x32xf32>
    %76 = arith.select %73, %71, %75 : vector<192x32xi1>, vector<192x32xf32>
    %77 = vector.broadcast %23 : vector<192x1xf32> to vector<192x32xf32>
    %78 = arith.mulf %76, %77 : vector<192x32xf32>
    %c1_i32_30 = arith.constant 1 : i32
    %79 = tpu.dynamic_rotate %78 by %c1_i32_30 dim 0 : vector<192x32xf32>, i32 -> vector<192x32xf32>
    %c191_i32_31 = arith.constant 191 : i32
    %80 = tpu.dynamic_rotate %78 by %c191_i32_31 dim 0 : vector<192x32xf32>, i32 -> vector<192x32xf32>
    %81 = tpu.concatenate %79, %78, %80 in 1 : vector<192x32xf32>, vector<192x32xf32>, vector<192x32xf32> -> vector<192x96xf32>
    %82 = arith.truncf %81 : vector<192x96xf32> to vector<192x96xbf16>
    %c0_32 = arith.constant 0 : index
    %c0_33 = arith.constant 0 : index
    %83 = vector.load %arg8[%c0_32, %c0_33] : memref<96x32xbf16, #tpu.memory_space<vmem>>, vector<96x32xbf16>
    %cst_34 = arith.constant dense<0.000000e+00> : vector<192x32xf32>
    %84 = tpu.matmul %82, %83, %cst_34 {dimension_numbers = #tpu.dot_dimension_numbers<[1], [0], [0], [1], [0, 0, 1, 1], [], []>} : vector<192x96xbf16>, vector<96x32xbf16>, vector<192x32xf32> -> vector<192x32xf32>
    %c0_35 = arith.constant 0 : index
    %c0_36 = arith.constant 0 : index
    %85 = vector.load %arg9[%c0_35, %c0_36] : memref<1x32xf32, #tpu.memory_space<vmem>>, vector<1x32xf32>
    %86 = vector.broadcast %85 : vector<1x32xf32> to vector<192x32xf32>
    %87 = arith.addf %84, %86 : vector<192x32xf32>
    %88 = vector.broadcast %23 : vector<192x1xf32> to vector<192x32xf32>
    %89 = arith.mulf %87, %88 : vector<192x32xf32>
    %90 = vector.extract_strided_slice %89 {offsets = [0, 8], sizes = [192, 8], strides = [1, 1]} : vector<192x32xf32> to vector<192x8xf32>
    %cst_37 = arith.constant 0.000000e+00 : f32
    %91 = vector.broadcast %cst_37 : f32 to vector<192x8xf32>
    %92 = arith.cmpf ogt, %90, %91 : vector<192x8xf32>
    %cst_38 = arith.constant 0.00999999977 : f32
    %93 = vector.broadcast %cst_38 : f32 to vector<192x8xf32>
    %94 = arith.mulf %93, %90 : vector<192x8xf32>
    %95 = arith.select %92, %90, %94 : vector<192x8xi1>, vector<192x8xf32>
    %c1_i32_39 = arith.constant 1 : i32
    %96 = tpu.dynamic_rotate %95 by %c1_i32_39 dim 0 : vector<192x8xf32>, i32 -> vector<192x8xf32>
    %c191_i32_40 = arith.constant 191 : i32
    %97 = tpu.dynamic_rotate %95 by %c191_i32_40 dim 0 : vector<192x8xf32>, i32 -> vector<192x8xf32>
    %98 = tpu.concatenate %96, %95, %97 in 1 : vector<192x8xf32>, vector<192x8xf32>, vector<192x8xf32> -> vector<192x24xf32>
    %99 = arith.truncf %98 : vector<192x24xf32> to vector<192x24xbf16>
    %c0_41 = arith.constant 0 : index
    %c0_42 = arith.constant 0 : index
    %100 = vector.load %arg10[%c0_41, %c0_42] : memref<24x8xbf16, #tpu.memory_space<vmem>>, vector<24x8xbf16>
    %cst_43 = arith.constant dense<0.000000e+00> : vector<192x8xf32>
    %101 = tpu.matmul %99, %100, %cst_43 {dimension_numbers = #tpu.dot_dimension_numbers<[1], [0], [0], [1], [0, 0, 1, 1], [], []>} : vector<192x24xbf16>, vector<24x8xbf16>, vector<192x8xf32> -> vector<192x8xf32>
    %c0_44 = arith.constant 0 : index
    %c0_45 = arith.constant 0 : index
    %102 = vector.load %arg11[%c0_44, %c0_45] : memref<1x8xf32, #tpu.memory_space<vmem>>, vector<1x8xf32>
    %103 = vector.broadcast %102 : vector<1x8xf32> to vector<192x8xf32>
    %104 = arith.addf %101, %103 : vector<192x8xf32>
    %105 = vector.extract_strided_slice %89 {offsets = [0, 16], sizes = [192, 8], strides = [1, 1]} : vector<192x32xf32> to vector<192x8xf32>
    %cst_46 = arith.constant 0.000000e+00 : f32
    %106 = vector.broadcast %cst_46 : f32 to vector<192x8xf32>
    %107 = arith.cmpf ogt, %105, %106 : vector<192x8xf32>
    %cst_47 = arith.constant 0.00999999977 : f32
    %108 = vector.broadcast %cst_47 : f32 to vector<192x8xf32>
    %109 = arith.mulf %108, %105 : vector<192x8xf32>
    %110 = arith.select %107, %105, %109 : vector<192x8xi1>, vector<192x8xf32>
    %c2_i32_48 = arith.constant 2 : i32
    %111 = tpu.dynamic_rotate %110 by %c2_i32_48 dim 0 : vector<192x8xf32>, i32 -> vector<192x8xf32>
    %c1_i32_49 = arith.constant 1 : i32
    %112 = tpu.dynamic_rotate %110 by %c1_i32_49 dim 0 : vector<192x8xf32>, i32 -> vector<192x8xf32>
    %c191_i32_50 = arith.constant 191 : i32
    %113 = tpu.dynamic_rotate %110 by %c191_i32_50 dim 0 : vector<192x8xf32>, i32 -> vector<192x8xf32>
    %c190_i32_51 = arith.constant 190 : i32
    %114 = tpu.dynamic_rotate %110 by %c190_i32_51 dim 0 : vector<192x8xf32>, i32 -> vector<192x8xf32>
    %115 = tpu.concatenate %111, %112, %110, %113, %114 in 1 : vector<192x8xf32>, vector<192x8xf32>, vector<192x8xf32>, vector<192x8xf32>, vector<192x8xf32> -> vector<192x40xf32>
    %116 = arith.truncf %115 : vector<192x40xf32> to vector<192x40xbf16>
    %c0_52 = arith.constant 0 : index
    %c0_53 = arith.constant 0 : index
    %117 = vector.load %arg12[%c0_52, %c0_53] : memref<40x8xbf16, #tpu.memory_space<vmem>>, vector<40x8xbf16>
    %cst_54 = arith.constant dense<0.000000e+00> : vector<192x8xf32>
    %118 = tpu.matmul %116, %117, %cst_54 {dimension_numbers = #tpu.dot_dimension_numbers<[1], [0], [0], [1], [0, 0, 1, 1], [], []>} : vector<192x40xbf16>, vector<40x8xbf16>, vector<192x8xf32> -> vector<192x8xf32>
    %c0_55 = arith.constant 0 : index
    %c0_56 = arith.constant 0 : index
    %119 = vector.load %arg13[%c0_55, %c0_56] : memref<1x8xf32, #tpu.memory_space<vmem>>, vector<1x8xf32>
    %120 = vector.broadcast %119 : vector<1x8xf32> to vector<192x8xf32>
    %121 = arith.addf %118, %120 : vector<192x8xf32>
    %122 = vector.extract_strided_slice %89 {offsets = [0, 0], sizes = [192, 8], strides = [1, 1]} : vector<192x32xf32> to vector<192x8xf32>
    %123 = vector.extract_strided_slice %89 {offsets = [0, 24], sizes = [192, 8], strides = [1, 1]} : vector<192x32xf32> to vector<192x8xf32>
    %124 = tpu.concatenate %122, %104, %121, %123 in 1 : vector<192x8xf32>, vector<192x8xf32>, vector<192x8xf32>, vector<192x8xf32> -> vector<192x32xf32>
    %cst_57 = arith.constant 0.000000e+00 : f32
    %125 = vector.broadcast %cst_57 : f32 to vector<192x32xf32>
    %126 = arith.cmpf ogt, %124, %125 : vector<192x32xf32>
    %cst_58 = arith.constant 0.00999999977 : f32
    %127 = vector.broadcast %cst_58 : f32 to vector<192x32xf32>
    %128 = arith.mulf %127, %124 : vector<192x32xf32>
    %129 = arith.select %126, %124, %128 : vector<192x32xi1>, vector<192x32xf32>
    %130 = vector.broadcast %23 : vector<192x1xf32> to vector<192x32xf32>
    %131 = arith.mulf %129, %130 : vector<192x32xf32>
    %c1_i32_59 = arith.constant 1 : i32
    %132 = tpu.dynamic_rotate %131 by %c1_i32_59 dim 0 : vector<192x32xf32>, i32 -> vector<192x32xf32>
    %c191_i32_60 = arith.constant 191 : i32
    %133 = tpu.dynamic_rotate %131 by %c191_i32_60 dim 0 : vector<192x32xf32>, i32 -> vector<192x32xf32>
    %134 = tpu.concatenate %132, %131, %133 in 1 : vector<192x32xf32>, vector<192x32xf32>, vector<192x32xf32> -> vector<192x96xf32>
    %135 = arith.truncf %134 : vector<192x96xf32> to vector<192x96xbf16>
    %c0_61 = arith.constant 0 : index
    %c0_62 = arith.constant 0 : index
    %136 = vector.load %arg14[%c0_61, %c0_62] : memref<96x32xbf16, #tpu.memory_space<vmem>>, vector<96x32xbf16>
    %cst_63 = arith.constant dense<0.000000e+00> : vector<192x32xf32>
    %137 = tpu.matmul %135, %136, %cst_63 {dimension_numbers = #tpu.dot_dimension_numbers<[1], [0], [0], [1], [0, 0, 1, 1], [], []>} : vector<192x96xbf16>, vector<96x32xbf16>, vector<192x32xf32> -> vector<192x32xf32>
    %c0_64 = arith.constant 0 : index
    %c0_65 = arith.constant 0 : index
    %138 = vector.load %arg15[%c0_64, %c0_65] : memref<1x32xf32, #tpu.memory_space<vmem>>, vector<1x32xf32>
    %139 = vector.broadcast %138 : vector<1x32xf32> to vector<192x32xf32>
    %140 = arith.addf %137, %139 : vector<192x32xf32>
    %141 = vector.broadcast %23 : vector<192x1xf32> to vector<192x32xf32>
    %142 = arith.mulf %140, %141 : vector<192x32xf32>
    %143 = vector.extract_strided_slice %142 {offsets = [0, 8], sizes = [192, 8], strides = [1, 1]} : vector<192x32xf32> to vector<192x8xf32>
    %cst_66 = arith.constant 0.000000e+00 : f32
    %144 = vector.broadcast %cst_66 : f32 to vector<192x8xf32>
    %145 = arith.cmpf ogt, %143, %144 : vector<192x8xf32>
    %cst_67 = arith.constant 0.00999999977 : f32
    %146 = vector.broadcast %cst_67 : f32 to vector<192x8xf32>
    %147 = arith.mulf %146, %143 : vector<192x8xf32>
    %148 = arith.select %145, %143, %147 : vector<192x8xi1>, vector<192x8xf32>
    %c1_i32_68 = arith.constant 1 : i32
    %149 = tpu.dynamic_rotate %148 by %c1_i32_68 dim 0 : vector<192x8xf32>, i32 -> vector<192x8xf32>
    %c191_i32_69 = arith.constant 191 : i32
    %150 = tpu.dynamic_rotate %148 by %c191_i32_69 dim 0 : vector<192x8xf32>, i32 -> vector<192x8xf32>
    %151 = tpu.concatenate %149, %148, %150 in 1 : vector<192x8xf32>, vector<192x8xf32>, vector<192x8xf32> -> vector<192x24xf32>
    %152 = arith.truncf %151 : vector<192x24xf32> to vector<192x24xbf16>
    %c0_70 = arith.constant 0 : index
    %c0_71 = arith.constant 0 : index
    %153 = vector.load %arg16[%c0_70, %c0_71] : memref<24x8xbf16, #tpu.memory_space<vmem>>, vector<24x8xbf16>
    %cst_72 = arith.constant dense<0.000000e+00> : vector<192x8xf32>
    %154 = tpu.matmul %152, %153, %cst_72 {dimension_numbers = #tpu.dot_dimension_numbers<[1], [0], [0], [1], [0, 0, 1, 1], [], []>} : vector<192x24xbf16>, vector<24x8xbf16>, vector<192x8xf32> -> vector<192x8xf32>
    %c0_73 = arith.constant 0 : index
    %c0_74 = arith.constant 0 : index
    %155 = vector.load %arg17[%c0_73, %c0_74] : memref<1x8xf32, #tpu.memory_space<vmem>>, vector<1x8xf32>
    %156 = vector.broadcast %155 : vector<1x8xf32> to vector<192x8xf32>
    %157 = arith.addf %154, %156 : vector<192x8xf32>
    %158 = vector.extract_strided_slice %142 {offsets = [0, 16], sizes = [192, 8], strides = [1, 1]} : vector<192x32xf32> to vector<192x8xf32>
    %cst_75 = arith.constant 0.000000e+00 : f32
    %159 = vector.broadcast %cst_75 : f32 to vector<192x8xf32>
    %160 = arith.cmpf ogt, %158, %159 : vector<192x8xf32>
    %cst_76 = arith.constant 0.00999999977 : f32
    %161 = vector.broadcast %cst_76 : f32 to vector<192x8xf32>
    %162 = arith.mulf %161, %158 : vector<192x8xf32>
    %163 = arith.select %160, %158, %162 : vector<192x8xi1>, vector<192x8xf32>
    %c2_i32_77 = arith.constant 2 : i32
    %164 = tpu.dynamic_rotate %163 by %c2_i32_77 dim 0 : vector<192x8xf32>, i32 -> vector<192x8xf32>
    %c1_i32_78 = arith.constant 1 : i32
    %165 = tpu.dynamic_rotate %163 by %c1_i32_78 dim 0 : vector<192x8xf32>, i32 -> vector<192x8xf32>
    %c191_i32_79 = arith.constant 191 : i32
    %166 = tpu.dynamic_rotate %163 by %c191_i32_79 dim 0 : vector<192x8xf32>, i32 -> vector<192x8xf32>
    %c190_i32_80 = arith.constant 190 : i32
    %167 = tpu.dynamic_rotate %163 by %c190_i32_80 dim 0 : vector<192x8xf32>, i32 -> vector<192x8xf32>
    %168 = tpu.concatenate %164, %165, %163, %166, %167 in 1 : vector<192x8xf32>, vector<192x8xf32>, vector<192x8xf32>, vector<192x8xf32>, vector<192x8xf32> -> vector<192x40xf32>
    %169 = arith.truncf %168 : vector<192x40xf32> to vector<192x40xbf16>
    %c0_81 = arith.constant 0 : index
    %c0_82 = arith.constant 0 : index
    %170 = vector.load %arg18[%c0_81, %c0_82] : memref<40x8xbf16, #tpu.memory_space<vmem>>, vector<40x8xbf16>
    %cst_83 = arith.constant dense<0.000000e+00> : vector<192x8xf32>
    %171 = tpu.matmul %169, %170, %cst_83 {dimension_numbers = #tpu.dot_dimension_numbers<[1], [0], [0], [1], [0, 0, 1, 1], [], []>} : vector<192x40xbf16>, vector<40x8xbf16>, vector<192x8xf32> -> vector<192x8xf32>
    %c0_84 = arith.constant 0 : index
    %c0_85 = arith.constant 0 : index
    %172 = vector.load %arg19[%c0_84, %c0_85] : memref<1x8xf32, #tpu.memory_space<vmem>>, vector<1x8xf32>
    %173 = vector.broadcast %172 : vector<1x8xf32> to vector<192x8xf32>
    %174 = arith.addf %171, %173 : vector<192x8xf32>
    %175 = vector.extract_strided_slice %142 {offsets = [0, 0], sizes = [192, 8], strides = [1, 1]} : vector<192x32xf32> to vector<192x8xf32>
    %176 = vector.extract_strided_slice %142 {offsets = [0, 24], sizes = [192, 8], strides = [1, 1]} : vector<192x32xf32> to vector<192x8xf32>
    %177 = tpu.concatenate %175, %157, %174, %176 in 1 : vector<192x8xf32>, vector<192x8xf32>, vector<192x8xf32>, vector<192x8xf32> -> vector<192x32xf32>
    %cst_86 = arith.constant 0.000000e+00 : f32
    %178 = vector.broadcast %cst_86 : f32 to vector<192x32xf32>
    %179 = arith.cmpf ogt, %177, %178 : vector<192x32xf32>
    %cst_87 = arith.constant 0.00999999977 : f32
    %180 = vector.broadcast %cst_87 : f32 to vector<192x32xf32>
    %181 = arith.mulf %180, %177 : vector<192x32xf32>
    %182 = arith.select %179, %177, %181 : vector<192x32xi1>, vector<192x32xf32>
    %cst_88 = arith.constant -3.000000e+38 : f32
    %183 = vector.shape_cast %21 : vector<192x1xi1> to vector<192x1xi1>
    %184 = vector.broadcast %183 : vector<192x1xi1> to vector<192x32xi1>
    %185 = vector.broadcast %cst_88 : f32 to vector<192x32xf32>
    %186 = arith.select %184, %182, %185 : vector<192x32xi1>, vector<192x32xf32>
    %187 = vector.shape_cast %186 : vector<192x32xf32> to vector<8x24x32xf32>
    %cst_89 = arith.constant dense<0xFF800000> : vector<8x32xf32>
    %188 = vector.multi_reduction <maximumf>, %187, %cst_89 [1] : vector<8x24x32xf32> to vector<8x32xf32>
    %c0_90 = arith.constant 0 : index
    %c0_91 = arith.constant 0 : index
    %189 = vector.load %arg20[%c0_90, %c0_91] : memref<8x32xf32, #tpu.memory_space<vmem>>, vector<8x32xf32>
    tpu.vector_store %arg20[%c0_90, %c0_91], %188 {strides = array<i32>} : memref<8x32xf32, #tpu.memory_space<vmem>>, vector<8x32xf32>,
    return
  }
  func.func @transform_0(%arg0: i32) -> (i32, i32) {
    %c0_i32 = arith.constant 0 : i32
    %c0_i32_0 = arith.constant 0 : i32
    return %arg0, %c0_i32 : i32, i32
  }
  func.func @transform_1(%arg0: i32) -> (i32, i32) {
    %c0_i32 = arith.constant 0 : i32
    %c0_i32_0 = arith.constant 0 : i32
    %c0_i32_1 = arith.constant 0 : i32
    return %c0_i32, %c0_i32_0 : i32, i32
  }
  func.func @transform_2(%arg0: i32) -> (i32, i32) {
    %c0_i32 = arith.constant 0 : i32
    %c0_i32_0 = arith.constant 0 : i32
    %c0_i32_1 = arith.constant 0 : i32
    return %c0_i32, %c0_i32_0 : i32, i32
  }
  func.func @transform_3(%arg0: i32) -> (i32, i32) {
    %c0_i32 = arith.constant 0 : i32
    %c0_i32_0 = arith.constant 0 : i32
    %c0_i32_1 = arith.constant 0 : i32
    return %c0_i32, %c0_i32_0 : i32, i32
  }
  func.func @transform_4(%arg0: i32) -> (i32, i32) {
    %c0_i32 = arith.constant 0 : i32
    %c0_i32_0 = arith.constant 0 : i32
    %c0_i32_1 = arith.constant 0 : i32
    return %c0_i32, %c0_i32_0 : i32, i32
  }
  func.func @transform_5(%arg0: i32) -> (i32, i32) {
    %c0_i32 = arith.constant 0 : i32
    %c0_i32_0 = arith.constant 0 : i32
    %c0_i32_1 = arith.constant 0 : i32
    return %c0_i32, %c0_i32_0 : i32, i32
  }
  func.func @transform_6(%arg0: i32) -> (i32, i32) {
    %c0_i32 = arith.constant 0 : i32
    %c0_i32_0 = arith.constant 0 : i32
    %c0_i32_1 = arith.constant 0 : i32
    return %c0_i32, %c0_i32_0 : i32, i32
  }
  func.func @transform_7(%arg0: i32) -> (i32, i32) {
    %c0_i32 = arith.constant 0 : i32
    %c0_i32_0 = arith.constant 0 : i32
    %c0_i32_1 = arith.constant 0 : i32
    return %c0_i32, %c0_i32_0 : i32, i32
  }
  func.func @transform_8(%arg0: i32) -> (i32, i32) {
    %c0_i32 = arith.constant 0 : i32
    %c0_i32_0 = arith.constant 0 : i32
    %c0_i32_1 = arith.constant 0 : i32
    return %c0_i32, %c0_i32_0 : i32, i32
  }
  func.func @transform_9(%arg0: i32) -> (i32, i32) {
    %c0_i32 = arith.constant 0 : i32
    %c0_i32_0 = arith.constant 0 : i32
    %c0_i32_1 = arith.constant 0 : i32
    return %c0_i32, %c0_i32_0 : i32, i32
  }
  func.func @transform_10(%arg0: i32) -> (i32, i32) {
    %c0_i32 = arith.constant 0 : i32
    %c0_i32_0 = arith.constant 0 : i32
    %c0_i32_1 = arith.constant 0 : i32
    return %c0_i32, %c0_i32_0 : i32, i32
  }
  func.func @transform_11(%arg0: i32) -> (i32, i32) {
    %c0_i32 = arith.constant 0 : i32
    %c0_i32_0 = arith.constant 0 : i32
    %c0_i32_1 = arith.constant 0 : i32
    return %c0_i32, %c0_i32_0 : i32, i32
  }
  func.func @transform_12(%arg0: i32) -> (i32, i32) {
    %c0_i32 = arith.constant 0 : i32
    %c0_i32_0 = arith.constant 0 : i32
    %c0_i32_1 = arith.constant 0 : i32
    return %c0_i32, %c0_i32_0 : i32, i32
  }
  func.func @transform_13(%arg0: i32) -> (i32, i32) {
    %c0_i32 = arith.constant 0 : i32
    %c0_i32_0 = arith.constant 0 : i32
    %c0_i32_1 = arith.constant 0 : i32
    return %c0_i32, %c0_i32_0 : i32, i32
  }
  func.func @transform_14(%arg0: i32) -> (i32, i32) {
    %c0_i32 = arith.constant 0 : i32
    %c0_i32_0 = arith.constant 0 : i32
    %c0_i32_1 = arith.constant 0 : i32
    return %c0_i32, %c0_i32_0 : i32, i32
  }
  func.func @transform_15(%arg0: i32) -> (i32, i32) {
    %c0_i32 = arith.constant 0 : i32
    %c0_i32_0 = arith.constant 0 : i32
    %c0_i32_1 = arith.constant 0 : i32
    return %c0_i32, %c0_i32_0 : i32, i32
  }
  func.func @transform_16(%arg0: i32) -> (i32, i32) {
    %c0_i32 = arith.constant 0 : i32
    %c0_i32_0 = arith.constant 0 : i32
    %c0_i32_1 = arith.constant 0 : i32
    return %c0_i32, %c0_i32_0 : i32, i32
  }
  func.func @transform_17(%arg0: i32) -> (i32, i32) {
    %c0_i32 = arith.constant 0 : i32
    %c0_i32_0 = arith.constant 0 : i32
    %c0_i32_1 = arith.constant 0 : i32
    return %c0_i32, %c0_i32_0 : i32, i32
  }
  func.func @transform_18(%arg0: i32) -> (i32, i32) {
    %c0_i32 = arith.constant 0 : i32
    %c0_i32_0 = arith.constant 0 : i32
    %c0_i32_1 = arith.constant 0 : i32
    return %c0_i32, %c0_i32_0 : i32, i32
  }
  func.func @transform_19(%arg0: i32) -> (i32, i32) {
    %c0_i32 = arith.constant 0 : i32
    %c0_i32_0 = arith.constant 0 : i32
    return %arg0, %c0_i32 : i32, i32
  }
}

</mosaic_0001>

<llo_original>
// kernel: tpu_custom_call.1
$region0: #{tpu_custom_call.1}
  #allocation0 [shape = 'u32[]', space=smem, size = 0x4, offset = 0x4, fixed_abs, tag = 'smem constant byte address 0x4 - core index']
  #allocation1 [shape = 'u32[72,128]{1,0:T(1,128)}', space=vmem, size = 0x9000, scoped, tag = 'internal scratch']
  %s0 = inlined_call_operand.vmem [shape: bf16[192,16], index: 0, kind: input, shape index: {}]
  %s1 = inlined_call_operand.vmem [shape: bf16[48,32], index: 1, kind: input, shape index: {}]
  %s2 = inlined_call_operand.vmem [shape: f32[1,32], index: 2, kind: input, shape index: {}]
  %s3 = inlined_call_operand.vmem [shape: bf16[24,8], index: 3, kind: input, shape index: {}]
  %s4 = inlined_call_operand.vmem [shape: f32[1,8], index: 4, kind: input, shape index: {}]
  %s5 = inlined_call_operand.vmem [shape: bf16[40,8], index: 5, kind: input, shape index: {}]
  %s6 = inlined_call_operand.vmem [shape: f32[1,8], index: 6, kind: input, shape index: {}]
  %s7 = inlined_call_operand.vmem [shape: bf16[96,32], index: 7, kind: input, shape index: {}]
  %s8 = inlined_call_operand.vmem [shape: f32[1,32], index: 8, kind: input, shape index: {}]
  %s9 = inlined_call_operand.vmem [shape: bf16[24,8], index: 9, kind: input, shape index: {}]
  %s10 = inlined_call_operand.vmem [shape: f32[1,8], index: 10, kind: input, shape index: {}]
  %s11 = inlined_call_operand.vmem [shape: bf16[40,8], index: 11, kind: input, shape index: {}]
  %s12 = inlined_call_operand.vmem [shape: f32[1,8], index: 12, kind: input, shape index: {}]
  %s13 = inlined_call_operand.vmem [shape: bf16[96,32], index: 13, kind: input, shape index: {}]
  %s14 = inlined_call_operand.vmem [shape: f32[1,32], index: 14, kind: input, shape index: {}]
  %s15 = inlined_call_operand.vmem [shape: bf16[24,8], index: 15, kind: input, shape index: {}]
  %s16 = inlined_call_operand.vmem [shape: f32[1,8], index: 16, kind: input, shape index: {}]
  %s17 = inlined_call_operand.vmem [shape: bf16[40,8], index: 17, kind: input, shape index: {}]
  %s18 = inlined_call_operand.vmem [shape: f32[1,8], index: 18, kind: input, shape index: {}]
  %s19 = inlined_call_operand.hbm [shape: f32[8,32], index: 19, kind: output, shape index: {}]
  %s20 = sld [smem:[#allocation0]]
  $region86: #{tpu_custom_call.1} parent=0
    _
  %s22 = ssub.s32 1, %s20
  %s23 = scalar_select 0, %s22, %s20
  $region1: #{tpu_custom_call.1} parent=0
    #allocation2 [shape = 'u8[4096]{0}', space=vmem, size = 0x1000, scoped, tag = 'output window, operand 0, single buffered']
    #allocation3 [shape = 's32[1]{0}', space=sflag, size = 0x4, scoped, tag = 'scoped memory for tpu_custom_call.1']
    %24 = vsyncpa [#allocation3], 0
    // Predicated region
    $region2: #{tpu_custom_call.1} parent=1 // pred_check
      _
    $region3: #{tpu_custom_call.1} parent=1 // pred_check_branch
      %26 = sbr.rel (0) target = $region5
    $region4: #{tpu_custom_call.1} parent=1 // pred_region
      _
    $region5: #{tpu_custom_call.1} parent=1 // pred_fallthru
      _
    // Predicated region
    $region6: #{tpu_custom_call.1} parent=1 // pred_check
      _
    $region7: #{tpu_custom_call.1} parent=1 // pred_check_branch
      %28 = sbr.rel (0) target = $region9
    $region8: #{tpu_custom_call.1} parent=1 // pred_region
      _
    $region9: #{tpu_custom_call.1} parent=1 // pred_fallthru
      _
    // Predicated region
    $region10: #{tpu_custom_call.1} parent=1 // pred_check
      _
    $region11: #{tpu_custom_call.1} parent=1 // pred_check_branch
      %30 = sbr.rel (0) target = $region13
    $region12: #{tpu_custom_call.1} parent=1 // pred_region
      _
    $region13: #{tpu_custom_call.1} parent=1 // pred_fallthru
      _
    // Predicated region
    $region14: #{tpu_custom_call.1} parent=1 // pred_check
      _
    $region15: #{tpu_custom_call.1} parent=1 // pred_check_branch
      %32 = sbr.rel (0) target = $region17
    $region16: #{tpu_custom_call.1} parent=1 // pred_region
      _
    $region17: #{tpu_custom_call.1} parent=1 // pred_fallthru
      _
    // Predicated region
    $region18: #{tpu_custom_call.1} parent=1 // pred_check
      _
    $region19: #{tpu_custom_call.1} parent=1 // pred_check_branch
      %34 = sbr.rel (0) target = $region21
    $region20: #{tpu_custom_call.1} parent=1 // pred_region
      _
    $region21: #{tpu_custom_call.1} parent=1 // pred_fallthru
      _
    // Predicated region
    $region22: #{tpu_custom_call.1} parent=1 // pred_check
      _
    $region23: #{tpu_custom_call.1} parent=1 // pred_check_branch
      %36 = sbr.rel (0) target = $region25
    $region24: #{tpu_custom_call.1} parent=1 // pred_region
      _
    $region25: #{tpu_custom_call.1} parent=1 // pred_fallthru
      _
    // Predicated region
    $region26: #{tpu_custom_call.1} parent=1 // pred_check
      _
    $region27: #{tpu_custom_call.1} parent=1 // pred_check_branch
      %38 = sbr.rel (0) target = $region29
    $region28: #{tpu_custom_call.1} parent=1 // pred_region
      _
    $region29: #{tpu_custom_call.1} parent=1 // pred_fallthru
      _
    // Predicated region
    $region30: #{tpu_custom_call.1} parent=1 // pred_check
      _
    $region31: #{tpu_custom_call.1} parent=1 // pred_check_branch
      %40 = sbr.rel (0) target = $region33
    $region32: #{tpu_custom_call.1} parent=1 // pred_region
      _
    $region33: #{tpu_custom_call.1} parent=1 // pred_fallthru
      _
    // Predicated region
    $region34: #{tpu_custom_call.1} parent=1 // pred_check
      _
    $region35: #{tpu_custom_call.1} parent=1 // pred_check_branch
      %42 = sbr.rel (0) target = $region37
    $region36: #{tpu_custom_call.1} parent=1 // pred_region
      _
    $region37: #{tpu_custom_call.1} parent=1 // pred_fallthru
      _
    // Predicated region
    $region38: #{tpu_custom_call.1} parent=1 // pred_check
      _
    $region39: #{tpu_custom_call.1} parent=1 // pred_check_branch
      %44 = sbr.rel (0) target = $region41
    $region40: #{tpu_custom_call.1} parent=1 // pred_region
      _
    $region41: #{tpu_custom_call.1} parent=1 // pred_fallthru
      _
    // Predicated region
    $region42: #{tpu_custom_call.1} parent=1 // pred_check
      _
    $region43: #{tpu_custom_call.1} parent=1 // pred_check_branch
      %46 = sbr.rel (0) target = $region45
    $region44: #{tpu_custom_call.1} parent=1 // pred_region
      _
    $region45: #{tpu_custom_call.1} parent=1 // pred_fallthru
      _
    // Predicated region
    $region46: #{tpu_custom_call.1} parent=1 // pred_check
      _
    $region47: #{tpu_custom_call.1} parent=1 // pred_check_branch
      %48 = sbr.rel (0) target = $region49
    $region48: #{tpu_custom_call.1} parent=1 // pred_region
      _
    $region49: #{tpu_custom_call.1} parent=1 // pred_fallthru
      _
    // Predicated region
    $region50: #{tpu_custom_call.1} parent=1 // pred_check
      _
    $region51: #{tpu_custom_call.1} parent=1 // pred_check_branch
      %50 = sbr.rel (0) target = $region53
    $region52: #{tpu_custom_call.1} parent=1 // pred_region
      _
    $region53: #{tpu_custom_call.1} parent=1 // pred_fallthru
      _
    // Predicated region
    $region54: #{tpu_custom_call.1} parent=1 // pred_check
      _
    $region55: #{tpu_custom_call.1} parent=1 // pred_check_branch
      %52 = sbr.rel (0) target = $region57
    $region56: #{tpu_custom_call.1} parent=1 // pred_region
      _
    $region57: #{tpu_custom_call.1} parent=1 // pred_fallthru
      _
    // Predicated region
    $region58: #{tpu_custom_call.1} parent=1 // pred_check
      _
    $region59: #{tpu_custom_call.1} parent=1 // pred_check_branch
      %54 = sbr.rel (0) target = $region61
    $region60: #{tpu_custom_call.1} parent=1 // pred_region
      _
    $region61: #{tpu_custom_call.1} parent=1 // pred_fallthru
      _
    // Predicated region
    $region62: #{tpu_custom_call.1} parent=1 // pred_check
      _
    $region63: #{tpu_custom_call.1} parent=1 // pred_check_branch
      %56 = sbr.rel (0) target = $region65
    $region64: #{tpu_custom_call.1} parent=1 // pred_region
      _
    $region65: #{tpu_custom_call.1} parent=1 // pred_fallthru
      _
    // Predicated region
    $region66: #{tpu_custom_call.1} parent=1 // pred_check
      _
    $region67: #{tpu_custom_call.1} parent=1 // pred_check_branch
      %58 = sbr.rel (0) target = $region69
    $region68: #{tpu_custom_call.1} parent=1 // pred_region
      _
    $region69: #{tpu_custom_call.1} parent=1 // pred_fallthru
      _
    // Predicated region
    $region70: #{tpu_custom_call.1} parent=1 // pred_check
      _
    $region71: #{tpu_custom_call.1} parent=1 // pred_check_branch
      %60 = sbr.rel (0) target = $region73
    $region72: #{tpu_custom_call.1} parent=1 // pred_region
      _
    $region73: #{tpu_custom_call.1} parent=1 // pred_fallthru
      _
    // Predicated region
    $region74: #{tpu_custom_call.1} parent=1 // pred_check
      _
    $region75: #{tpu_custom_call.1} parent=1 // pred_check_branch
      %62 = sbr.rel (0) target = $region77
    $region76: #{tpu_custom_call.1} parent=1 // pred_region
      _
    $region77: #{tpu_custom_call.1} parent=1 // pred_fallthru
      _
    %v64 = vlaneseq
    %v65 = vshrl.u32 %v64, 7
    %v66 = vadd.s32 %v65, 8
    %v67 = vadd.s32 %v65, 16
    %v68 = vadd.s32 %v65, 24
    %v69 = vadd.s32 %v65, 32
    %v70 = vadd.s32 %v65, 40
    %v71 = vadd.s32 %v65, 48
    %v72 = vadd.s32 %v65, 56
    %v73 = vadd.s32 %v65, 64
    %v74 = vadd.s32 %v65, 72
    %v75 = vadd.s32 %v65, 80
    %v76 = vadd.s32 %v65, 88
    %v77 = vadd.s32 %v65, 96
    %v78 = vadd.s32 %v65, 104
    %v79 = vadd.s32 %v65, 112
    %v80 = vadd.s32 %v65, 120
    %v81 = vadd.s32 %v65, 128
    %v82 = vadd.s32 %v65, 136
    %v83 = vadd.s32 %v65, 144
    %v84 = vadd.s32 %v65, 152
    %v85 = vadd.s32 %v65, 160
    %v86 = vadd.s32 %v65, 168
    %v87 = vadd.s32 %v65, 176
    %v88 = vadd.s32 %v65, 184
    %vm89 = vcmp.lt.s32.totalorder %v65, 0
    %v90 = vsub.s32 0, %v65
    %v91 = vsel %vm89, %v90, %v65
    %v92 = vand.u32 %v91, 65535
    %v93 = vshrl.u32 %v91, 16
    %v95 = vmul.u32 %v92, 43691
    %v96 = vmul.u32 %v92, 43690
    %v97 = vmul.u32 %v93, 43691
    %v98 = vmul.u32 %v93, 43690
    %v99 = vshll.u32 %v96, 16
    %v100 = vshrl.u32 %v96, 16
    %v101 = vshll.u32 %v97, 16
    %v102 = vshrl.u32 %v97, 16
    %vm103 = vc.u32 %v95, %v99
    %v104 = vsel %vm103, 1, 0
    %v105 = vadd.s32 %v95, %v99
    %v106 = vadd.s32 %v98, %v104
    %vm107 = vc.u32 %v105, %v101
    %v108 = vsel %vm107, 1, 0
    %v109 = vadd.s32 %v105, %v101
    %v110 = vadd.s32 %v106, %v108
    %v111 = vadd.s32 %v110, %v100
    %v112 = vadd.s32 %v111, %v102
    %v113 = vshrl.u32 %v112, 4
    %v114 = vmul.u32 %v113, 24
    %v115 = vsub.s32 %v91, %v114
    %v116 = vsub.s32 0, %v115
    %v117 = vsel %vm89, %v116, %v115
    %vm118 = vcmp.lt.s32.totalorder %v66, 0
    %v119 = vsub.s32 0, %v66
    %v120 = vsel %vm118, %v119, %v66
    %v121 = vand.u32 %v120, 65535
    %v122 = vshrl.u32 %v120, 16
    %v124 = vmul.u32 %v121, 43691
    %v125 = vmul.u32 %v121, 43690
    %v126 = vmul.u32 %v122, 43691
    %v127 = vmul.u32 %v122, 43690
    %v128 = vshll.u32 %v125, 16
    %v129 = vshrl.u32 %v125, 16
    %v130 = vshll.u32 %v126, 16
    %v131 = vshrl.u32 %v126, 16
    %vm132 = vc.u32 %v124, %v128
    %v133 = vsel %vm132, 1, 0
    %v134 = vadd.s32 %v124, %v128
    %v135 = vadd.s32 %v127, %v133
    %vm136 = vc.u32 %v134, %v130
    %v137 = vsel %vm136, 1, 0
    %v138 = vadd.s32 %v134, %v130
    %v139 = vadd.s32 %v135, %v137
    %v140 = vadd.s32 %v139, %v129
    %v141 = vadd.s32 %v140, %v131
    %v142 = vshrl.u32 %v141, 4
    %v143 = vmul.u32 %v142, 24
    %v144 = vsub.s32 %v120, %v143
    %v145 = vsub.s32 0, %v144
    %v146 = vsel %vm118, %v145, %v144
    %vm147 = vcmp.lt.s32.totalorder %v67, 0
    %v148 = vsub.s32 0, %v67
    %v149 = vsel %vm147, %v148, %v67
    %v150 = vand.u32 %v149, 65535
    %v151 = vshrl.u32 %v149, 16
    %v153 = vmul.u32 %v150, 43691
    %v154 = vmul.u32 %v150, 43690
    %v155 = vmul.u32 %v151, 43691
    %v156 = vmul.u32 %v151, 43690
    %v157 = vshll.u32 %v154, 16
    %v158 = vshrl.u32 %v154, 16
    %v159 = vshll.u32 %v155, 16
    %v160 = vshrl.u32 %v155, 16
    %vm161 = vc.u32 %v153, %v157
    %v162 = vsel %vm161, 1, 0
    %v163 = vadd.s32 %v153, %v157
    %v164 = vadd.s32 %v156, %v162
    %vm165 = vc.u32 %v163, %v159
    %v166 = vsel %vm165, 1, 0
    %v167 = vadd.s32 %v163, %v159
    %v168 = vadd.s32 %v164, %v166
    %v169 = vadd.s32 %v168, %v158
    %v170 = vadd.s32 %v169, %v160
    %v171 = vshrl.u32 %v170, 4
    %v172 = vmul.u32 %v171, 24
    %v173 = vsub.s32 %v149, %v172
    %v174 = vsub.s32 0, %v173
    %v175 = vsel %vm147, %v174, %v173
    %vm176 = vcmp.lt.s32.totalorder %v68, 0
    %v177 = vsub.s32 0, %v68
    %v178 = vsel %vm176, %v177, %v68
    %v179 = vand.u32 %v178, 65535
    %v180 = vshrl.u32 %v178, 16
    %v182 = vmul.u32 %v179, 43691
    %v183 = vmul.u32 %v179, 43690
    %v184 = vmul.u32 %v180, 43691
    %v185 = vmul.u32 %v180, 43690
    %v186 = vshll.u32 %v183, 16
    %v187 = vshrl.u32 %v183, 16
    %v188 = vshll.u32 %v184, 16
    %v189 = vshrl.u32 %v184, 16
    %vm190 = vc.u32 %v182, %v186
    %v191 = vsel %vm190, 1, 0
    %v192 = vadd.s32 %v182, %v186
    %v193 = vadd.s32 %v185, %v191
    %vm194 = vc.u32 %v192, %v188
    %v195 = vsel %vm194, 1, 0
    %v196 = vadd.s32 %v192, %v188
    %v197 = vadd.s32 %v193, %v195
    %v198 = vadd.s32 %v197, %v187
    %v199 = vadd.s32 %v198, %v189
    %v200 = vshrl.u32 %v199, 4
    %v201 = vmul.u32 %v200, 24
    %v202 = vsub.s32 %v178, %v201
    %v203 = vsub.s32 0, %v202
    %v204 = vsel %vm176, %v203, %v202
    %vm205 = vcmp.lt.s32.totalorder %v69, 0
    %v206 = vsub.s32 0, %v69
    %v207 = vsel %vm205, %v206, %v69
    %v208 = vand.u32 %v207, 65535
    %v209 = vshrl.u32 %v207, 16
    %v211 = vmul.u32 %v208, 43691
    %v212 = vmul.u32 %v208, 43690
    %v213 = vmul.u32 %v209, 43691
    %v214 = vmul.u32 %v209, 43690
    %v215 = vshll.u32 %v212, 16
    %v216 = vshrl.u32 %v212, 16
    %v217 = vshll.u32 %v213, 16
    %v218 = vshrl.u32 %v213, 16
    %vm219 = vc.u32 %v211, %v215
    %v220 = vsel %vm219, 1, 0
    %v221 = vadd.s32 %v211, %v215
    %v222 = vadd.s32 %v214, %v220
    %vm223 = vc.u32 %v221, %v217
    %v224 = vsel %vm223, 1, 0
    %v225 = vadd.s32 %v221, %v217
    %v226 = vadd.s32 %v222, %v224
    %v227 = vadd.s32 %v226, %v216
    %v228 = vadd.s32 %v227, %v218
    %v229 = vshrl.u32 %v228, 4
    %v230 = vmul.u32 %v229, 24
    %v231 = vsub.s32 %v207, %v230
    %v232 = vsub.s32 0, %v231
    %v233 = vsel %vm205, %v232, %v231
    %vm234 = vcmp.lt.s32.totalorder %v70, 0
    %v235 = vsub.s32 0, %v70
    %v236 = vsel %vm234, %v235, %v70
    %v237 = vand.u32 %v236, 65535
    %v238 = vshrl.u32 %v236, 16
    %v240 = vmul.u32 %v237, 43691
    %v241 = vmul.u32 %v237, 43690
    %v242 = vmul.u32 %v238, 43691
    %v243 = vmul.u32 %v238, 43690
    %v244 = vshll.u32 %v241, 16
    %v245 = vshrl.u32 %v241, 16
    %v246 = vshll.u32 %v242, 16
    %v247 = vshrl.u32 %v242, 16
    %vm248 = vc.u32 %v240, %v244
    %v249 = vsel %vm248, 1, 0
    %v250 = vadd.s32 %v240, %v244
    %v251 = vadd.s32 %v243, %v249
    %vm252 = vc.u32 %v250, %v246
    %v253 = vsel %vm252, 1, 0
    %v254 = vadd.s32 %v250, %v246
    %v255 = vadd.s32 %v251, %v253
    %v256 = vadd.s32 %v255, %v245
    %v257 = vadd.s32 %v256, %v247
    %v258 = vshrl.u32 %v257, 4
    %v259 = vmul.u32 %v258, 24
    %v260 = vsub.s32 %v236, %v259
    %v261 = vsub.s32 0, %v260
    %v262 = vsel %vm234, %v261, %v260
    %vm263 = vcmp.lt.s32.totalorder %v71, 0
    %v264 = vsub.s32 0, %v71
    %v265 = vsel %vm263, %v264, %v71
    %v266 = vand.u32 %v265, 65535
    %v267 = vshrl.u32 %v265, 16
    %v269 = vmul.u32 %v266, 43691
    %v270 = vmul.u32 %v266, 43690
    %v271 = vmul.u32 %v267, 43691
    %v272 = vmul.u32 %v267, 43690
    %v273 = vshll.u32 %v270, 16
    %v274 = vshrl.u32 %v270, 16
    %v275 = vshll.u32 %v271, 16
    %v276 = vshrl.u32 %v271, 16
    %vm277 = vc.u32 %v269, %v273
    %v278 = vsel %vm277, 1, 0
    %v279 = vadd.s32 %v269, %v273
    %v280 = vadd.s32 %v272, %v278
    %vm281 = vc.u32 %v279, %v275
    %v282 = vsel %vm281, 1, 0
    %v283 = vadd.s32 %v279, %v275
    %v284 = vadd.s32 %v280, %v282
    %v285 = vadd.s32 %v284, %v274
    %v286 = vadd.s32 %v285, %v276
    %v287 = vshrl.u32 %v286, 4
    %v288 = vmul.u32 %v287, 24
    %v289 = vsub.s32 %v265, %v288
    %v290 = vsub.s32 0, %v289
    %v291 = vsel %vm263, %v290, %v289
    %vm292 = vcmp.lt.s32.totalorder %v72, 0
    %v293 = vsub.s32 0, %v72
    %v294 = vsel %vm292, %v293, %v72
    %v295 = vand.u32 %v294, 65535
    %v296 = vshrl.u32 %v294, 16
    %v298 = vmul.u32 %v295, 43691
    %v299 = vmul.u32 %v295, 43690
    %v300 = vmul.u32 %v296, 43691
    %v301 = vmul.u32 %v296, 43690
    %v302 = vshll.u32 %v299, 16
    %v303 = vshrl.u32 %v299, 16
    %v304 = vshll.u32 %v300, 16
    %v305 = vshrl.u32 %v300, 16
    %vm306 = vc.u32 %v298, %v302
    %v307 = vsel %vm306, 1, 0
    %v308 = vadd.s32 %v298, %v302
    %v309 = vadd.s32 %v301, %v307
    %vm310 = vc.u32 %v308, %v304
    %v311 = vsel %vm310, 1, 0
    %v312 = vadd.s32 %v308, %v304
    %v313 = vadd.s32 %v309, %v311
    %v314 = vadd.s32 %v313, %v303
    %v315 = vadd.s32 %v314, %v305
    %v316 = vshrl.u32 %v315, 4
    %v317 = vmul.u32 %v316, 24
    %v318 = vsub.s32 %v294, %v317
    %v319 = vsub.s32 0, %v318
    %v320 = vsel %vm292, %v319, %v318
    %vm321 = vcmp.lt.s32.totalorder %v73, 0
    %v322 = vsub.s32 0, %v73
    %v323 = vsel %vm321, %v322, %v73
    %v324 = vand.u32 %v323, 65535
    %v325 = vshrl.u32 %v323, 16
    %v327 = vmul.u32 %v324, 43691
    %v328 = vmul.u32 %v324, 43690
    %v329 = vmul.u32 %v325, 43691
    %v330 = vmul.u32 %v325, 43690
    %v331 = vshll.u32 %v328, 16
    %v332 = vshrl.u32 %v328, 16
    %v333 = vshll.u32 %v329, 16
    %v334 = vshrl.u32 %v329, 16
    %vm335 = vc.u32 %v327, %v331
    %v336 = vsel %vm335, 1, 0
    %v337 = vadd.s32 %v327, %v331
    %v338 = vadd.s32 %v330, %v336
    %vm339 = vc.u32 %v337, %v333
    %v340 = vsel %vm339, 1, 0
    %v341 = vadd.s32 %v337, %v333
    %v342 = vadd.s32 %v338, %v340
    %v343 = vadd.s32 %v342, %v332
    %v344 = vadd.s32 %v343, %v334
    %v345 = vshrl.u32 %v344, 4
    %v346 = vmul.u32 %v345, 24
    %v347 = vsub.s32 %v323, %v346
    %v348 = vsub.s32 0, %v347
    %v349 = vsel %vm321, %v348, %v347
    %vm350 = vcmp.lt.s32.totalorder %v74, 0
    %v351 = vsub.s32 0, %v74
    %v352 = vsel %vm350, %v351, %v74
    %v353 = vand.u32 %v352, 65535
    %v354 = vshrl.u32 %v352, 16
    %v356 = vmul.u32 %v353, 43691
    %v357 = vmul.u32 %v353, 43690
    %v358 = vmul.u32 %v354, 43691
    %v359 = vmul.u32 %v354, 43690
    %v360 = vshll.u32 %v357, 16
    %v361 = vshrl.u32 %v357, 16
    %v362 = vshll.u32 %v358, 16
    %v363 = vshrl.u32 %v358, 16
    %vm364 = vc.u32 %v356, %v360
    %v365 = vsel %vm364, 1, 0
    %v366 = vadd.s32 %v356, %v360
    %v367 = vadd.s32 %v359, %v365
    %vm368 = vc.u32 %v366, %v362
    %v369 = vsel %vm368, 1, 0
    %v370 = vadd.s32 %v366, %v362
    %v371 = vadd.s32 %v367, %v369
    %v372 = vadd.s32 %v371, %v361
    %v373 = vadd.s32 %v372, %v363
    %v374 = vshrl.u32 %v373, 4
    %v375 = vmul.u32 %v374, 24
    %v376 = vsub.s32 %v352, %v375
    %v377 = vsub.s32 0, %v376
    %v378 = vsel %vm350, %v377, %v376
    %vm379 = vcmp.lt.s32.totalorder %v75, 0
    %v380 = vsub.s32 0, %v75
    %v381 = vsel %vm379, %v380, %v75
    %v382 = vand.u32 %v381, 65535
    %v383 = vshrl.u32 %v381, 16
    %v385 = vmul.u32 %v382, 43691
    %v386 = vmul.u32 %v382, 43690
    %v387 = vmul.u32 %v383, 43691
    %v388 = vmul.u32 %v383, 43690
    %v389 = vshll.u32 %v386, 16
    %v390 = vshrl.u32 %v386, 16
    %v391 = vshll.u32 %v387, 16
    %v392 = vshrl.u32 %v387, 16
    %vm393 = vc.u32 %v385, %v389
    %v394 = vsel %vm393, 1, 0
    %v395 = vadd.s32 %v385, %v389
    %v396 = vadd.s32 %v388, %v394
    %vm397 = vc.u32 %v395, %v391
    %v398 = vsel %vm397, 1, 0
    %v399 = vadd.s32 %v395, %v391
    %v400 = vadd.s32 %v396, %v398
    %v401 = vadd.s32 %v400, %v390
    %v402 = vadd.s32 %v401, %v392
    %v403 = vshrl.u32 %v402, 4
    %v404 = vmul.u32 %v403, 24
    %v405 = vsub.s32 %v381, %v404
    %v406 = vsub.s32 0, %v405
    %v407 = vsel %vm379, %v406, %v405
    %vm408 = vcmp.lt.s32.totalorder %v76, 0
    %v409 = vsub.s32 0, %v76
    %v410 = vsel %vm408, %v409, %v76
    %v411 = vand.u32 %v410, 65535
    %v412 = vshrl.u32 %v410, 16
    %v414 = vmul.u32 %v411, 43691
    %v415 = vmul.u32 %v411, 43690
    %v416 = vmul.u32 %v412, 43691
    %v417 = vmul.u32 %v412, 43690
    %v418 = vshll.u32 %v415, 16
    %v419 = vshrl.u32 %v415, 16
    %v420 = vshll.u32 %v416, 16
    %v421 = vshrl.u32 %v416, 16
    %vm422 = vc.u32 %v414, %v418
    %v423 = vsel %vm422, 1, 0
    %v424 = vadd.s32 %v414, %v418
    %v425 = vadd.s32 %v417, %v423
    %vm426 = vc.u32 %v424, %v420
    %v427 = vsel %vm426, 1, 0
    %v428 = vadd.s32 %v424, %v420
    %v429 = vadd.s32 %v425, %v427
    %v430 = vadd.s32 %v429, %v419
    %v431 = vadd.s32 %v430, %v421
    %v432 = vshrl.u32 %v431, 4
    %v433 = vmul.u32 %v432, 24
    %v434 = vsub.s32 %v410, %v433
    %v435 = vsub.s32 0, %v434
    %v436 = vsel %vm408, %v435, %v434
    %vm437 = vcmp.lt.s32.totalorder %v77, 0
    %v438 = vsub.s32 0, %v77
    %v439 = vsel %vm437, %v438, %v77
    %v440 = vand.u32 %v439, 65535
    %v441 = vshrl.u32 %v439, 16
    %v443 = vmul.u32 %v440, 43691
    %v444 = vmul.u32 %v440, 43690
    %v445 = vmul.u32 %v441, 43691
    %v446 = vmul.u32 %v441, 43690
    %v447 = vshll.u32 %v444, 16
    %v448 = vshrl.u32 %v444, 16
    %v449 = vshll.u32 %v445, 16
    %v450 = vshrl.u32 %v445, 16
    %vm451 = vc.u32 %v443, %v447
    %v452 = vsel %vm451, 1, 0
    %v453 = vadd.s32 %v443, %v447
    %v454 = vadd.s32 %v446, %v452
    %vm455 = vc.u32 %v453, %v449
    %v456 = vsel %vm455, 1, 0
    %v457 = vadd.s32 %v453, %v449
    %v458 = vadd.s32 %v454, %v456
    %v459 = vadd.s32 %v458, %v448
    %v460 = vadd.s32 %v459, %v450
    %v461 = vshrl.u32 %v460, 4
    %v462 = vmul.u32 %v461, 24
    %v463 = vsub.s32 %v439, %v462
    %v464 = vsub.s32 0, %v463
    %v465 = vsel %vm437, %v464, %v463
    %vm466 = vcmp.lt.s32.totalorder %v78, 0
    %v467 = vsub.s32 0, %v78
    %v468 = vsel %vm466, %v467, %v78
    %v469 = vand.u32 %v468, 65535
    %v470 = vshrl.u32 %v468, 16
    %v472 = vmul.u32 %v469, 43691
    %v473 = vmul.u32 %v469, 43690
    %v474 = vmul.u32 %v470, 43691
    %v475 = vmul.u32 %v470, 43690
    %v476 = vshll.u32 %v473, 16
    %v477 = vshrl.u32 %v473, 16
    %v478 = vshll.u32 %v474, 16
    %v479 = vshrl.u32 %v474, 16
    %vm480 = vc.u32 %v472, %v476
    %v481 = vsel %vm480, 1, 0
    %v482 = vadd.s32 %v472, %v476
    %v483 = vadd.s32 %v475, %v481
    %vm484 = vc.u32 %v482, %v478
    %v485 = vsel %vm484, 1, 0
    %v486 = vadd.s32 %v482, %v478
    %v487 = vadd.s32 %v483, %v485
    %v488 = vadd.s32 %v487, %v477
    %v489 = vadd.s32 %v488, %v479
    %v490 = vshrl.u32 %v489, 4
    %v491 = vmul.u32 %v490, 24
    %v492 = vsub.s32 %v468, %v491
    %v493 = vsub.s32 0, %v492
    %v494 = vsel %vm466, %v493, %v492
    %vm495 = vcmp.lt.s32.totalorder %v79, 0
    %v496 = vsub.s32 0, %v79
    %v497 = vsel %vm495, %v496, %v79
    %v498 = vand.u32 %v497, 65535
    %v499 = vshrl.u32 %v497, 16
    %v501 = vmul.u32 %v498, 43691
    %v502 = vmul.u32 %v498, 43690
    %v503 = vmul.u32 %v499, 43691
    %v504 = vmul.u32 %v499, 43690
    %v505 = vshll.u32 %v502, 16
    %v506 = vshrl.u32 %v502, 16
    %v507 = vshll.u32 %v503, 16
    %v508 = vshrl.u32 %v503, 16
    %vm509 = vc.u32 %v501, %v505
    %v510 = vsel %vm509, 1, 0
    %v511 = vadd.s32 %v501, %v505
    %v512 = vadd.s32 %v504, %v510
    %vm513 = vc.u32 %v511, %v507
    %v514 = vsel %vm513, 1, 0
    %v515 = vadd.s32 %v511, %v507
    %v516 = vadd.s32 %v512, %v514
    %v517 = vadd.s32 %v516, %v506
    %v518 = vadd.s32 %v517, %v508
    %v519 = vshrl.u32 %v518, 4
    %v520 = vmul.u32 %v519, 24
    %v521 = vsub.s32 %v497, %v520
    %v522 = vsub.s32 0, %v521
    %v523 = vsel %vm495, %v522, %v521
    %vm524 = vcmp.lt.s32.totalorder %v80, 0
    %v525 = vsub.s32 0, %v80
    %v526 = vsel %vm524, %v525, %v80
    %v527 = vand.u32 %v526, 65535
    %v528 = vshrl.u32 %v526, 16
    %v530 = vmul.u32 %v527, 43691
    %v531 = vmul.u32 %v527, 43690
    %v532 = vmul.u32 %v528, 43691
    %v533 = vmul.u32 %v528, 43690
    %v534 = vshll.u32 %v531, 16
    %v535 = vshrl.u32 %v531, 16
    %v536 = vshll.u32 %v532, 16
    %v537 = vshrl.u32 %v532, 16
    %vm538 = vc.u32 %v530, %v534
    %v539 = vsel %vm538, 1, 0
    %v540 = vadd.s32 %v530, %v534
    %v541 = vadd.s32 %v533, %v539
    %vm542 = vc.u32 %v540, %v536
    %v543 = vsel %vm542, 1, 0
    %v544 = vadd.s32 %v540, %v536
    %v545 = vadd.s32 %v541, %v543
    %v546 = vadd.s32 %v545, %v535
    %v547 = vadd.s32 %v546, %v537
    %v548 = vshrl.u32 %v547, 4
    %v549 = vmul.u32 %v548, 24
    %v550 = vsub.s32 %v526, %v549
    %v551 = vsub.s32 0, %v550
    %v552 = vsel %vm524, %v551, %v550
    %vm553 = vcmp.lt.s32.totalorder %v81, 0
    %v554 = vsub.s32 0, %v81
    %v555 = vsel %vm553, %v554, %v81
    %v556 = vand.u32 %v555, 65535
    %v557 = vshrl.u32 %v555, 16
    %v559 = vmul.u32 %v556, 43691
    %v560 = vmul.u32 %v556, 43690
    %v561 = vmul.u32 %v557, 43691
    %v562 = vmul.u32 %v557, 43690
    %v563 = vshll.u32 %v560, 16
    %v564 = vshrl.u32 %v560, 16
    %v565 = vshll.u32 %v561, 16
    %v566 = vshrl.u32 %v561, 16
    %vm567 = vc.u32 %v559, %v563
    %v568 = vsel %vm567, 1, 0
    %v569 = vadd.s32 %v559, %v563
    %v570 = vadd.s32 %v562, %v568
    %vm571 = vc.u32 %v569, %v565
    %v572 = vsel %vm571, 1, 0
    %v573 = vadd.s32 %v569, %v565
    %v574 = vadd.s32 %v570, %v572
    %v575 = vadd.s32 %v574, %v564
    %v576 = vadd.s32 %v575, %v566
    %v577 = vshrl.u32 %v576, 4
    %v578 = vmul.u32 %v577, 24
    %v579 = vsub.s32 %v555, %v578
    %v580 = vsub.s32 0, %v579
    %v581 = vsel %vm553, %v580, %v579
    %vm582 = vcmp.lt.s32.totalorder %v82, 0
    %v583 = vsub.s32 0, %v82
    %v584 = vsel %vm582, %v583, %v82
    %v585 = vand.u32 %v584, 65535
    %v586 = vshrl.u32 %v584, 16
    %v588 = vmul.u32 %v585, 43691
    %v589 = vmul.u32 %v585, 43690
    %v590 = vmul.u32 %v586, 43691
    %v591 = vmul.u32 %v586, 43690
    %v592 = vshll.u32 %v589, 16
    %v593 = vshrl.u32 %v589, 16
    %v594 = vshll.u32 %v590, 16
    %v595 = vshrl.u32 %v590, 16
    %vm596 = vc.u32 %v588, %v592
    %v597 = vsel %vm596, 1, 0
    %v598 = vadd.s32 %v588, %v592
    %v599 = vadd.s32 %v591, %v597
    %vm600 = vc.u32 %v598, %v594
    %v601 = vsel %vm600, 1, 0
    %v602 = vadd.s32 %v598, %v594
    %v603 = vadd.s32 %v599, %v601
    %v604 = vadd.s32 %v603, %v593
    %v605 = vadd.s32 %v604, %v595
    %v606 = vshrl.u32 %v605, 4
    %v607 = vmul.u32 %v606, 24
    %v608 = vsub.s32 %v584, %v607
    %v609 = vsub.s32 0, %v608
    %v610 = vsel %vm582, %v609, %v608
    %vm611 = vcmp.lt.s32.totalorder %v83, 0
    %v612 = vsub.s32 0, %v83
    %v613 = vsel %vm611, %v612, %v83
    %v614 = vand.u32 %v613, 65535
    %v615 = vshrl.u32 %v613, 16
    %v617 = vmul.u32 %v614, 43691
    %v618 = vmul.u32 %v614, 43690
    %v619 = vmul.u32 %v615, 43691
    %v620 = vmul.u32 %v615, 43690
    %v621 = vshll.u32 %v618, 16
    %v622 = vshrl.u32 %v618, 16
    %v623 = vshll.u32 %v619, 16
    %v624 = vshrl.u32 %v619, 16
    %vm625 = vc.u32 %v617, %v621
    %v626 = vsel %vm625, 1, 0
    %v627 = vadd.s32 %v617, %v621
    %v628 = vadd.s32 %v620, %v626
    %vm629 = vc.u32 %v627, %v623
    %v630 = vsel %vm629, 1, 0
    %v631 = vadd.s32 %v627, %v623
    %v632 = vadd.s32 %v628, %v630
    %v633 = vadd.s32 %v632, %v622
    %v634 = vadd.s32 %v633, %v624
    %v635 = vshrl.u32 %v634, 4
    %v636 = vmul.u32 %v635, 24
    %v637 = vsub.s32 %v613, %v636
    %v638 = vsub.s32 0, %v637
    %v639 = vsel %vm611, %v638, %v637
    %vm640 = vcmp.lt.s32.totalorder %v84, 0
    %v641 = vsub.s32 0, %v84
    %v642 = vsel %vm640, %v641, %v84
    %v643 = vand.u32 %v642, 65535
    %v644 = vshrl.u32 %v642, 16
    %v646 = vmul.u32 %v643, 43691
    %v647 = vmul.u32 %v643, 43690
    %v648 = vmul.u32 %v644, 43691
    %v649 = vmul.u32 %v644, 43690
    %v650 = vshll.u32 %v647, 16
    %v651 = vshrl.u32 %v647, 16
    %v652 = vshll.u32 %v648, 16
    %v653 = vshrl.u32 %v648, 16
    %vm654 = vc.u32 %v646, %v650
    %v655 = vsel %vm654, 1, 0
    %v656 = vadd.s32 %v646, %v650
    %v657 = vadd.s32 %v649, %v655
    %vm658 = vc.u32 %v656, %v652
    %v659 = vsel %vm658, 1, 0
    %v660 = vadd.s32 %v656, %v652
    %v661 = vadd.s32 %v657, %v659
    %v662 = vadd.s32 %v661, %v651
    %v663 = vadd.s32 %v662, %v653
    %v664 = vshrl.u32 %v663, 4
    %v665 = vmul.u32 %v664, 24
    %v666 = vsub.s32 %v642, %v665
    %v667 = vsub.s32 0, %v666
    %v668 = vsel %vm640, %v667, %v666
    %vm669 = vcmp.lt.s32.totalorder %v85, 0
    %v670 = vsub.s32 0, %v85
    %v671 = vsel %vm669, %v670, %v85
    %v672 = vand.u32 %v671, 65535
    %v673 = vshrl.u32 %v671, 16
    %v675 = vmul.u32 %v672, 43691
    %v676 = vmul.u32 %v672, 43690
    %v677 = vmul.u32 %v673, 43691
    %v678 = vmul.u32 %v673, 43690
    %v679 = vshll.u32 %v676, 16
    %v680 = vshrl.u32 %v676, 16
    %v681 = vshll.u32 %v677, 16
    %v682 = vshrl.u32 %v677, 16
    %vm683 = vc.u32 %v675, %v679
    %v684 = vsel %vm683, 1, 0
    %v685 = vadd.s32 %v675, %v679
    %v686 = vadd.s32 %v678, %v684
    %vm687 = vc.u32 %v685, %v681
    %v688 = vsel %vm687, 1, 0
    %v689 = vadd.s32 %v685, %v681
    %v690 = vadd.s32 %v686, %v688
    %v691 = vadd.s32 %v690, %v680
    %v692 = vadd.s32 %v691, %v682
    %v693 = vshrl.u32 %v692, 4
    %v694 = vmul.u32 %v693, 24
    %v695 = vsub.s32 %v671, %v694
    %v696 = vsub.s32 0, %v695
    %v697 = vsel %vm669, %v696, %v695
    %vm698 = vcmp.lt.s32.totalorder %v86, 0
    %v699 = vsub.s32 0, %v86
    %v700 = vsel %vm698, %v699, %v86
    %v701 = vand.u32 %v700, 65535
    %v702 = vshrl.u32 %v700, 16
    %v704 = vmul.u32 %v701, 43691
    %v705 = vmul.u32 %v701, 43690
    %v706 = vmul.u32 %v702, 43691
    %v707 = vmul.u32 %v702, 43690
    %v708 = vshll.u32 %v705, 16
    %v709 = vshrl.u32 %v705, 16
    %v710 = vshll.u32 %v706, 16
    %v711 = vshrl.u32 %v706, 16
    %vm712 = vc.u32 %v704, %v708
    %v713 = vsel %vm712, 1, 0
    %v714 = vadd.s32 %v704, %v708
    %v715 = vadd.s32 %v707, %v713
    %vm716 = vc.u32 %v714, %v710
    %v717 = vsel %vm716, 1, 0
    %v718 = vadd.s32 %v714, %v710
    %v719 = vadd.s32 %v715, %v717
    %v720 = vadd.s32 %v719, %v709
    %v721 = vadd.s32 %v720, %v711
    %v722 = vshrl.u32 %v721, 4
    %v723 = vmul.u32 %v722, 24
    %v724 = vsub.s32 %v700, %v723
    %v725 = vsub.s32 0, %v724
    %v726 = vsel %vm698, %v725, %v724
    %vm727 = vcmp.lt.s32.totalorder %v87, 0
    %v728 = vsub.s32 0, %v87
    %v729 = vsel %vm727, %v728, %v87
    %v730 = vand.u32 %v729, 65535
    %v731 = vshrl.u32 %v729, 16
    %v733 = vmul.u32 %v730, 43691
    %v734 = vmul.u32 %v730, 43690
    %v735 = vmul.u32 %v731, 43691
    %v736 = vmul.u32 %v731, 43690
    %v737 = vshll.u32 %v734, 16
    %v738 = vshrl.u32 %v734, 16
    %v739 = vshll.u32 %v735, 16
    %v740 = vshrl.u32 %v735, 16
    %vm741 = vc.u32 %v733, %v737
    %v742 = vsel %vm741, 1, 0
    %v743 = vadd.s32 %v733, %v737
    %v744 = vadd.s32 %v736, %v742
    %vm745 = vc.u32 %v743, %v739
    %v746 = vsel %vm745, 1, 0
    %v747 = vadd.s32 %v743, %v739
    %v748 = vadd.s32 %v744, %v746
    %v749 = vadd.s32 %v748, %v738
    %v750 = vadd.s32 %v749, %v740
    %v751 = vshrl.u32 %v750, 4
    %v752 = vmul.u32 %v751, 24
    %v753 = vsub.s32 %v729, %v752
    %v754 = vsub.s32 0, %v753
    %v755 = vsel %vm727, %v754, %v753
    %vm756 = vcmp.lt.s32.totalorder %v88, 0
    %v757 = vsub.s32 0, %v88
    %v758 = vsel %vm756, %v757, %v88
    %v759 = vand.u32 %v758, 65535
    %v760 = vshrl.u32 %v758, 16
    %v762 = vmul.u32 %v759, 43691
    %v763 = vmul.u32 %v759, 43690
    %v764 = vmul.u32 %v760, 43691
    %v765 = vmul.u32 %v760, 43690
    %v766 = vshll.u32 %v763, 16
    %v767 = vshrl.u32 %v763, 16
    %v768 = vshll.u32 %v764, 16
    %v769 = vshrl.u32 %v764, 16
    %vm770 = vc.u32 %v762, %v766
    %v771 = vsel %vm770, 1, 0
    %v772 = vadd.s32 %v762, %v766
    %v773 = vadd.s32 %v765, %v771
    %vm774 = vc.u32 %v772, %v768
    %v775 = vsel %vm774, 1, 0
    %v776 = vadd.s32 %v772, %v768
    %v777 = vadd.s32 %v773, %v775
    %v778 = vadd.s32 %v777, %v767
    %v779 = vadd.s32 %v778, %v769
    %v780 = vshrl.u32 %v779, 4
    %v781 = vmul.u32 %v780, 24
    %v782 = vsub.s32 %v758, %v781
    %v783 = vsub.s32 0, %v782
    %v784 = vsel %vm756, %v783, %v782
    %vm785 = vcmp.ne.s32.totalorder %v117, 0
    %vm786 = vcmp.ne.s32.totalorder %v146, 0
    %vm787 = vcmp.ne.s32.totalorder %v175, 0
    %vm788 = vcmp.ne.s32.totalorder %v204, 0
    %vm789 = vcmp.ne.s32.totalorder %v233, 0
    %vm790 = vcmp.ne.s32.totalorder %v262, 0
    %vm791 = vcmp.ne.s32.totalorder %v291, 0
    %vm792 = vcmp.ne.s32.totalorder %v320, 0
    %vm793 = vcmp.ne.s32.totalorder %v349, 0
    %vm794 = vcmp.ne.s32.totalorder %v378, 0
    %vm795 = vcmp.ne.s32.totalorder %v407, 0
    %vm796 = vcmp.ne.s32.totalorder %v436, 0
    %vm797 = vcmp.ne.s32.totalorder %v465, 0
    %vm798 = vcmp.ne.s32.totalorder %v494, 0
    %vm799 = vcmp.ne.s32.totalorder %v523, 0
    %vm800 = vcmp.ne.s32.totalorder %v552, 0
    %vm801 = vcmp.ne.s32.totalorder %v581, 0
    %vm802 = vcmp.ne.s32.totalorder %v610, 0
    %vm803 = vcmp.ne.s32.totalorder %v639, 0
    %vm804 = vcmp.ne.s32.totalorder %v668, 0
    %vm805 = vcmp.ne.s32.totalorder %v697, 0
    %vm806 = vcmp.ne.s32.totalorder %v726, 0
    %vm807 = vcmp.ne.s32.totalorder %v755, 0
    %vm808 = vcmp.ne.s32.totalorder %v784, 0
    %vm809 = vcmp.lt.s32.totalorder %v117, 0
    %vm810 = vcmp.lt.s32.totalorder %v146, 0
    %vm811 = vcmp.lt.s32.totalorder %v175, 0
    %vm812 = vcmp.lt.s32.totalorder %v204, 0
    %vm813 = vcmp.lt.s32.totalorder %v233, 0
    %vm814 = vcmp.lt.s32.totalorder %v262, 0
    %vm815 = vcmp.lt.s32.totalorder %v291, 0
    %vm816 = vcmp.lt.s32.totalorder %v320, 0
    %vm817 = vcmp.lt.s32.totalorder %v349, 0
    %vm818 = vcmp.lt.s32.totalorder %v378, 0
    %vm819 = vcmp.lt.s32.totalorder %v407, 0
    %vm820 = vcmp.lt.s32.totalorder %v436, 0
    %vm821 = vcmp.lt.s32.totalorder %v465, 0
    %vm822 = vcmp.lt.s32.totalorder %v494, 0
    %vm823 = vcmp.lt.s32.totalorder %v523, 0
    %vm824 = vcmp.lt.s32.totalorder %v552, 0
    %vm825 = vcmp.lt.s32.totalorder %v581, 0
    %vm826 = vcmp.lt.s32.totalorder %v610, 0
    %vm827 = vcmp.lt.s32.totalorder %v639, 0
    %vm828 = vcmp.lt.s32.totalorder %v668, 0
    %vm829 = vcmp.lt.s32.totalorder %v697, 0
    %vm830 = vcmp.lt.s32.totalorder %v726, 0
    %vm831 = vcmp.lt.s32.totalorder %v755, 0
    %vm832 = vcmp.lt.s32.totalorder %v784, 0
    %vm833 = vmand %vm809, %vm785
    %vm834 = vmand %vm810, %vm786
    %vm835 = vmand %vm811, %vm787
    %vm836 = vmand %vm812, %vm788
    %vm837 = vmand %vm813, %vm789
    %vm838 = vmand %vm814, %vm790
    %vm839 = vmand %vm815, %vm791
    %vm840 = vmand %vm816, %vm792
    %vm841 = vmand %vm817, %vm793
    %vm842 = vmand %vm818, %vm794
    %vm843 = vmand %vm819, %vm795
    %vm844 = vmand %vm820, %vm796
    %vm845 = vmand %vm821, %vm797
    %vm846 = vmand %vm822, %vm798
    %vm847 = vmand %vm823, %vm799
    %vm848 = vmand %vm824, %vm800
    %vm849 = vmand %vm825, %vm801
    %vm850 = vmand %vm826, %vm802
    %vm851 = vmand %vm827, %vm803
    %vm852 = vmand %vm828, %vm804
    %vm853 = vmand %vm829, %vm805
    %vm854 = vmand %vm830, %vm806
    %vm855 = vmand %vm831, %vm807
    %vm856 = vmand %vm832, %vm808
    %v857 = vadd.s32 %v117, 24
    %v858 = vadd.s32 %v146, 24
    %v859 = vadd.s32 %v175, 24
    %v860 = vadd.s32 %v204, 24
    %v861 = vadd.s32 %v233, 24
    %v862 = vadd.s32 %v262, 24
    %v863 = vadd.s32 %v291, 24
    %v864 = vadd.s32 %v320, 24
    %v865 = vadd.s32 %v349, 24
    %v866 = vadd.s32 %v378, 24
    %v867 = vadd.s32 %v407, 24
    %v868 = vadd.s32 %v436, 24
    %v869 = vadd.s32 %v465, 24
    %v870 = vadd.s32 %v494, 24
    %v871 = vadd.s32 %v523, 24
    %v872 = vadd.s32 %v552, 24
    %v873 = vadd.s32 %v581, 24
    %v874 = vadd.s32 %v610, 24
    %v875 = vadd.s32 %v639, 24
    %v876 = vadd.s32 %v668, 24
    %v877 = vadd.s32 %v697, 24
    %v878 = vadd.s32 %v726, 24
    %v879 = vadd.s32 %v755, 24
    %v880 = vadd.s32 %v784, 24
    %v881 = vsel %vm833, %v857, %v117
    %v882 = vsel %vm834, %v858, %v146
    %v883 = vsel %vm835, %v859, %v175
    %v884 = vsel %vm836, %v860, %v204
    %v885 = vsel %vm837, %v861, %v233
    %v886 = vsel %vm838, %v862, %v262
    %v887 = vsel %vm839, %v863, %v291
    %v888 = vsel %vm840, %v864, %v320
    %v889 = vsel %vm841, %v865, %v349
    %v890 = vsel %vm842, %v866, %v378
    %v891 = vsel %vm843, %v867, %v407
    %v892 = vsel %vm844, %v868, %v436
    %v893 = vsel %vm845, %v869, %v465
    %v894 = vsel %vm846, %v870, %v494
    %v895 = vsel %vm847, %v871, %v523
    %v896 = vsel %vm848, %v872, %v552
    %v897 = vsel %vm849, %v873, %v581
    %v898 = vsel %vm850, %v874, %v610
    %v899 = vsel %vm851, %v875, %v639
    %v900 = vsel %vm852, %v876, %v668
    %v901 = vsel %vm853, %v877, %v697
    %v902 = vsel %vm854, %v878, %v726
    %v903 = vsel %vm855, %v879, %v755
    %v904 = vsel %vm856, %v880, %v784
    %vm905 = vcmp.ge.s32.totalorder %v881, 2
    %vm906 = vcmp.ge.s32.totalorder %v882, 2
    %vm907 = vcmp.ge.s32.totalorder %v883, 2
    %vm908 = vcmp.ge.s32.totalorder %v884, 2
    %vm909 = vcmp.ge.s32.totalorder %v885, 2
    %vm910 = vcmp.ge.s32.totalorder %v886, 2
    %vm911 = vcmp.ge.s32.totalorder %v887, 2
    %vm912 = vcmp.ge.s32.totalorder %v888, 2
    %vm913 = vcmp.ge.s32.totalorder %v889, 2
    %vm914 = vcmp.ge.s32.totalorder %v890, 2
    %vm915 = vcmp.ge.s32.totalorder %v891, 2
    %vm916 = vcmp.ge.s32.totalorder %v892, 2
    %vm917 = vcmp.ge.s32.totalorder %v893, 2
    %vm918 = vcmp.ge.s32.totalorder %v894, 2
    %vm919 = vcmp.ge.s32.totalorder %v895, 2
    %vm920 = vcmp.ge.s32.totalorder %v896, 2
    %vm921 = vcmp.ge.s32.totalorder %v897, 2
    %vm922 = vcmp.ge.s32.totalorder %v898, 2
    %vm923 = vcmp.ge.s32.totalorder %v899, 2
    %vm924 = vcmp.ge.s32.totalorder %v900, 2
    %vm925 = vcmp.ge.s32.totalorder %v901, 2
    %vm926 = vcmp.ge.s32.totalorder %v902, 2
    %vm927 = vcmp.ge.s32.totalorder %v903, 2
    %vm928 = vcmp.ge.s32.totalorder %v904, 2
    %vm929 = vcmp.lt.s32.totalorder %v881, 18
    %vm930 = vcmp.lt.s32.totalorder %v882, 18
    %vm931 = vcmp.lt.s32.totalorder %v883, 18
    %vm932 = vcmp.lt.s32.totalorder %v884, 18
    %vm933 = vcmp.lt.s32.totalorder %v885, 18
    %vm934 = vcmp.lt.s32.totalorder %v886, 18
    %vm935 = vcmp.lt.s32.totalorder %v887, 18
    %vm936 = vcmp.lt.s32.totalorder %v888, 18
    %vm937 = vcmp.lt.s32.totalorder %v889, 18
    %vm938 = vcmp.lt.s32.totalorder %v890, 18
    %vm939 = vcmp.lt.s32.totalorder %v891, 18
    %vm940 = vcmp.lt.s32.totalorder %v892, 18
    %vm941 = vcmp.lt.s32.totalorder %v893, 18
    %vm942 = vcmp.lt.s32.totalorder %v894, 18
    %vm943 = vcmp.lt.s32.totalorder %v895, 18
    %vm944 = vcmp.lt.s32.totalorder %v896, 18
    %vm945 = vcmp.lt.s32.totalorder %v897, 18
    %vm946 = vcmp.lt.s32.totalorder %v898, 18
    %vm947 = vcmp.lt.s32.totalorder %v899, 18
    %vm948 = vcmp.lt.s32.totalorder %v900, 18
    %vm949 = vcmp.lt.s32.totalorder %v901, 18
    %vm950 = vcmp.lt.s32.totalorder %v902, 18
    %vm951 = vcmp.lt.s32.totalorder %v903, 18
    %vm952 = vcmp.lt.s32.totalorder %v904, 18
    %vm953 = vmand %vm905, %vm929
    %vm954 = vmand %vm906, %vm930
    %vm955 = vmand %vm907, %vm931
    %vm956 = vmand %vm908, %vm932
    %vm957 = vmand %vm909, %vm933
    %vm958 = vmand %vm910, %vm934
    %vm959 = vmand %vm911, %vm935
    %vm960 = vmand %vm912, %vm936
    %vm961 = vmand %vm913, %vm937
    %vm962 = vmand %vm914, %vm938
    %vm963 = vmand %vm915, %vm939
    %vm964 = vmand %vm916, %vm940
    %vm965 = vmand %vm917, %vm941
    %vm966 = vmand %vm918, %vm942
    %vm967 = vmand %vm919, %vm943
    %vm968 = vmand %vm920, %vm944
    %vm969 = vmand %vm921, %vm945
    %vm970 = vmand %vm922, %vm946
    %vm971 = vmand %vm923, %vm947
    %vm972 = vmand %vm924, %vm948
    %vm973 = vmand %vm925, %vm949
    %vm974 = vmand %vm926, %vm950
    %vm975 = vmand %vm927, %vm951
    %vm976 = vmand %vm928, %vm952
    %v977 = vsel %vm953, 1, 0
    %v978 = vsel %vm954, 1, 0
    %v979 = vsel %vm955, 1, 0
    %v980 = vsel %vm956, 1, 0
    %v981 = vsel %vm957, 1, 0
    %v982 = vsel %vm958, 1, 0
    %v983 = vsel %vm959, 1, 0
    %v984 = vsel %vm960, 1, 0
    %v985 = vsel %vm961, 1, 0
    %v986 = vsel %vm962, 1, 0
    %v987 = vsel %vm963, 1, 0
    %v988 = vsel %vm964, 1, 0
    %v989 = vsel %vm965, 1, 0
    %v990 = vsel %vm966, 1, 0
    %v991 = vsel %vm967, 1, 0
    %v992 = vsel %vm968, 1, 0
    %v993 = vsel %vm969, 1, 0
    %v994 = vsel %vm970, 1, 0
    %v995 = vsel %vm971, 1, 0
    %v996 = vsel %vm972, 1, 0
    %v997 = vsel %vm973, 1, 0
    %v998 = vsel %vm974, 1, 0
    %v999 = vsel %vm975, 1, 0
    %v1000 = vsel %vm976, 1, 0
    %v1001 = vcvt.s32.f32 %v977
    %v1002 = vcvt.s32.f32 %v978
    %v1003 = vcvt.s32.f32 %v979
    %v1004 = vcvt.s32.f32 %v980
    %v1005 = vcvt.s32.f32 %v981
    %v1006 = vcvt.s32.f32 %v982
    %v1007 = vcvt.s32.f32 %v983
    %v1008 = vcvt.s32.f32 %v984
    %v1009 = vcvt.s32.f32 %v985
    %v1010 = vcvt.s32.f32 %v986
    %v1011 = vcvt.s32.f32 %v987
    %v1012 = vcvt.s32.f32 %v988
    %v1013 = vcvt.s32.f32 %v989
    %v1014 = vcvt.s32.f32 %v990
    %v1015 = vcvt.s32.f32 %v991
    %v1016 = vcvt.s32.f32 %v992
    %v1017 = vcvt.s32.f32 %v993
    %v1018 = vcvt.s32.f32 %v994
    %v1019 = vcvt.s32.f32 %v995
    %v1020 = vcvt.s32.f32 %v996
    %v1021 = vcvt.s32.f32 %v997
    %v1022 = vcvt.s32.f32 %v998
    %v1023 = vcvt.s32.f32 %v999
    %v1024 = vcvt.s32.f32 %v1000
    %v1025 = vld [vmem:[%s0] sm:$0xf]
    %v1026 = vld [vmem:[%s0 + $0x4] sm:$0xf]
    %v1027 = vld [vmem:[%s0 + $0x8] sm:$0xf]
    %v1028 = vld [vmem:[%s0 + $0xc] sm:$0xf]
    %v1029 = vld [vmem:[%s0 + $0x10] sm:$0xf]
    %v1030 = vld [vmem:[%s0 + $0x14] sm:$0xf]
    %v1031 = vld [vmem:[%s0 + $0x18] sm:$0xf]
    %v1032 = vld [vmem:[%s0 + $0x1c] sm:$0xf]
    %v1033 = vld [vmem:[%s0 + $0x20] sm:$0xf]
    %v1034 = vld [vmem:[%s0 + $0x24] sm:$0xf]
    %v1035 = vld [vmem:[%s0 + $0x28] sm:$0xf]
    %v1036 = vld [vmem:[%s0 + $0x2c] sm:$0xf]
    %v1037 = vld [vmem:[%s0 + $0x30] sm:$0xf]
    %v1038 = vld [vmem:[%s0 + $0x34] sm:$0xf]
    %v1039 = vld [vmem:[%s0 + $0x38] sm:$0xf]
    %v1040 = vld [vmem:[%s0 + $0x3c] sm:$0xf]
    %v1041 = vld [vmem:[%s0 + $0x40] sm:$0xf]
    %v1042 = vld [vmem:[%s0 + $0x44] sm:$0xf]
    %v1043 = vld [vmem:[%s0 + $0x48] sm:$0xf]
    %v1044 = vld [vmem:[%s0 + $0x4c] sm:$0xf]
    %v1045 = vld [vmem:[%s0 + $0x50] sm:$0xf]
    %v1046 = vld [vmem:[%s0 + $0x54] sm:$0xf]
    %v1047 = vld [vmem:[%s0 + $0x58] sm:$0xf]
    %v1048 = vld [vmem:[%s0 + $0x5c] sm:$0xf]
    %v1049 = vunpack.c.l.bf16 %v1025
    %v1050 = vunpack.c.l.bf16 %v1026
    %v1051 = vunpack.c.l.bf16 %v1027
    %v1052 = vunpack.c.l.bf16 %v1028
    %v1053 = vunpack.c.l.bf16 %v1029
    %v1054 = vunpack.c.l.bf16 %v1030
    %v1055 = vunpack.c.l.bf16 %v1031
    %v1056 = vunpack.c.l.bf16 %v1032
    %v1057 = vunpack.c.l.bf16 %v1033
    %v1058 = vunpack.c.l.bf16 %v1034
    %v1059 = vunpack.c.l.bf16 %v1035
    %v1060 = vunpack.c.l.bf16 %v1036
    %v1061 = vunpack.c.l.bf16 %v1037
    %v1062 = vunpack.c.l.bf16 %v1038
    %v1063 = vunpack.c.l.bf16 %v1039
    %v1064 = vunpack.c.l.bf16 %v1040
    %v1065 = vunpack.c.l.bf16 %v1041
    %v1066 = vunpack.c.l.bf16 %v1042
    %v1067 = vunpack.c.l.bf16 %v1043
    %v1068 = vunpack.c.l.bf16 %v1044
    %v1069 = vunpack.c.l.bf16 %v1045
    %v1070 = vunpack.c.l.bf16 %v1046
    %v1071 = vunpack.c.l.bf16 %v1047
    %v1072 = vunpack.c.l.bf16 %v1048
    %v1073 = vrot.slane %v1049, 7
    %v1074 = vrot.slane %v1050, 7
    %v1075 = vrot.slane %v1051, 7
    %v1076 = vrot.slane %v1052, 7
    %v1077 = vrot.slane %v1053, 7
    %v1078 = vrot.slane %v1054, 7
    %v1079 = vrot.slane %v1055, 7
    %v1080 = vrot.slane %v1056, 7
    %v1081 = vrot.slane %v1057, 7
    %v1082 = vrot.slane %v1058, 7
    %v1083 = vrot.slane %v1059, 7
    %v1084 = vrot.slane %v1060, 7
    %v1085 = vrot.slane %v1061, 7
    %v1086 = vrot.slane %v1062, 7
    %v1087 = vrot.slane %v1063, 7
    %v1088 = vrot.slane %v1064, 7
    %v1089 = vrot.slane %v1065, 7
    %v1090 = vrot.slane %v1066, 7
    %v1091 = vrot.slane %v1067, 7
    %v1092 = vrot.slane %v1068, 7
    %v1093 = vrot.slane %v1069, 7
    %v1094 = vrot.slane %v1070, 7
    %v1095 = vrot.slane %v1071, 7
    %v1096 = vrot.slane %v1072, 7
    %vm1097 = vcmp.lt.s32.totalorder %v65, 1
    %v1098 = vsel %vm1097, %v1095, %v1096
    %v1099 = vsel %vm1097, %v1094, %v1095
    %v1100 = vsel %vm1097, %v1093, %v1094
    %v1101 = vsel %vm1097, %v1092, %v1093
    %v1102 = vsel %vm1097, %v1091, %v1092
    %v1103 = vsel %vm1097, %v1090, %v1091
    %v1104 = vsel %vm1097, %v1089, %v1090
    %v1105 = vsel %vm1097, %v1088, %v1089
    %v1106 = vsel %vm1097, %v1087, %v1088
    %v1107 = vsel %vm1097, %v1086, %v1087
    %v1108 = vsel %vm1097, %v1085, %v1086
    %v1109 = vsel %vm1097, %v1084, %v1085
    %v1110 = vsel %vm1097, %v1083, %v1084
    %v1111 = vsel %vm1097, %v1082, %v1083
    %v1112 = vsel %vm1097, %v1081, %v1082
    %v1113 = vsel %vm1097, %v1080, %v1081
    %v1114 = vsel %vm1097, %v1079, %v1080
    %v1115 = vsel %vm1097, %v1078, %v1079
    %v1116 = vsel %vm1097, %v1077, %v1078
    %v1117 = vsel %vm1097, %v1076, %v1077
    %v1118 = vsel %vm1097, %v1075, %v1076
    %v1119 = vsel %vm1097, %v1074, %v1075
    %v1120 = vsel %vm1097, %v1073, %v1074
    %v1121 = vsel %vm1097, %v1096, %v1073
    %v1122 = vrot.slane %v1049, 1
    %v1123 = vrot.slane %v1050, 1
    %v1124 = vrot.slane %v1051, 1
    %v1125 = vrot.slane %v1052, 1
    %v1126 = vrot.slane %v1053, 1
    %v1127 = vrot.slane %v1054, 1
    %v1128 = vrot.slane %v1055, 1
    %v1129 = vrot.slane %v1056, 1
    %v1130 = vrot.slane %v1057, 1
    %v1131 = vrot.slane %v1058, 1
    %v1132 = vrot.slane %v1059, 1
    %v1133 = vrot.slane %v1060, 1
    %v1134 = vrot.slane %v1061, 1
    %v1135 = vrot.slane %v1062, 1
    %v1136 = vrot.slane %v1063, 1
    %v1137 = vrot.slane %v1064, 1
    %v1138 = vrot.slane %v1065, 1
    %v1139 = vrot.slane %v1066, 1
    %v1140 = vrot.slane %v1067, 1
    %v1141 = vrot.slane %v1068, 1
    %v1142 = vrot.slane %v1069, 1
    %v1143 = vrot.slane %v1070, 1
    %v1144 = vrot.slane %v1071, 1
    %v1145 = vrot.slane %v1072, 1
    %vm1146 = vcmp.lt.s32.totalorder %v65, 7
    %v1147 = vsel %vm1146, %v1144, %v1145
    %v1148 = vsel %vm1146, %v1143, %v1144
    %v1149 = vsel %vm1146, %v1142, %v1143
    %v1150 = vsel %vm1146, %v1141, %v1142
    %v1151 = vsel %vm1146, %v1140, %v1141
    %v1152 = vsel %vm1146, %v1139, %v1140
    %v1153 = vsel %vm1146, %v1138, %v1139
    %v1154 = vsel %vm1146, %v1137, %v1138
    %v1155 = vsel %vm1146, %v1136, %v1137
    %v1156 = vsel %vm1146, %v1135, %v1136
    %v1157 = vsel %vm1146, %v1134, %v1135
    %v1158 = vsel %vm1146, %v1133, %v1134
    %v1159 = vsel %vm1146, %v1132, %v1133
    %v1160 = vsel %vm1146, %v1131, %v1132
    %v1161 = vsel %vm1146, %v1130, %v1131
    %v1162 = vsel %vm1146, %v1129, %v1130
    %v1163 = vsel %vm1146, %v1128, %v1129
    %v1164 = vsel %vm1146, %v1127, %v1128
    %v1165 = vsel %vm1146, %v1126, %v1127
    %v1166 = vsel %vm1146, %v1125, %v1126
    %v1167 = vsel %vm1146, %v1124, %v1125
    %v1168 = vsel %vm1146, %v1123, %v1124
    %v1169 = vsel %vm1146, %v1122, %v1123
    %v1170 = vsel %vm1146, %v1145, %v1122
    %1195 = vrot.lane.b32.xlu0 %v1049, 16
    %v1196 = vpop.permute.xlu0 %1195
    %1197 = vrot.lane.b32.xlu0 %v1050, 16
    %v1198 = vpop.permute.xlu0 %1197
    %1199 = vrot.lane.b32.xlu0 %v1051, 16
    %v1200 = vpop.permute.xlu0 %1199
    %1201 = vrot.lane.b32.xlu0 %v1052, 16
    %v1202 = vpop.permute.xlu0 %1201
    %1203 = vrot.lane.b32.xlu0 %v1053, 16
    %v1204 = vpop.permute.xlu0 %1203
    %1205 = vrot.lane.b32.xlu0 %v1054, 16
    %v1206 = vpop.permute.xlu0 %1205
    %1207 = vrot.lane.b32.xlu0 %v1055, 16
    %v1208 = vpop.permute.xlu0 %1207
    %1209 = vrot.lane.b32.xlu0 %v1056, 16
    %v1210 = vpop.permute.xlu0 %1209
    %1211 = vrot.lane.b32.xlu0 %v1057, 16
    %v1212 = vpop.permute.xlu0 %1211
    %1213 = vrot.lane.b32.xlu0 %v1058, 16
    %v1214 = vpop.permute.xlu0 %1213
    %1215 = vrot.lane.b32.xlu0 %v1059, 16
    %v1216 = vpop.permute.xlu0 %1215
    %1217 = vrot.lane.b32.xlu0 %v1060, 16
    %v1218 = vpop.permute.xlu0 %1217
    %1219 = vrot.lane.b32.xlu0 %v1061, 16
    %v1220 = vpop.permute.xlu0 %1219
    %1221 = vrot.lane.b32.xlu0 %v1062, 16
    %v1222 = vpop.permute.xlu0 %1221
    %1223 = vrot.lane.b32.xlu0 %v1063, 16
    %v1224 = vpop.permute.xlu0 %1223
    %1225 = vrot.lane.b32.xlu0 %v1064, 16
    %v1226 = vpop.permute.xlu0 %1225
    %1227 = vrot.lane.b32.xlu0 %v1065, 16
    %v1228 = vpop.permute.xlu0 %1227
    %1229 = vrot.lane.b32.xlu0 %v1066, 16
    %v1230 = vpop.permute.xlu0 %1229
    %1231 = vrot.lane.b32.xlu0 %v1067, 16
    %v1232 = vpop.permute.xlu0 %1231
    %1233 = vrot.lane.b32.xlu0 %v1068, 16
    %v1234 = vpop.permute.xlu0 %1233
    %1235 = vrot.lane.b32.xlu0 %v1069, 16
    %v1236 = vpop.permute.xlu0 %1235
    %1237 = vrot.lane.b32.xlu0 %v1070, 16
    %v1238 = vpop.permute.xlu0 %1237
    %1239 = vrot.lane.b32.xlu0 %v1071, 16
    %v1240 = vpop.permute.xlu0 %1239
    %1241 = vrot.lane.b32.xlu0 %v1072, 16
    %v1242 = vpop.permute.xlu0 %1241
    %1291 = vrot.lane.b32.xlu0 %v1169, 32
    %v1292 = vpop.permute.xlu0 %1291
    %1293 = vrot.lane.b32.xlu0 %v1168, 32
    %v1294 = vpop.permute.xlu0 %1293
    %1295 = vrot.lane.b32.xlu0 %v1167, 32
    %v1296 = vpop.permute.xlu0 %1295
    %1297 = vrot.lane.b32.xlu0 %v1166, 32
    %v1298 = vpop.permute.xlu0 %1297
    %1299 = vrot.lane.b32.xlu0 %v1165, 32
    %v1300 = vpop.permute.xlu0 %1299
    %1301 = vrot.lane.b32.xlu0 %v1164, 32
    %v1302 = vpop.permute.xlu0 %1301
    %1303 = vrot.lane.b32.xlu0 %v1163, 32
    %v1304 = vpop.permute.xlu0 %1303
    %1305 = vrot.lane.b32.xlu0 %v1162, 32
    %v1306 = vpop.permute.xlu0 %1305
    %1307 = vrot.lane.b32.xlu0 %v1161, 32
    %v1308 = vpop.permute.xlu0 %1307
    %1309 = vrot.lane.b32.xlu0 %v1160, 32
    %v1310 = vpop.permute.xlu0 %1309
    %1311 = vrot.lane.b32.xlu0 %v1159, 32
    %v1312 = vpop.permute.xlu0 %1311
    %1313 = vrot.lane.b32.xlu0 %v1158, 32
    %v1314 = vpop.permute.xlu0 %1313
    %1315 = vrot.lane.b32.xlu0 %v1157, 32
    %v1316 = vpop.permute.xlu0 %1315
    %1317 = vrot.lane.b32.xlu0 %v1156, 32
    %v1318 = vpop.permute.xlu0 %1317
    %1319 = vrot.lane.b32.xlu0 %v1155, 32
    %v1320 = vpop.permute.xlu0 %1319
    %1321 = vrot.lane.b32.xlu0 %v1154, 32
    %v1322 = vpop.permute.xlu0 %1321
    %1323 = vrot.lane.b32.xlu0 %v1153, 32
    %v1324 = vpop.permute.xlu0 %1323
    %1325 = vrot.lane.b32.xlu0 %v1152, 32
    %v1326 = vpop.permute.xlu0 %1325
    %1327 = vrot.lane.b32.xlu0 %v1151, 32
    %v1328 = vpop.permute.xlu0 %1327
    %1329 = vrot.lane.b32.xlu0 %v1150, 32
    %v1330 = vpop.permute.xlu0 %1329
    %1331 = vrot.lane.b32.xlu0 %v1149, 32
    %v1332 = vpop.permute.xlu0 %1331
    %1333 = vrot.lane.b32.xlu0 %v1148, 32
    %v1334 = vpop.permute.xlu0 %1333
    %1335 = vrot.lane.b32.xlu0 %v1147, 32
    %v1336 = vpop.permute.xlu0 %1335
    %1337 = vrot.lane.b32.xlu0 %v1170, 32
    %v1338 = vpop.permute.xlu0 %1337
    %vm1363 = vcmask 130048
    %v1364 = vsel %vm1363, %v1121, %v1196
    %v1365 = vsel %vm1363, %v1120, %v1198
    %v1366 = vsel %vm1363, %v1119, %v1200
    %v1367 = vsel %vm1363, %v1118, %v1202
    %v1368 = vsel %vm1363, %v1117, %v1204
    %v1369 = vsel %vm1363, %v1116, %v1206
    %v1370 = vsel %vm1363, %v1115, %v1208
    %v1371 = vsel %vm1363, %v1114, %v1210
    %v1372 = vsel %vm1363, %v1113, %v1212
    %v1373 = vsel %vm1363, %v1112, %v1214
    %v1374 = vsel %vm1363, %v1111, %v1216
    %v1375 = vsel %vm1363, %v1110, %v1218
    %v1376 = vsel %vm1363, %v1109, %v1220
    %v1377 = vsel %vm1363, %v1108, %v1222
    %v1378 = vsel %vm1363, %v1107, %v1224
    %v1379 = vsel %vm1363, %v1106, %v1226
    %v1380 = vsel %vm1363, %v1105, %v1228
    %v1381 = vsel %vm1363, %v1104, %v1230
    %v1382 = vsel %vm1363, %v1103, %v1232
    %v1383 = vsel %vm1363, %v1102, %v1234
    %v1384 = vsel %vm1363, %v1101, %v1236
    %v1385 = vsel %vm1363, %v1100, %v1238
    %v1386 = vsel %vm1363, %v1099, %v1240
    %v1387 = vsel %vm1363, %v1098, %v1242
    %vm1388 = vcmask 261120
    %v1389 = vsel %vm1388, %v1364, %v1292
    %v1390 = vsel %vm1388, %v1365, %v1294
    %v1391 = vsel %vm1388, %v1366, %v1296
    %v1392 = vsel %vm1388, %v1367, %v1298
    %v1393 = vsel %vm1388, %v1368, %v1300
    %v1394 = vsel %vm1388, %v1369, %v1302
    %v1395 = vsel %vm1388, %v1370, %v1304
    %v1396 = vsel %vm1388, %v1371, %v1306
    %v1397 = vsel %vm1388, %v1372, %v1308
    %v1398 = vsel %vm1388, %v1373, %v1310
    %v1399 = vsel %vm1388, %v1374, %v1312
    %v1400 = vsel %vm1388, %v1375, %v1314
    %v1401 = vsel %vm1388, %v1376, %v1316
    %v1402 = vsel %vm1388, %v1377, %v1318
    %v1403 = vsel %vm1388, %v1378, %v1320
    %v1404 = vsel %vm1388, %v1379, %v1322
    %v1405 = vsel %vm1388, %v1380, %v1324
    %v1406 = vsel %vm1388, %v1381, %v1326
    %v1407 = vsel %vm1388, %v1382, %v1328
    %v1408 = vsel %vm1388, %v1383, %v1330
    %v1409 = vsel %vm1388, %v1384, %v1332
    %v1410 = vsel %vm1388, %v1385, %v1334
    %v1411 = vsel %vm1388, %v1386, %v1336
    %v1412 = vsel %vm1388, %v1387, %v1338
    %v1413 = vpack.c.bf16 %v1390, %v1389
    %v1414 = vpack.c.bf16 %v1392, %v1391
    %v1415 = vpack.c.bf16 %v1394, %v1393
    %v1416 = vpack.c.bf16 %v1396, %v1395
    %v1417 = vpack.c.bf16 %v1398, %v1397
    %v1418 = vpack.c.bf16 %v1400, %v1399
    %v1419 = vpack.c.bf16 %v1402, %v1401
    %v1420 = vpack.c.bf16 %v1404, %v1403
    %v1421 = vpack.c.bf16 %v1406, %v1405
    %v1422 = vpack.c.bf16 %v1408, %v1407
    %v1423 = vpack.c.bf16 %v1410, %v1409
    %v1424 = vpack.c.bf16 %v1412, %v1411
    %v1425 = vld [vmem:[%s1] sm:$0xf]
    %v1426 = vld [vmem:[%s1 + $0x4] sm:$0xf]
    %v1427 = vld [vmem:[%s1 + $0x8] sm:$0xf]
    %v1428 = vld [vmem:[%s1 + $0xc] sm:$0xf]
    %v1429 = vld [vmem:[%s1 + $0x10] sm:$0xf]
    %v1430 = vld [vmem:[%s1 + $0x14] sm:$0xf]
    %v1431 = vld [vmem:[%s2] sm:$0x1]
    %v1433 = vperm.slane %v1431, 0
    %v1441 = vunpack.c.l.b16 %v1425
    %v1442 = vunpack.c.l.b16 %v1426
    %v1443 = vunpack.c.l.b16 %v1427
    %v1444 = vunpack.c.l.b16 %v1428
    %v1445 = vunpack.c.l.b16 %v1429
    %v1446 = vunpack.c.l.b16 %v1430
    %v1447 = vpack.c.b16 %v1442, %v1441
    %v1448 = vpack.c.b16 %v1444, %v1443
    %v1449 = vpack.c.b16 %v1446, %v1445
    %vm1453 = vcmask 392192
    %v1455 = vsel %vm1453, %v1413, 0
    %v1458 = vsel %vm1453, %v1414, 0
    %v1461 = vsel %vm1453, %v1415, 0
    %v1464 = vsel %vm1453, %v1416, 0
    %v1467 = vsel %vm1453, %v1417, 0
    %v1470 = vsel %vm1453, %v1418, 0
    %v1473 = vsel %vm1453, %v1419, 0
    %v1476 = vsel %vm1453, %v1420, 0
    %v1479 = vsel %vm1453, %v1421, 0
    %v1482 = vsel %vm1453, %v1422, 0
    %v1485 = vsel %vm1453, %v1423, 0
    %v1488 = vsel %vm1453, %v1424, 0
    %1490 = vmatpush.bf16.msra.mxu0 0
    %1491 = vmatpush.bf16.msra.mxu0 0
    %1492 = vmatpush.bf16.msra.mxu0 0
    %1493 = vmatpush.bf16.msra.mxu0 0
    %1494 = vmatpush.bf16.msra.mxu0 0
    %1495 = vmatpush.bf16.msra.mxu0 %v1449
    %1496 = vmatpush.bf16.msra.mxu0 %v1448
    %1497 = vmatpush.bf16.msra.mxu0 %v1447
    %1498 = vmatmul.bf16.gmra.mxu0 %v1455
    %v1499 = vpop.f32.mrf.mxu0
    %v1500 = vadd.f32 %v1433, %v1499
    %v1501 = vpop.f32.mrf.mxu0
    %v1502 = vadd.f32 %v1433, %v1501
    %1503 = vmatmul.bf16.gmra.mxu0 %v1458
    %v1504 = vpop.f32.mrf.mxu0
    %v1505 = vadd.f32 %v1433, %v1504
    %v1506 = vpop.f32.mrf.mxu0
    %v1507 = vadd.f32 %v1433, %v1506
    %1508 = vmatmul.bf16.gmra.mxu0 %v1461
    %v1509 = vpop.f32.mrf.mxu0
    %v1510 = vadd.f32 %v1433, %v1509
    %v1511 = vpop.f32.mrf.mxu0
    %v1512 = vadd.f32 %v1433, %v1511
    %1513 = vmatmul.bf16.gmra.mxu0 %v1464
    %v1514 = vpop.f32.mrf.mxu0
    %v1515 = vadd.f32 %v1433, %v1514
    %v1516 = vpop.f32.mrf.mxu0
    %v1517 = vadd.f32 %v1433, %v1516
    %1518 = vmatmul.bf16.gmra.mxu0 %v1467
    %v1519 = vpop.f32.mrf.mxu0
    %v1520 = vadd.f32 %v1433, %v1519
    %v1521 = vpop.f32.mrf.mxu0
    %v1522 = vadd.f32 %v1433, %v1521
    %1523 = vmatmul.bf16.gmra.mxu0 %v1470
    %v1524 = vpop.f32.mrf.mxu0
    %v1525 = vadd.f32 %v1433, %v1524
    %v1526 = vpop.f32.mrf.mxu0
    %v1527 = vadd.f32 %v1433, %v1526
    %1528 = vmatmul.bf16.gmra.mxu0 %v1473
    %v1529 = vpop.f32.mrf.mxu0
    %v1530 = vadd.f32 %v1433, %v1529
    %v1531 = vpop.f32.mrf.mxu0
    %v1532 = vadd.f32 %v1433, %v1531
    %1533 = vmatmul.bf16.gmra.mxu0 %v1476
    %v1534 = vpop.f32.mrf.mxu0
    %v1535 = vadd.f32 %v1433, %v1534
    %v1536 = vpop.f32.mrf.mxu0
    %v1537 = vadd.f32 %v1433, %v1536
    %1538 = vmatmul.bf16.gmra.mxu0 %v1479
    %v1539 = vpop.f32.mrf.mxu0
    %v1540 = vadd.f32 %v1433, %v1539
    %v1541 = vpop.f32.mrf.mxu0
    %v1542 = vadd.f32 %v1433, %v1541
    %1543 = vmatmul.bf16.gmra.mxu0 %v1482
    %v1544 = vpop.f32.mrf.mxu0
    %v1545 = vadd.f32 %v1433, %v1544
    %v1546 = vpop.f32.mrf.mxu0
    %v1547 = vadd.f32 %v1433, %v1546
    %1548 = vmatmul.bf16.gmra.mxu0 %v1485
    %v1549 = vpop.f32.mrf.mxu0
    %v1550 = vadd.f32 %v1433, %v1549
    %v1551 = vpop.f32.mrf.mxu0
    %v1552 = vadd.f32 %v1433, %v1551
    %1553 = vmatmul.bf16.gmra.mxu0 %v1488
    %v1554 = vpop.f32.mrf.mxu0
    %v1555 = vadd.f32 %v1433, %v1554
    %v1556 = vpop.f32.mrf.mxu0
    %v1557 = vadd.f32 %v1433, %v1556
    %1558 = vdwg.mxu0
    %v1559 = vmul.f32 %v1500, %v1001
    %v1560 = vmul.f32 %v1502, %v1002
    %v1561 = vmul.f32 %v1505, %v1003
    %v1562 = vmul.f32 %v1507, %v1004
    %v1563 = vmul.f32 %v1510, %v1005
    %v1564 = vmul.f32 %v1512, %v1006
    %v1565 = vmul.f32 %v1515, %v1007
    %v1566 = vmul.f32 %v1517, %v1008
    %v1567 = vmul.f32 %v1520, %v1009
    %v1568 = vmul.f32 %v1522, %v1010
    %v1569 = vmul.f32 %v1525, %v1011
    %v1570 = vmul.f32 %v1527, %v1012
    %v1571 = vmul.f32 %v1530, %v1013
    %v1572 = vmul.f32 %v1532, %v1014
    %v1573 = vmul.f32 %v1535, %v1015
    %v1574 = vmul.f32 %v1537, %v1016
    %v1575 = vmul.f32 %v1540, %v1017
    %v1576 = vmul.f32 %v1542, %v1018
    %v1577 = vmul.f32 %v1545, %v1019
    %v1578 = vmul.f32 %v1547, %v1020
    %v1579 = vmul.f32 %v1550, %v1021
    %v1580 = vmul.f32 %v1552, %v1022
    %v1581 = vmul.f32 %v1555, %v1023
    %v1582 = vmul.f32 %v1557, %v1024
    %vm1583 = vcmp.gt.f32.partialorder %v1559, 0.0
    %vm1584 = vcmp.gt.f32.partialorder %v1560, 0.0
    %vm1585 = vcmp.gt.f32.partialorder %v1561, 0.0
    %vm1586 = vcmp.gt.f32.partialorder %v1562, 0.0
    %vm1587 = vcmp.gt.f32.partialorder %v1563, 0.0
    %vm1588 = vcmp.gt.f32.partialorder %v1564, 0.0
    %vm1589 = vcmp.gt.f32.partialorder %v1565, 0.0
    %vm1590 = vcmp.gt.f32.partialorder %v1566, 0.0
    %vm1591 = vcmp.gt.f32.partialorder %v1567, 0.0
    %vm1592 = vcmp.gt.f32.partialorder %v1568, 0.0
    %vm1593 = vcmp.gt.f32.partialorder %v1569, 0.0
    %vm1594 = vcmp.gt.f32.partialorder %v1570, 0.0
    %vm1595 = vcmp.gt.f32.partialorder %v1571, 0.0
    %vm1596 = vcmp.gt.f32.partialorder %v1572, 0.0
    %vm1597 = vcmp.gt.f32.partialorder %v1573, 0.0
    %vm1598 = vcmp.gt.f32.partialorder %v1574, 0.0
    %vm1599 = vcmp.gt.f32.partialorder %v1575, 0.0
    %vm1600 = vcmp.gt.f32.partialorder %v1576, 0.0
    %vm1601 = vcmp.gt.f32.partialorder %v1577, 0.0
    %vm1602 = vcmp.gt.f32.partialorder %v1578, 0.0
    %vm1603 = vcmp.gt.f32.partialorder %v1579, 0.0
    %vm1604 = vcmp.gt.f32.partialorder %v1580, 0.0
    %vm1605 = vcmp.gt.f32.partialorder %v1581, 0.0
    %vm1606 = vcmp.gt.f32.partialorder %v1582, 0.0
    %v1607 = vmul.f32 %v1559, 0.01
    %v1608 = vmul.f32 %v1560, 0.01
    %v1609 = vmul.f32 %v1561, 0.01
    %v1610 = vmul.f32 %v1562, 0.01
    %v1611 = vmul.f32 %v1563, 0.01
    %v1612 = vmul.f32 %v1564, 0.01
    %v1613 = vmul.f32 %v1565, 0.01
    %v1614 = vmul.f32 %v1566, 0.01
    %v1615 = vmul.f32 %v1567, 0.01
    %v1616 = vmul.f32 %v1568, 0.01
    %v1617 = vmul.f32 %v1569, 0.01
    %v1618 = vmul.f32 %v1570, 0.01
    %v1619 = vmul.f32 %v1571, 0.01
    %v1620 = vmul.f32 %v1572, 0.01
    %v1621 = vmul.f32 %v1573, 0.01
    %v1622 = vmul.f32 %v1574, 0.01
    %v1623 = vmul.f32 %v1575, 0.01
    %v1624 = vmul.f32 %v1576, 0.01
    %v1625 = vmul.f32 %v1577, 0.01
    %v1626 = vmul.f32 %v1578, 0.01
    %v1627 = vmul.f32 %v1579, 0.01
    %v1628 = vmul.f32 %v1580, 0.01
    %v1629 = vmul.f32 %v1581, 0.01
    %v1630 = vmul.f32 %v1582, 0.01
    %v1631 = vsel %vm1583, %v1559, %v1607
    %v1632 = vsel %vm1584, %v1560, %v1608
    %v1633 = vsel %vm1585, %v1561, %v1609
    %v1634 = vsel %vm1586, %v1562, %v1610
    %v1635 = vsel %vm1587, %v1563, %v1611
    %v1636 = vsel %vm1588, %v1564, %v1612
    %v1637 = vsel %vm1589, %v1565, %v1613
    %v1638 = vsel %vm1590, %v1566, %v1614
    %v1639 = vsel %vm1591, %v1567, %v1615
    %v1640 = vsel %vm1592, %v1568, %v1616
    %v1641 = vsel %vm1593, %v1569, %v1617
    %v1642 = vsel %vm1594, %v1570, %v1618
    %v1643 = vsel %vm1595, %v1571, %v1619
    %v1644 = vsel %vm1596, %v1572, %v1620
    %v1645 = vsel %vm1597, %v1573, %v1621
    %v1646 = vsel %vm1598, %v1574, %v1622
    %v1647 = vsel %vm1599, %v1575, %v1623
    %v1648 = vsel %vm1600, %v1576, %v1624
    %v1649 = vsel %vm1601, %v1577, %v1625
    %v1650 = vsel %vm1602, %v1578, %v1626
    %v1651 = vsel %vm1603, %v1579, %v1627
    %v1652 = vsel %vm1604, %v1580, %v1628
    %v1653 = vsel %vm1605, %v1581, %v1629
    %v1654 = vsel %vm1606, %v1582, %v1630
    %1679 = vrot.lane.b32.xlu0 %v1631, 120
    %v1680 = vpop.permute.xlu0 %1679
    %1681 = vrot.lane.b32.xlu0 %v1632, 120
    %v1682 = vpop.permute.xlu0 %1681
    %1683 = vrot.lane.b32.xlu0 %v1633, 120
    %v1684 = vpop.permute.xlu0 %1683
    %1685 = vrot.lane.b32.xlu0 %v1634, 120
    %v1686 = vpop.permute.xlu0 %1685
    %1687 = vrot.lane.b32.xlu0 %v1635, 120
    %v1688 = vpop.permute.xlu0 %1687
    %1689 = vrot.lane.b32.xlu0 %v1636, 120
    %v1690 = vpop.permute.xlu0 %1689
    %1691 = vrot.lane.b32.xlu0 %v1637, 120
    %v1692 = vpop.permute.xlu0 %1691
    %1693 = vrot.lane.b32.xlu0 %v1638, 120
    %v1694 = vpop.permute.xlu0 %1693
    %1695 = vrot.lane.b32.xlu0 %v1639, 120
    %v1696 = vpop.permute.xlu0 %1695
    %1697 = vrot.lane.b32.xlu0 %v1640, 120
    %v1698 = vpop.permute.xlu0 %1697
    %1699 = vrot.lane.b32.xlu0 %v1641, 120
    %v1700 = vpop.permute.xlu0 %1699
    %1701 = vrot.lane.b32.xlu0 %v1642, 120
    %v1702 = vpop.permute.xlu0 %1701
    %1703 = vrot.lane.b32.xlu0 %v1643, 120
    %v1704 = vpop.permute.xlu0 %1703
    %1705 = vrot.lane.b32.xlu0 %v1644, 120
    %v1706 = vpop.permute.xlu0 %1705
    %1707 = vrot.lane.b32.xlu0 %v1645, 120
    %v1708 = vpop.permute.xlu0 %1707
    %1709 = vrot.lane.b32.xlu0 %v1646, 120
    %v1710 = vpop.permute.xlu0 %1709
    %1711 = vrot.lane.b32.xlu0 %v1647, 120
    %v1712 = vpop.permute.xlu0 %1711
    %1713 = vrot.lane.b32.xlu0 %v1648, 120
    %v1714 = vpop.permute.xlu0 %1713
    %1715 = vrot.lane.b32.xlu0 %v1649, 120
    %v1716 = vpop.permute.xlu0 %1715
    %1717 = vrot.lane.b32.xlu0 %v1650, 120
    %v1718 = vpop.permute.xlu0 %1717
    %1719 = vrot.lane.b32.xlu0 %v1651, 120
    %v1720 = vpop.permute.xlu0 %1719
    %1721 = vrot.lane.b32.xlu0 %v1652, 120
    %v1722 = vpop.permute.xlu0 %1721
    %1723 = vrot.lane.b32.xlu0 %v1653, 120
    %v1724 = vpop.permute.xlu0 %1723
    %1725 = vrot.lane.b32.xlu0 %v1654, 120
    %v1726 = vpop.permute.xlu0 %1725
    %v1751 = vrot.slane %v1680, 7
    %v1752 = vrot.slane %v1682, 7
    %v1753 = vrot.slane %v1684, 7
    %v1754 = vrot.slane %v1686, 7
    %v1755 = vrot.slane %v1688, 7
    %v1756 = vrot.slane %v1690, 7
    %v1757 = vrot.slane %v1692, 7
    %v1758 = vrot.slane %v1694, 7
    %v1759 = vrot.slane %v1696, 7
    %v1760 = vrot.slane %v1698, 7
    %v1761 = vrot.slane %v1700, 7
    %v1762 = vrot.slane %v1702, 7
    %v1763 = vrot.slane %v1704, 7
    %v1764 = vrot.slane %v1706, 7
    %v1765 = vrot.slane %v1708, 7
    %v1766 = vrot.slane %v1710, 7
    %v1767 = vrot.slane %v1712, 7
    %v1768 = vrot.slane %v1714, 7
    %v1769 = vrot.slane %v1716, 7
    %v1770 = vrot.slane %v1718, 7
    %v1771 = vrot.slane %v1720, 7
    %v1772 = vrot.slane %v1722, 7
    %v1773 = vrot.slane %v1724, 7
    %v1774 = vrot.slane %v1726, 7
    %v1775 = vsel %vm1097, %v1773, %v1774
    %v1776 = vsel %vm1097, %v1772, %v1773
    %v1777 = vsel %vm1097, %v1771, %v1772
    %v1778 = vsel %vm1097, %v1770, %v1771
    %v1779 = vsel %vm1097, %v1769, %v1770
    %v1780 = vsel %vm1097, %v1768, %v1769
    %v1781 = vsel %vm1097, %v1767, %v1768
    %v1782 = vsel %vm1097, %v1766, %v1767
    %v1783 = vsel %vm1097, %v1765, %v1766
    %v1784 = vsel %vm1097, %v1764, %v1765
    %v1785 = vsel %vm1097, %v1763, %v1764
    %v1786 = vsel %vm1097, %v1762, %v1763
    %v1787 = vsel %vm1097, %v1761, %v1762
    %v1788 = vsel %vm1097, %v1760, %v1761
    %v1789 = vsel %vm1097, %v1759, %v1760
    %v1790 = vsel %vm1097, %v1758, %v1759
    %v1791 = vsel %vm1097, %v1757, %v1758
    %v1792 = vsel %vm1097, %v1756, %v1757
    %v1793 = vsel %vm1097, %v1755, %v1756
    %v1794 = vsel %vm1097, %v1754, %v1755
    %v1795 = vsel %vm1097, %v1753, %v1754
    %v1796 = vsel %vm1097, %v1752, %v1753
    %v1797 = vsel %vm1097, %v1751, %v1752
    %v1798 = vsel %vm1097, %v1774, %v1751
    %v1799 = vrot.slane %v1680, 1
    %v1800 = vrot.slane %v1682, 1
    %v1801 = vrot.slane %v1684, 1
    %v1802 = vrot.slane %v1686, 1
    %v1803 = vrot.slane %v1688, 1
    %v1804 = vrot.slane %v1690, 1
    %v1805 = vrot.slane %v1692, 1
    %v1806 = vrot.slane %v1694, 1
    %v1807 = vrot.slane %v1696, 1
    %v1808 = vrot.slane %v1698, 1
    %v1809 = vrot.slane %v1700, 1
    %v1810 = vrot.slane %v1702, 1
    %v1811 = vrot.slane %v1704, 1
    %v1812 = vrot.slane %v1706, 1
    %v1813 = vrot.slane %v1708, 1
    %v1814 = vrot.slane %v1710, 1
    %v1815 = vrot.slane %v1712, 1
    %v1816 = vrot.slane %v1714, 1
    %v1817 = vrot.slane %v1716, 1
    %v1818 = vrot.slane %v1718, 1
    %v1819 = vrot.slane %v1720, 1
    %v1820 = vrot.slane %v1722, 1
    %v1821 = vrot.slane %v1724, 1
    %v1822 = vrot.slane %v1726, 1
    %v1823 = vsel %vm1146, %v1821, %v1822
    %v1824 = vsel %vm1146, %v1820, %v1821
    %v1825 = vsel %vm1146, %v1819, %v1820
    %v1826 = vsel %vm1146, %v1818, %v1819
    %v1827 = vsel %vm1146, %v1817, %v1818
    %v1828 = vsel %vm1146, %v1816, %v1817
    %v1829 = vsel %vm1146, %v1815, %v1816
    %v1830 = vsel %vm1146, %v1814, %v1815
    %v1831 = vsel %vm1146, %v1813, %v1814
    %v1832 = vsel %vm1146, %v1812, %v1813
    %v1833 = vsel %vm1146, %v1811, %v1812
    %v1834 = vsel %vm1146, %v1810, %v1811
    %v1835 = vsel %vm1146, %v1809, %v1810
    %v1836 = vsel %vm1146, %v1808, %v1809
    %v1837 = vsel %vm1146, %v1807, %v1808
    %v1838 = vsel %vm1146, %v1806, %v1807
    %v1839 = vsel %vm1146, %v1805, %v1806
    %v1840 = vsel %vm1146, %v1804, %v1805
    %v1841 = vsel %vm1146, %v1803, %v1804
    %v1842 = vsel %vm1146, %v1802, %v1803
    %v1843 = vsel %vm1146, %v1801, %v1802
    %v1844 = vsel %vm1146, %v1800, %v1801
    %v1845 = vsel %vm1146, %v1799, %v1800
    %v1846 = vsel %vm1146, %v1822, %v1799
    %1871 = vrot.lane.b32.xlu0 %v1845, 16
    %v1872 = vpop.permute.xlu0 %1871
    %1873 = vrot.lane.b32.xlu0 %v1844, 16
    %v1874 = vpop.permute.xlu0 %1873
    %1875 = vrot.lane.b32.xlu0 %v1843, 16
    %v1876 = vpop.permute.xlu0 %1875
    %1877 = vrot.lane.b32.xlu0 %v1842, 16
    %v1878 = vpop.permute.xlu0 %1877
    %1879 = vrot.lane.b32.xlu0 %v1841, 16
    %v1880 = vpop.permute.xlu0 %1879
    %1881 = vrot.lane.b32.xlu0 %v1840, 16
    %v1882 = vpop.permute.xlu0 %1881
    %1883 = vrot.lane.b32.xlu0 %v1839, 16
    %v1884 = vpop.permute.xlu0 %1883
    %1885 = vrot.lane.b32.xlu0 %v1838, 16
    %v1886 = vpop.permute.xlu0 %1885
    %1887 = vrot.lane.b32.xlu0 %v1837, 16
    %v1888 = vpop.permute.xlu0 %1887
    %1889 = vrot.lane.b32.xlu0 %v1836, 16
    %v1890 = vpop.permute.xlu0 %1889
    %1891 = vrot.lane.b32.xlu0 %v1835, 16
    %v1892 = vpop.permute.xlu0 %1891
    %1893 = vrot.lane.b32.xlu0 %v1834, 16
    %v1894 = vpop.permute.xlu0 %1893
    %1895 = vrot.lane.b32.xlu0 %v1833, 16
    %v1896 = vpop.permute.xlu0 %1895
    %1897 = vrot.lane.b32.xlu0 %v1832, 16
    %v1898 = vpop.permute.xlu0 %1897
    %1899 = vrot.lane.b32.xlu0 %v1831, 16
    %v1900 = vpop.permute.xlu0 %1899
    %1901 = vrot.lane.b32.xlu0 %v1830, 16
    %v1902 = vpop.permute.xlu0 %1901
    %1903 = vrot.lane.b32.xlu0 %v1829, 16
    %v1904 = vpop.permute.xlu0 %1903
    %1905 = vrot.lane.b32.xlu0 %v1828, 16
    %v1906 = vpop.permute.xlu0 %1905
    %1907 = vrot.lane.b32.xlu0 %v1827, 16
    %v1908 = vpop.permute.xlu0 %1907
    %1909 = vrot.lane.b32.xlu0 %v1826, 16
    %v1910 = vpop.permute.xlu0 %1909
    %1911 = vrot.lane.b32.xlu0 %v1825, 16
    %v1912 = vpop.permute.xlu0 %1911
    %1913 = vrot.lane.b32.xlu0 %v1824, 16
    %v1914 = vpop.permute.xlu0 %1913
    %1915 = vrot.lane.b32.xlu0 %v1823, 16
    %v1916 = vpop.permute.xlu0 %1915
    %1917 = vrot.lane.b32.xlu0 %v1846, 16
    %v1918 = vpop.permute.xlu0 %1917
    %vm1943 = vcmask 64512
    %v1944 = vsel %vm1943, %v1798, %v1631
    %v1945 = vsel %vm1943, %v1797, %v1632
    %v1946 = vsel %vm1943, %v1796, %v1633
    %v1947 = vsel %vm1943, %v1795, %v1634
    %v1948 = vsel %vm1943, %v1794, %v1635
    %v1949 = vsel %vm1943, %v1793, %v1636
    %v1950 = vsel %vm1943, %v1792, %v1637
    %v1951 = vsel %vm1943, %v1791, %v1638
    %v1952 = vsel %vm1943, %v1790, %v1639
    %v1953 = vsel %vm1943, %v1789, %v1640
    %v1954 = vsel %vm1943, %v1788, %v1641
    %v1955 = vsel %vm1943, %v1787, %v1642
    %v1956 = vsel %vm1943, %v1786, %v1643
    %v1957 = vsel %vm1943, %v1785, %v1644
    %v1958 = vsel %vm1943, %v1784, %v1645
    %v1959 = vsel %vm1943, %v1783, %v1646
    %v1960 = vsel %vm1943, %v1782, %v1647
    %v1961 = vsel %vm1943, %v1781, %v1648
    %v1962 = vsel %vm1943, %v1780, %v1649
    %v1963 = vsel %vm1943, %v1779, %v1650
    %v1964 = vsel %vm1943, %v1778, %v1651
    %v1965 = vsel %vm1943, %v1777, %v1652
    %v1966 = vsel %vm1943, %v1776, %v1653
    %v1967 = vsel %vm1943, %v1775, %v1654
    %v1968 = vsel %vm1363, %v1944, %v1872
    %v1969 = vsel %vm1363, %v1945, %v1874
    %v1970 = vsel %vm1363, %v1946, %v1876
    %v1971 = vsel %vm1363, %v1947, %v1878
    %v1972 = vsel %vm1363, %v1948, %v1880
    %v1973 = vsel %vm1363, %v1949, %v1882
    %v1974 = vsel %vm1363, %v1950, %v1884
    %v1975 = vsel %vm1363, %v1951, %v1886
    %v1976 = vsel %vm1363, %v1952, %v1888
    %v1977 = vsel %vm1363, %v1953, %v1890
    %v1978 = vsel %vm1363, %v1954, %v1892
    %v1979 = vsel %vm1363, %v1955, %v1894
    %v1980 = vsel %vm1363, %v1956, %v1896
    %v1981 = vsel %vm1363, %v1957, %v1898
    %v1982 = vsel %vm1363, %v1958, %v1900
    %v1983 = vsel %vm1363, %v1959, %v1902
    %v1984 = vsel %vm1363, %v1960, %v1904
    %v1985 = vsel %vm1363, %v1961, %v1906
    %v1986 = vsel %vm1363, %v1962, %v1908
    %v1987 = vsel %vm1363, %v1963, %v1910
    %v1988 = vsel %vm1363, %v1964, %v1912
    %v1989 = vsel %vm1363, %v1965, %v1914
    %v1990 = vsel %vm1363, %v1966, %v1916
    %v1991 = vsel %vm1363, %v1967, %v1918
    %v1992 = vpack.c.bf16 %v1969, %v1968
    %v1993 = vpack.c.bf16 %v1971, %v1970
    %v1994 = vpack.c.bf16 %v1973, %v1972
    %v1995 = vpack.c.bf16 %v1975, %v1974
    %v1996 = vpack.c.bf16 %v1977, %v1976
    %v1997 = vpack.c.bf16 %v1979, %v1978
    %v1998 = vpack.c.bf16 %v1981, %v1980
    %v1999 = vpack.c.bf16 %v1983, %v1982
    %v2000 = vpack.c.bf16 %v1985, %v1984
    %v2001 = vpack.c.bf16 %v1987, %v1986
    %v2002 = vpack.c.bf16 %v1989, %v1988
    %v2003 = vpack.c.bf16 %v1991, %v1990
    %v2004 = vld [vmem:[%s3] sm:$0xf]
    %v2005 = vld [vmem:[%s3 + $0x4] sm:$0xf]
    %v2006 = vld [vmem:[%s3 + $0x8] sm:$0xf]
    %v2007 = vld [vmem:[%s4] sm:$0x1]
    %v2009 = vperm.slane %v2007, 0
    %v2014 = vunpack.c.l.b16 %v2004
    %v2015 = vunpack.c.l.b16 %v2005
    %v2016 = vunpack.c.l.b16 %v2006
    %v2017 = vpack.c.b16 %v2015, %v2014
    %v2018 = vpack.c.b16 %v2016, %v2016
    %vm2020 = vcmask 195584
    %v2022 = vsel %vm2020, %v1992, 0
    %v2025 = vsel %vm2020, %v1993, 0
    %v2028 = vsel %vm2020, %v1994, 0
    %v2031 = vsel %vm2020, %v1995, 0
    %v2034 = vsel %vm2020, %v1996, 0
    %v2037 = vsel %vm2020, %v1997, 0
    %v2040 = vsel %vm2020, %v1998, 0
    %v2043 = vsel %vm2020, %v1999, 0
    %v2046 = vsel %vm2020, %v2000, 0
    %v2049 = vsel %vm2020, %v2001, 0
    %v2052 = vsel %vm2020, %v2002, 0
    %v2055 = vsel %vm2020, %v2003, 0
    %vm2057 = vcmask 1043456
    %v2059 = vsel %vm2057, %v2018, 0
    %2061 = vmatpush.bf16.msra.mxu0 0
    %2062 = vmatpush.bf16.msra.mxu0 0
    %2063 = vmatpush.bf16.msra.mxu0 0
    %2064 = vmatpush.bf16.msra.mxu0 0
    %2065 = vmatpush.bf16.msra.mxu0 0
    %2066 = vmatpush.bf16.msra.mxu0 0
    %2067 = vmatpush.bf16.msra.mxu0 %v2059
    %2068 = vmatpush.bf16.msra.mxu0 %v2017
    %2069 = vmatmul.bf16.gmra.mxu0 %v2022
    %v2070 = vpop.f32.mrf.mxu0
    %v2071 = vadd.f32 %v2009, %v2070
    %v2072 = vpop.f32.mrf.mxu0
    %v2073 = vadd.f32 %v2009, %v2072
    %2074 = vmatmul.bf16.gmra.mxu0 %v2025
    %v2075 = vpop.f32.mrf.mxu0
    %v2076 = vadd.f32 %v2009, %v2075
    %v2077 = vpop.f32.mrf.mxu0
    %v2078 = vadd.f32 %v2009, %v2077
    %2079 = vmatmul.bf16.gmra.mxu0 %v2028
    %v2080 = vpop.f32.mrf.mxu0
    %v2081 = vadd.f32 %v2009, %v2080
    %v2082 = vpop.f32.mrf.mxu0
    %v2083 = vadd.f32 %v2009, %v2082
    %2084 = vmatmul.bf16.gmra.mxu0 %v2031
    %v2085 = vpop.f32.mrf.mxu0
    %v2086 = vadd.f32 %v2009, %v2085
    %v2087 = vpop.f32.mrf.mxu0
    %v2088 = vadd.f32 %v2009, %v2087
    %2089 = vmatmul.bf16.gmra.mxu0 %v2034
    %v2090 = vpop.f32.mrf.mxu0
    %v2091 = vadd.f32 %v2009, %v2090
    %v2092 = vpop.f32.mrf.mxu0
    %v2093 = vadd.f32 %v2009, %v2092
    %2094 = vmatmul.bf16.gmra.mxu0 %v2037
    %v2095 = vpop.f32.mrf.mxu0
    %v2096 = vadd.f32 %v2009, %v2095
    %v2097 = vpop.f32.mrf.mxu0
    %v2098 = vadd.f32 %v2009, %v2097
    %2099 = vmatmul.bf16.gmra.mxu0 %v2040
    %v2100 = vpop.f32.mrf.mxu0
    %v2101 = vadd.f32 %v2009, %v2100
    %v2102 = vpop.f32.mrf.mxu0
    %v2103 = vadd.f32 %v2009, %v2102
    %2104 = vmatmul.bf16.gmra.mxu0 %v2043
    %v2105 = vpop.f32.mrf.mxu0
    %v2106 = vadd.f32 %v2009, %v2105
    %v2107 = vpop.f32.mrf.mxu0
    %v2108 = vadd.f32 %v2009, %v2107
    %2109 = vmatmul.bf16.gmra.mxu0 %v2046
    %v2110 = vpop.f32.mrf.mxu0
    %v2111 = vadd.f32 %v2009, %v2110
    %v2112 = vpop.f32.mrf.mxu0
    %v2113 = vadd.f32 %v2009, %v2112
    %2114 = vmatmul.bf16.gmra.mxu0 %v2049
    %v2115 = vpop.f32.mrf.mxu0
    %v2116 = vadd.f32 %v2009, %v2115
    %v2117 = vpop.f32.mrf.mxu0
    %v2118 = vadd.f32 %v2009, %v2117
    %2119 = vmatmul.bf16.gmra.mxu0 %v2052
    %v2120 = vpop.f32.mrf.mxu0
    %v2121 = vadd.f32 %v2009, %v2120
    %v2122 = vpop.f32.mrf.mxu0
    %v2123 = vadd.f32 %v2009, %v2122
    %2124 = vmatmul.bf16.gmra.mxu0 %v2055
    %v2125 = vpop.f32.mrf.mxu0
    %v2126 = vadd.f32 %v2009, %v2125
    %v2127 = vpop.f32.mrf.mxu0
    %v2128 = vadd.f32 %v2009, %v2127
    %2129 = vdwg.mxu0
    %2130 = vrot.lane.b32.xlu0 %v1631, 112
    %v2131 = vpop.permute.xlu0 %2130
    %2132 = vrot.lane.b32.xlu0 %v1632, 112
    %v2133 = vpop.permute.xlu0 %2132
    %2134 = vrot.lane.b32.xlu0 %v1633, 112
    %v2135 = vpop.permute.xlu0 %2134
    %2136 = vrot.lane.b32.xlu0 %v1634, 112
    %v2137 = vpop.permute.xlu0 %2136
    %2138 = vrot.lane.b32.xlu0 %v1635, 112
    %v2139 = vpop.permute.xlu0 %2138
    %2140 = vrot.lane.b32.xlu0 %v1636, 112
    %v2141 = vpop.permute.xlu0 %2140
    %2142 = vrot.lane.b32.xlu0 %v1637, 112
    %v2143 = vpop.permute.xlu0 %2142
    %2144 = vrot.lane.b32.xlu0 %v1638, 112
    %v2145 = vpop.permute.xlu0 %2144
    %2146 = vrot.lane.b32.xlu0 %v1639, 112
    %v2147 = vpop.permute.xlu0 %2146
    %2148 = vrot.lane.b32.xlu0 %v1640, 112
    %v2149 = vpop.permute.xlu0 %2148
    %2150 = vrot.lane.b32.xlu0 %v1641, 112
    %v2151 = vpop.permute.xlu0 %2150
    %2152 = vrot.lane.b32.xlu0 %v1642, 112
    %v2153 = vpop.permute.xlu0 %2152
    %2154 = vrot.lane.b32.xlu0 %v1643, 112
    %v2155 = vpop.permute.xlu0 %2154
    %2156 = vrot.lane.b32.xlu0 %v1644, 112
    %v2157 = vpop.permute.xlu0 %2156
    %2158 = vrot.lane.b32.xlu0 %v1645, 112
    %v2159 = vpop.permute.xlu0 %2158
    %2160 = vrot.lane.b32.xlu0 %v1646, 112
    %v2161 = vpop.permute.xlu0 %2160
    %2162 = vrot.lane.b32.xlu0 %v1647, 112
    %v2163 = vpop.permute.xlu0 %2162
    %2164 = vrot.lane.b32.xlu0 %v1648, 112
    %v2165 = vpop.permute.xlu0 %2164
    %2166 = vrot.lane.b32.xlu0 %v1649, 112
    %v2167 = vpop.permute.xlu0 %2166
    %2168 = vrot.lane.b32.xlu0 %v1650, 112
    %v2169 = vpop.permute.xlu0 %2168
    %2170 = vrot.lane.b32.xlu0 %v1651, 112
    %v2171 = vpop.permute.xlu0 %2170
    %2172 = vrot.lane.b32.xlu0 %v1652, 112
    %v2173 = vpop.permute.xlu0 %2172
    %2174 = vrot.lane.b32.xlu0 %v1653, 112
    %v2175 = vpop.permute.xlu0 %2174
    %2176 = vrot.lane.b32.xlu0 %v1654, 112
    %v2177 = vpop.permute.xlu0 %2176
    %v2202 = vrot.slane %v2131, 6
    %v2203 = vrot.slane %v2133, 6
    %v2204 = vrot.slane %v2135, 6
    %v2205 = vrot.slane %v2137, 6
    %v2206 = vrot.slane %v2139, 6
    %v2207 = vrot.slane %v2141, 6
    %v2208 = vrot.slane %v2143, 6
    %v2209 = vrot.slane %v2145, 6
    %v2210 = vrot.slane %v2147, 6
    %v2211 = vrot.slane %v2149, 6
    %v2212 = vrot.slane %v2151, 6
    %v2213 = vrot.slane %v2153, 6
    %v2214 = vrot.slane %v2155, 6
    %v2215 = vrot.slane %v2157, 6
    %v2216 = vrot.slane %v2159, 6
    %v2217 = vrot.slane %v2161, 6
    %v2218 = vrot.slane %v2163, 6
    %v2219 = vrot.slane %v2165, 6
    %v2220 = vrot.slane %v2167, 6
    %v2221 = vrot.slane %v2169, 6
    %v2222 = vrot.slane %v2171, 6
    %v2223 = vrot.slane %v2173, 6
    %v2224 = vrot.slane %v2175, 6
    %v2225 = vrot.slane %v2177, 6
    %vm2226 = vcmp.lt.s32.totalorder %v65, 2
    %v2227 = vsel %vm2226, %v2224, %v2225
    %v2228 = vsel %vm2226, %v2223, %v2224
    %v2229 = vsel %vm2226, %v2222, %v2223
    %v2230 = vsel %vm2226, %v2221, %v2222
    %v2231 = vsel %vm2226, %v2220, %v2221
    %v2232 = vsel %vm2226, %v2219, %v2220
    %v2233 = vsel %vm2226, %v2218, %v2219
    %v2234 = vsel %vm2226, %v2217, %v2218
    %v2235 = vsel %vm2226, %v2216, %v2217
    %v2236 = vsel %vm2226, %v2215, %v2216
    %v2237 = vsel %vm2226, %v2214, %v2215
    %v2238 = vsel %vm2226, %v2213, %v2214
    %v2239 = vsel %vm2226, %v2212, %v2213
    %v2240 = vsel %vm2226, %v2211, %v2212
    %v2241 = vsel %vm2226, %v2210, %v2211
    %v2242 = vsel %vm2226, %v2209, %v2210
    %v2243 = vsel %vm2226, %v2208, %v2209
    %v2244 = vsel %vm2226, %v2207, %v2208
    %v2245 = vsel %vm2226, %v2206, %v2207
    %v2246 = vsel %vm2226, %v2205, %v2206
    %v2247 = vsel %vm2226, %v2204, %v2205
    %v2248 = vsel %vm2226, %v2203, %v2204
    %v2249 = vsel %vm2226, %v2202, %v2203
    %v2250 = vsel %vm2226, %v2225, %v2202
    %v2251 = vrot.slane %v2131, 7
    %v2252 = vrot.slane %v2133, 7
    %v2253 = vrot.slane %v2135, 7
    %v2254 = vrot.slane %v2137, 7
    %v2255 = vrot.slane %v2139, 7
    %v2256 = vrot.slane %v2141, 7
    %v2257 = vrot.slane %v2143, 7
    %v2258 = vrot.slane %v2145, 7
    %v2259 = vrot.slane %v2147, 7
    %v2260 = vrot.slane %v2149, 7
    %v2261 = vrot.slane %v2151, 7
    %v2262 = vrot.slane %v2153, 7
    %v2263 = vrot.slane %v2155, 7
    %v2264 = vrot.slane %v2157, 7
    %v2265 = vrot.slane %v2159, 7
    %v2266 = vrot.slane %v2161, 7
    %v2267 = vrot.slane %v2163, 7
    %v2268 = vrot.slane %v2165, 7
    %v2269 = vrot.slane %v2167, 7
    %v2270 = vrot.slane %v2169, 7
    %v2271 = vrot.slane %v2171, 7
    %v2272 = vrot.slane %v2173, 7
    %v2273 = vrot.slane %v2175, 7
    %v2274 = vrot.slane %v2177, 7
    %v2275 = vsel %vm1097, %v2273, %v2274
    %v2276 = vsel %vm1097, %v2272, %v2273
    %v2277 = vsel %vm1097, %v2271, %v2272
    %v2278 = vsel %vm1097, %v2270, %v2271
    %v2279 = vsel %vm1097, %v2269, %v2270
    %v2280 = vsel %vm1097, %v2268, %v2269
    %v2281 = vsel %vm1097, %v2267, %v2268
    %v2282 = vsel %vm1097, %v2266, %v2267
    %v2283 = vsel %vm1097, %v2265, %v2266
    %v2284 = vsel %vm1097, %v2264, %v2265
    %v2285 = vsel %vm1097, %v2263, %v2264
    %v2286 = vsel %vm1097, %v2262, %v2263
    %v2287 = vsel %vm1097, %v2261, %v2262
    %v2288 = vsel %vm1097, %v2260, %v2261
    %v2289 = vsel %vm1097, %v2259, %v2260
    %v2290 = vsel %vm1097, %v2258, %v2259
    %v2291 = vsel %vm1097, %v2257, %v2258
    %v2292 = vsel %vm1097, %v2256, %v2257
    %v2293 = vsel %vm1097, %v2255, %v2256
    %v2294 = vsel %vm1097, %v2254, %v2255
    %v2295 = vsel %vm1097, %v2253, %v2254
    %v2296 = vsel %vm1097, %v2252, %v2253
    %v2297 = vsel %vm1097, %v2251, %v2252
    %v2298 = vsel %vm1097, %v2274, %v2251
    %v2299 = vrot.slane %v2131, 1
    %v2300 = vrot.slane %v2133, 1
    %v2301 = vrot.slane %v2135, 1
    %v2302 = vrot.slane %v2137, 1
    %v2303 = vrot.slane %v2139, 1
    %v2304 = vrot.slane %v2141, 1
    %v2305 = vrot.slane %v2143, 1
    %v2306 = vrot.slane %v2145, 1
    %v2307 = vrot.slane %v2147, 1
    %v2308 = vrot.slane %v2149, 1
    %v2309 = vrot.slane %v2151, 1
    %v2310 = vrot.slane %v2153, 1
    %v2311 = vrot.slane %v2155, 1
    %v2312 = vrot.slane %v2157, 1
    %v2313 = vrot.slane %v2159, 1
    %v2314 = vrot.slane %v2161, 1
    %v2315 = vrot.slane %v2163, 1
    %v2316 = vrot.slane %v2165, 1
    %v2317 = vrot.slane %v2167, 1
    %v2318 = vrot.slane %v2169, 1
    %v2319 = vrot.slane %v2171, 1
    %v2320 = vrot.slane %v2173, 1
    %v2321 = vrot.slane %v2175, 1
    %v2322 = vrot.slane %v2177, 1
    %v2323 = vsel %vm1146, %v2321, %v2322
    %v2324 = vsel %vm1146, %v2320, %v2321
    %v2325 = vsel %vm1146, %v2319, %v2320
    %v2326 = vsel %vm1146, %v2318, %v2319
    %v2327 = vsel %vm1146, %v2317, %v2318
    %v2328 = vsel %vm1146, %v2316, %v2317
    %v2329 = vsel %vm1146, %v2315, %v2316
    %v2330 = vsel %vm1146, %v2314, %v2315
    %v2331 = vsel %vm1146, %v2313, %v2314
    %v2332 = vsel %vm1146, %v2312, %v2313
    %v2333 = vsel %vm1146, %v2311, %v2312
    %v2334 = vsel %vm1146, %v2310, %v2311
    %v2335 = vsel %vm1146, %v2309, %v2310
    %v2336 = vsel %vm1146, %v2308, %v2309
    %v2337 = vsel %vm1146, %v2307, %v2308
    %v2338 = vsel %vm1146, %v2306, %v2307
    %v2339 = vsel %vm1146, %v2305, %v2306
    %v2340 = vsel %vm1146, %v2304, %v2305
    %v2341 = vsel %vm1146, %v2303, %v2304
    %v2342 = vsel %vm1146, %v2302, %v2303
    %v2343 = vsel %vm1146, %v2301, %v2302
    %v2344 = vsel %vm1146, %v2300, %v2301
    %v2345 = vsel %vm1146, %v2299, %v2300
    %v2346 = vsel %vm1146, %v2322, %v2299
    %v2347 = vrot.slane %v2131, 2
    %v2348 = vrot.slane %v2133, 2
    %v2349 = vrot.slane %v2135, 2
    %v2350 = vrot.slane %v2137, 2
    %v2351 = vrot.slane %v2139, 2
    %v2352 = vrot.slane %v2141, 2
    %v2353 = vrot.slane %v2143, 2
    %v2354 = vrot.slane %v2145, 2
    %v2355 = vrot.slane %v2147, 2
    %v2356 = vrot.slane %v2149, 2
    %v2357 = vrot.slane %v2151, 2
    %v2358 = vrot.slane %v2153, 2
    %v2359 = vrot.slane %v2155, 2
    %v2360 = vrot.slane %v2157, 2
    %v2361 = vrot.slane %v2159, 2
    %v2362 = vrot.slane %v2161, 2
    %v2363 = vrot.slane %v2163, 2
    %v2364 = vrot.slane %v2165, 2
    %v2365 = vrot.slane %v2167, 2
    %v2366 = vrot.slane %v2169, 2
    %v2367 = vrot.slane %v2171, 2
    %v2368 = vrot.slane %v2173, 2
    %v2369 = vrot.slane %v2175, 2
    %v2370 = vrot.slane %v2177, 2
    %vm2371 = vcmp.lt.s32.totalorder %v65, 6
    %v2372 = vsel %vm2371, %v2369, %v2370
    %v2373 = vsel %vm2371, %v2368, %v2369
    %v2374 = vsel %vm2371, %v2367, %v2368
    %v2375 = vsel %vm2371, %v2366, %v2367
    %v2376 = vsel %vm2371, %v2365, %v2366
    %v2377 = vsel %vm2371, %v2364, %v2365
    %v2378 = vsel %vm2371, %v2363, %v2364
    %v2379 = vsel %vm2371, %v2362, %v2363
    %v2380 = vsel %vm2371, %v2361, %v2362
    %v2381 = vsel %vm2371, %v2360, %v2361
    %v2382 = vsel %vm2371, %v2359, %v2360
    %v2383 = vsel %vm2371, %v2358, %v2359
    %v2384 = vsel %vm2371, %v2357, %v2358
    %v2385 = vsel %vm2371, %v2356, %v2357
    %v2386 = vsel %vm2371, %v2355, %v2356
    %v2387 = vsel %vm2371, %v2354, %v2355
    %v2388 = vsel %vm2371, %v2353, %v2354
    %v2389 = vsel %vm2371, %v2352, %v2353
    %v2390 = vsel %vm2371, %v2351, %v2352
    %v2391 = vsel %vm2371, %v2350, %v2351
    %v2392 = vsel %vm2371, %v2349, %v2350
    %v2393 = vsel %vm2371, %v2348, %v2349
    %v2394 = vsel %vm2371, %v2347, %v2348
    %v2395 = vsel %vm2371, %v2370, %v2347
    %2420 = vrot.lane.b32.xlu0 %v2298, 8
    %v2421 = vpop.permute.xlu0 %2420
    %2422 = vrot.lane.b32.xlu0 %v2297, 8
    %v2423 = vpop.permute.xlu0 %2422
    %2424 = vrot.lane.b32.xlu0 %v2296, 8
    %v2425 = vpop.permute.xlu0 %2424
    %2426 = vrot.lane.b32.xlu0 %v2295, 8
    %v2427 = vpop.permute.xlu0 %2426
    %2428 = vrot.lane.b32.xlu0 %v2294, 8
    %v2429 = vpop.permute.xlu0 %2428
    %2430 = vrot.lane.b32.xlu0 %v2293, 8
    %v2431 = vpop.permute.xlu0 %2430
    %2432 = vrot.lane.b32.xlu0 %v2292, 8
    %v2433 = vpop.permute.xlu0 %2432
    %2434 = vrot.lane.b32.xlu0 %v2291, 8
    %v2435 = vpop.permute.xlu0 %2434
    %2436 = vrot.lane.b32.xlu0 %v2290, 8
    %v2437 = vpop.permute.xlu0 %2436
    %2438 = vrot.lane.b32.xlu0 %v2289, 8
    %v2439 = vpop.permute.xlu0 %2438
    %2440 = vrot.lane.b32.xlu0 %v2288, 8
    %v2441 = vpop.permute.xlu0 %2440
    %2442 = vrot.lane.b32.xlu0 %v2287, 8
    %v2443 = vpop.permute.xlu0 %2442
    %2444 = vrot.lane.b32.xlu0 %v2286, 8
    %v2445 = vpop.permute.xlu0 %2444
    %2446 = vrot.lane.b32.xlu0 %v2285, 8
    %v2447 = vpop.permute.xlu0 %2446
    %2448 = vrot.lane.b32.xlu0 %v2284, 8
    %v2449 = vpop.permute.xlu0 %2448
    %2450 = vrot.lane.b32.xlu0 %v2283, 8
    %v2451 = vpop.permute.xlu0 %2450
    %2452 = vrot.lane.b32.xlu0 %v2282, 8
    %v2453 = vpop.permute.xlu0 %2452
    %2454 = vrot.lane.b32.xlu0 %v2281, 8
    %v2455 = vpop.permute.xlu0 %2454
    %2456 = vrot.lane.b32.xlu0 %v2280, 8
    %v2457 = vpop.permute.xlu0 %2456
    %2458 = vrot.lane.b32.xlu0 %v2279, 8
    %v2459 = vpop.permute.xlu0 %2458
    %2460 = vrot.lane.b32.xlu0 %v2278, 8
    %v2461 = vpop.permute.xlu0 %2460
    %2462 = vrot.lane.b32.xlu0 %v2277, 8
    %v2463 = vpop.permute.xlu0 %2462
    %2464 = vrot.lane.b32.xlu0 %v2276, 8
    %v2465 = vpop.permute.xlu0 %2464
    %2466 = vrot.lane.b32.xlu0 %v2275, 8
    %v2467 = vpop.permute.xlu0 %2466
    %2516 = vrot.lane.b32.xlu0 %v2345, 24
    %v2517 = vpop.permute.xlu0 %2516
    %2518 = vrot.lane.b32.xlu0 %v2344, 24
    %v2519 = vpop.permute.xlu0 %2518
    %2520 = vrot.lane.b32.xlu0 %v2343, 24
    %v2521 = vpop.permute.xlu0 %2520
    %2522 = vrot.lane.b32.xlu0 %v2342, 24
    %v2523 = vpop.permute.xlu0 %2522
    %2524 = vrot.lane.b32.xlu0 %v2341, 24
    %v2525 = vpop.permute.xlu0 %2524
    %2526 = vrot.lane.b32.xlu0 %v2340, 24
    %v2527 = vpop.permute.xlu0 %2526
    %2528 = vrot.lane.b32.xlu0 %v2339, 24
    %v2529 = vpop.permute.xlu0 %2528
    %2530 = vrot.lane.b32.xlu0 %v2338, 24
    %v2531 = vpop.permute.xlu0 %2530
    %2532 = vrot.lane.b32.xlu0 %v2337, 24
    %v2533 = vpop.permute.xlu0 %2532
    %2534 = vrot.lane.b32.xlu0 %v2336, 24
    %v2535 = vpop.permute.xlu0 %2534
    %2536 = vrot.lane.b32.xlu0 %v2335, 24
    %v2537 = vpop.permute.xlu0 %2536
    %2538 = vrot.lane.b32.xlu0 %v2334, 24
    %v2539 = vpop.permute.xlu0 %2538
    %2540 = vrot.lane.b32.xlu0 %v2333, 24
    %v2541 = vpop.permute.xlu0 %2540
    %2542 = vrot.lane.b32.xlu0 %v2332, 24
    %v2543 = vpop.permute.xlu0 %2542
    %2544 = vrot.lane.b32.xlu0 %v2331, 24
    %v2545 = vpop.permute.xlu0 %2544
    %2546 = vrot.lane.b32.xlu0 %v2330, 24
    %v2547 = vpop.permute.xlu0 %2546
    %2548 = vrot.lane.b32.xlu0 %v2329, 24
    %v2549 = vpop.permute.xlu0 %2548
    %2550 = vrot.lane.b32.xlu0 %v2328, 24
    %v2551 = vpop.permute.xlu0 %2550
    %2552 = vrot.lane.b32.xlu0 %v2327, 24
    %v2553 = vpop.permute.xlu0 %2552
    %2554 = vrot.lane.b32.xlu0 %v2326, 24
    %v2555 = vpop.permute.xlu0 %2554
    %2556 = vrot.lane.b32.xlu0 %v2325, 24
    %v2557 = vpop.permute.xlu0 %2556
    %2558 = vrot.lane.b32.xlu0 %v2324, 24
    %v2559 = vpop.permute.xlu0 %2558
    %2560 = vrot.lane.b32.xlu0 %v2323, 24
    %v2561 = vpop.permute.xlu0 %2560
    %2562 = vrot.lane.b32.xlu0 %v2346, 24
    %v2563 = vpop.permute.xlu0 %2562
    %2612 = vrot.lane.b32.xlu0 %v2394, 32
    %v2613 = vpop.permute.xlu0 %2612
    %2614 = vrot.lane.b32.xlu0 %v2393, 32
    %v2615 = vpop.permute.xlu0 %2614
    %2616 = vrot.lane.b32.xlu0 %v2392, 32
    %v2617 = vpop.permute.xlu0 %2616
    %2618 = vrot.lane.b32.xlu0 %v2391, 32
    %v2619 = vpop.permute.xlu0 %2618
    %2620 = vrot.lane.b32.xlu0 %v2390, 32
    %v2621 = vpop.permute.xlu0 %2620
    %2622 = vrot.lane.b32.xlu0 %v2389, 32
    %v2623 = vpop.permute.xlu0 %2622
    %2624 = vrot.lane.b32.xlu0 %v2388, 32
    %v2625 = vpop.permute.xlu0 %2624
    %2626 = vrot.lane.b32.xlu0 %v2387, 32
    %v2627 = vpop.permute.xlu0 %2626
    %2628 = vrot.lane.b32.xlu0 %v2386, 32
    %v2629 = vpop.permute.xlu0 %2628
    %2630 = vrot.lane.b32.xlu0 %v2385, 32
    %v2631 = vpop.permute.xlu0 %2630
    %2632 = vrot.lane.b32.xlu0 %v2384, 32
    %v2633 = vpop.permute.xlu0 %2632
    %2634 = vrot.lane.b32.xlu0 %v2383, 32
    %v2635 = vpop.permute.xlu0 %2634
    %2636 = vrot.lane.b32.xlu0 %v2382, 32
    %v2637 = vpop.permute.xlu0 %2636
    %2638 = vrot.lane.b32.xlu0 %v2381, 32
    %v2639 = vpop.permute.xlu0 %2638
    %2640 = vrot.lane.b32.xlu0 %v2380, 32
    %v2641 = vpop.permute.xlu0 %2640
    %2642 = vrot.lane.b32.xlu0 %v2379, 32
    %v2643 = vpop.permute.xlu0 %2642
    %2644 = vrot.lane.b32.xlu0 %v2378, 32
    %v2645 = vpop.permute.xlu0 %2644
    %2646 = vrot.lane.b32.xlu0 %v2377, 32
    %v2647 = vpop.permute.xlu0 %2646
    %2648 = vrot.lane.b32.xlu0 %v2376, 32
    %v2649 = vpop.permute.xlu0 %2648
    %2650 = vrot.lane.b32.xlu0 %v2375, 32
    %v2651 = vpop.permute.xlu0 %2650
    %2652 = vrot.lane.b32.xlu0 %v2374, 32
    %v2653 = vpop.permute.xlu0 %2652
    %2654 = vrot.lane.b32.xlu0 %v2373, 32
    %v2655 = vpop.permute.xlu0 %2654
    %2656 = vrot.lane.b32.xlu0 %v2372, 32
    %v2657 = vpop.permute.xlu0 %2656
    %2658 = vrot.lane.b32.xlu0 %v2395, 32
    %v2659 = vpop.permute.xlu0 %2658
    %v2684 = vsel %vm1943, %v2250, %v2421
    %v2685 = vsel %vm1943, %v2249, %v2423
    %v2686 = vsel %vm1943, %v2248, %v2425
    %v2687 = vsel %vm1943, %v2247, %v2427
    %v2688 = vsel %vm1943, %v2246, %v2429
    %v2689 = vsel %vm1943, %v2245, %v2431
    %v2690 = vsel %vm1943, %v2244, %v2433
    %v2691 = vsel %vm1943, %v2243, %v2435
    %v2692 = vsel %vm1943, %v2242, %v2437
    %v2693 = vsel %vm1943, %v2241, %v2439
    %v2694 = vsel %vm1943, %v2240, %v2441
    %v2695 = vsel %vm1943, %v2239, %v2443
    %v2696 = vsel %vm1943, %v2238, %v2445
    %v2697 = vsel %vm1943, %v2237, %v2447
    %v2698 = vsel %vm1943, %v2236, %v2449
    %v2699 = vsel %vm1943, %v2235, %v2451
    %v2700 = vsel %vm1943, %v2234, %v2453
    %v2701 = vsel %vm1943, %v2233, %v2455
    %v2702 = vsel %vm1943, %v2232, %v2457
    %v2703 = vsel %vm1943, %v2231, %v2459
    %v2704 = vsel %vm1943, %v2230, %v2461
    %v2705 = vsel %vm1943, %v2229, %v2463
    %v2706 = vsel %vm1943, %v2228, %v2465
    %v2707 = vsel %vm1943, %v2227, %v2467
    %v2708 = vsel %vm1363, %v2684, %v1631
    %v2709 = vsel %vm1363, %v2685, %v1632
    %v2710 = vsel %vm1363, %v2686, %v1633
    %v2711 = vsel %vm1363, %v2687, %v1634
    %v2712 = vsel %vm1363, %v2688, %v1635
    %v2713 = vsel %vm1363, %v2689, %v1636
    %v2714 = vsel %vm1363, %v2690, %v1637
    %v2715 = vsel %vm1363, %v2691, %v1638
    %v2716 = vsel %vm1363, %v2692, %v1639
    %v2717 = vsel %vm1363, %v2693, %v1640
    %v2718 = vsel %vm1363, %v2694, %v1641
    %v2719 = vsel %vm1363, %v2695, %v1642
    %v2720 = vsel %vm1363, %v2696, %v1643
    %v2721 = vsel %vm1363, %v2697, %v1644
    %v2722 = vsel %vm1363, %v2698, %v1645
    %v2723 = vsel %vm1363, %v2699, %v1646
    %v2724 = vsel %vm1363, %v2700, %v1647
    %v2725 = vsel %vm1363, %v2701, %v1648
    %v2726 = vsel %vm1363, %v2702, %v1649
    %v2727 = vsel %vm1363, %v2703, %v1650
    %v2728 = vsel %vm1363, %v2704, %v1651
    %v2729 = vsel %vm1363, %v2705, %v1652
    %v2730 = vsel %vm1363, %v2706, %v1653
    %v2731 = vsel %vm1363, %v2707, %v1654
    %v2732 = vsel %vm2020, %v2708, %v2517
    %v2733 = vsel %vm2020, %v2709, %v2519
    %v2734 = vsel %vm2020, %v2710, %v2521
    %v2735 = vsel %vm2020, %v2711, %v2523
    %v2736 = vsel %vm2020, %v2712, %v2525
    %v2737 = vsel %vm2020, %v2713, %v2527
    %v2738 = vsel %vm2020, %v2714, %v2529
    %v2739 = vsel %vm2020, %v2715, %v2531
    %v2740 = vsel %vm2020, %v2716, %v2533
    %v2741 = vsel %vm2020, %v2717, %v2535
    %v2742 = vsel %vm2020, %v2718, %v2537
    %v2743 = vsel %vm2020, %v2719, %v2539
    %v2744 = vsel %vm2020, %v2720, %v2541
    %v2745 = vsel %vm2020, %v2721, %v2543
    %v2746 = vsel %vm2020, %v2722, %v2545
    %v2747 = vsel %vm2020, %v2723, %v2547
    %v2748 = vsel %vm2020, %v2724, %v2549
    %v2749 = vsel %vm2020, %v2725, %v2551
    %v2750 = vsel %vm2020, %v2726, %v2553
    %v2751 = vsel %vm2020, %v2727, %v2555
    %v2752 = vsel %vm2020, %v2728, %v2557
    %v2753 = vsel %vm2020, %v2729, %v2559
    %v2754 = vsel %vm2020, %v2730, %v2561
    %v2755 = vsel %vm2020, %v2731, %v2563
    %v2756 = vsel %vm1388, %v2732, %v2613
    %v2757 = vsel %vm1388, %v2733, %v2615
    %v2758 = vsel %vm1388, %v2734, %v2617
    %v2759 = vsel %vm1388, %v2735, %v2619
    %v2760 = vsel %vm1388, %v2736, %v2621
    %v2761 = vsel %vm1388, %v2737, %v2623
    %v2762 = vsel %vm1388, %v2738, %v2625
    %v2763 = vsel %vm1388, %v2739, %v2627
    %v2764 = vsel %vm1388, %v2740, %v2629
    %v2765 = vsel %vm1388, %v2741, %v2631
    %v2766 = vsel %vm1388, %v2742, %v2633
    %v2767 = vsel %vm1388, %v2743, %v2635
    %v2768 = vsel %vm1388, %v2744, %v2637
    %v2769 = vsel %vm1388, %v2745, %v2639
    %v2770 = vsel %vm1388, %v2746, %v2641
    %v2771 = vsel %vm1388, %v2747, %v2643
    %v2772 = vsel %vm1388, %v2748, %v2645
    %v2773 = vsel %vm1388, %v2749, %v2647
    %v2774 = vsel %vm1388, %v2750, %v2649
    %v2775 = vsel %vm1388, %v2751, %v2651
    %v2776 = vsel %vm1388, %v2752, %v2653
    %v2777 = vsel %vm1388, %v2753, %v2655
    %v2778 = vsel %vm1388, %v2754, %v2657
    %v2779 = vsel %vm1388, %v2755, %v2659
    %v2780 = vpack.c.bf16 %v2757, %v2756
    %v2781 = vpack.c.bf16 %v2759, %v2758
    %v2782 = vpack.c.bf16 %v2761, %v2760
    %v2783 = vpack.c.bf16 %v2763, %v2762
    %v2784 = vpack.c.bf16 %v2765, %v2764
    %v2785 = vpack.c.bf16 %v2767, %v2766
    %v2786 = vpack.c.bf16 %v2769, %v2768
    %v2787 = vpack.c.bf16 %v2771, %v2770
    %v2788 = vpack.c.bf16 %v2773, %v2772
    %v2789 = vpack.c.bf16 %v2775, %v2774
    %v2790 = vpack.c.bf16 %v2777, %v2776
    %v2791 = vpack.c.bf16 %v2779, %v2778
    %v2792 = vld [vmem:[%s5] sm:$0xf]
    %v2793 = vld [vmem:[%s5 + $0x4] sm:$0xf]
    %v2794 = vld [vmem:[%s5 + $0x8] sm:$0xf]
    %v2795 = vld [vmem:[%s5 + $0xc] sm:$0xf]
    %v2796 = vld [vmem:[%s5 + $0x10] sm:$0xf]
    %v2797 = vld [vmem:[%s6] sm:$0x1]
    %v2799 = vperm.slane %v2797, 0
    %v2806 = vunpack.c.l.b16 %v2792
    %v2807 = vunpack.c.l.b16 %v2793
    %v2808 = vunpack.c.l.b16 %v2794
    %v2809 = vunpack.c.l.b16 %v2795
    %v2810 = vunpack.c.l.b16 %v2796
    %v2811 = vpack.c.b16 %v2807, %v2806
    %v2812 = vpack.c.b16 %v2809, %v2808
    %v2813 = vpack.c.b16 %v2810, %v2810
    %vm2816 = vcmask 326656
    %v2818 = vsel %vm2816, %v2780, 0
    %v2821 = vsel %vm2816, %v2781, 0
    %v2824 = vsel %vm2816, %v2782, 0
    %v2827 = vsel %vm2816, %v2783, 0
    %v2830 = vsel %vm2816, %v2784, 0
    %v2833 = vsel %vm2816, %v2785, 0
    %v2836 = vsel %vm2816, %v2786, 0
    %v2839 = vsel %vm2816, %v2787, 0
    %v2842 = vsel %vm2816, %v2788, 0
    %v2845 = vsel %vm2816, %v2789, 0
    %v2848 = vsel %vm2816, %v2790, 0
    %v2851 = vsel %vm2816, %v2791, 0
    %v2854 = vsel %vm2057, %v2813, 0
    %2856 = vmatpush.bf16.msra.mxu0 0
    %2857 = vmatpush.bf16.msra.mxu0 0
    %2858 = vmatpush.bf16.msra.mxu0 0
    %2859 = vmatpush.bf16.msra.mxu0 0
    %2860 = vmatpush.bf16.msra.mxu0 0
    %2861 = vmatpush.bf16.msra.mxu0 %v2854
    %2862 = vmatpush.bf16.msra.mxu0 %v2812
    %2863 = vmatpush.bf16.msra.mxu0 %v2811
    %2864 = vmatmul.bf16.gmra.mxu0 %v2818
    %v2865 = vpop.f32.mrf.mxu0
    %v2866 = vadd.f32 %v2799, %v2865
    %v2867 = vpop.f32.mrf.mxu0
    %v2868 = vadd.f32 %v2799, %v2867
    %2869 = vmatmul.bf16.gmra.mxu0 %v2821
    %v2870 = vpop.f32.mrf.mxu0
    %v2871 = vadd.f32 %v2799, %v2870
    %v2872 = vpop.f32.mrf.mxu0
    %v2873 = vadd.f32 %v2799, %v2872
    %2874 = vmatmul.bf16.gmra.mxu0 %v2824
    %v2875 = vpop.f32.mrf.mxu0
    %v2876 = vadd.f32 %v2799, %v2875
    %v2877 = vpop.f32.mrf.mxu0
    %v2878 = vadd.f32 %v2799, %v2877
    %2879 = vmatmul.bf16.gmra.mxu0 %v2827
    %v2880 = vpop.f32.mrf.mxu0
    %v2881 = vadd.f32 %v2799, %v2880
    %v2882 = vpop.f32.mrf.mxu0
    %v2883 = vadd.f32 %v2799, %v2882
    %2884 = vmatmul.bf16.gmra.mxu0 %v2830
    %v2885 = vpop.f32.mrf.mxu0
    %v2886 = vadd.f32 %v2799, %v2885
    %v2887 = vpop.f32.mrf.mxu0
    %v2888 = vadd.f32 %v2799, %v2887
    %2889 = vmatmul.bf16.gmra.mxu0 %v2833
    %v2890 = vpop.f32.mrf.mxu0
    %v2891 = vadd.f32 %v2799, %v2890
    %v2892 = vpop.f32.mrf.mxu0
    %v2893 = vadd.f32 %v2799, %v2892
    %2894 = vmatmul.bf16.gmra.mxu0 %v2836
    %v2895 = vpop.f32.mrf.mxu0
    %v2896 = vadd.f32 %v2799, %v2895
    %v2897 = vpop.f32.mrf.mxu0
    %v2898 = vadd.f32 %v2799, %v2897
    %2899 = vmatmul.bf16.gmra.mxu0 %v2839
    %v2900 = vpop.f32.mrf.mxu0
    %v2901 = vadd.f32 %v2799, %v2900
    %v2902 = vpop.f32.mrf.mxu0
    %v2903 = vadd.f32 %v2799, %v2902
    %2904 = vmatmul.bf16.gmra.mxu0 %v2842
    %v2905 = vpop.f32.mrf.mxu0
    %v2906 = vadd.f32 %v2799, %v2905
    %v2907 = vpop.f32.mrf.mxu0
    %v2908 = vadd.f32 %v2799, %v2907
    %2909 = vmatmul.bf16.gmra.mxu0 %v2845
    %v2910 = vpop.f32.mrf.mxu0
    %v2911 = vadd.f32 %v2799, %v2910
    %v2912 = vpop.f32.mrf.mxu0
    %v2913 = vadd.f32 %v2799, %v2912
    %2914 = vmatmul.bf16.gmra.mxu0 %v2848
    %v2915 = vpop.f32.mrf.mxu0
    %v2916 = vadd.f32 %v2799, %v2915
    %v2917 = vpop.f32.mrf.mxu0
    %v2918 = vadd.f32 %v2799, %v2917
    %2919 = vmatmul.bf16.gmra.mxu0 %v2851
    %v2920 = vpop.f32.mrf.mxu0
    %v2921 = vadd.f32 %v2799, %v2920
    %v2922 = vpop.f32.mrf.mxu0
    %v2923 = vadd.f32 %v2799, %v2922
    %2924 = vdwg.mxu0
    %2949 = vrot.lane.b32.xlu0 %v2071, 8
    %v2950 = vpop.permute.xlu0 %2949
    %2951 = vrot.lane.b32.xlu0 %v2073, 8
    %v2952 = vpop.permute.xlu0 %2951
    %2953 = vrot.lane.b32.xlu0 %v2076, 8
    %v2954 = vpop.permute.xlu0 %2953
    %2955 = vrot.lane.b32.xlu0 %v2078, 8
    %v2956 = vpop.permute.xlu0 %2955
    %2957 = vrot.lane.b32.xlu0 %v2081, 8
    %v2958 = vpop.permute.xlu0 %2957
    %2959 = vrot.lane.b32.xlu0 %v2083, 8
    %v2960 = vpop.permute.xlu0 %2959
    %2961 = vrot.lane.b32.xlu0 %v2086, 8
    %v2962 = vpop.permute.xlu0 %2961
    %2963 = vrot.lane.b32.xlu0 %v2088, 8
    %v2964 = vpop.permute.xlu0 %2963
    %2965 = vrot.lane.b32.xlu0 %v2091, 8
    %v2966 = vpop.permute.xlu0 %2965
    %2967 = vrot.lane.b32.xlu0 %v2093, 8
    %v2968 = vpop.permute.xlu0 %2967
    %2969 = vrot.lane.b32.xlu0 %v2096, 8
    %v2970 = vpop.permute.xlu0 %2969
    %2971 = vrot.lane.b32.xlu0 %v2098, 8
    %v2972 = vpop.permute.xlu0 %2971
    %2973 = vrot.lane.b32.xlu0 %v2101, 8
    %v2974 = vpop.permute.xlu0 %2973
    %2975 = vrot.lane.b32.xlu0 %v2103, 8
    %v2976 = vpop.permute.xlu0 %2975
    %2977 = vrot.lane.b32.xlu0 %v2106, 8
    %v2978 = vpop.permute.xlu0 %2977
    %2979 = vrot.lane.b32.xlu0 %v2108, 8
    %v2980 = vpop.permute.xlu0 %2979
    %2981 = vrot.lane.b32.xlu0 %v2111, 8
    %v2982 = vpop.permute.xlu0 %2981
    %2983 = vrot.lane.b32.xlu0 %v2113, 8
    %v2984 = vpop.permute.xlu0 %2983
    %2985 = vrot.lane.b32.xlu0 %v2116, 8
    %v2986 = vpop.permute.xlu0 %2985
    %2987 = vrot.lane.b32.xlu0 %v2118, 8
    %v2988 = vpop.permute.xlu0 %2987
    %2989 = vrot.lane.b32.xlu0 %v2121, 8
    %v2990 = vpop.permute.xlu0 %2989
    %2991 = vrot.lane.b32.xlu0 %v2123, 8
    %v2992 = vpop.permute.xlu0 %2991
    %2993 = vrot.lane.b32.xlu0 %v2126, 8
    %v2994 = vpop.permute.xlu0 %2993
    %2995 = vrot.lane.b32.xlu0 %v2128, 8
    %v2996 = vpop.permute.xlu0 %2995
    %3045 = vrot.lane.b32.xlu0 %v2866, 16
    %v3046 = vpop.permute.xlu0 %3045
    %3047 = vrot.lane.b32.xlu0 %v2868, 16
    %v3048 = vpop.permute.xlu0 %3047
    %3049 = vrot.lane.b32.xlu0 %v2871, 16
    %v3050 = vpop.permute.xlu0 %3049
    %3051 = vrot.lane.b32.xlu0 %v2873, 16
    %v3052 = vpop.permute.xlu0 %3051
    %3053 = vrot.lane.b32.xlu0 %v2876, 16
    %v3054 = vpop.permute.xlu0 %3053
    %3055 = vrot.lane.b32.xlu0 %v2878, 16
    %v3056 = vpop.permute.xlu0 %3055
    %3057 = vrot.lane.b32.xlu0 %v2881, 16
    %v3058 = vpop.permute.xlu0 %3057
    %3059 = vrot.lane.b32.xlu0 %v2883, 16
    %v3060 = vpop.permute.xlu0 %3059
    %3061 = vrot.lane.b32.xlu0 %v2886, 16
    %v3062 = vpop.permute.xlu0 %3061
    %3063 = vrot.lane.b32.xlu0 %v2888, 16
    %v3064 = vpop.permute.xlu0 %3063
    %3065 = vrot.lane.b32.xlu0 %v2891, 16
    %v3066 = vpop.permute.xlu0 %3065
    %3067 = vrot.lane.b32.xlu0 %v2893, 16
    %v3068 = vpop.permute.xlu0 %3067
    %3069 = vrot.lane.b32.xlu0 %v2896, 16
    %v3070 = vpop.permute.xlu0 %3069
    %3071 = vrot.lane.b32.xlu0 %v2898, 16
    %v3072 = vpop.permute.xlu0 %3071
    %3073 = vrot.lane.b32.xlu0 %v2901, 16
    %v3074 = vpop.permute.xlu0 %3073
    %3075 = vrot.lane.b32.xlu0 %v2903, 16
    %v3076 = vpop.permute.xlu0 %3075
    %3077 = vrot.lane.b32.xlu0 %v2906, 16
    %v3078 = vpop.permute.xlu0 %3077
    %3079 = vrot.lane.b32.xlu0 %v2908, 16
    %v3080 = vpop.permute.xlu0 %3079
    %3081 = vrot.lane.b32.xlu0 %v2911, 16
    %v3082 = vpop.permute.xlu0 %3081
    %3083 = vrot.lane.b32.xlu0 %v2913, 16
    %v3084 = vpop.permute.xlu0 %3083
    %3085 = vrot.lane.b32.xlu0 %v2916, 16
    %v3086 = vpop.permute.xlu0 %3085
    %3087 = vrot.lane.b32.xlu0 %v2918, 16
    %v3088 = vpop.permute.xlu0 %3087
    %3089 = vrot.lane.b32.xlu0 %v2921, 16
    %v3090 = vpop.permute.xlu0 %3089
    %3091 = vrot.lane.b32.xlu0 %v2923, 16
    %v3092 = vpop.permute.xlu0 %3091
    %v3117 = vsel %vm1943, %v1559, %v2950
    %v3118 = vsel %vm1943, %v1560, %v2952
    %v3119 = vsel %vm1943, %v1561, %v2954
    %v3120 = vsel %vm1943, %v1562, %v2956
    %v3121 = vsel %vm1943, %v1563, %v2958
    %v3122 = vsel %vm1943, %v1564, %v2960
    %v3123 = vsel %vm1943, %v1565, %v2962
    %v3124 = vsel %vm1943, %v1566, %v2964
    %v3125 = vsel %vm1943, %v1567, %v2966
    %v3126 = vsel %vm1943, %v1568, %v2968
    %v3127 = vsel %vm1943, %v1569, %v2970
    %v3128 = vsel %vm1943, %v1570, %v2972
    %v3129 = vsel %vm1943, %v1571, %v2974
    %v3130 = vsel %vm1943, %v1572, %v2976
    %v3131 = vsel %vm1943, %v1573, %v2978
    %v3132 = vsel %vm1943, %v1574, %v2980
    %v3133 = vsel %vm1943, %v1575, %v2982
    %v3134 = vsel %vm1943, %v1576, %v2984
    %v3135 = vsel %vm1943, %v1577, %v2986
    %v3136 = vsel %vm1943, %v1578, %v2988
    %v3137 = vsel %vm1943, %v1579, %v2990
    %v3138 = vsel %vm1943, %v1580, %v2992
    %v3139 = vsel %vm1943, %v1581, %v2994
    %v3140 = vsel %vm1943, %v1582, %v2996
    %v3141 = vsel %vm1363, %v3117, %v3046
    %v3142 = vsel %vm1363, %v3118, %v3048
    %v3143 = vsel %vm1363, %v3119, %v3050
    %v3144 = vsel %vm1363, %v3120, %v3052
    %v3145 = vsel %vm1363, %v3121, %v3054
    %v3146 = vsel %vm1363, %v3122, %v3056
    %v3147 = vsel %vm1363, %v3123, %v3058
    %v3148 = vsel %vm1363, %v3124, %v3060
    %v3149 = vsel %vm1363, %v3125, %v3062
    %v3150 = vsel %vm1363, %v3126, %v3064
    %v3151 = vsel %vm1363, %v3127, %v3066
    %v3152 = vsel %vm1363, %v3128, %v3068
    %v3153 = vsel %vm1363, %v3129, %v3070
    %v3154 = vsel %vm1363, %v3130, %v3072
    %v3155 = vsel %vm1363, %v3131, %v3074
    %v3156 = vsel %vm1363, %v3132, %v3076
    %v3157 = vsel %vm1363, %v3133, %v3078
    %v3158 = vsel %vm1363, %v3134, %v3080
    %v3159 = vsel %vm1363, %v3135, %v3082
    %v3160 = vsel %vm1363, %v3136, %v3084
    %v3161 = vsel %vm1363, %v3137, %v3086
    %v3162 = vsel %vm1363, %v3138, %v3088
    %v3163 = vsel %vm1363, %v3139, %v3090
    %v3164 = vsel %vm1363, %v3140, %v3092
    %v3165 = vsel %vm2020, %v3141, %v1559
    %v3166 = vsel %vm2020, %v3142, %v1560
    %v3167 = vsel %vm2020, %v3143, %v1561
    %v3168 = vsel %vm2020, %v3144, %v1562
    %v3169 = vsel %vm2020, %v3145, %v1563
    %v3170 = vsel %vm2020, %v3146, %v1564
    %v3171 = vsel %vm2020, %v3147, %v1565
    %v3172 = vsel %vm2020, %v3148, %v1566
    %v3173 = vsel %vm2020, %v3149, %v1567
    %v3174 = vsel %vm2020, %v3150, %v1568
    %v3175 = vsel %vm2020, %v3151, %v1569
    %v3176 = vsel %vm2020, %v3152, %v1570
    %v3177 = vsel %vm2020, %v3153, %v1571
    %v3178 = vsel %vm2020, %v3154, %v1572
    %v3179 = vsel %vm2020, %v3155, %v1573
    %v3180 = vsel %vm2020, %v3156, %v1574
    %v3181 = vsel %vm2020, %v3157, %v1575
    %v3182 = vsel %vm2020, %v3158, %v1576
    %v3183 = vsel %vm2020, %v3159, %v1577
    %v3184 = vsel %vm2020, %v3160, %v1578
    %v3185 = vsel %vm2020, %v3161, %v1579
    %v3186 = vsel %vm2020, %v3162, %v1580
    %v3187 = vsel %vm2020, %v3163, %v1581
    %v3188 = vsel %vm2020, %v3164, %v1582
    %vm3189 = vcmp.gt.f32.partialorder %v3165, 0.0
    %vm3190 = vcmp.gt.f32.partialorder %v3166, 0.0
    %vm3191 = vcmp.gt.f32.partialorder %v3167, 0.0
    %vm3192 = vcmp.gt.f32.partialorder %v3168, 0.0
    %vm3193 = vcmp.gt.f32.partialorder %v3169, 0.0
    %vm3194 = vcmp.gt.f32.partialorder %v3170, 0.0
    %vm3195 = vcmp.gt.f32.partialorder %v3171, 0.0
    %vm3196 = vcmp.gt.f32.partialorder %v3172, 0.0
    %vm3197 = vcmp.gt.f32.partialorder %v3173, 0.0
    %vm3198 = vcmp.gt.f32.partialorder %v3174, 0.0
    %vm3199 = vcmp.gt.f32.partialorder %v3175, 0.0
    %vm3200 = vcmp.gt.f32.partialorder %v3176, 0.0
    %vm3201 = vcmp.gt.f32.partialorder %v3177, 0.0
    %vm3202 = vcmp.gt.f32.partialorder %v3178, 0.0
    %vm3203 = vcmp.gt.f32.partialorder %v3179, 0.0
    %vm3204 = vcmp.gt.f32.partialorder %v3180, 0.0
    %vm3205 = vcmp.gt.f32.partialorder %v3181, 0.0
    %vm3206 = vcmp.gt.f32.partialorder %v3182, 0.0
    %vm3207 = vcmp.gt.f32.partialorder %v3183, 0.0
    %vm3208 = vcmp.gt.f32.partialorder %v3184, 0.0
    %vm3209 = vcmp.gt.f32.partialorder %v3185, 0.0
    %vm3210 = vcmp.gt.f32.partialorder %v3186, 0.0
    %vm3211 = vcmp.gt.f32.partialorder %v3187, 0.0
    %vm3212 = vcmp.gt.f32.partialorder %v3188, 0.0
    %v3213 = vmul.f32 %v3165, 0.01
    %v3214 = vmul.f32 %v3166, 0.01
    %v3215 = vmul.f32 %v3167, 0.01
    %v3216 = vmul.f32 %v3168, 0.01
    %v3217 = vmul.f32 %v3169, 0.01
    %v3218 = vmul.f32 %v3170, 0.01
    %v3219 = vmul.f32 %v3171, 0.01
    %v3220 = vmul.f32 %v3172, 0.01
    %v3221 = vmul.f32 %v3173, 0.01
    %v3222 = vmul.f32 %v3174, 0.01
    %v3223 = vmul.f32 %v3175, 0.01
    %v3224 = vmul.f32 %v3176, 0.01
    %v3225 = vmul.f32 %v3177, 0.01
    %v3226 = vmul.f32 %v3178, 0.01
    %v3227 = vmul.f32 %v3179, 0.01
    %v3228 = vmul.f32 %v3180, 0.01
    %v3229 = vmul.f32 %v3181, 0.01
    %v3230 = vmul.f32 %v3182, 0.01
    %v3231 = vmul.f32 %v3183, 0.01
    %v3232 = vmul.f32 %v3184, 0.01
    %v3233 = vmul.f32 %v3185, 0.01
    %v3234 = vmul.f32 %v3186, 0.01
    %v3235 = vmul.f32 %v3187, 0.01
    %v3236 = vmul.f32 %v3188, 0.01
    %v3237 = vsel %vm3189, %v3165, %v3213
    %v3238 = vsel %vm3190, %v3166, %v3214
    %v3239 = vsel %vm3191, %v3167, %v3215
    %v3240 = vsel %vm3192, %v3168, %v3216
    %v3241 = vsel %vm3193, %v3169, %v3217
    %v3242 = vsel %vm3194, %v3170, %v3218
    %v3243 = vsel %vm3195, %v3171, %v3219
    %v3244 = vsel %vm3196, %v3172, %v3220
    %v3245 = vsel %vm3197, %v3173, %v3221
    %v3246 = vsel %vm3198, %v3174, %v3222
    %v3247 = vsel %vm3199, %v3175, %v3223
    %v3248 = vsel %vm3200, %v3176, %v3224
    %v3249 = vsel %vm3201, %v3177, %v3225
    %v3250 = vsel %vm3202, %v3178, %v3226
    %v3251 = vsel %vm3203, %v3179, %v3227
    %v3252 = vsel %vm3204, %v3180, %v3228
    %v3253 = vsel %vm3205, %v3181, %v3229
    %v3254 = vsel %vm3206, %v3182, %v3230
    %v3255 = vsel %vm3207, %v3183, %v3231
    %v3256 = vsel %vm3208, %v3184, %v3232
    %v3257 = vsel %vm3209, %v3185, %v3233
    %v3258 = vsel %vm3210, %v3186, %v3234
    %v3259 = vsel %vm3211, %v3187, %v3235
    %v3260 = vsel %vm3212, %v3188, %v3236
    %v3261 = vmul.f32 %v3237, %v1001
    %v3262 = vmul.f32 %v3238, %v1002
    %v3263 = vmul.f32 %v3239, %v1003
    %v3264 = vmul.f32 %v3240, %v1004
    %v3265 = vmul.f32 %v3241, %v1005
    %v3266 = vmul.f32 %v3242, %v1006
    %v3267 = vmul.f32 %v3243, %v1007
    %v3268 = vmul.f32 %v3244, %v1008
    %v3269 = vmul.f32 %v3245, %v1009
    %v3270 = vmul.f32 %v3246, %v1010
    %v3271 = vmul.f32 %v3247, %v1011
    %v3272 = vmul.f32 %v3248, %v1012
    %v3273 = vmul.f32 %v3249, %v1013
    %v3274 = vmul.f32 %v3250, %v1014
    %v3275 = vmul.f32 %v3251, %v1015
    %v3276 = vmul.f32 %v3252, %v1016
    %v3277 = vmul.f32 %v3253, %v1017
    %v3278 = vmul.f32 %v3254, %v1018
    %v3279 = vmul.f32 %v3255, %v1019
    %v3280 = vmul.f32 %v3256, %v1020
    %v3281 = vmul.f32 %v3257, %v1021
    %v3282 = vmul.f32 %v3258, %v1022
    %v3283 = vmul.f32 %v3259, %v1023
    %v3284 = vmul.f32 %v3260, %v1024
    %v3285 = vrot.slane %v3261, 7
    %v3286 = vrot.slane %v3262, 7
    %v3287 = vrot.slane %v3263, 7
    %v3288 = vrot.slane %v3264, 7
    %v3289 = vrot.slane %v3265, 7
    %v3290 = vrot.slane %v3266, 7
    %v3291 = vrot.slane %v3267, 7
    %v3292 = vrot.slane %v3268, 7
    %v3293 = vrot.slane %v3269, 7
    %v3294 = vrot.slane %v3270, 7
    %v3295 = vrot.slane %v3271, 7
    %v3296 = vrot.slane %v3272, 7
    %v3297 = vrot.slane %v3273, 7
    %v3298 = vrot.slane %v3274, 7
    %v3299 = vrot.slane %v3275, 7
    %v3300 = vrot.slane %v3276, 7
    %v3301 = vrot.slane %v3277, 7
    %v3302 = vrot.slane %v3278, 7
    %v3303 = vrot.slane %v3279, 7
    %v3304 = vrot.slane %v3280, 7
    %v3305 = vrot.slane %v3281, 7
    %v3306 = vrot.slane %v3282, 7
    %v3307 = vrot.slane %v3283, 7
    %v3308 = vrot.slane %v3284, 7
    %v3309 = vsel %vm1097, %v3307, %v3308
    %v3310 = vsel %vm1097, %v3306, %v3307
    %v3311 = vsel %vm1097, %v3305, %v3306
    %v3312 = vsel %vm1097, %v3304, %v3305
    %v3313 = vsel %vm1097, %v3303, %v3304
    %v3314 = vsel %vm1097, %v3302, %v3303
    %v3315 = vsel %vm1097, %v3301, %v3302
    %v3316 = vsel %vm1097, %v3300, %v3301
    %v3317 = vsel %vm1097, %v3299, %v3300
    %v3318 = vsel %vm1097, %v3298, %v3299
    %v3319 = vsel %vm1097, %v3297, %v3298
    %v3320 = vsel %vm1097, %v3296, %v3297
    %v3321 = vsel %vm1097, %v3295, %v3296
    %v3322 = vsel %vm1097, %v3294, %v3295
    %v3323 = vsel %vm1097, %v3293, %v3294
    %v3324 = vsel %vm1097, %v3292, %v3293
    %v3325 = vsel %vm1097, %v3291, %v3292
    %v3326 = vsel %vm1097, %v3290, %v3291
    %v3327 = vsel %vm1097, %v3289, %v3290
    %v3328 = vsel %vm1097, %v3288, %v3289
    %v3329 = vsel %vm1097, %v3287, %v3288
    %v3330 = vsel %vm1097, %v3286, %v3287
    %v3331 = vsel %vm1097, %v3285, %v3286
    %v3332 = vsel %vm1097, %v3308, %v3285
    %v3333 = vrot.slane %v3261, 1
    %v3334 = vrot.slane %v3262, 1
    %v3335 = vrot.slane %v3263, 1
    %v3336 = vrot.slane %v3264, 1
    %v3337 = vrot.slane %v3265, 1
    %v3338 = vrot.slane %v3266, 1
    %v3339 = vrot.slane %v3267, 1
    %v3340 = vrot.slane %v3268, 1
    %v3341 = vrot.slane %v3269, 1
    %v3342 = vrot.slane %v3270, 1
    %v3343 = vrot.slane %v3271, 1
    %v3344 = vrot.slane %v3272, 1
    %v3345 = vrot.slane %v3273, 1
    %v3346 = vrot.slane %v3274, 1
    %v3347 = vrot.slane %v3275, 1
    %v3348 = vrot.slane %v3276, 1
    %v3349 = vrot.slane %v3277, 1
    %v3350 = vrot.slane %v3278, 1
    %v3351 = vrot.slane %v3279, 1
    %v3352 = vrot.slane %v3280, 1
    %v3353 = vrot.slane %v3281, 1
    %v3354 = vrot.slane %v3282, 1
    %v3355 = vrot.slane %v3283, 1
    %v3356 = vrot.slane %v3284, 1
    %v3357 = vsel %vm1146, %v3355, %v3356
    %v3358 = vsel %vm1146, %v3354, %v3355
    %v3359 = vsel %vm1146, %v3353, %v3354
    %v3360 = vsel %vm1146, %v3352, %v3353
    %v3361 = vsel %vm1146, %v3351, %v3352
    %v3362 = vsel %vm1146, %v3350, %v3351
    %v3363 = vsel %vm1146, %v3349, %v3350
    %v3364 = vsel %vm1146, %v3348, %v3349
    %v3365 = vsel %vm1146, %v3347, %v3348
    %v3366 = vsel %vm1146, %v3346, %v3347
    %v3367 = vsel %vm1146, %v3345, %v3346
    %v3368 = vsel %vm1146, %v3344, %v3345
    %v3369 = vsel %vm1146, %v3343, %v3344
    %v3370 = vsel %vm1146, %v3342, %v3343
    %v3371 = vsel %vm1146, %v3341, %v3342
    %v3372 = vsel %vm1146, %v3340, %v3341
    %v3373 = vsel %vm1146, %v3339, %v3340
    %v3374 = vsel %vm1146, %v3338, %v3339
    %v3375 = vsel %vm1146, %v3337, %v3338
    %v3376 = vsel %vm1146, %v3336, %v3337
    %v3377 = vsel %vm1146, %v3335, %v3336
    %v3378 = vsel %vm1146, %v3334, %v3335
    %v3379 = vsel %vm1146, %v3333, %v3334
    %v3380 = vsel %vm1146, %v3356, %v3333
    %3405 = vrot.lane.b32.xlu0 %v3261, 32
    %v3406 = vpop.permute.xlu0 %3405
    %3407 = vrot.lane.b32.xlu0 %v3262, 32
    %v3408 = vpop.permute.xlu0 %3407
    %3409 = vrot.lane.b32.xlu0 %v3263, 32
    %v3410 = vpop.permute.xlu0 %3409
    %3411 = vrot.lane.b32.xlu0 %v3264, 32
    %v3412 = vpop.permute.xlu0 %3411
    %3413 = vrot.lane.b32.xlu0 %v3265, 32
    %v3414 = vpop.permute.xlu0 %3413
    %3415 = vrot.lane.b32.xlu0 %v3266, 32
    %v3416 = vpop.permute.xlu0 %3415
    %3417 = vrot.lane.b32.xlu0 %v3267, 32
    %v3418 = vpop.permute.xlu0 %3417
    %3419 = vrot.lane.b32.xlu0 %v3268, 32
    %v3420 = vpop.permute.xlu0 %3419
    %3421 = vrot.lane.b32.xlu0 %v3269, 32
    %v3422 = vpop.permute.xlu0 %3421
    %3423 = vrot.lane.b32.xlu0 %v3270, 32
    %v3424 = vpop.permute.xlu0 %3423
    %3425 = vrot.lane.b32.xlu0 %v3271, 32
    %v3426 = vpop.permute.xlu0 %3425
    %3427 = vrot.lane.b32.xlu0 %v3272, 32
    %v3428 = vpop.permute.xlu0 %3427
    %3429 = vrot.lane.b32.xlu0 %v3273, 32
    %v3430 = vpop.permute.xlu0 %3429
    %3431 = vrot.lane.b32.xlu0 %v3274, 32
    %v3432 = vpop.permute.xlu0 %3431
    %3433 = vrot.lane.b32.xlu0 %v3275, 32
    %v3434 = vpop.permute.xlu0 %3433
    %3435 = vrot.lane.b32.xlu0 %v3276, 32
    %v3436 = vpop.permute.xlu0 %3435
    %3437 = vrot.lane.b32.xlu0 %v3277, 32
    %v3438 = vpop.permute.xlu0 %3437
    %3439 = vrot.lane.b32.xlu0 %v3278, 32
    %v3440 = vpop.permute.xlu0 %3439
    %3441 = vrot.lane.b32.xlu0 %v3279, 32
    %v3442 = vpop.permute.xlu0 %3441
    %3443 = vrot.lane.b32.xlu0 %v3280, 32
    %v3444 = vpop.permute.xlu0 %3443
    %3445 = vrot.lane.b32.xlu0 %v3281, 32
    %v3446 = vpop.permute.xlu0 %3445
    %3447 = vrot.lane.b32.xlu0 %v3282, 32
    %v3448 = vpop.permute.xlu0 %3447
    %3449 = vrot.lane.b32.xlu0 %v3283, 32
    %v3450 = vpop.permute.xlu0 %3449
    %3451 = vrot.lane.b32.xlu0 %v3284, 32
    %v3452 = vpop.permute.xlu0 %3451
    %3501 = vrot.lane.b32.xlu0 %v3379, 64
    %v3502 = vpop.permute.xlu0 %3501
    %3503 = vrot.lane.b32.xlu0 %v3378, 64
    %v3504 = vpop.permute.xlu0 %3503
    %3505 = vrot.lane.b32.xlu0 %v3377, 64
    %v3506 = vpop.permute.xlu0 %3505
    %3507 = vrot.lane.b32.xlu0 %v3376, 64
    %v3508 = vpop.permute.xlu0 %3507
    %3509 = vrot.lane.b32.xlu0 %v3375, 64
    %v3510 = vpop.permute.xlu0 %3509
    %3511 = vrot.lane.b32.xlu0 %v3374, 64
    %v3512 = vpop.permute.xlu0 %3511
    %3513 = vrot.lane.b32.xlu0 %v3373, 64
    %v3514 = vpop.permute.xlu0 %3513
    %3515 = vrot.lane.b32.xlu0 %v3372, 64
    %v3516 = vpop.permute.xlu0 %3515
    %3517 = vrot.lane.b32.xlu0 %v3371, 64
    %v3518 = vpop.permute.xlu0 %3517
    %3519 = vrot.lane.b32.xlu0 %v3370, 64
    %v3520 = vpop.permute.xlu0 %3519
    %3521 = vrot.lane.b32.xlu0 %v3369, 64
    %v3522 = vpop.permute.xlu0 %3521
    %3523 = vrot.lane.b32.xlu0 %v3368, 64
    %v3524 = vpop.permute.xlu0 %3523
    %3525 = vrot.lane.b32.xlu0 %v3367, 64
    %v3526 = vpop.permute.xlu0 %3525
    %3527 = vrot.lane.b32.xlu0 %v3366, 64
    %v3528 = vpop.permute.xlu0 %3527
    %3529 = vrot.lane.b32.xlu0 %v3365, 64
    %v3530 = vpop.permute.xlu0 %3529
    %3531 = vrot.lane.b32.xlu0 %v3364, 64
    %v3532 = vpop.permute.xlu0 %3531
    %3533 = vrot.lane.b32.xlu0 %v3363, 64
    %v3534 = vpop.permute.xlu0 %3533
    %3535 = vrot.lane.b32.xlu0 %v3362, 64
    %v3536 = vpop.permute.xlu0 %3535
    %3537 = vrot.lane.b32.xlu0 %v3361, 64
    %v3538 = vpop.permute.xlu0 %3537
    %3539 = vrot.lane.b32.xlu0 %v3360, 64
    %v3540 = vpop.permute.xlu0 %3539
    %3541 = vrot.lane.b32.xlu0 %v3359, 64
    %v3542 = vpop.permute.xlu0 %3541
    %3543 = vrot.lane.b32.xlu0 %v3358, 64
    %v3544 = vpop.permute.xlu0 %3543
    %3545 = vrot.lane.b32.xlu0 %v3357, 64
    %v3546 = vpop.permute.xlu0 %3545
    %3547 = vrot.lane.b32.xlu0 %v3380, 64
    %v3548 = vpop.permute.xlu0 %3547
    %v3573 = vsel %vm1388, %v3332, %v3406
    %v3574 = vsel %vm1388, %v3331, %v3408
    %v3575 = vsel %vm1388, %v3330, %v3410
    %v3576 = vsel %vm1388, %v3329, %v3412
    %v3577 = vsel %vm1388, %v3328, %v3414
    %v3578 = vsel %vm1388, %v3327, %v3416
    %v3579 = vsel %vm1388, %v3326, %v3418
    %v3580 = vsel %vm1388, %v3325, %v3420
    %v3581 = vsel %vm1388, %v3324, %v3422
    %v3582 = vsel %vm1388, %v3323, %v3424
    %v3583 = vsel %vm1388, %v3322, %v3426
    %v3584 = vsel %vm1388, %v3321, %v3428
    %v3585 = vsel %vm1388, %v3320, %v3430
    %v3586 = vsel %vm1388, %v3319, %v3432
    %v3587 = vsel %vm1388, %v3318, %v3434
    %v3588 = vsel %vm1388, %v3317, %v3436
    %v3589 = vsel %vm1388, %v3316, %v3438
    %v3590 = vsel %vm1388, %v3315, %v3440
    %v3591 = vsel %vm1388, %v3314, %v3442
    %v3592 = vsel %vm1388, %v3313, %v3444
    %v3593 = vsel %vm1388, %v3312, %v3446
    %v3594 = vsel %vm1388, %v3311, %v3448
    %v3595 = vsel %vm1388, %v3310, %v3450
    %v3596 = vsel %vm1388, %v3309, %v3452
    %vm3597 = vcmask 523264
    %v3598 = vsel %vm3597, %v3573, %v3502
    %v3599 = vsel %vm3597, %v3574, %v3504
    %v3600 = vsel %vm3597, %v3575, %v3506
    %v3601 = vsel %vm3597, %v3576, %v3508
    %v3602 = vsel %vm3597, %v3577, %v3510
    %v3603 = vsel %vm3597, %v3578, %v3512
    %v3604 = vsel %vm3597, %v3579, %v3514
    %v3605 = vsel %vm3597, %v3580, %v3516
    %v3606 = vsel %vm3597, %v3581, %v3518
    %v3607 = vsel %vm3597, %v3582, %v3520
    %v3608 = vsel %vm3597, %v3583, %v3522
    %v3609 = vsel %vm3597, %v3584, %v3524
    %v3610 = vsel %vm3597, %v3585, %v3526
    %v3611 = vsel %vm3597, %v3586, %v3528
    %v3612 = vsel %vm3597, %v3587, %v3530
    %v3613 = vsel %vm3597, %v3588, %v3532
    %v3614 = vsel %vm3597, %v3589, %v3534
    %v3615 = vsel %vm3597, %v3590, %v3536
    %v3616 = vsel %vm3597, %v3591, %v3538
    %v3617 = vsel %vm3597, %v3592, %v3540
    %v3618 = vsel %vm3597, %v3593, %v3542
    %v3619 = vsel %vm3597, %v3594, %v3544
    %v3620 = vsel %vm3597, %v3595, %v3546
    %v3621 = vsel %vm3597, %v3596, %v3548
    %v3622 = vpack.c.bf16 %v3599, %v3598
    %v3623 = vpack.c.bf16 %v3601, %v3600
    %v3624 = vpack.c.bf16 %v3603, %v3602
    %v3625 = vpack.c.bf16 %v3605, %v3604
    %v3626 = vpack.c.bf16 %v3607, %v3606
    %v3627 = vpack.c.bf16 %v3609, %v3608
    %v3628 = vpack.c.bf16 %v3611, %v3610
    %v3629 = vpack.c.bf16 %v3613, %v3612
    %v3630 = vpack.c.bf16 %v3615, %v3614
    %v3631 = vpack.c.bf16 %v3617, %v3616
    %v3632 = vpack.c.bf16 %v3619, %v3618
    %v3633 = vpack.c.bf16 %v3621, %v3620
    %v3634 = vld [vmem:[%s7] sm:$0xf]
    %v3635 = vld [vmem:[%s7 + $0x4] sm:$0xf]
    %v3636 = vld [vmem:[%s7 + $0x8] sm:$0xf]
    %v3637 = vld [vmem:[%s7 + $0xc] sm:$0xf]
    %v3638 = vld [vmem:[%s7 + $0x10] sm:$0xf]
    %v3639 = vld [vmem:[%s7 + $0x14] sm:$0xf]
    %v3640 = vld [vmem:[%s7 + $0x18] sm:$0xf]
    %v3641 = vld [vmem:[%s7 + $0x1c] sm:$0xf]
    %v3642 = vld [vmem:[%s7 + $0x20] sm:$0xf]
    %v3643 = vld [vmem:[%s7 + $0x24] sm:$0xf]
    %v3644 = vld [vmem:[%s7 + $0x28] sm:$0xf]
    %v3645 = vld [vmem:[%s7 + $0x2c] sm:$0xf]
    %v3646 = vld [vmem:[%s8] sm:$0x1]
    %v3648 = vperm.slane %v3646, 0
    %v3662 = vunpack.c.l.b16 %v3634
    %v3663 = vunpack.c.l.b16 %v3635
    %v3664 = vunpack.c.l.b16 %v3636
    %v3665 = vunpack.c.l.b16 %v3637
    %v3666 = vunpack.c.l.b16 %v3638
    %v3667 = vunpack.c.l.b16 %v3639
    %v3668 = vunpack.c.l.b16 %v3640
    %v3669 = vunpack.c.l.b16 %v3641
    %v3670 = vunpack.c.l.b16 %v3642
    %v3671 = vunpack.c.l.b16 %v3643
    %v3672 = vunpack.c.l.b16 %v3644
    %v3673 = vunpack.c.l.b16 %v3645
    %v3674 = vpack.c.b16 %v3663, %v3662
    %v3675 = vpack.c.b16 %v3665, %v3664
    %v3676 = vpack.c.b16 %v3667, %v3666
    %v3677 = vpack.c.b16 %v3669, %v3668
    %v3678 = vpack.c.b16 %v3671, %v3670
    %v3679 = vpack.c.b16 %v3673, %v3672
    %vm3686 = vcmask 785408
    %v3688 = vsel %vm3686, %v3622, 0
    %v3691 = vsel %vm3686, %v3623, 0
    %v3694 = vsel %vm3686, %v3624, 0
    %v3697 = vsel %vm3686, %v3625, 0
    %v3700 = vsel %vm3686, %v3626, 0
    %v3703 = vsel %vm3686, %v3627, 0
    %v3706 = vsel %vm3686, %v3628, 0
    %v3709 = vsel %vm3686, %v3629, 0
    %v3712 = vsel %vm3686, %v3630, 0
    %v3715 = vsel %vm3686, %v3631, 0
    %v3718 = vsel %vm3686, %v3632, 0
    %v3721 = vsel %vm3686, %v3633, 0
    %3723 = vmatpush.bf16.msra.mxu0 0
    %3724 = vmatpush.bf16.msra.mxu0 0
    %3725 = vmatpush.bf16.msra.mxu0 %v3679
    %3726 = vmatpush.bf16.msra.mxu0 %v3678
    %3727 = vmatpush.bf16.msra.mxu0 %v3677
    %3728 = vmatpush.bf16.msra.mxu0 %v3676
    %3729 = vmatpush.bf16.msra.mxu0 %v3675
    %3730 = vmatpush.bf16.msra.mxu0 %v3674
    %3731 = vmatmul.bf16.gmra.mxu0 %v3688
    %v3732 = vpop.f32.mrf.mxu0
    %v3733 = vadd.f32 %v3648, %v3732
    %v3734 = vpop.f32.mrf.mxu0
    %v3735 = vadd.f32 %v3648, %v3734
    %3736 = vmatmul.bf16.gmra.mxu0 %v3691
    %v3737 = vpop.f32.mrf.mxu0
    %v3738 = vadd.f32 %v3648, %v3737
    %v3739 = vpop.f32.mrf.mxu0
    %v3740 = vadd.f32 %v3648, %v3739
    %3741 = vmatmul.bf16.gmra.mxu0 %v3694
    %v3742 = vpop.f32.mrf.mxu0
    %v3743 = vadd.f32 %v3648, %v3742
    %v3744 = vpop.f32.mrf.mxu0
    %v3745 = vadd.f32 %v3648, %v3744
    %3746 = vmatmul.bf16.gmra.mxu0 %v3697
    %v3747 = vpop.f32.mrf.mxu0
    %v3748 = vadd.f32 %v3648, %v3747
    %v3749 = vpop.f32.mrf.mxu0
    %v3750 = vadd.f32 %v3648, %v3749
    %3751 = vmatmul.bf16.gmra.mxu0 %v3700
    %v3752 = vpop.f32.mrf.mxu0
    %v3753 = vadd.f32 %v3648, %v3752
    %v3754 = vpop.f32.mrf.mxu0
    %v3755 = vadd.f32 %v3648, %v3754
    %3756 = vmatmul.bf16.gmra.mxu0 %v3703
    %v3757 = vpop.f32.mrf.mxu0
    %v3758 = vadd.f32 %v3648, %v3757
    %v3759 = vpop.f32.mrf.mxu0
    %v3760 = vadd.f32 %v3648, %v3759
    %3761 = vmatmul.bf16.gmra.mxu0 %v3706
    %v3762 = vpop.f32.mrf.mxu0
    %v3763 = vadd.f32 %v3648, %v3762
    %v3764 = vpop.f32.mrf.mxu0
    %v3765 = vadd.f32 %v3648, %v3764
    %3766 = vmatmul.bf16.gmra.mxu0 %v3709
    %v3767 = vpop.f32.mrf.mxu0
    %v3768 = vadd.f32 %v3648, %v3767
    %v3769 = vpop.f32.mrf.mxu0
    %v3770 = vadd.f32 %v3648, %v3769
    %3771 = vmatmul.bf16.gmra.mxu0 %v3712
    %v3772 = vpop.f32.mrf.mxu0
    %v3773 = vadd.f32 %v3648, %v3772
    %v3774 = vpop.f32.mrf.mxu0
    %v3775 = vadd.f32 %v3648, %v3774
    %3776 = vmatmul.bf16.gmra.mxu0 %v3715
    %v3777 = vpop.f32.mrf.mxu0
    %v3778 = vadd.f32 %v3648, %v3777
    %v3779 = vpop.f32.mrf.mxu0
    %v3780 = vadd.f32 %v3648, %v3779
    %3781 = vmatmul.bf16.gmra.mxu0 %v3718
    %v3782 = vpop.f32.mrf.mxu0
    %v3783 = vadd.f32 %v3648, %v3782
    %v3784 = vpop.f32.mrf.mxu0
    %v3785 = vadd.f32 %v3648, %v3784
    %3786 = vmatmul.bf16.gmra.mxu0 %v3721
    %v3787 = vpop.f32.mrf.mxu0
    %v3788 = vadd.f32 %v3648, %v3787
    %v3789 = vpop.f32.mrf.mxu0
    %v3790 = vadd.f32 %v3648, %v3789
    %3791 = vdwg.mxu0
    %v3792 = vmul.f32 %v3733, %v1001
    %v3793 = vmul.f32 %v3735, %v1002
    %v3794 = vmul.f32 %v3738, %v1003
    %v3795 = vmul.f32 %v3740, %v1004
    %v3796 = vmul.f32 %v3743, %v1005
    %v3797 = vmul.f32 %v3745, %v1006
    %v3798 = vmul.f32 %v3748, %v1007
    %v3799 = vmul.f32 %v3750, %v1008
    %v3800 = vmul.f32 %v3753, %v1009
    %v3801 = vmul.f32 %v3755, %v1010
    %v3802 = vmul.f32 %v3758, %v1011
    %v3803 = vmul.f32 %v3760, %v1012
    %v3804 = vmul.f32 %v3763, %v1013
    %v3805 = vmul.f32 %v3765, %v1014
    %v3806 = vmul.f32 %v3768, %v1015
    %v3807 = vmul.f32 %v3770, %v1016
    %v3808 = vmul.f32 %v3773, %v1017
    %v3809 = vmul.f32 %v3775, %v1018
    %v3810 = vmul.f32 %v3778, %v1019
    %v3811 = vmul.f32 %v3780, %v1020
    %v3812 = vmul.f32 %v3783, %v1021
    %v3813 = vmul.f32 %v3785, %v1022
    %v3814 = vmul.f32 %v3788, %v1023
    %v3815 = vmul.f32 %v3790, %v1024
    %vm3816 = vcmp.gt.f32.partialorder %v3792, 0.0
    %vm3817 = vcmp.gt.f32.partialorder %v3793, 0.0
    %vm3818 = vcmp.gt.f32.partialorder %v3794, 0.0
    %vm3819 = vcmp.gt.f32.partialorder %v3795, 0.0
    %vm3820 = vcmp.gt.f32.partialorder %v3796, 0.0
    %vm3821 = vcmp.gt.f32.partialorder %v3797, 0.0
    %vm3822 = vcmp.gt.f32.partialorder %v3798, 0.0
    %vm3823 = vcmp.gt.f32.partialorder %v3799, 0.0
    %vm3824 = vcmp.gt.f32.partialorder %v3800, 0.0
    %vm3825 = vcmp.gt.f32.partialorder %v3801, 0.0
    %vm3826 = vcmp.gt.f32.partialorder %v3802, 0.0
    %vm3827 = vcmp.gt.f32.partialorder %v3803, 0.0
    %vm3828 = vcmp.gt.f32.partialorder %v3804, 0.0
    %vm3829 = vcmp.gt.f32.partialorder %v3805, 0.0
    %vm3830 = vcmp.gt.f32.partialorder %v3806, 0.0
    %vm3831 = vcmp.gt.f32.partialorder %v3807, 0.0
    %vm3832 = vcmp.gt.f32.partialorder %v3808, 0.0
    %vm3833 = vcmp.gt.f32.partialorder %v3809, 0.0
    %vm3834 = vcmp.gt.f32.partialorder %v3810, 0.0
    %vm3835 = vcmp.gt.f32.partialorder %v3811, 0.0
    %vm3836 = vcmp.gt.f32.partialorder %v3812, 0.0
    %vm3837 = vcmp.gt.f32.partialorder %v3813, 0.0
    %vm3838 = vcmp.gt.f32.partialorder %v3814, 0.0
    %vm3839 = vcmp.gt.f32.partialorder %v3815, 0.0
    %v3840 = vmul.f32 %v3792, 0.01
    %v3841 = vmul.f32 %v3793, 0.01
    %v3842 = vmul.f32 %v3794, 0.01
    %v3843 = vmul.f32 %v3795, 0.01
    %v3844 = vmul.f32 %v3796, 0.01
    %v3845 = vmul.f32 %v3797, 0.01
    %v3846 = vmul.f32 %v3798, 0.01
    %v3847 = vmul.f32 %v3799, 0.01
    %v3848 = vmul.f32 %v3800, 0.01
    %v3849 = vmul.f32 %v3801, 0.01
    %v3850 = vmul.f32 %v3802, 0.01
    %v3851 = vmul.f32 %v3803, 0.01
    %v3852 = vmul.f32 %v3804, 0.01
    %v3853 = vmul.f32 %v3805, 0.01
    %v3854 = vmul.f32 %v3806, 0.01
    %v3855 = vmul.f32 %v3807, 0.01
    %v3856 = vmul.f32 %v3808, 0.01
    %v3857 = vmul.f32 %v3809, 0.01
    %v3858 = vmul.f32 %v3810, 0.01
    %v3859 = vmul.f32 %v3811, 0.01
    %v3860 = vmul.f32 %v3812, 0.01
    %v3861 = vmul.f32 %v3813, 0.01
    %v3862 = vmul.f32 %v3814, 0.01
    %v3863 = vmul.f32 %v3815, 0.01
    %v3864 = vsel %vm3816, %v3792, %v3840
    %v3865 = vsel %vm3817, %v3793, %v3841
    %v3866 = vsel %vm3818, %v3794, %v3842
    %v3867 = vsel %vm3819, %v3795, %v3843
    %v3868 = vsel %vm3820, %v3796, %v3844
    %v3869 = vsel %vm3821, %v3797, %v3845
    %v3870 = vsel %vm3822, %v3798, %v3846
    %v3871 = vsel %vm3823, %v3799, %v3847
    %v3872 = vsel %vm3824, %v3800, %v3848
    %v3873 = vsel %vm3825, %v3801, %v3849
    %v3874 = vsel %vm3826, %v3802, %v3850
    %v3875 = vsel %vm3827, %v3803, %v3851
    %v3876 = vsel %vm3828, %v3804, %v3852
    %v3877 = vsel %vm3829, %v3805, %v3853
    %v3878 = vsel %vm3830, %v3806, %v3854
    %v3879 = vsel %vm3831, %v3807, %v3855
    %v3880 = vsel %vm3832, %v3808, %v3856
    %v3881 = vsel %vm3833, %v3809, %v3857
    %v3882 = vsel %vm3834, %v3810, %v3858
    %v3883 = vsel %vm3835, %v3811, %v3859
    %v3884 = vsel %vm3836, %v3812, %v3860
    %v3885 = vsel %vm3837, %v3813, %v3861
    %v3886 = vsel %vm3838, %v3814, %v3862
    %v3887 = vsel %vm3839, %v3815, %v3863
    %3912 = vrot.lane.b32.xlu0 %v3864, 120
    %v3913 = vpop.permute.xlu0 %3912
    %3914 = vrot.lane.b32.xlu0 %v3865, 120
    %v3915 = vpop.permute.xlu0 %3914
    %3916 = vrot.lane.b32.xlu0 %v3866, 120
    %v3917 = vpop.permute.xlu0 %3916
    %3918 = vrot.lane.b32.xlu0 %v3867, 120
    %v3919 = vpop.permute.xlu0 %3918
    %3920 = vrot.lane.b32.xlu0 %v3868, 120
    %v3921 = vpop.permute.xlu0 %3920
    %3922 = vrot.lane.b32.xlu0 %v3869, 120
    %v3923 = vpop.permute.xlu0 %3922
    %3924 = vrot.lane.b32.xlu0 %v3870, 120
    %v3925 = vpop.permute.xlu0 %3924
    %3926 = vrot.lane.b32.xlu0 %v3871, 120
    %v3927 = vpop.permute.xlu0 %3926
    %3928 = vrot.lane.b32.xlu0 %v3872, 120
    %v3929 = vpop.permute.xlu0 %3928
    %3930 = vrot.lane.b32.xlu0 %v3873, 120
    %v3931 = vpop.permute.xlu0 %3930
    %3932 = vrot.lane.b32.xlu0 %v3874, 120
    %v3933 = vpop.permute.xlu0 %3932
    %3934 = vrot.lane.b32.xlu0 %v3875, 120
    %v3935 = vpop.permute.xlu0 %3934
    %3936 = vrot.lane.b32.xlu0 %v3876, 120
    %v3937 = vpop.permute.xlu0 %3936
    %3938 = vrot.lane.b32.xlu0 %v3877, 120
    %v3939 = vpop.permute.xlu0 %3938
    %3940 = vrot.lane.b32.xlu0 %v3878, 120
    %v3941 = vpop.permute.xlu0 %3940
    %3942 = vrot.lane.b32.xlu0 %v3879, 120
    %v3943 = vpop.permute.xlu0 %3942
    %3944 = vrot.lane.b32.xlu0 %v3880, 120
    %v3945 = vpop.permute.xlu0 %3944
    %3946 = vrot.lane.b32.xlu0 %v3881, 120
    %v3947 = vpop.permute.xlu0 %3946
    %3948 = vrot.lane.b32.xlu0 %v3882, 120
    %v3949 = vpop.permute.xlu0 %3948
    %3950 = vrot.lane.b32.xlu0 %v3883, 120
    %v3951 = vpop.permute.xlu0 %3950
    %3952 = vrot.lane.b32.xlu0 %v3884, 120
    %v3953 = vpop.permute.xlu0 %3952
    %3954 = vrot.lane.b32.xlu0 %v3885, 120
    %v3955 = vpop.permute.xlu0 %3954
    %3956 = vrot.lane.b32.xlu0 %v3886, 120
    %v3957 = vpop.permute.xlu0 %3956
    %3958 = vrot.lane.b32.xlu0 %v3887, 120
    %v3959 = vpop.permute.xlu0 %3958
    %v3984 = vrot.slane %v3913, 7
    %v3985 = vrot.slane %v3915, 7
    %v3986 = vrot.slane %v3917, 7
    %v3987 = vrot.slane %v3919, 7
    %v3988 = vrot.slane %v3921, 7
    %v3989 = vrot.slane %v3923, 7
    %v3990 = vrot.slane %v3925, 7
    %v3991 = vrot.slane %v3927, 7
    %v3992 = vrot.slane %v3929, 7
    %v3993 = vrot.slane %v3931, 7
    %v3994 = vrot.slane %v3933, 7
    %v3995 = vrot.slane %v3935, 7
    %v3996 = vrot.slane %v3937, 7
    %v3997 = vrot.slane %v3939, 7
    %v3998 = vrot.slane %v3941, 7
    %v3999 = vrot.slane %v3943, 7
    %v4000 = vrot.slane %v3945, 7
    %v4001 = vrot.slane %v3947, 7
    %v4002 = vrot.slane %v3949, 7
    %v4003 = vrot.slane %v3951, 7
    %v4004 = vrot.slane %v3953, 7
    %v4005 = vrot.slane %v3955, 7
    %v4006 = vrot.slane %v3957, 7
    %v4007 = vrot.slane %v3959, 7
    %v4008 = vsel %vm1097, %v4006, %v4007
    %v4009 = vsel %vm1097, %v4005, %v4006
    %v4010 = vsel %vm1097, %v4004, %v4005
    %v4011 = vsel %vm1097, %v4003, %v4004
    %v4012 = vsel %vm1097, %v4002, %v4003
    %v4013 = vsel %vm1097, %v4001, %v4002
    %v4014 = vsel %vm1097, %v4000, %v4001
    %v4015 = vsel %vm1097, %v3999, %v4000
    %v4016 = vsel %vm1097, %v3998, %v3999
    %v4017 = vsel %vm1097, %v3997, %v3998
    %v4018 = vsel %vm1097, %v3996, %v3997
    %v4019 = vsel %vm1097, %v3995, %v3996
    %v4020 = vsel %vm1097, %v3994, %v3995
    %v4021 = vsel %vm1097, %v3993, %v3994
    %v4022 = vsel %vm1097, %v3992, %v3993
    %v4023 = vsel %vm1097, %v3991, %v3992
    %v4024 = vsel %vm1097, %v3990, %v3991
    %v4025 = vsel %vm1097, %v3989, %v3990
    %v4026 = vsel %vm1097, %v3988, %v3989
    %v4027 = vsel %vm1097, %v3987, %v3988
    %v4028 = vsel %vm1097, %v3986, %v3987
    %v4029 = vsel %vm1097, %v3985, %v3986
    %v4030 = vsel %vm1097, %v3984, %v3985
    %v4031 = vsel %vm1097, %v4007, %v3984
    %v4032 = vrot.slane %v3913, 1
    %v4033 = vrot.slane %v3915, 1
    %v4034 = vrot.slane %v3917, 1
    %v4035 = vrot.slane %v3919, 1
    %v4036 = vrot.slane %v3921, 1
    %v4037 = vrot.slane %v3923, 1
    %v4038 = vrot.slane %v3925, 1
    %v4039 = vrot.slane %v3927, 1
    %v4040 = vrot.slane %v3929, 1
    %v4041 = vrot.slane %v3931, 1
    %v4042 = vrot.slane %v3933, 1
    %v4043 = vrot.slane %v3935, 1
    %v4044 = vrot.slane %v3937, 1
    %v4045 = vrot.slane %v3939, 1
    %v4046 = vrot.slane %v3941, 1
    %v4047 = vrot.slane %v3943, 1
    %v4048 = vrot.slane %v3945, 1
    %v4049 = vrot.slane %v3947, 1
    %v4050 = vrot.slane %v3949, 1
    %v4051 = vrot.slane %v3951, 1
    %v4052 = vrot.slane %v3953, 1
    %v4053 = vrot.slane %v3955, 1
    %v4054 = vrot.slane %v3957, 1
    %v4055 = vrot.slane %v3959, 1
    %v4056 = vsel %vm1146, %v4054, %v4055
    %v4057 = vsel %vm1146, %v4053, %v4054
    %v4058 = vsel %vm1146, %v4052, %v4053
    %v4059 = vsel %vm1146, %v4051, %v4052
    %v4060 = vsel %vm1146, %v4050, %v4051
    %v4061 = vsel %vm1146, %v4049, %v4050
    %v4062 = vsel %vm1146, %v4048, %v4049
    %v4063 = vsel %vm1146, %v4047, %v4048
    %v4064 = vsel %vm1146, %v4046, %v4047
    %v4065 = vsel %vm1146, %v4045, %v4046
    %v4066 = vsel %vm1146, %v4044, %v4045
    %v4067 = vsel %vm1146, %v4043, %v4044
    %v4068 = vsel %vm1146, %v4042, %v4043
    %v4069 = vsel %vm1146, %v4041, %v4042
    %v4070 = vsel %vm1146, %v4040, %v4041
    %v4071 = vsel %vm1146, %v4039, %v4040
    %v4072 = vsel %vm1146, %v4038, %v4039
    %v4073 = vsel %vm1146, %v4037, %v4038
    %v4074 = vsel %vm1146, %v4036, %v4037
    %v4075 = vsel %vm1146, %v4035, %v4036
    %v4076 = vsel %vm1146, %v4034, %v4035
    %v4077 = vsel %vm1146, %v4033, %v4034
    %v4078 = vsel %vm1146, %v4032, %v4033
    %v4079 = vsel %vm1146, %v4055, %v4032
    %4104 = vrot.lane.b32.xlu0 %v4078, 16
    %v4105 = vpop.permute.xlu0 %4104
    %4106 = vrot.lane.b32.xlu0 %v4077, 16
    %v4107 = vpop.permute.xlu0 %4106
    %4108 = vrot.lane.b32.xlu0 %v4076, 16
    %v4109 = vpop.permute.xlu0 %4108
    %4110 = vrot.lane.b32.xlu0 %v4075, 16
    %v4111 = vpop.permute.xlu0 %4110
    %4112 = vrot.lane.b32.xlu0 %v4074, 16
    %v4113 = vpop.permute.xlu0 %4112
    %4114 = vrot.lane.b32.xlu0 %v4073, 16
    %v4115 = vpop.permute.xlu0 %4114
    %4116 = vrot.lane.b32.xlu0 %v4072, 16
    %v4117 = vpop.permute.xlu0 %4116
    %4118 = vrot.lane.b32.xlu0 %v4071, 16
    %v4119 = vpop.permute.xlu0 %4118
    %4120 = vrot.lane.b32.xlu0 %v4070, 16
    %v4121 = vpop.permute.xlu0 %4120
    %4122 = vrot.lane.b32.xlu0 %v4069, 16
    %v4123 = vpop.permute.xlu0 %4122
    %4124 = vrot.lane.b32.xlu0 %v4068, 16
    %v4125 = vpop.permute.xlu0 %4124
    %4126 = vrot.lane.b32.xlu0 %v4067, 16
    %v4127 = vpop.permute.xlu0 %4126
    %4128 = vrot.lane.b32.xlu0 %v4066, 16
    %v4129 = vpop.permute.xlu0 %4128
    %4130 = vrot.lane.b32.xlu0 %v4065, 16
    %v4131 = vpop.permute.xlu0 %4130
    %4132 = vrot.lane.b32.xlu0 %v4064, 16
    %v4133 = vpop.permute.xlu0 %4132
    %4134 = vrot.lane.b32.xlu0 %v4063, 16
    %v4135 = vpop.permute.xlu0 %4134
    %4136 = vrot.lane.b32.xlu0 %v4062, 16
    %v4137 = vpop.permute.xlu0 %4136
    %4138 = vrot.lane.b32.xlu0 %v4061, 16
    %v4139 = vpop.permute.xlu0 %4138
    %4140 = vrot.lane.b32.xlu0 %v4060, 16
    %v4141 = vpop.permute.xlu0 %4140
    %4142 = vrot.lane.b32.xlu0 %v4059, 16
    %v4143 = vpop.permute.xlu0 %4142
    %4144 = vrot.lane.b32.xlu0 %v4058, 16
    %v4145 = vpop.permute.xlu0 %4144
    %4146 = vrot.lane.b32.xlu0 %v4057, 16
    %v4147 = vpop.permute.xlu0 %4146
    %4148 = vrot.lane.b32.xlu0 %v4056, 16
    %v4149 = vpop.permute.xlu0 %4148
    %4150 = vrot.lane.b32.xlu0 %v4079, 16
    %v4151 = vpop.permute.xlu0 %4150
    %v4176 = vsel %vm1943, %v4031, %v3864
    %v4177 = vsel %vm1943, %v4030, %v3865
    %v4178 = vsel %vm1943, %v4029, %v3866
    %v4179 = vsel %vm1943, %v4028, %v3867
    %v4180 = vsel %vm1943, %v4027, %v3868
    %v4181 = vsel %vm1943, %v4026, %v3869
    %v4182 = vsel %vm1943, %v4025, %v3870
    %v4183 = vsel %vm1943, %v4024, %v3871
    %v4184 = vsel %vm1943, %v4023, %v3872
    %v4185 = vsel %vm1943, %v4022, %v3873
    %v4186 = vsel %vm1943, %v4021, %v3874
    %v4187 = vsel %vm1943, %v4020, %v3875
    %v4188 = vsel %vm1943, %v4019, %v3876
    %v4189 = vsel %vm1943, %v4018, %v3877
    %v4190 = vsel %vm1943, %v4017, %v3878
    %v4191 = vsel %vm1943, %v4016, %v3879
    %v4192 = vsel %vm1943, %v4015, %v3880
    %v4193 = vsel %vm1943, %v4014, %v3881
    %v4194 = vsel %vm1943, %v4013, %v3882
    %v4195 = vsel %vm1943, %v4012, %v3883
    %v4196 = vsel %vm1943, %v4011, %v3884
    %v4197 = vsel %vm1943, %v4010, %v3885
    %v4198 = vsel %vm1943, %v4009, %v3886
    %v4199 = vsel %vm1943, %v4008, %v3887
    %v4200 = vsel %vm1363, %v4176, %v4105
    %v4201 = vsel %vm1363, %v4177, %v4107
    %v4202 = vsel %vm1363, %v4178, %v4109
    %v4203 = vsel %vm1363, %v4179, %v4111
    %v4204 = vsel %vm1363, %v4180, %v4113
    %v4205 = vsel %vm1363, %v4181, %v4115
    %v4206 = vsel %vm1363, %v4182, %v4117
    %v4207 = vsel %vm1363, %v4183, %v4119
    %v4208 = vsel %vm1363, %v4184, %v4121
    %v4209 = vsel %vm1363, %v4185, %v4123
    %v4210 = vsel %vm1363, %v4186, %v4125
    %v4211 = vsel %vm1363, %v4187, %v4127
    %v4212 = vsel %vm1363, %v4188, %v4129
    %v4213 = vsel %vm1363, %v4189, %v4131
    %v4214 = vsel %vm1363, %v4190, %v4133
    %v4215 = vsel %vm1363, %v4191, %v4135
    %v4216 = vsel %vm1363, %v4192, %v4137
    %v4217 = vsel %vm1363, %v4193, %v4139
    %v4218 = vsel %vm1363, %v4194, %v4141
    %v4219 = vsel %vm1363, %v4195, %v4143
    %v4220 = vsel %vm1363, %v4196, %v4145
    %v4221 = vsel %vm1363, %v4197, %v4147
    %v4222 = vsel %vm1363, %v4198, %v4149
    %v4223 = vsel %vm1363, %v4199, %v4151
    %v4224 = vpack.c.bf16 %v4201, %v4200
    %v4225 = vpack.c.bf16 %v4203, %v4202
    %v4226 = vpack.c.bf16 %v4205, %v4204
    %v4227 = vpack.c.bf16 %v4207, %v4206
    %v4228 = vpack.c.bf16 %v4209, %v4208
    %v4229 = vpack.c.bf16 %v4211, %v4210
    %v4230 = vpack.c.bf16 %v4213, %v4212
    %v4231 = vpack.c.bf16 %v4215, %v4214
    %v4232 = vpack.c.bf16 %v4217, %v4216
    %v4233 = vpack.c.bf16 %v4219, %v4218
    %v4234 = vpack.c.bf16 %v4221, %v4220
    %v4235 = vpack.c.bf16 %v4223, %v4222
    %v4236 = vld [vmem:[%s9] sm:$0xf]
    %v4237 = vld [vmem:[%s9 + $0x4] sm:$0xf]
    %v4238 = vld [vmem:[%s9 + $0x8] sm:$0xf]
    %v4239 = vld [vmem:[%s10] sm:$0x1]
    %v4241 = vperm.slane %v4239, 0
    %v4246 = vunpack.c.l.b16 %v4236
    %v4247 = vunpack.c.l.b16 %v4237
    %v4248 = vunpack.c.l.b16 %v4238
    %v4249 = vpack.c.b16 %v4247, %v4246
    %v4250 = vpack.c.b16 %v4248, %v4248
    %v4253 = vsel %vm2020, %v4224, 0
    %v4256 = vsel %vm2020, %v4225, 0
    %v4259 = vsel %vm2020, %v4226, 0
    %v4262 = vsel %vm2020, %v4227, 0
    %v4265 = vsel %vm2020, %v4228, 0
    %v4268 = vsel %vm2020, %v4229, 0
    %v4271 = vsel %vm2020, %v4230, 0
    %v4274 = vsel %vm2020, %v4231, 0
    %v4277 = vsel %vm2020, %v4232, 0
    %v4280 = vsel %vm2020, %v4233, 0
    %v4283 = vsel %vm2020, %v4234, 0
    %v4286 = vsel %vm2020, %v4235, 0
    %v4289 = vsel %vm2057, %v4250, 0
    %4291 = vmatpush.bf16.msra.mxu0 0
    %4292 = vmatpush.bf16.msra.mxu0 0
    %4293 = vmatpush.bf16.msra.mxu0 0
    %4294 = vmatpush.bf16.msra.mxu0 0
    %4295 = vmatpush.bf16.msra.mxu0 0
    %4296 = vmatpush.bf16.msra.mxu0 0
    %4297 = vmatpush.bf16.msra.mxu0 %v4289
    %4298 = vmatpush.bf16.msra.mxu0 %v4249
    %4299 = vmatmul.bf16.gmra.mxu0 %v4253
    %v4300 = vpop.f32.mrf.mxu0
    %v4301 = vadd.f32 %v4241, %v4300
    %v4302 = vpop.f32.mrf.mxu0
    %v4303 = vadd.f32 %v4241, %v4302
    %4304 = vmatmul.bf16.gmra.mxu0 %v4256
    %v4305 = vpop.f32.mrf.mxu0
    %v4306 = vadd.f32 %v4241, %v4305
    %v4307 = vpop.f32.mrf.mxu0
    %v4308 = vadd.f32 %v4241, %v4307
    %4309 = vmatmul.bf16.gmra.mxu0 %v4259
    %v4310 = vpop.f32.mrf.mxu0
    %v4311 = vadd.f32 %v4241, %v4310
    %v4312 = vpop.f32.mrf.mxu0
    %v4313 = vadd.f32 %v4241, %v4312
    %4314 = vmatmul.bf16.gmra.mxu0 %v4262
    %v4315 = vpop.f32.mrf.mxu0
    %v4316 = vadd.f32 %v4241, %v4315
    %v4317 = vpop.f32.mrf.mxu0
    %v4318 = vadd.f32 %v4241, %v4317
    %4319 = vmatmul.bf16.gmra.mxu0 %v4265
    %v4320 = vpop.f32.mrf.mxu0
    %v4321 = vadd.f32 %v4241, %v4320
    %v4322 = vpop.f32.mrf.mxu0
    %v4323 = vadd.f32 %v4241, %v4322
    %4324 = vmatmul.bf16.gmra.mxu0 %v4268
    %v4325 = vpop.f32.mrf.mxu0
    %v4326 = vadd.f32 %v4241, %v4325
    %v4327 = vpop.f32.mrf.mxu0
    %v4328 = vadd.f32 %v4241, %v4327
    %4329 = vmatmul.bf16.gmra.mxu0 %v4271
    %v4330 = vpop.f32.mrf.mxu0
    %v4331 = vadd.f32 %v4241, %v4330
    %v4332 = vpop.f32.mrf.mxu0
    %v4333 = vadd.f32 %v4241, %v4332
    %4334 = vmatmul.bf16.gmra.mxu0 %v4274
    %v4335 = vpop.f32.mrf.mxu0
    %v4336 = vadd.f32 %v4241, %v4335
    %v4337 = vpop.f32.mrf.mxu0
    %v4338 = vadd.f32 %v4241, %v4337
    %4339 = vmatmul.bf16.gmra.mxu0 %v4277
    %v4340 = vpop.f32.mrf.mxu0
    %v4341 = vadd.f32 %v4241, %v4340
    %v4342 = vpop.f32.mrf.mxu0
    %v4343 = vadd.f32 %v4241, %v4342
    %4344 = vmatmul.bf16.gmra.mxu0 %v4280
    %v4345 = vpop.f32.mrf.mxu0
    %v4346 = vadd.f32 %v4241, %v4345
    %v4347 = vpop.f32.mrf.mxu0
    %v4348 = vadd.f32 %v4241, %v4347
    %4349 = vmatmul.bf16.gmra.mxu0 %v4283
    %v4350 = vpop.f32.mrf.mxu0
    %v4351 = vadd.f32 %v4241, %v4350
    %v4352 = vpop.f32.mrf.mxu0
    %v4353 = vadd.f32 %v4241, %v4352
    %4354 = vmatmul.bf16.gmra.mxu0 %v4286
    %v4355 = vpop.f32.mrf.mxu0
    %v4356 = vadd.f32 %v4241, %v4355
    %v4357 = vpop.f32.mrf.mxu0
    %v4358 = vadd.f32 %v4241, %v4357
    %4359 = vdwg.mxu0
    %4360 = vrot.lane.b32.xlu0 %v3864, 112
    %v4361 = vpop.permute.xlu0 %4360
    %4362 = vrot.lane.b32.xlu0 %v3865, 112
    %v4363 = vpop.permute.xlu0 %4362
    %4364 = vrot.lane.b32.xlu0 %v3866, 112
    %v4365 = vpop.permute.xlu0 %4364
    %4366 = vrot.lane.b32.xlu0 %v3867, 112
    %v4367 = vpop.permute.xlu0 %4366
    %4368 = vrot.lane.b32.xlu0 %v3868, 112
    %v4369 = vpop.permute.xlu0 %4368
    %4370 = vrot.lane.b32.xlu0 %v3869, 112
    %v4371 = vpop.permute.xlu0 %4370
    %4372 = vrot.lane.b32.xlu0 %v3870, 112
    %v4373 = vpop.permute.xlu0 %4372
    %4374 = vrot.lane.b32.xlu0 %v3871, 112
    %v4375 = vpop.permute.xlu0 %4374
    %4376 = vrot.lane.b32.xlu0 %v3872, 112
    %v4377 = vpop.permute.xlu0 %4376
    %4378 = vrot.lane.b32.xlu0 %v3873, 112
    %v4379 = vpop.permute.xlu0 %4378
    %4380 = vrot.lane.b32.xlu0 %v3874, 112
    %v4381 = vpop.permute.xlu0 %4380
    %4382 = vrot.lane.b32.xlu0 %v3875, 112
    %v4383 = vpop.permute.xlu0 %4382
    %4384 = vrot.lane.b32.xlu0 %v3876, 112
    %v4385 = vpop.permute.xlu0 %4384
    %4386 = vrot.lane.b32.xlu0 %v3877, 112
    %v4387 = vpop.permute.xlu0 %4386
    %4388 = vrot.lane.b32.xlu0 %v3878, 112
    %v4389 = vpop.permute.xlu0 %4388
    %4390 = vrot.lane.b32.xlu0 %v3879, 112
    %v4391 = vpop.permute.xlu0 %4390
    %4392 = vrot.lane.b32.xlu0 %v3880, 112
    %v4393 = vpop.permute.xlu0 %4392
    %4394 = vrot.lane.b32.xlu0 %v3881, 112
    %v4395 = vpop.permute.xlu0 %4394
    %4396 = vrot.lane.b32.xlu0 %v3882, 112
    %v4397 = vpop.permute.xlu0 %4396
    %4398 = vrot.lane.b32.xlu0 %v3883, 112
    %v4399 = vpop.permute.xlu0 %4398
    %4400 = vrot.lane.b32.xlu0 %v3884, 112
    %v4401 = vpop.permute.xlu0 %4400
    %4402 = vrot.lane.b32.xlu0 %v3885, 112
    %v4403 = vpop.permute.xlu0 %4402
    %4404 = vrot.lane.b32.xlu0 %v3886, 112
    %v4405 = vpop.permute.xlu0 %4404
    %4406 = vrot.lane.b32.xlu0 %v3887, 112
    %v4407 = vpop.permute.xlu0 %4406
    %v4432 = vrot.slane %v4361, 6
    %v4433 = vrot.slane %v4363, 6
    %v4434 = vrot.slane %v4365, 6
    %v4435 = vrot.slane %v4367, 6
    %v4436 = vrot.slane %v4369, 6
    %v4437 = vrot.slane %v4371, 6
    %v4438 = vrot.slane %v4373, 6
    %v4439 = vrot.slane %v4375, 6
    %v4440 = vrot.slane %v4377, 6
    %v4441 = vrot.slane %v4379, 6
    %v4442 = vrot.slane %v4381, 6
    %v4443 = vrot.slane %v4383, 6
    %v4444 = vrot.slane %v4385, 6
    %v4445 = vrot.slane %v4387, 6
    %v4446 = vrot.slane %v4389, 6
    %v4447 = vrot.slane %v4391, 6
    %v4448 = vrot.slane %v4393, 6
    %v4449 = vrot.slane %v4395, 6
    %v4450 = vrot.slane %v4397, 6
    %v4451 = vrot.slane %v4399, 6
    %v4452 = vrot.slane %v4401, 6
    %v4453 = vrot.slane %v4403, 6
    %v4454 = vrot.slane %v4405, 6
    %v4455 = vrot.slane %v4407, 6
    %v4456 = vsel %vm2226, %v4454, %v4455
    %v4457 = vsel %vm2226, %v4453, %v4454
    %v4458 = vsel %vm2226, %v4452, %v4453
    %v4459 = vsel %vm2226, %v4451, %v4452
    %v4460 = vsel %vm2226, %v4450, %v4451
    %v4461 = vsel %vm2226, %v4449, %v4450
    %v4462 = vsel %vm2226, %v4448, %v4449
    %v4463 = vsel %vm2226, %v4447, %v4448
    %v4464 = vsel %vm2226, %v4446, %v4447
    %v4465 = vsel %vm2226, %v4445, %v4446
    %v4466 = vsel %vm2226, %v4444, %v4445
    %v4467 = vsel %vm2226, %v4443, %v4444
    %v4468 = vsel %vm2226, %v4442, %v4443
    %v4469 = vsel %vm2226, %v4441, %v4442
    %v4470 = vsel %vm2226, %v4440, %v4441
    %v4471 = vsel %vm2226, %v4439, %v4440
    %v4472 = vsel %vm2226, %v4438, %v4439
    %v4473 = vsel %vm2226, %v4437, %v4438
    %v4474 = vsel %vm2226, %v4436, %v4437
    %v4475 = vsel %vm2226, %v4435, %v4436
    %v4476 = vsel %vm2226, %v4434, %v4435
    %v4477 = vsel %vm2226, %v4433, %v4434
    %v4478 = vsel %vm2226, %v4432, %v4433
    %v4479 = vsel %vm2226, %v4455, %v4432
    %v4480 = vrot.slane %v4361, 7
    %v4481 = vrot.slane %v4363, 7
    %v4482 = vrot.slane %v4365, 7
    %v4483 = vrot.slane %v4367, 7
    %v4484 = vrot.slane %v4369, 7
    %v4485 = vrot.slane %v4371, 7
    %v4486 = vrot.slane %v4373, 7
    %v4487 = vrot.slane %v4375, 7
    %v4488 = vrot.slane %v4377, 7
    %v4489 = vrot.slane %v4379, 7
    %v4490 = vrot.slane %v4381, 7
    %v4491 = vrot.slane %v4383, 7
    %v4492 = vrot.slane %v4385, 7
    %v4493 = vrot.slane %v4387, 7
    %v4494 = vrot.slane %v4389, 7
    %v4495 = vrot.slane %v4391, 7
    %v4496 = vrot.slane %v4393, 7
    %v4497 = vrot.slane %v4395, 7
    %v4498 = vrot.slane %v4397, 7
    %v4499 = vrot.slane %v4399, 7
    %v4500 = vrot.slane %v4401, 7
    %v4501 = vrot.slane %v4403, 7
    %v4502 = vrot.slane %v4405, 7
    %v4503 = vrot.slane %v4407, 7
    %v4504 = vsel %vm1097, %v4502, %v4503
    %v4505 = vsel %vm1097, %v4501, %v4502
    %v4506 = vsel %vm1097, %v4500, %v4501
    %v4507 = vsel %vm1097, %v4499, %v4500
    %v4508 = vsel %vm1097, %v4498, %v4499
    %v4509 = vsel %vm1097, %v4497, %v4498
    %v4510 = vsel %vm1097, %v4496, %v4497
    %v4511 = vsel %vm1097, %v4495, %v4496
    %v4512 = vsel %vm1097, %v4494, %v4495
    %v4513 = vsel %vm1097, %v4493, %v4494
    %v4514 = vsel %vm1097, %v4492, %v4493
    %v4515 = vsel %vm1097, %v4491, %v4492
    %v4516 = vsel %vm1097, %v4490, %v4491
    %v4517 = vsel %vm1097, %v4489, %v4490
    %v4518 = vsel %vm1097, %v4488, %v4489
    %v4519 = vsel %vm1097, %v4487, %v4488
    %v4520 = vsel %vm1097, %v4486, %v4487
    %v4521 = vsel %vm1097, %v4485, %v4486
    %v4522 = vsel %vm1097, %v4484, %v4485
    %v4523 = vsel %vm1097, %v4483, %v4484
    %v4524 = vsel %vm1097, %v4482, %v4483
    %v4525 = vsel %vm1097, %v4481, %v4482
    %v4526 = vsel %vm1097, %v4480, %v4481
    %v4527 = vsel %vm1097, %v4503, %v4480
    %v4528 = vrot.slane %v4361, 1
    %v4529 = vrot.slane %v4363, 1
    %v4530 = vrot.slane %v4365, 1
    %v4531 = vrot.slane %v4367, 1
    %v4532 = vrot.slane %v4369, 1
    %v4533 = vrot.slane %v4371, 1
    %v4534 = vrot.slane %v4373, 1
    %v4535 = vrot.slane %v4375, 1
    %v4536 = vrot.slane %v4377, 1
    %v4537 = vrot.slane %v4379, 1
    %v4538 = vrot.slane %v4381, 1
    %v4539 = vrot.slane %v4383, 1
    %v4540 = vrot.slane %v4385, 1
    %v4541 = vrot.slane %v4387, 1
    %v4542 = vrot.slane %v4389, 1
    %v4543 = vrot.slane %v4391, 1
    %v4544 = vrot.slane %v4393, 1
    %v4545 = vrot.slane %v4395, 1
    %v4546 = vrot.slane %v4397, 1
    %v4547 = vrot.slane %v4399, 1
    %v4548 = vrot.slane %v4401, 1
    %v4549 = vrot.slane %v4403, 1
    %v4550 = vrot.slane %v4405, 1
    %v4551 = vrot.slane %v4407, 1
    %v4552 = vsel %vm1146, %v4550, %v4551
    %v4553 = vsel %vm1146, %v4549, %v4550
    %v4554 = vsel %vm1146, %v4548, %v4549
    %v4555 = vsel %vm1146, %v4547, %v4548
    %v4556 = vsel %vm1146, %v4546, %v4547
    %v4557 = vsel %vm1146, %v4545, %v4546
    %v4558 = vsel %vm1146, %v4544, %v4545
    %v4559 = vsel %vm1146, %v4543, %v4544
    %v4560 = vsel %vm1146, %v4542, %v4543
    %v4561 = vsel %vm1146, %v4541, %v4542
    %v4562 = vsel %vm1146, %v4540, %v4541
    %v4563 = vsel %vm1146, %v4539, %v4540
    %v4564 = vsel %vm1146, %v4538, %v4539
    %v4565 = vsel %vm1146, %v4537, %v4538
    %v4566 = vsel %vm1146, %v4536, %v4537
    %v4567 = vsel %vm1146, %v4535, %v4536
    %v4568 = vsel %vm1146, %v4534, %v4535
    %v4569 = vsel %vm1146, %v4533, %v4534
    %v4570 = vsel %vm1146, %v4532, %v4533
    %v4571 = vsel %vm1146, %v4531, %v4532
    %v4572 = vsel %vm1146, %v4530, %v4531
    %v4573 = vsel %vm1146, %v4529, %v4530
    %v4574 = vsel %vm1146, %v4528, %v4529
    %v4575 = vsel %vm1146, %v4551, %v4528
    %v4576 = vrot.slane %v4361, 2
    %v4577 = vrot.slane %v4363, 2
    %v4578 = vrot.slane %v4365, 2
    %v4579 = vrot.slane %v4367, 2
    %v4580 = vrot.slane %v4369, 2
    %v4581 = vrot.slane %v4371, 2
    %v4582 = vrot.slane %v4373, 2
    %v4583 = vrot.slane %v4375, 2
    %v4584 = vrot.slane %v4377, 2
    %v4585 = vrot.slane %v4379, 2
    %v4586 = vrot.slane %v4381, 2
    %v4587 = vrot.slane %v4383, 2
    %v4588 = vrot.slane %v4385, 2
    %v4589 = vrot.slane %v4387, 2
    %v4590 = vrot.slane %v4389, 2
    %v4591 = vrot.slane %v4391, 2
    %v4592 = vrot.slane %v4393, 2
    %v4593 = vrot.slane %v4395, 2
    %v4594 = vrot.slane %v4397, 2
    %v4595 = vrot.slane %v4399, 2
    %v4596 = vrot.slane %v4401, 2
    %v4597 = vrot.slane %v4403, 2
    %v4598 = vrot.slane %v4405, 2
    %v4599 = vrot.slane %v4407, 2
    %v4600 = vsel %vm2371, %v4598, %v4599
    %v4601 = vsel %vm2371, %v4597, %v4598
    %v4602 = vsel %vm2371, %v4596, %v4597
    %v4603 = vsel %vm2371, %v4595, %v4596
    %v4604 = vsel %vm2371, %v4594, %v4595
    %v4605 = vsel %vm2371, %v4593, %v4594
    %v4606 = vsel %vm2371, %v4592, %v4593
    %v4607 = vsel %vm2371, %v4591, %v4592
    %v4608 = vsel %vm2371, %v4590, %v4591
    %v4609 = vsel %vm2371, %v4589, %v4590
    %v4610 = vsel %vm2371, %v4588, %v4589
    %v4611 = vsel %vm2371, %v4587, %v4588
    %v4612 = vsel %vm2371, %v4586, %v4587
    %v4613 = vsel %vm2371, %v4585, %v4586
    %v4614 = vsel %vm2371, %v4584, %v4585
    %v4615 = vsel %vm2371, %v4583, %v4584
    %v4616 = vsel %vm2371, %v4582, %v4583
    %v4617 = vsel %vm2371, %v4581, %v4582
    %v4618 = vsel %vm2371, %v4580, %v4581
    %v4619 = vsel %vm2371, %v4579, %v4580
    %v4620 = vsel %vm2371, %v4578, %v4579
    %v4621 = vsel %vm2371, %v4577, %v4578
    %v4622 = vsel %vm2371, %v4576, %v4577
    %v4623 = vsel %vm2371, %v4599, %v4576
    %4648 = vrot.lane.b32.xlu0 %v4527, 8
    %v4649 = vpop.permute.xlu0 %4648
    %4650 = vrot.lane.b32.xlu0 %v4526, 8
    %v4651 = vpop.permute.xlu0 %4650
    %4652 = vrot.lane.b32.xlu0 %v4525, 8
    %v4653 = vpop.permute.xlu0 %4652
    %4654 = vrot.lane.b32.xlu0 %v4524, 8
    %v4655 = vpop.permute.xlu0 %4654
    %4656 = vrot.lane.b32.xlu0 %v4523, 8
    %v4657 = vpop.permute.xlu0 %4656
    %4658 = vrot.lane.b32.xlu0 %v4522, 8
    %v4659 = vpop.permute.xlu0 %4658
    %4660 = vrot.lane.b32.xlu0 %v4521, 8
    %v4661 = vpop.permute.xlu0 %4660
    %4662 = vrot.lane.b32.xlu0 %v4520, 8
    %v4663 = vpop.permute.xlu0 %4662
    %4664 = vrot.lane.b32.xlu0 %v4519, 8
    %v4665 = vpop.permute.xlu0 %4664
    %4666 = vrot.lane.b32.xlu0 %v4518, 8
    %v4667 = vpop.permute.xlu0 %4666
    %4668 = vrot.lane.b32.xlu0 %v4517, 8
    %v4669 = vpop.permute.xlu0 %4668
    %4670 = vrot.lane.b32.xlu0 %v4516, 8
    %v4671 = vpop.permute.xlu0 %4670
    %4672 = vrot.lane.b32.xlu0 %v4515, 8
    %v4673 = vpop.permute.xlu0 %4672
    %4674 = vrot.lane.b32.xlu0 %v4514, 8
    %v4675 = vpop.permute.xlu0 %4674
    %4676 = vrot.lane.b32.xlu0 %v4513, 8
    %v4677 = vpop.permute.xlu0 %4676
    %4678 = vrot.lane.b32.xlu0 %v4512, 8
    %v4679 = vpop.permute.xlu0 %4678
    %4680 = vrot.lane.b32.xlu0 %v4511, 8
    %v4681 = vpop.permute.xlu0 %4680
    %4682 = vrot.lane.b32.xlu0 %v4510, 8
    %v4683 = vpop.permute.xlu0 %4682
    %4684 = vrot.lane.b32.xlu0 %v4509, 8
    %v4685 = vpop.permute.xlu0 %4684
    %4686 = vrot.lane.b32.xlu0 %v4508, 8
    %v4687 = vpop.permute.xlu0 %4686
    %4688 = vrot.lane.b32.xlu0 %v4507, 8
    %v4689 = vpop.permute.xlu0 %4688
    %4690 = vrot.lane.b32.xlu0 %v4506, 8
    %v4691 = vpop.permute.xlu0 %4690
    %4692 = vrot.lane.b32.xlu0 %v4505, 8
    %v4693 = vpop.permute.xlu0 %4692
    %4694 = vrot.lane.b32.xlu0 %v4504, 8
    %v4695 = vpop.permute.xlu0 %4694
    %4744 = vrot.lane.b32.xlu0 %v4574, 24
    %v4745 = vpop.permute.xlu0 %4744
    %4746 = vrot.lane.b32.xlu0 %v4573, 24
    %v4747 = vpop.permute.xlu0 %4746
    %4748 = vrot.lane.b32.xlu0 %v4572, 24
    %v4749 = vpop.permute.xlu0 %4748
    %4750 = vrot.lane.b32.xlu0 %v4571, 24
    %v4751 = vpop.permute.xlu0 %4750
    %4752 = vrot.lane.b32.xlu0 %v4570, 24
    %v4753 = vpop.permute.xlu0 %4752
    %4754 = vrot.lane.b32.xlu0 %v4569, 24
    %v4755 = vpop.permute.xlu0 %4754
    %4756 = vrot.lane.b32.xlu0 %v4568, 24
    %v4757 = vpop.permute.xlu0 %4756
    %4758 = vrot.lane.b32.xlu0 %v4567, 24
    %v4759 = vpop.permute.xlu0 %4758
    %4760 = vrot.lane.b32.xlu0 %v4566, 24
    %v4761 = vpop.permute.xlu0 %4760
    %4762 = vrot.lane.b32.xlu0 %v4565, 24
    %v4763 = vpop.permute.xlu0 %4762
    %4764 = vrot.lane.b32.xlu0 %v4564, 24
    %v4765 = vpop.permute.xlu0 %4764
    %4766 = vrot.lane.b32.xlu0 %v4563, 24
    %v4767 = vpop.permute.xlu0 %4766
    %4768 = vrot.lane.b32.xlu0 %v4562, 24
    %v4769 = vpop.permute.xlu0 %4768
    %4770 = vrot.lane.b32.xlu0 %v4561, 24
    %v4771 = vpop.permute.xlu0 %4770
    %4772 = vrot.lane.b32.xlu0 %v4560, 24
    %v4773 = vpop.permute.xlu0 %4772
    %4774 = vrot.lane.b32.xlu0 %v4559, 24
    %v4775 = vpop.permute.xlu0 %4774
    %4776 = vrot.lane.b32.xlu0 %v4558, 24
    %v4777 = vpop.permute.xlu0 %4776
    %4778 = vrot.lane.b32.xlu0 %v4557, 24
    %v4779 = vpop.permute.xlu0 %4778
    %4780 = vrot.lane.b32.xlu0 %v4556, 24
    %v4781 = vpop.permute.xlu0 %4780
    %4782 = vrot.lane.b32.xlu0 %v4555, 24
    %v4783 = vpop.permute.xlu0 %4782
    %4784 = vrot.lane.b32.xlu0 %v4554, 24
    %v4785 = vpop.permute.xlu0 %4784
    %4786 = vrot.lane.b32.xlu0 %v4553, 24
    %v4787 = vpop.permute.xlu0 %4786
    %4788 = vrot.lane.b32.xlu0 %v4552, 24
    %v4789 = vpop.permute.xlu0 %4788
    %4790 = vrot.lane.b32.xlu0 %v4575, 24
    %v4791 = vpop.permute.xlu0 %4790
    %4840 = vrot.lane.b32.xlu0 %v4622, 32
    %v4841 = vpop.permute.xlu0 %4840
    %4842 = vrot.lane.b32.xlu0 %v4621, 32
    %v4843 = vpop.permute.xlu0 %4842
    %4844 = vrot.lane.b32.xlu0 %v4620, 32
    %v4845 = vpop.permute.xlu0 %4844
    %4846 = vrot.lane.b32.xlu0 %v4619, 32
    %v4847 = vpop.permute.xlu0 %4846
    %4848 = vrot.lane.b32.xlu0 %v4618, 32
    %v4849 = vpop.permute.xlu0 %4848
    %4850 = vrot.lane.b32.xlu0 %v4617, 32
    %v4851 = vpop.permute.xlu0 %4850
    %4852 = vrot.lane.b32.xlu0 %v4616, 32
    %v4853 = vpop.permute.xlu0 %4852
    %4854 = vrot.lane.b32.xlu0 %v4615, 32
    %v4855 = vpop.permute.xlu0 %4854
    %4856 = vrot.lane.b32.xlu0 %v4614, 32
    %v4857 = vpop.permute.xlu0 %4856
    %4858 = vrot.lane.b32.xlu0 %v4613, 32
    %v4859 = vpop.permute.xlu0 %4858
    %4860 = vrot.lane.b32.xlu0 %v4612, 32
    %v4861 = vpop.permute.xlu0 %4860
    %4862 = vrot.lane.b32.xlu0 %v4611, 32
    %v4863 = vpop.permute.xlu0 %4862
    %4864 = vrot.lane.b32.xlu0 %v4610, 32
    %v4865 = vpop.permute.xlu0 %4864
    %4866 = vrot.lane.b32.xlu0 %v4609, 32
    %v4867 = vpop.permute.xlu0 %4866
    %4868 = vrot.lane.b32.xlu0 %v4608, 32
    %v4869 = vpop.permute.xlu0 %4868
    %4870 = vrot.lane.b32.xlu0 %v4607, 32
    %v4871 = vpop.permute.xlu0 %4870
    %4872 = vrot.lane.b32.xlu0 %v4606, 32
    %v4873 = vpop.permute.xlu0 %4872
    %4874 = vrot.lane.b32.xlu0 %v4605, 32
    %v4875 = vpop.permute.xlu0 %4874
    %4876 = vrot.lane.b32.xlu0 %v4604, 32
    %v4877 = vpop.permute.xlu0 %4876
    %4878 = vrot.lane.b32.xlu0 %v4603, 32
    %v4879 = vpop.permute.xlu0 %4878
    %4880 = vrot.lane.b32.xlu0 %v4602, 32
    %v4881 = vpop.permute.xlu0 %4880
    %4882 = vrot.lane.b32.xlu0 %v4601, 32
    %v4883 = vpop.permute.xlu0 %4882
    %4884 = vrot.lane.b32.xlu0 %v4600, 32
    %v4885 = vpop.permute.xlu0 %4884
    %4886 = vrot.lane.b32.xlu0 %v4623, 32
    %v4887 = vpop.permute.xlu0 %4886
    %v4912 = vsel %vm1943, %v4479, %v4649
    %v4913 = vsel %vm1943, %v4478, %v4651
    %v4914 = vsel %vm1943, %v4477, %v4653
    %v4915 = vsel %vm1943, %v4476, %v4655
    %v4916 = vsel %vm1943, %v4475, %v4657
    %v4917 = vsel %vm1943, %v4474, %v4659
    %v4918 = vsel %vm1943, %v4473, %v4661
    %v4919 = vsel %vm1943, %v4472, %v4663
    %v4920 = vsel %vm1943, %v4471, %v4665
    %v4921 = vsel %vm1943, %v4470, %v4667
    %v4922 = vsel %vm1943, %v4469, %v4669
    %v4923 = vsel %vm1943, %v4468, %v4671
    %v4924 = vsel %vm1943, %v4467, %v4673
    %v4925 = vsel %vm1943, %v4466, %v4675
    %v4926 = vsel %vm1943, %v4465, %v4677
    %v4927 = vsel %vm1943, %v4464, %v4679
    %v4928 = vsel %vm1943, %v4463, %v4681
    %v4929 = vsel %vm1943, %v4462, %v4683
    %v4930 = vsel %vm1943, %v4461, %v4685
    %v4931 = vsel %vm1943, %v4460, %v4687
    %v4932 = vsel %vm1943, %v4459, %v4689
    %v4933 = vsel %vm1943, %v4458, %v4691
    %v4934 = vsel %vm1943, %v4457, %v4693
    %v4935 = vsel %vm1943, %v4456, %v4695
    %v4936 = vsel %vm1363, %v4912, %v3864
    %v4937 = vsel %vm1363, %v4913, %v3865
    %v4938 = vsel %vm1363, %v4914, %v3866
    %v4939 = vsel %vm1363, %v4915, %v3867
    %v4940 = vsel %vm1363, %v4916, %v3868
    %v4941 = vsel %vm1363, %v4917, %v3869
    %v4942 = vsel %vm1363, %v4918, %v3870
    %v4943 = vsel %vm1363, %v4919, %v3871
    %v4944 = vsel %vm1363, %v4920, %v3872
    %v4945 = vsel %vm1363, %v4921, %v3873
    %v4946 = vsel %vm1363, %v4922, %v3874
    %v4947 = vsel %vm1363, %v4923, %v3875
    %v4948 = vsel %vm1363, %v4924, %v3876
    %v4949 = vsel %vm1363, %v4925, %v3877
    %v4950 = vsel %vm1363, %v4926, %v3878
    %v4951 = vsel %vm1363, %v4927, %v3879
    %v4952 = vsel %vm1363, %v4928, %v3880
    %v4953 = vsel %vm1363, %v4929, %v3881
    %v4954 = vsel %vm1363, %v4930, %v3882
    %v4955 = vsel %vm1363, %v4931, %v3883
    %v4956 = vsel %vm1363, %v4932, %v3884
    %v4957 = vsel %vm1363, %v4933, %v3885
    %v4958 = vsel %vm1363, %v4934, %v3886
    %v4959 = vsel %vm1363, %v4935, %v3887
    %v4960 = vsel %vm2020, %v4936, %v4745
    %v4961 = vsel %vm2020, %v4937, %v4747
    %v4962 = vsel %vm2020, %v4938, %v4749
    %v4963 = vsel %vm2020, %v4939, %v4751
    %v4964 = vsel %vm2020, %v4940, %v4753
    %v4965 = vsel %vm2020, %v4941, %v4755
    %v4966 = vsel %vm2020, %v4942, %v4757
    %v4967 = vsel %vm2020, %v4943, %v4759
    %v4968 = vsel %vm2020, %v4944, %v4761
    %v4969 = vsel %vm2020, %v4945, %v4763
    %v4970 = vsel %vm2020, %v4946, %v4765
    %v4971 = vsel %vm2020, %v4947, %v4767
    %v4972 = vsel %vm2020, %v4948, %v4769
    %v4973 = vsel %vm2020, %v4949, %v4771
    %v4974 = vsel %vm2020, %v4950, %v4773
    %v4975 = vsel %vm2020, %v4951, %v4775
    %v4976 = vsel %vm2020, %v4952, %v4777
    %v4977 = vsel %vm2020, %v4953, %v4779
    %v4978 = vsel %vm2020, %v4954, %v4781
    %v4979 = vsel %vm2020, %v4955, %v4783
    %v4980 = vsel %vm2020, %v4956, %v4785
    %v4981 = vsel %vm2020, %v4957, %v4787
    %v4982 = vsel %vm2020, %v4958, %v4789
    %v4983 = vsel %vm2020, %v4959, %v4791
    %v4984 = vsel %vm1388, %v4960, %v4841
    %v4985 = vsel %vm1388, %v4961, %v4843
    %v4986 = vsel %vm1388, %v4962, %v4845
    %v4987 = vsel %vm1388, %v4963, %v4847
    %v4988 = vsel %vm1388, %v4964, %v4849
    %v4989 = vsel %vm1388, %v4965, %v4851
    %v4990 = vsel %vm1388, %v4966, %v4853
    %v4991 = vsel %vm1388, %v4967, %v4855
    %v4992 = vsel %vm1388, %v4968, %v4857
    %v4993 = vsel %vm1388, %v4969, %v4859
    %v4994 = vsel %vm1388, %v4970, %v4861
    %v4995 = vsel %vm1388, %v4971, %v4863
    %v4996 = vsel %vm1388, %v4972, %v4865
    %v4997 = vsel %vm1388, %v4973, %v4867
    %v4998 = vsel %vm1388, %v4974, %v4869
    %v4999 = vsel %vm1388, %v4975, %v4871
    %v5000 = vsel %vm1388, %v4976, %v4873
    %v5001 = vsel %vm1388, %v4977, %v4875
    %v5002 = vsel %vm1388, %v4978, %v4877
    %v5003 = vsel %vm1388, %v4979, %v4879
    %v5004 = vsel %vm1388, %v4980, %v4881
    %v5005 = vsel %vm1388, %v4981, %v4883
    %v5006 = vsel %vm1388, %v4982, %v4885
    %v5007 = vsel %vm1388, %v4983, %v4887
    %v5008 = vpack.c.bf16 %v4985, %v4984
    %v5009 = vpack.c.bf16 %v4987, %v4986
    %v5010 = vpack.c.bf16 %v4989, %v4988
    %v5011 = vpack.c.bf16 %v4991, %v4990
    %v5012 = vpack.c.bf16 %v4993, %v4992
    %v5013 = vpack.c.bf16 %v4995, %v4994
    %v5014 = vpack.c.bf16 %v4997, %v4996
    %v5015 = vpack.c.bf16 %v4999, %v4998
    %v5016 = vpack.c.bf16 %v5001, %v5000
    %v5017 = vpack.c.bf16 %v5003, %v5002
    %v5018 = vpack.c.bf16 %v5005, %v5004
    %v5019 = vpack.c.bf16 %v5007, %v5006
    %v5020 = vld [vmem:[%s11] sm:$0xf]
    %v5021 = vld [vmem:[%s11 + $0x4] sm:$0xf]
    %v5022 = vld [vmem:[%s11 + $0x8] sm:$0xf]
    %v5023 = vld [vmem:[%s11 + $0xc] sm:$0xf]
    %v5024 = vld [vmem:[%s11 + $0x10] sm:$0xf]
    %v5025 = vld [vmem:[%s12] sm:$0x1]
    %v5027 = vperm.slane %v5025, 0
    %v5034 = vunpack.c.l.b16 %v5020
    %v5035 = vunpack.c.l.b16 %v5021
    %v5036 = vunpack.c.l.b16 %v5022
    %v5037 = vunpack.c.l.b16 %v5023
    %v5038 = vunpack.c.l.b16 %v5024
    %v5039 = vpack.c.b16 %v5035, %v5034
    %v5040 = vpack.c.b16 %v5037, %v5036
    %v5041 = vpack.c.b16 %v5038, %v5038
    %v5045 = vsel %vm2816, %v5008, 0
    %v5048 = vsel %vm2816, %v5009, 0
    %v5051 = vsel %vm2816, %v5010, 0
    %v5054 = vsel %vm2816, %v5011, 0
    %v5057 = vsel %vm2816, %v5012, 0
    %v5060 = vsel %vm2816, %v5013, 0
    %v5063 = vsel %vm2816, %v5014, 0
    %v5066 = vsel %vm2816, %v5015, 0
    %v5069 = vsel %vm2816, %v5016, 0
    %v5072 = vsel %vm2816, %v5017, 0
    %v5075 = vsel %vm2816, %v5018, 0
    %v5078 = vsel %vm2816, %v5019, 0
    %v5081 = vsel %vm2057, %v5041, 0
    %5083 = vmatpush.bf16.msra.mxu0 0
    %5084 = vmatpush.bf16.msra.mxu0 0
    %5085 = vmatpush.bf16.msra.mxu0 0
    %5086 = vmatpush.bf16.msra.mxu0 0
    %5087 = vmatpush.bf16.msra.mxu0 0
    %5088 = vmatpush.bf16.msra.mxu0 %v5081
    %5089 = vmatpush.bf16.msra.mxu0 %v5040
    %5090 = vmatpush.bf16.msra.mxu0 %v5039
    %5091 = vmatmul.bf16.gmra.mxu0 %v5045
    %v5092 = vpop.f32.mrf.mxu0
    %v5093 = vadd.f32 %v5027, %v5092
    %v5094 = vpop.f32.mrf.mxu0
    %v5095 = vadd.f32 %v5027, %v5094
    %5096 = vmatmul.bf16.gmra.mxu0 %v5048
    %v5097 = vpop.f32.mrf.mxu0
    %v5098 = vadd.f32 %v5027, %v5097
    %v5099 = vpop.f32.mrf.mxu0
    %v5100 = vadd.f32 %v5027, %v5099
    %5101 = vmatmul.bf16.gmra.mxu0 %v5051
    %v5102 = vpop.f32.mrf.mxu0
    %v5103 = vadd.f32 %v5027, %v5102
    %v5104 = vpop.f32.mrf.mxu0
    %v5105 = vadd.f32 %v5027, %v5104
    %5106 = vmatmul.bf16.gmra.mxu0 %v5054
    %v5107 = vpop.f32.mrf.mxu0
    %v5108 = vadd.f32 %v5027, %v5107
    %v5109 = vpop.f32.mrf.mxu0
    %v5110 = vadd.f32 %v5027, %v5109
    %5111 = vmatmul.bf16.gmra.mxu0 %v5057
    %v5112 = vpop.f32.mrf.mxu0
    %v5113 = vadd.f32 %v5027, %v5112
    %v5114 = vpop.f32.mrf.mxu0
    %v5115 = vadd.f32 %v5027, %v5114
    %5116 = vmatmul.bf16.gmra.mxu0 %v5060
    %v5117 = vpop.f32.mrf.mxu0
    %v5118 = vadd.f32 %v5027, %v5117
    %v5119 = vpop.f32.mrf.mxu0
    %v5120 = vadd.f32 %v5027, %v5119
    %5121 = vmatmul.bf16.gmra.mxu0 %v5063
    %v5122 = vpop.f32.mrf.mxu0
    %v5123 = vadd.f32 %v5027, %v5122
    %v5124 = vpop.f32.mrf.mxu0
    %v5125 = vadd.f32 %v5027, %v5124
    %5126 = vmatmul.bf16.gmra.mxu0 %v5066
    %v5127 = vpop.f32.mrf.mxu0
    %v5128 = vadd.f32 %v5027, %v5127
    %v5129 = vpop.f32.mrf.mxu0
    %v5130 = vadd.f32 %v5027, %v5129
    %5131 = vmatmul.bf16.gmra.mxu0 %v5069
    %v5132 = vpop.f32.mrf.mxu0
    %v5133 = vadd.f32 %v5027, %v5132
    %v5134 = vpop.f32.mrf.mxu0
    %v5135 = vadd.f32 %v5027, %v5134
    %5136 = vmatmul.bf16.gmra.mxu0 %v5072
    %v5137 = vpop.f32.mrf.mxu0
    %v5138 = vadd.f32 %v5027, %v5137
    %v5139 = vpop.f32.mrf.mxu0
    %v5140 = vadd.f32 %v5027, %v5139
    %5141 = vmatmul.bf16.gmra.mxu0 %v5075
    %v5142 = vpop.f32.mrf.mxu0
    %v5143 = vadd.f32 %v5027, %v5142
    %v5144 = vpop.f32.mrf.mxu0
    %v5145 = vadd.f32 %v5027, %v5144
    %5146 = vmatmul.bf16.gmra.mxu0 %v5078
    %v5147 = vpop.f32.mrf.mxu0
    %v5148 = vadd.f32 %v5027, %v5147
    %v5149 = vpop.f32.mrf.mxu0
    %v5150 = vadd.f32 %v5027, %v5149
    %5151 = vdwg.mxu0
    %5176 = vrot.lane.b32.xlu0 %v4301, 8
    %v5177 = vpop.permute.xlu0 %5176
    %5178 = vrot.lane.b32.xlu0 %v4303, 8
    %v5179 = vpop.permute.xlu0 %5178
    %5180 = vrot.lane.b32.xlu0 %v4306, 8
    %v5181 = vpop.permute.xlu0 %5180
    %5182 = vrot.lane.b32.xlu0 %v4308, 8
    %v5183 = vpop.permute.xlu0 %5182
    %5184 = vrot.lane.b32.xlu0 %v4311, 8
    %v5185 = vpop.permute.xlu0 %5184
    %5186 = vrot.lane.b32.xlu0 %v4313, 8
    %v5187 = vpop.permute.xlu0 %5186
    %5188 = vrot.lane.b32.xlu0 %v4316, 8
    %v5189 = vpop.permute.xlu0 %5188
    %5190 = vrot.lane.b32.xlu0 %v4318, 8
    %v5191 = vpop.permute.xlu0 %5190
    %5192 = vrot.lane.b32.xlu0 %v4321, 8
    %v5193 = vpop.permute.xlu0 %5192
    %5194 = vrot.lane.b32.xlu0 %v4323, 8
    %v5195 = vpop.permute.xlu0 %5194
    %5196 = vrot.lane.b32.xlu0 %v4326, 8
    %v5197 = vpop.permute.xlu0 %5196
    %5198 = vrot.lane.b32.xlu0 %v4328, 8
    %v5199 = vpop.permute.xlu0 %5198
    %5200 = vrot.lane.b32.xlu0 %v4331, 8
    %v5201 = vpop.permute.xlu0 %5200
    %5202 = vrot.lane.b32.xlu0 %v4333, 8
    %v5203 = vpop.permute.xlu0 %5202
    %5204 = vrot.lane.b32.xlu0 %v4336, 8
    %v5205 = vpop.permute.xlu0 %5204
    %5206 = vrot.lane.b32.xlu0 %v4338, 8
    %v5207 = vpop.permute.xlu0 %5206
    %5208 = vrot.lane.b32.xlu0 %v4341, 8
    %v5209 = vpop.permute.xlu0 %5208
    %5210 = vrot.lane.b32.xlu0 %v4343, 8
    %v5211 = vpop.permute.xlu0 %5210
    %5212 = vrot.lane.b32.xlu0 %v4346, 8
    %v5213 = vpop.permute.xlu0 %5212
    %5214 = vrot.lane.b32.xlu0 %v4348, 8
    %v5215 = vpop.permute.xlu0 %5214
    %5216 = vrot.lane.b32.xlu0 %v4351, 8
    %v5217 = vpop.permute.xlu0 %5216
    %5218 = vrot.lane.b32.xlu0 %v4353, 8
    %v5219 = vpop.permute.xlu0 %5218
    %5220 = vrot.lane.b32.xlu0 %v4356, 8
    %v5221 = vpop.permute.xlu0 %5220
    %5222 = vrot.lane.b32.xlu0 %v4358, 8
    %v5223 = vpop.permute.xlu0 %5222
    %5272 = vrot.lane.b32.xlu0 %v5093, 16
    %v5273 = vpop.permute.xlu0 %5272
    %5274 = vrot.lane.b32.xlu0 %v5095, 16
    %v5275 = vpop.permute.xlu0 %5274
    %5276 = vrot.lane.b32.xlu0 %v5098, 16
    %v5277 = vpop.permute.xlu0 %5276
    %5278 = vrot.lane.b32.xlu0 %v5100, 16
    %v5279 = vpop.permute.xlu0 %5278
    %5280 = vrot.lane.b32.xlu0 %v5103, 16
    %v5281 = vpop.permute.xlu0 %5280
    %5282 = vrot.lane.b32.xlu0 %v5105, 16
    %v5283 = vpop.permute.xlu0 %5282
    %5284 = vrot.lane.b32.xlu0 %v5108, 16
    %v5285 = vpop.permute.xlu0 %5284
    %5286 = vrot.lane.b32.xlu0 %v5110, 16
    %v5287 = vpop.permute.xlu0 %5286
    %5288 = vrot.lane.b32.xlu0 %v5113, 16
    %v5289 = vpop.permute.xlu0 %5288
    %5290 = vrot.lane.b32.xlu0 %v5115, 16
    %v5291 = vpop.permute.xlu0 %5290
    %5292 = vrot.lane.b32.xlu0 %v5118, 16
    %v5293 = vpop.permute.xlu0 %5292
    %5294 = vrot.lane.b32.xlu0 %v5120, 16
    %v5295 = vpop.permute.xlu0 %5294
    %5296 = vrot.lane.b32.xlu0 %v5123, 16
    %v5297 = vpop.permute.xlu0 %5296
    %5298 = vrot.lane.b32.xlu0 %v5125, 16
    %v5299 = vpop.permute.xlu0 %5298
    %5300 = vrot.lane.b32.xlu0 %v5128, 16
    %v5301 = vpop.permute.xlu0 %5300
    %5302 = vrot.lane.b32.xlu0 %v5130, 16
    %v5303 = vpop.permute.xlu0 %5302
    %5304 = vrot.lane.b32.xlu0 %v5133, 16
    %v5305 = vpop.permute.xlu0 %5304
    %5306 = vrot.lane.b32.xlu0 %v5135, 16
    %v5307 = vpop.permute.xlu0 %5306
    %5308 = vrot.lane.b32.xlu0 %v5138, 16
    %v5309 = vpop.permute.xlu0 %5308
    %5310 = vrot.lane.b32.xlu0 %v5140, 16
    %v5311 = vpop.permute.xlu0 %5310
    %5312 = vrot.lane.b32.xlu0 %v5143, 16
    %v5313 = vpop.permute.xlu0 %5312
    %5314 = vrot.lane.b32.xlu0 %v5145, 16
    %v5315 = vpop.permute.xlu0 %5314
    %5316 = vrot.lane.b32.xlu0 %v5148, 16
    %v5317 = vpop.permute.xlu0 %5316
    %5318 = vrot.lane.b32.xlu0 %v5150, 16
    %v5319 = vpop.permute.xlu0 %5318
    %v5344 = vsel %vm1943, %v3792, %v5177
    %v5345 = vsel %vm1943, %v3793, %v5179
    %v5346 = vsel %vm1943, %v3794, %v5181
    %v5347 = vsel %vm1943, %v3795, %v5183
    %v5348 = vsel %vm1943, %v3796, %v5185
    %v5349 = vsel %vm1943, %v3797, %v5187
    %v5350 = vsel %vm1943, %v3798, %v5189
    %v5351 = vsel %vm1943, %v3799, %v5191
    %v5352 = vsel %vm1943, %v3800, %v5193
    %v5353 = vsel %vm1943, %v3801, %v5195
    %v5354 = vsel %vm1943, %v3802, %v5197
    %v5355 = vsel %vm1943, %v3803, %v5199
    %v5356 = vsel %vm1943, %v3804, %v5201
    %v5357 = vsel %vm1943, %v3805, %v5203
    %v5358 = vsel %vm1943, %v3806, %v5205
    %v5359 = vsel %vm1943, %v3807, %v5207
    %v5360 = vsel %vm1943, %v3808, %v5209
    %v5361 = vsel %vm1943, %v3809, %v5211
    %v5362 = vsel %vm1943, %v3810, %v5213
    %v5363 = vsel %vm1943, %v3811, %v5215
    %v5364 = vsel %vm1943, %v3812, %v5217
    %v5365 = vsel %vm1943, %v3813, %v5219
    %v5366 = vsel %vm1943, %v3814, %v5221
    %v5367 = vsel %vm1943, %v3815, %v5223
    %v5368 = vsel %vm1363, %v5344, %v5273
    %v5369 = vsel %vm1363, %v5345, %v5275
    %v5370 = vsel %vm1363, %v5346, %v5277
    %v5371 = vsel %vm1363, %v5347, %v5279
    %v5372 = vsel %vm1363, %v5348, %v5281
    %v5373 = vsel %vm1363, %v5349, %v5283
    %v5374 = vsel %vm1363, %v5350, %v5285
    %v5375 = vsel %vm1363, %v5351, %v5287
    %v5376 = vsel %vm1363, %v5352, %v5289
    %v5377 = vsel %vm1363, %v5353, %v5291
    %v5378 = vsel %vm1363, %v5354, %v5293
    %v5379 = vsel %vm1363, %v5355, %v5295
    %v5380 = vsel %vm1363, %v5356, %v5297
    %v5381 = vsel %vm1363, %v5357, %v5299
    %v5382 = vsel %vm1363, %v5358, %v5301
    %v5383 = vsel %vm1363, %v5359, %v5303
    %v5384 = vsel %vm1363, %v5360, %v5305
    %v5385 = vsel %vm1363, %v5361, %v5307
    %v5386 = vsel %vm1363, %v5362, %v5309
    %v5387 = vsel %vm1363, %v5363, %v5311
    %v5388 = vsel %vm1363, %v5364, %v5313
    %v5389 = vsel %vm1363, %v5365, %v5315
    %v5390 = vsel %vm1363, %v5366, %v5317
    %v5391 = vsel %vm1363, %v5367, %v5319
    %v5392 = vsel %vm2020, %v5368, %v3792
    %v5393 = vsel %vm2020, %v5369, %v3793
    %v5394 = vsel %vm2020, %v5370, %v3794
    %v5395 = vsel %vm2020, %v5371, %v3795
    %v5396 = vsel %vm2020, %v5372, %v3796
    %v5397 = vsel %vm2020, %v5373, %v3797
    %v5398 = vsel %vm2020, %v5374, %v3798
    %v5399 = vsel %vm2020, %v5375, %v3799
    %v5400 = vsel %vm2020, %v5376, %v3800
    %v5401 = vsel %vm2020, %v5377, %v3801
    %v5402 = vsel %vm2020, %v5378, %v3802
    %v5403 = vsel %vm2020, %v5379, %v3803
    %v5404 = vsel %vm2020, %v5380, %v3804
    %v5405 = vsel %vm2020, %v5381, %v3805
    %v5406 = vsel %vm2020, %v5382, %v3806
    %v5407 = vsel %vm2020, %v5383, %v3807
    %v5408 = vsel %vm2020, %v5384, %v3808
    %v5409 = vsel %vm2020, %v5385, %v3809
    %v5410 = vsel %vm2020, %v5386, %v3810
    %v5411 = vsel %vm2020, %v5387, %v3811
    %v5412 = vsel %vm2020, %v5388, %v3812
    %v5413 = vsel %vm2020, %v5389, %v3813
    %v5414 = vsel %vm2020, %v5390, %v3814
    %v5415 = vsel %vm2020, %v5391, %v3815
    %vm5416 = vcmp.gt.f32.partialorder %v5392, 0.0
    %vm5417 = vcmp.gt.f32.partialorder %v5393, 0.0
    %vm5418 = vcmp.gt.f32.partialorder %v5394, 0.0
    %vm5419 = vcmp.gt.f32.partialorder %v5395, 0.0
    %vm5420 = vcmp.gt.f32.partialorder %v5396, 0.0
    %vm5421 = vcmp.gt.f32.partialorder %v5397, 0.0
    %vm5422 = vcmp.gt.f32.partialorder %v5398, 0.0
    %vm5423 = vcmp.gt.f32.partialorder %v5399, 0.0
    %vm5424 = vcmp.gt.f32.partialorder %v5400, 0.0
    %vm5425 = vcmp.gt.f32.partialorder %v5401, 0.0
    %vm5426 = vcmp.gt.f32.partialorder %v5402, 0.0
    %vm5427 = vcmp.gt.f32.partialorder %v5403, 0.0
    %vm5428 = vcmp.gt.f32.partialorder %v5404, 0.0
    %vm5429 = vcmp.gt.f32.partialorder %v5405, 0.0
    %vm5430 = vcmp.gt.f32.partialorder %v5406, 0.0
    %vm5431 = vcmp.gt.f32.partialorder %v5407, 0.0
    %vm5432 = vcmp.gt.f32.partialorder %v5408, 0.0
    %vm5433 = vcmp.gt.f32.partialorder %v5409, 0.0
    %vm5434 = vcmp.gt.f32.partialorder %v5410, 0.0
    %vm5435 = vcmp.gt.f32.partialorder %v5411, 0.0
    %vm5436 = vcmp.gt.f32.partialorder %v5412, 0.0
    %vm5437 = vcmp.gt.f32.partialorder %v5413, 0.0
    %vm5438 = vcmp.gt.f32.partialorder %v5414, 0.0
    %vm5439 = vcmp.gt.f32.partialorder %v5415, 0.0
    %v5440 = vmul.f32 %v5392, 0.01
    %v5441 = vmul.f32 %v5393, 0.01
    %v5442 = vmul.f32 %v5394, 0.01
    %v5443 = vmul.f32 %v5395, 0.01
    %v5444 = vmul.f32 %v5396, 0.01
    %v5445 = vmul.f32 %v5397, 0.01
    %v5446 = vmul.f32 %v5398, 0.01
    %v5447 = vmul.f32 %v5399, 0.01
    %v5448 = vmul.f32 %v5400, 0.01
    %v5449 = vmul.f32 %v5401, 0.01
    %v5450 = vmul.f32 %v5402, 0.01
    %v5451 = vmul.f32 %v5403, 0.01
    %v5452 = vmul.f32 %v5404, 0.01
    %v5453 = vmul.f32 %v5405, 0.01
    %v5454 = vmul.f32 %v5406, 0.01
    %v5455 = vmul.f32 %v5407, 0.01
    %v5456 = vmul.f32 %v5408, 0.01
    %v5457 = vmul.f32 %v5409, 0.01
    %v5458 = vmul.f32 %v5410, 0.01
    %v5459 = vmul.f32 %v5411, 0.01
    %v5460 = vmul.f32 %v5412, 0.01
    %v5461 = vmul.f32 %v5413, 0.01
    %v5462 = vmul.f32 %v5414, 0.01
    %v5463 = vmul.f32 %v5415, 0.01
    %v5464 = vsel %vm5416, %v5392, %v5440
    %v5465 = vsel %vm5417, %v5393, %v5441
    %v5466 = vsel %vm5418, %v5394, %v5442
    %v5467 = vsel %vm5419, %v5395, %v5443
    %v5468 = vsel %vm5420, %v5396, %v5444
    %v5469 = vsel %vm5421, %v5397, %v5445
    %v5470 = vsel %vm5422, %v5398, %v5446
    %v5471 = vsel %vm5423, %v5399, %v5447
    %v5472 = vsel %vm5424, %v5400, %v5448
    %v5473 = vsel %vm5425, %v5401, %v5449
    %v5474 = vsel %vm5426, %v5402, %v5450
    %v5475 = vsel %vm5427, %v5403, %v5451
    %v5476 = vsel %vm5428, %v5404, %v5452
    %v5477 = vsel %vm5429, %v5405, %v5453
    %v5478 = vsel %vm5430, %v5406, %v5454
    %v5479 = vsel %vm5431, %v5407, %v5455
    %v5480 = vsel %vm5432, %v5408, %v5456
    %v5481 = vsel %vm5433, %v5409, %v5457
    %v5482 = vsel %vm5434, %v5410, %v5458
    %v5483 = vsel %vm5435, %v5411, %v5459
    %v5484 = vsel %vm5436, %v5412, %v5460
    %v5485 = vsel %vm5437, %v5413, %v5461
    %v5486 = vsel %vm5438, %v5414, %v5462
    %v5487 = vsel %vm5439, %v5415, %v5463
    %v5488 = vmul.f32 %v5464, %v1001
    %v5489 = vmul.f32 %v5465, %v1002
    %v5490 = vmul.f32 %v5466, %v1003
    %v5491 = vmul.f32 %v5467, %v1004
    %v5492 = vmul.f32 %v5468, %v1005
    %v5493 = vmul.f32 %v5469, %v1006
    %v5494 = vmul.f32 %v5470, %v1007
    %v5495 = vmul.f32 %v5471, %v1008
    %v5496 = vmul.f32 %v5472, %v1009
    %v5497 = vmul.f32 %v5473, %v1010
    %v5498 = vmul.f32 %v5474, %v1011
    %v5499 = vmul.f32 %v5475, %v1012
    %v5500 = vmul.f32 %v5476, %v1013
    %v5501 = vmul.f32 %v5477, %v1014
    %v5502 = vmul.f32 %v5478, %v1015
    %v5503 = vmul.f32 %v5479, %v1016
    %v5504 = vmul.f32 %v5480, %v1017
    %v5505 = vmul.f32 %v5481, %v1018
    %v5506 = vmul.f32 %v5482, %v1019
    %v5507 = vmul.f32 %v5483, %v1020
    %v5508 = vmul.f32 %v5484, %v1021
    %v5509 = vmul.f32 %v5485, %v1022
    %v5510 = vmul.f32 %v5486, %v1023
    %v5511 = vmul.f32 %v5487, %v1024
    %v5512 = vrot.slane %v5488, 7
    %v5513 = vrot.slane %v5489, 7
    %v5514 = vrot.slane %v5490, 7
    %v5515 = vrot.slane %v5491, 7
    %v5516 = vrot.slane %v5492, 7
    %v5517 = vrot.slane %v5493, 7
    %v5518 = vrot.slane %v5494, 7
    %v5519 = vrot.slane %v5495, 7
    %v5520 = vrot.slane %v5496, 7
    %v5521 = vrot.slane %v5497, 7
    %v5522 = vrot.slane %v5498, 7
    %v5523 = vrot.slane %v5499, 7
    %v5524 = vrot.slane %v5500, 7
    %v5525 = vrot.slane %v5501, 7
    %v5526 = vrot.slane %v5502, 7
    %v5527 = vrot.slane %v5503, 7
    %v5528 = vrot.slane %v5504, 7
    %v5529 = vrot.slane %v5505, 7
    %v5530 = vrot.slane %v5506, 7
    %v5531 = vrot.slane %v5507, 7
    %v5532 = vrot.slane %v5508, 7
    %v5533 = vrot.slane %v5509, 7
    %v5534 = vrot.slane %v5510, 7
    %v5535 = vrot.slane %v5511, 7
    %v5536 = vsel %vm1097, %v5534, %v5535
    %v5537 = vsel %vm1097, %v5533, %v5534
    %v5538 = vsel %vm1097, %v5532, %v5533
    %v5539 = vsel %vm1097, %v5531, %v5532
    %v5540 = vsel %vm1097, %v5530, %v5531
    %v5541 = vsel %vm1097, %v5529, %v5530
    %v5542 = vsel %vm1097, %v5528, %v5529
    %v5543 = vsel %vm1097, %v5527, %v5528
    %v5544 = vsel %vm1097, %v5526, %v5527
    %v5545 = vsel %vm1097, %v5525, %v5526
    %v5546 = vsel %vm1097, %v5524, %v5525
    %v5547 = vsel %vm1097, %v5523, %v5524
    %v5548 = vsel %vm1097, %v5522, %v5523
    %v5549 = vsel %vm1097, %v5521, %v5522
    %v5550 = vsel %vm1097, %v5520, %v5521
    %v5551 = vsel %vm1097, %v5519, %v5520
    %v5552 = vsel %vm1097, %v5518, %v5519
    %v5553 = vsel %vm1097, %v5517, %v5518
    %v5554 = vsel %vm1097, %v5516, %v5517
    %v5555 = vsel %vm1097, %v5515, %v5516
    %v5556 = vsel %vm1097, %v5514, %v5515
    %v5557 = vsel %vm1097, %v5513, %v5514
    %v5558 = vsel %vm1097, %v5512, %v5513
    %v5559 = vsel %vm1097, %v5535, %v5512
    %v5560 = vrot.slane %v5488, 1
    %v5561 = vrot.slane %v5489, 1
    %v5562 = vrot.slane %v5490, 1
    %v5563 = vrot.slane %v5491, 1
    %v5564 = vrot.slane %v5492, 1
    %v5565 = vrot.slane %v5493, 1
    %v5566 = vrot.slane %v5494, 1
    %v5567 = vrot.slane %v5495, 1
    %v5568 = vrot.slane %v5496, 1
    %v5569 = vrot.slane %v5497, 1
    %v5570 = vrot.slane %v5498, 1
    %v5571 = vrot.slane %v5499, 1
    %v5572 = vrot.slane %v5500, 1
    %v5573 = vrot.slane %v5501, 1
    %v5574 = vrot.slane %v5502, 1
    %v5575 = vrot.slane %v5503, 1
    %v5576 = vrot.slane %v5504, 1
    %v5577 = vrot.slane %v5505, 1
    %v5578 = vrot.slane %v5506, 1
    %v5579 = vrot.slane %v5507, 1
    %v5580 = vrot.slane %v5508, 1
    %v5581 = vrot.slane %v5509, 1
    %v5582 = vrot.slane %v5510, 1
    %v5583 = vrot.slane %v5511, 1
    %v5584 = vsel %vm1146, %v5582, %v5583
    %v5585 = vsel %vm1146, %v5581, %v5582
    %v5586 = vsel %vm1146, %v5580, %v5581
    %v5587 = vsel %vm1146, %v5579, %v5580
    %v5588 = vsel %vm1146, %v5578, %v5579
    %v5589 = vsel %vm1146, %v5577, %v5578
    %v5590 = vsel %vm1146, %v5576, %v5577
    %v5591 = vsel %vm1146, %v5575, %v5576
    %v5592 = vsel %vm1146, %v5574, %v5575
    %v5593 = vsel %vm1146, %v5573, %v5574
    %v5594 = vsel %vm1146, %v5572, %v5573
    %v5595 = vsel %vm1146, %v5571, %v5572
    %v5596 = vsel %vm1146, %v5570, %v5571
    %v5597 = vsel %vm1146, %v5569, %v5570
    %v5598 = vsel %vm1146, %v5568, %v5569
    %v5599 = vsel %vm1146, %v5567, %v5568
    %v5600 = vsel %vm1146, %v5566, %v5567
    %v5601 = vsel %vm1146, %v5565, %v5566
    %v5602 = vsel %vm1146, %v5564, %v5565
    %v5603 = vsel %vm1146, %v5563, %v5564
    %v5604 = vsel %vm1146, %v5562, %v5563
    %v5605 = vsel %vm1146, %v5561, %v5562
    %v5606 = vsel %vm1146, %v5560, %v5561
    %v5607 = vsel %vm1146, %v5583, %v5560
    %5632 = vrot.lane.b32.xlu0 %v5488, 32
    %v5633 = vpop.permute.xlu0 %5632
    %5634 = vrot.lane.b32.xlu0 %v5489, 32
    %v5635 = vpop.permute.xlu0 %5634
    %5636 = vrot.lane.b32.xlu0 %v5490, 32
    %v5637 = vpop.permute.xlu0 %5636
    %5638 = vrot.lane.b32.xlu0 %v5491, 32
    %v5639 = vpop.permute.xlu0 %5638
    %5640 = vrot.lane.b32.xlu0 %v5492, 32
    %v5641 = vpop.permute.xlu0 %5640
    %5642 = vrot.lane.b32.xlu0 %v5493, 32
    %v5643 = vpop.permute.xlu0 %5642
    %5644 = vrot.lane.b32.xlu0 %v5494, 32
    %v5645 = vpop.permute.xlu0 %5644
    %5646 = vrot.lane.b32.xlu0 %v5495, 32
    %v5647 = vpop.permute.xlu0 %5646
    %5648 = vrot.lane.b32.xlu0 %v5496, 32
    %v5649 = vpop.permute.xlu0 %5648
    %5650 = vrot.lane.b32.xlu0 %v5497, 32
    %v5651 = vpop.permute.xlu0 %5650
    %5652 = vrot.lane.b32.xlu0 %v5498, 32
    %v5653 = vpop.permute.xlu0 %5652
    %5654 = vrot.lane.b32.xlu0 %v5499, 32
    %v5655 = vpop.permute.xlu0 %5654
    %5656 = vrot.lane.b32.xlu0 %v5500, 32
    %v5657 = vpop.permute.xlu0 %5656
    %5658 = vrot.lane.b32.xlu0 %v5501, 32
    %v5659 = vpop.permute.xlu0 %5658
    %5660 = vrot.lane.b32.xlu0 %v5502, 32
    %v5661 = vpop.permute.xlu0 %5660
    %5662 = vrot.lane.b32.xlu0 %v5503, 32
    %v5663 = vpop.permute.xlu0 %5662
    %5664 = vrot.lane.b32.xlu0 %v5504, 32
    %v5665 = vpop.permute.xlu0 %5664
    %5666 = vrot.lane.b32.xlu0 %v5505, 32
    %v5667 = vpop.permute.xlu0 %5666
    %5668 = vrot.lane.b32.xlu0 %v5506, 32
    %v5669 = vpop.permute.xlu0 %5668
    %5670 = vrot.lane.b32.xlu0 %v5507, 32
    %v5671 = vpop.permute.xlu0 %5670
    %5672 = vrot.lane.b32.xlu0 %v5508, 32
    %v5673 = vpop.permute.xlu0 %5672
    %5674 = vrot.lane.b32.xlu0 %v5509, 32
    %v5675 = vpop.permute.xlu0 %5674
    %5676 = vrot.lane.b32.xlu0 %v5510, 32
    %v5677 = vpop.permute.xlu0 %5676
    %5678 = vrot.lane.b32.xlu0 %v5511, 32
    %v5679 = vpop.permute.xlu0 %5678
    %5728 = vrot.lane.b32.xlu0 %v5606, 64
    %v5729 = vpop.permute.xlu0 %5728
    %5730 = vrot.lane.b32.xlu0 %v5605, 64
    %v5731 = vpop.permute.xlu0 %5730
    %5732 = vrot.lane.b32.xlu0 %v5604, 64
    %v5733 = vpop.permute.xlu0 %5732
    %5734 = vrot.lane.b32.xlu0 %v5603, 64
    %v5735 = vpop.permute.xlu0 %5734
    %5736 = vrot.lane.b32.xlu0 %v5602, 64
    %v5737 = vpop.permute.xlu0 %5736
    %5738 = vrot.lane.b32.xlu0 %v5601, 64
    %v5739 = vpop.permute.xlu0 %5738
    %5740 = vrot.lane.b32.xlu0 %v5600, 64
    %v5741 = vpop.permute.xlu0 %5740
    %5742 = vrot.lane.b32.xlu0 %v5599, 64
    %v5743 = vpop.permute.xlu0 %5742
    %5744 = vrot.lane.b32.xlu0 %v5598, 64
    %v5745 = vpop.permute.xlu0 %5744
    %5746 = vrot.lane.b32.xlu0 %v5597, 64
    %v5747 = vpop.permute.xlu0 %5746
    %5748 = vrot.lane.b32.xlu0 %v5596, 64
    %v5749 = vpop.permute.xlu0 %5748
    %5750 = vrot.lane.b32.xlu0 %v5595, 64
    %v5751 = vpop.permute.xlu0 %5750
    %5752 = vrot.lane.b32.xlu0 %v5594, 64
    %v5753 = vpop.permute.xlu0 %5752
    %5754 = vrot.lane.b32.xlu0 %v5593, 64
    %v5755 = vpop.permute.xlu0 %5754
    %5756 = vrot.lane.b32.xlu0 %v5592, 64
    %v5757 = vpop.permute.xlu0 %5756
    %5758 = vrot.lane.b32.xlu0 %v5591, 64
    %v5759 = vpop.permute.xlu0 %5758
    %5760 = vrot.lane.b32.xlu0 %v5590, 64
    %v5761 = vpop.permute.xlu0 %5760
    %5762 = vrot.lane.b32.xlu0 %v5589, 64
    %v5763 = vpop.permute.xlu0 %5762
    %5764 = vrot.lane.b32.xlu0 %v5588, 64
    %v5765 = vpop.permute.xlu0 %5764
    %5766 = vrot.lane.b32.xlu0 %v5587, 64
    %v5767 = vpop.permute.xlu0 %5766
    %5768 = vrot.lane.b32.xlu0 %v5586, 64
    %v5769 = vpop.permute.xlu0 %5768
    %5770 = vrot.lane.b32.xlu0 %v5585, 64
    %v5771 = vpop.permute.xlu0 %5770
    %5772 = vrot.lane.b32.xlu0 %v5584, 64
    %v5773 = vpop.permute.xlu0 %5772
    %5774 = vrot.lane.b32.xlu0 %v5607, 64
    %v5775 = vpop.permute.xlu0 %5774
    %v5800 = vsel %vm1388, %v5559, %v5633
    %v5801 = vsel %vm1388, %v5558, %v5635
    %v5802 = vsel %vm1388, %v5557, %v5637
    %v5803 = vsel %vm1388, %v5556, %v5639
    %v5804 = vsel %vm1388, %v5555, %v5641
    %v5805 = vsel %vm1388, %v5554, %v5643
    %v5806 = vsel %vm1388, %v5553, %v5645
    %v5807 = vsel %vm1388, %v5552, %v5647
    %v5808 = vsel %vm1388, %v5551, %v5649
    %v5809 = vsel %vm1388, %v5550, %v5651
    %v5810 = vsel %vm1388, %v5549, %v5653
    %v5811 = vsel %vm1388, %v5548, %v5655
    %v5812 = vsel %vm1388, %v5547, %v5657
    %v5813 = vsel %vm1388, %v5546, %v5659
    %v5814 = vsel %vm1388, %v5545, %v5661
    %v5815 = vsel %vm1388, %v5544, %v5663
    %v5816 = vsel %vm1388, %v5543, %v5665
    %v5817 = vsel %vm1388, %v5542, %v5667
    %v5818 = vsel %vm1388, %v5541, %v5669
    %v5819 = vsel %vm1388, %v5540, %v5671
    %v5820 = vsel %vm1388, %v5539, %v5673
    %v5821 = vsel %vm1388, %v5538, %v5675
    %v5822 = vsel %vm1388, %v5537, %v5677
    %v5823 = vsel %vm1388, %v5536, %v5679
    %v5824 = vsel %vm3597, %v5800, %v5729
    %v5825 = vsel %vm3597, %v5801, %v5731
    %v5826 = vsel %vm3597, %v5802, %v5733
    %v5827 = vsel %vm3597, %v5803, %v5735
    %v5828 = vsel %vm3597, %v5804, %v5737
    %v5829 = vsel %vm3597, %v5805, %v5739
    %v5830 = vsel %vm3597, %v5806, %v5741
    %v5831 = vsel %vm3597, %v5807, %v5743
    %v5832 = vsel %vm3597, %v5808, %v5745
    %v5833 = vsel %vm3597, %v5809, %v5747
    %v5834 = vsel %vm3597, %v5810, %v5749
    %v5835 = vsel %vm3597, %v5811, %v5751
    %v5836 = vsel %vm3597, %v5812, %v5753
    %v5837 = vsel %vm3597, %v5813, %v5755
    %v5838 = vsel %vm3597, %v5814, %v5757
    %v5839 = vsel %vm3597, %v5815, %v5759
    %v5840 = vsel %vm3597, %v5816, %v5761
    %v5841 = vsel %vm3597, %v5817, %v5763
    %v5842 = vsel %vm3597, %v5818, %v5765
    %v5843 = vsel %vm3597, %v5819, %v5767
    %v5844 = vsel %vm3597, %v5820, %v5769
    %v5845 = vsel %vm3597, %v5821, %v5771
    %v5846 = vsel %vm3597, %v5822, %v5773
    %v5847 = vsel %vm3597, %v5823, %v5775
    %v5848 = vpack.c.bf16 %v5825, %v5824
    %v5849 = vpack.c.bf16 %v5827, %v5826
    %v5850 = vpack.c.bf16 %v5829, %v5828
    %v5851 = vpack.c.bf16 %v5831, %v5830
    %v5852 = vpack.c.bf16 %v5833, %v5832
    %v5853 = vpack.c.bf16 %v5835, %v5834
    %v5854 = vpack.c.bf16 %v5837, %v5836
    %v5855 = vpack.c.bf16 %v5839, %v5838
    %v5856 = vpack.c.bf16 %v5841, %v5840
    %v5857 = vpack.c.bf16 %v5843, %v5842
    %v5858 = vpack.c.bf16 %v5845, %v5844
    %v5859 = vpack.c.bf16 %v5847, %v5846
    %v5860 = vld [vmem:[%s13] sm:$0xf]
    %v5861 = vld [vmem:[%s13 + $0x4] sm:$0xf]
    %v5862 = vld [vmem:[%s13 + $0x8] sm:$0xf]
    %v5863 = vld [vmem:[%s13 + $0xc] sm:$0xf]
    %v5864 = vld [vmem:[%s13 + $0x10] sm:$0xf]
    %v5865 = vld [vmem:[%s13 + $0x14] sm:$0xf]
    %v5866 = vld [vmem:[%s13 + $0x18] sm:$0xf]
    %v5867 = vld [vmem:[%s13 + $0x1c] sm:$0xf]
    %v5868 = vld [vmem:[%s13 + $0x20] sm:$0xf]
    %v5869 = vld [vmem:[%s13 + $0x24] sm:$0xf]
    %v5870 = vld [vmem:[%s13 + $0x28] sm:$0xf]
    %v5871 = vld [vmem:[%s13 + $0x2c] sm:$0xf]
    %v5872 = vld [vmem:[%s14] sm:$0x1]
    %v5874 = vperm.slane %v5872, 0
    %v5888 = vunpack.c.l.b16 %v5860
    %v5889 = vunpack.c.l.b16 %v5861
    %v5890 = vunpack.c.l.b16 %v5862
    %v5891 = vunpack.c.l.b16 %v5863
    %v5892 = vunpack.c.l.b16 %v5864
    %v5893 = vunpack.c.l.b16 %v5865
    %v5894 = vunpack.c.l.b16 %v5866
    %v5895 = vunpack.c.l.b16 %v5867
    %v5896 = vunpack.c.l.b16 %v5868
    %v5897 = vunpack.c.l.b16 %v5869
    %v5898 = vunpack.c.l.b16 %v5870
    %v5899 = vunpack.c.l.b16 %v5871
    %v5900 = vpack.c.b16 %v5889, %v5888
    %v5901 = vpack.c.b16 %v5891, %v5890
    %v5902 = vpack.c.b16 %v5893, %v5892
    %v5903 = vpack.c.b16 %v5895, %v5894
    %v5904 = vpack.c.b16 %v5897, %v5896
    %v5905 = vpack.c.b16 %v5899, %v5898
    %v5913 = vsel %vm3686, %v5848, 0
    %v5916 = vsel %vm3686, %v5849, 0
    %v5919 = vsel %vm3686, %v5850, 0
    %v5922 = vsel %vm3686, %v5851, 0
    %v5925 = vsel %vm3686, %v5852, 0
    %v5928 = vsel %vm3686, %v5853, 0
    %v5931 = vsel %vm3686, %v5854, 0
    %v5934 = vsel %vm3686, %v5855, 0
    %v5937 = vsel %vm3686, %v5856, 0
    %v5940 = vsel %vm3686, %v5857, 0
    %v5943 = vsel %vm3686, %v5858, 0
    %v5946 = vsel %vm3686, %v5859, 0
    %5948 = vmatpush.bf16.msra.mxu0 0
    %5949 = vmatpush.bf16.msra.mxu0 0
    %5950 = vmatpush.bf16.msra.mxu0 %v5905
    %5951 = vmatpush.bf16.msra.mxu0 %v5904
    %5952 = vmatpush.bf16.msra.mxu0 %v5903
    %5953 = vmatpush.bf16.msra.mxu0 %v5902
    %5954 = vmatpush.bf16.msra.mxu0 %v5901
    %5955 = vmatpush.bf16.msra.mxu0 %v5900
    %5956 = vmatmul.bf16.gmra.mxu0 %v5913
    %v5957 = vpop.f32.mrf.mxu0
    %v5958 = vadd.f32 %v5874, %v5957
    %v5959 = vpop.f32.mrf.mxu0
    %v5960 = vadd.f32 %v5874, %v5959
    %5961 = vmatmul.bf16.gmra.mxu0 %v5916
    %v5962 = vpop.f32.mrf.mxu0
    %v5963 = vadd.f32 %v5874, %v5962
    %v5964 = vpop.f32.mrf.mxu0
    %v5965 = vadd.f32 %v5874, %v5964
    %5966 = vmatmul.bf16.gmra.mxu0 %v5919
    %v5967 = vpop.f32.mrf.mxu0
    %v5968 = vadd.f32 %v5874, %v5967
    %v5969 = vpop.f32.mrf.mxu0
    %v5970 = vadd.f32 %v5874, %v5969
    %5971 = vmatmul.bf16.gmra.mxu0 %v5922
    %v5972 = vpop.f32.mrf.mxu0
    %v5973 = vadd.f32 %v5874, %v5972
    %v5974 = vpop.f32.mrf.mxu0
    %v5975 = vadd.f32 %v5874, %v5974
    %5976 = vmatmul.bf16.gmra.mxu0 %v5925
    %v5977 = vpop.f32.mrf.mxu0
    %v5978 = vadd.f32 %v5874, %v5977
    %v5979 = vpop.f32.mrf.mxu0
    %v5980 = vadd.f32 %v5874, %v5979
    %5981 = vmatmul.bf16.gmra.mxu0 %v5928
    %v5982 = vpop.f32.mrf.mxu0
    %v5983 = vadd.f32 %v5874, %v5982
    %v5984 = vpop.f32.mrf.mxu0
    %v5985 = vadd.f32 %v5874, %v5984
    %5986 = vmatmul.bf16.gmra.mxu0 %v5931
    %v5987 = vpop.f32.mrf.mxu0
    %v5988 = vadd.f32 %v5874, %v5987
    %v5989 = vpop.f32.mrf.mxu0
    %v5990 = vadd.f32 %v5874, %v5989
    %5991 = vmatmul.bf16.gmra.mxu0 %v5934
    %v5992 = vpop.f32.mrf.mxu0
    %v5993 = vadd.f32 %v5874, %v5992
    %v5994 = vpop.f32.mrf.mxu0
    %v5995 = vadd.f32 %v5874, %v5994
    %5996 = vmatmul.bf16.gmra.mxu0 %v5937
    %v5997 = vpop.f32.mrf.mxu0
    %v5998 = vadd.f32 %v5874, %v5997
    %v5999 = vpop.f32.mrf.mxu0
    %v6000 = vadd.f32 %v5874, %v5999
    %6001 = vmatmul.bf16.gmra.mxu0 %v5940
    %v6002 = vpop.f32.mrf.mxu0
    %v6003 = vadd.f32 %v5874, %v6002
    %v6004 = vpop.f32.mrf.mxu0
    %v6005 = vadd.f32 %v5874, %v6004
    %6006 = vmatmul.bf16.gmra.mxu0 %v5943
    %v6007 = vpop.f32.mrf.mxu0
    %v6008 = vadd.f32 %v5874, %v6007
    %v6009 = vpop.f32.mrf.mxu0
    %v6010 = vadd.f32 %v5874, %v6009
    %6011 = vmatmul.bf16.gmra.mxu0 %v5946
    %v6012 = vpop.f32.mrf.mxu0
    %v6013 = vadd.f32 %v5874, %v6012
    %v6014 = vpop.f32.mrf.mxu0
    %v6015 = vadd.f32 %v5874, %v6014
    %6016 = vdwg.mxu0
    %v6017 = vmul.f32 %v5958, %v1001
    %v6018 = vmul.f32 %v5960, %v1002
    %v6019 = vmul.f32 %v5963, %v1003
    %v6020 = vmul.f32 %v5965, %v1004
    %v6021 = vmul.f32 %v5968, %v1005
    %v6022 = vmul.f32 %v5970, %v1006
    %v6023 = vmul.f32 %v5973, %v1007
    %v6024 = vmul.f32 %v5975, %v1008
    %v6025 = vmul.f32 %v5978, %v1009
    %v6026 = vmul.f32 %v5980, %v1010
    %v6027 = vmul.f32 %v5983, %v1011
    %v6028 = vmul.f32 %v5985, %v1012
    %v6029 = vmul.f32 %v5988, %v1013
    %v6030 = vmul.f32 %v5990, %v1014
    %v6031 = vmul.f32 %v5993, %v1015
    %v6032 = vmul.f32 %v5995, %v1016
    %v6033 = vmul.f32 %v5998, %v1017
    %v6034 = vmul.f32 %v6000, %v1018
    %v6035 = vmul.f32 %v6003, %v1019
    %v6036 = vmul.f32 %v6005, %v1020
    %v6037 = vmul.f32 %v6008, %v1021
    %v6038 = vmul.f32 %v6010, %v1022
    %v6039 = vmul.f32 %v6013, %v1023
    %v6040 = vmul.f32 %v6015, %v1024
    %vm6041 = vcmp.gt.f32.partialorder %v6017, 0.0
    %vm6042 = vcmp.gt.f32.partialorder %v6018, 0.0
    %vm6043 = vcmp.gt.f32.partialorder %v6019, 0.0
    %vm6044 = vcmp.gt.f32.partialorder %v6020, 0.0
    %vm6045 = vcmp.gt.f32.partialorder %v6021, 0.0
    %vm6046 = vcmp.gt.f32.partialorder %v6022, 0.0
    %vm6047 = vcmp.gt.f32.partialorder %v6023, 0.0
    %vm6048 = vcmp.gt.f32.partialorder %v6024, 0.0
    %vm6049 = vcmp.gt.f32.partialorder %v6025, 0.0
    %vm6050 = vcmp.gt.f32.partialorder %v6026, 0.0
    %vm6051 = vcmp.gt.f32.partialorder %v6027, 0.0
    %vm6052 = vcmp.gt.f32.partialorder %v6028, 0.0
    %vm6053 = vcmp.gt.f32.partialorder %v6029, 0.0
    %vm6054 = vcmp.gt.f32.partialorder %v6030, 0.0
    %vm6055 = vcmp.gt.f32.partialorder %v6031, 0.0
    %vm6056 = vcmp.gt.f32.partialorder %v6032, 0.0
    %vm6057 = vcmp.gt.f32.partialorder %v6033, 0.0
    %vm6058 = vcmp.gt.f32.partialorder %v6034, 0.0
    %vm6059 = vcmp.gt.f32.partialorder %v6035, 0.0
    %vm6060 = vcmp.gt.f32.partialorder %v6036, 0.0
    %vm6061 = vcmp.gt.f32.partialorder %v6037, 0.0
    %vm6062 = vcmp.gt.f32.partialorder %v6038, 0.0
    %vm6063 = vcmp.gt.f32.partialorder %v6039, 0.0
    %vm6064 = vcmp.gt.f32.partialorder %v6040, 0.0
    %v6065 = vmul.f32 %v6017, 0.01
    %v6066 = vmul.f32 %v6018, 0.01
    %v6067 = vmul.f32 %v6019, 0.01
    %v6068 = vmul.f32 %v6020, 0.01
    %v6069 = vmul.f32 %v6021, 0.01
    %v6070 = vmul.f32 %v6022, 0.01
    %v6071 = vmul.f32 %v6023, 0.01
    %v6072 = vmul.f32 %v6024, 0.01
    %v6073 = vmul.f32 %v6025, 0.01
    %v6074 = vmul.f32 %v6026, 0.01
    %v6075 = vmul.f32 %v6027, 0.01
    %v6076 = vmul.f32 %v6028, 0.01
    %v6077 = vmul.f32 %v6029, 0.01
    %v6078 = vmul.f32 %v6030, 0.01
    %v6079 = vmul.f32 %v6031, 0.01
    %v6080 = vmul.f32 %v6032, 0.01
    %v6081 = vmul.f32 %v6033, 0.01
    %v6082 = vmul.f32 %v6034, 0.01
    %v6083 = vmul.f32 %v6035, 0.01
    %v6084 = vmul.f32 %v6036, 0.01
    %v6085 = vmul.f32 %v6037, 0.01
    %v6086 = vmul.f32 %v6038, 0.01
    %v6087 = vmul.f32 %v6039, 0.01
    %v6088 = vmul.f32 %v6040, 0.01
    %v6089 = vsel %vm6041, %v6017, %v6065
    %v6090 = vsel %vm6042, %v6018, %v6066
    %v6091 = vsel %vm6043, %v6019, %v6067
    %v6092 = vsel %vm6044, %v6020, %v6068
    %v6093 = vsel %vm6045, %v6021, %v6069
    %v6094 = vsel %vm6046, %v6022, %v6070
    %v6095 = vsel %vm6047, %v6023, %v6071
    %v6096 = vsel %vm6048, %v6024, %v6072
    %v6097 = vsel %vm6049, %v6025, %v6073
    %v6098 = vsel %vm6050, %v6026, %v6074
    %v6099 = vsel %vm6051, %v6027, %v6075
    %v6100 = vsel %vm6052, %v6028, %v6076
    %v6101 = vsel %vm6053, %v6029, %v6077
    %v6102 = vsel %vm6054, %v6030, %v6078
    %v6103 = vsel %vm6055, %v6031, %v6079
    %v6104 = vsel %vm6056, %v6032, %v6080
    %v6105 = vsel %vm6057, %v6033, %v6081
    %v6106 = vsel %vm6058, %v6034, %v6082
    %v6107 = vsel %vm6059, %v6035, %v6083
    %v6108 = vsel %vm6060, %v6036, %v6084
    %v6109 = vsel %vm6061, %v6037, %v6085
    %v6110 = vsel %vm6062, %v6038, %v6086
    %v6111 = vsel %vm6063, %v6039, %v6087
    %v6112 = vsel %vm6064, %v6040, %v6088
    %6137 = vrot.lane.b32.xlu0 %v6089, 120
    %v6138 = vpop.permute.xlu0 %6137
    %6139 = vrot.lane.b32.xlu0 %v6090, 120
    %v6140 = vpop.permute.xlu0 %6139
    %6141 = vrot.lane.b32.xlu0 %v6091, 120
    %v6142 = vpop.permute.xlu0 %6141
    %6143 = vrot.lane.b32.xlu0 %v6092, 120
    %v6144 = vpop.permute.xlu0 %6143
    %6145 = vrot.lane.b32.xlu0 %v6093, 120
    %v6146 = vpop.permute.xlu0 %6145
    %6147 = vrot.lane.b32.xlu0 %v6094, 120
    %v6148 = vpop.permute.xlu0 %6147
    %6149 = vrot.lane.b32.xlu0 %v6095, 120
    %v6150 = vpop.permute.xlu0 %6149
    %6151 = vrot.lane.b32.xlu0 %v6096, 120
    %v6152 = vpop.permute.xlu0 %6151
    %6153 = vrot.lane.b32.xlu0 %v6097, 120
    %v6154 = vpop.permute.xlu0 %6153
    %6155 = vrot.lane.b32.xlu0 %v6098, 120
    %v6156 = vpop.permute.xlu0 %6155
    %6157 = vrot.lane.b32.xlu0 %v6099, 120
    %v6158 = vpop.permute.xlu0 %6157
    %6159 = vrot.lane.b32.xlu0 %v6100, 120
    %v6160 = vpop.permute.xlu0 %6159
    %6161 = vrot.lane.b32.xlu0 %v6101, 120
    %v6162 = vpop.permute.xlu0 %6161
    %6163 = vrot.lane.b32.xlu0 %v6102, 120
    %v6164 = vpop.permute.xlu0 %6163
    %6165 = vrot.lane.b32.xlu0 %v6103, 120
    %v6166 = vpop.permute.xlu0 %6165
    %6167 = vrot.lane.b32.xlu0 %v6104, 120
    %v6168 = vpop.permute.xlu0 %6167
    %6169 = vrot.lane.b32.xlu0 %v6105, 120
    %v6170 = vpop.permute.xlu0 %6169
    %6171 = vrot.lane.b32.xlu0 %v6106, 120
    %v6172 = vpop.permute.xlu0 %6171
    %6173 = vrot.lane.b32.xlu0 %v6107, 120
    %v6174 = vpop.permute.xlu0 %6173
    %6175 = vrot.lane.b32.xlu0 %v6108, 120
    %v6176 = vpop.permute.xlu0 %6175
    %6177 = vrot.lane.b32.xlu0 %v6109, 120
    %v6178 = vpop.permute.xlu0 %6177
    %6179 = vrot.lane.b32.xlu0 %v6110, 120
    %v6180 = vpop.permute.xlu0 %6179
    %6181 = vrot.lane.b32.xlu0 %v6111, 120
    %v6182 = vpop.permute.xlu0 %6181
    %6183 = vrot.lane.b32.xlu0 %v6112, 120
    %v6184 = vpop.permute.xlu0 %6183
    %v6209 = vrot.slane %v6138, 7
    %v6210 = vrot.slane %v6140, 7
    %v6211 = vrot.slane %v6142, 7
    %v6212 = vrot.slane %v6144, 7
    %v6213 = vrot.slane %v6146, 7
    %v6214 = vrot.slane %v6148, 7
    %v6215 = vrot.slane %v6150, 7
    %v6216 = vrot.slane %v6152, 7
    %v6217 = vrot.slane %v6154, 7
    %v6218 = vrot.slane %v6156, 7
    %v6219 = vrot.slane %v6158, 7
    %v6220 = vrot.slane %v6160, 7
    %v6221 = vrot.slane %v6162, 7
    %v6222 = vrot.slane %v6164, 7
    %v6223 = vrot.slane %v6166, 7
    %v6224 = vrot.slane %v6168, 7
    %v6225 = vrot.slane %v6170, 7
    %v6226 = vrot.slane %v6172, 7
    %v6227 = vrot.slane %v6174, 7
    %v6228 = vrot.slane %v6176, 7
    %v6229 = vrot.slane %v6178, 7
    %v6230 = vrot.slane %v6180, 7
    %v6231 = vrot.slane %v6182, 7
    %v6232 = vrot.slane %v6184, 7
    %v6233 = vsel %vm1097, %v6231, %v6232
    %v6234 = vsel %vm1097, %v6230, %v6231
    %v6235 = vsel %vm1097, %v6229, %v6230
    %v6236 = vsel %vm1097, %v6228, %v6229
    %v6237 = vsel %vm1097, %v6227, %v6228
    %v6238 = vsel %vm1097, %v6226, %v6227
    %v6239 = vsel %vm1097, %v6225, %v6226
    %v6240 = vsel %vm1097, %v6224, %v6225
    %v6241 = vsel %vm1097, %v6223, %v6224
    %v6242 = vsel %vm1097, %v6222, %v6223
    %v6243 = vsel %vm1097, %v6221, %v6222
    %v6244 = vsel %vm1097, %v6220, %v6221
    %v6245 = vsel %vm1097, %v6219, %v6220
    %v6246 = vsel %vm1097, %v6218, %v6219
    %v6247 = vsel %vm1097, %v6217, %v6218
    %v6248 = vsel %vm1097, %v6216, %v6217
    %v6249 = vsel %vm1097, %v6215, %v6216
    %v6250 = vsel %vm1097, %v6214, %v6215
    %v6251 = vsel %vm1097, %v6213, %v6214
    %v6252 = vsel %vm1097, %v6212, %v6213
    %v6253 = vsel %vm1097, %v6211, %v6212
    %v6254 = vsel %vm1097, %v6210, %v6211
    %v6255 = vsel %vm1097, %v6209, %v6210
    %v6256 = vsel %vm1097, %v6232, %v6209
    %v6257 = vrot.slane %v6138, 1
    %v6258 = vrot.slane %v6140, 1
    %v6259 = vrot.slane %v6142, 1
    %v6260 = vrot.slane %v6144, 1
    %v6261 = vrot.slane %v6146, 1
    %v6262 = vrot.slane %v6148, 1
    %v6263 = vrot.slane %v6150, 1
    %v6264 = vrot.slane %v6152, 1
    %v6265 = vrot.slane %v6154, 1
    %v6266 = vrot.slane %v6156, 1
    %v6267 = vrot.slane %v6158, 1
    %v6268 = vrot.slane %v6160, 1
    %v6269 = vrot.slane %v6162, 1
    %v6270 = vrot.slane %v6164, 1
    %v6271 = vrot.slane %v6166, 1
    %v6272 = vrot.slane %v6168, 1
    %v6273 = vrot.slane %v6170, 1
    %v6274 = vrot.slane %v6172, 1
    %v6275 = vrot.slane %v6174, 1
    %v6276 = vrot.slane %v6176, 1
    %v6277 = vrot.slane %v6178, 1
    %v6278 = vrot.slane %v6180, 1
    %v6279 = vrot.slane %v6182, 1
    %v6280 = vrot.slane %v6184, 1
    %v6281 = vsel %vm1146, %v6279, %v6280
    %v6282 = vsel %vm1146, %v6278, %v6279
    %v6283 = vsel %vm1146, %v6277, %v6278
    %v6284 = vsel %vm1146, %v6276, %v6277
    %v6285 = vsel %vm1146, %v6275, %v6276
    %v6286 = vsel %vm1146, %v6274, %v6275
    %v6287 = vsel %vm1146, %v6273, %v6274
    %v6288 = vsel %vm1146, %v6272, %v6273
    %v6289 = vsel %vm1146, %v6271, %v6272
    %v6290 = vsel %vm1146, %v6270, %v6271
    %v6291 = vsel %vm1146, %v6269, %v6270
    %v6292 = vsel %vm1146, %v6268, %v6269
    %v6293 = vsel %vm1146, %v6267, %v6268
    %v6294 = vsel %vm1146, %v6266, %v6267
    %v6295 = vsel %vm1146, %v6265, %v6266
    %v6296 = vsel %vm1146, %v6264, %v6265
    %v6297 = vsel %vm1146, %v6263, %v6264
    %v6298 = vsel %vm1146, %v6262, %v6263
    %v6299 = vsel %vm1146, %v6261, %v6262
    %v6300 = vsel %vm1146, %v6260, %v6261
    %v6301 = vsel %vm1146, %v6259, %v6260
    %v6302 = vsel %vm1146, %v6258, %v6259
    %v6303 = vsel %vm1146, %v6257, %v6258
    %v6304 = vsel %vm1146, %v6280, %v6257
    %6329 = vrot.lane.b32.xlu0 %v6303, 16
    %v6330 = vpop.permute.xlu0 %6329
    %6331 = vrot.lane.b32.xlu0 %v6302, 16
    %v6332 = vpop.permute.xlu0 %6331
    %6333 = vrot.lane.b32.xlu0 %v6301, 16
    %v6334 = vpop.permute.xlu0 %6333
    %6335 = vrot.lane.b32.xlu0 %v6300, 16
    %v6336 = vpop.permute.xlu0 %6335
    %6337 = vrot.lane.b32.xlu0 %v6299, 16
    %v6338 = vpop.permute.xlu0 %6337
    %6339 = vrot.lane.b32.xlu0 %v6298, 16
    %v6340 = vpop.permute.xlu0 %6339
    %6341 = vrot.lane.b32.xlu0 %v6297, 16
    %v6342 = vpop.permute.xlu0 %6341
    %6343 = vrot.lane.b32.xlu0 %v6296, 16
    %v6344 = vpop.permute.xlu0 %6343
    %6345 = vrot.lane.b32.xlu0 %v6295, 16
    %v6346 = vpop.permute.xlu0 %6345
    %6347 = vrot.lane.b32.xlu0 %v6294, 16
    %v6348 = vpop.permute.xlu0 %6347
    %6349 = vrot.lane.b32.xlu0 %v6293, 16
    %v6350 = vpop.permute.xlu0 %6349
    %6351 = vrot.lane.b32.xlu0 %v6292, 16
    %v6352 = vpop.permute.xlu0 %6351
    %6353 = vrot.lane.b32.xlu0 %v6291, 16
    %v6354 = vpop.permute.xlu0 %6353
    %6355 = vrot.lane.b32.xlu0 %v6290, 16
    %v6356 = vpop.permute.xlu0 %6355
    %6357 = vrot.lane.b32.xlu0 %v6289, 16
    %v6358 = vpop.permute.xlu0 %6357
    %6359 = vrot.lane.b32.xlu0 %v6288, 16
    %v6360 = vpop.permute.xlu0 %6359
    %6361 = vrot.lane.b32.xlu0 %v6287, 16
    %v6362 = vpop.permute.xlu0 %6361
    %6363 = vrot.lane.b32.xlu0 %v6286, 16
    %v6364 = vpop.permute.xlu0 %6363
    %6365 = vrot.lane.b32.xlu0 %v6285, 16
    %v6366 = vpop.permute.xlu0 %6365
    %6367 = vrot.lane.b32.xlu0 %v6284, 16
    %v6368 = vpop.permute.xlu0 %6367
    %6369 = vrot.lane.b32.xlu0 %v6283, 16
    %v6370 = vpop.permute.xlu0 %6369
    %6371 = vrot.lane.b32.xlu0 %v6282, 16
    %v6372 = vpop.permute.xlu0 %6371
    %6373 = vrot.lane.b32.xlu0 %v6281, 16
    %v6374 = vpop.permute.xlu0 %6373
    %6375 = vrot.lane.b32.xlu0 %v6304, 16
    %v6376 = vpop.permute.xlu0 %6375
    %v6401 = vsel %vm1943, %v6256, %v6089
    %v6402 = vsel %vm1943, %v6255, %v6090
    %v6403 = vsel %vm1943, %v6254, %v6091
    %v6404 = vsel %vm1943, %v6253, %v6092
    %v6405 = vsel %vm1943, %v6252, %v6093
    %v6406 = vsel %vm1943, %v6251, %v6094
    %v6407 = vsel %vm1943, %v6250, %v6095
    %v6408 = vsel %vm1943, %v6249, %v6096
    %v6409 = vsel %vm1943, %v6248, %v6097
    %v6410 = vsel %vm1943, %v6247, %v6098
    %v6411 = vsel %vm1943, %v6246, %v6099
    %v6412 = vsel %vm1943, %v6245, %v6100
    %v6413 = vsel %vm1943, %v6244, %v6101
    %v6414 = vsel %vm1943, %v6243, %v6102
    %v6415 = vsel %vm1943, %v6242, %v6103
    %v6416 = vsel %vm1943, %v6241, %v6104
    %v6417 = vsel %vm1943, %v6240, %v6105
    %v6418 = vsel %vm1943, %v6239, %v6106
    %v6419 = vsel %vm1943, %v6238, %v6107
    %v6420 = vsel %vm1943, %v6237, %v6108
    %v6421 = vsel %vm1943, %v6236, %v6109
    %v6422 = vsel %vm1943, %v6235, %v6110
    %v6423 = vsel %vm1943, %v6234, %v6111
    %v6424 = vsel %vm1943, %v6233, %v6112
    %v6425 = vsel %vm1363, %v6401, %v6330
    %v6426 = vsel %vm1363, %v6402, %v6332
    %v6427 = vsel %vm1363, %v6403, %v6334
    %v6428 = vsel %vm1363, %v6404, %v6336
    %v6429 = vsel %vm1363, %v6405, %v6338
    %v6430 = vsel %vm1363, %v6406, %v6340
    %v6431 = vsel %vm1363, %v6407, %v6342
    %v6432 = vsel %vm1363, %v6408, %v6344
    %v6433 = vsel %vm1363, %v6409, %v6346
    %v6434 = vsel %vm1363, %v6410, %v6348
    %v6435 = vsel %vm1363, %v6411, %v6350
    %v6436 = vsel %vm1363, %v6412, %v6352
    %v6437 = vsel %vm1363, %v6413, %v6354
    %v6438 = vsel %vm1363, %v6414, %v6356
    %v6439 = vsel %vm1363, %v6415, %v6358
    %v6440 = vsel %vm1363, %v6416, %v6360
    %v6441 = vsel %vm1363, %v6417, %v6362
    %v6442 = vsel %vm1363, %v6418, %v6364
    %v6443 = vsel %vm1363, %v6419, %v6366
    %v6444 = vsel %vm1363, %v6420, %v6368
    %v6445 = vsel %vm1363, %v6421, %v6370
    %v6446 = vsel %vm1363, %v6422, %v6372
    %v6447 = vsel %vm1363, %v6423, %v6374
    %v6448 = vsel %vm1363, %v6424, %v6376
    %v6449 = vpack.c.bf16 %v6426, %v6425
    %v6450 = vpack.c.bf16 %v6428, %v6427
    %v6451 = vpack.c.bf16 %v6430, %v6429
    %v6452 = vpack.c.bf16 %v6432, %v6431
    %v6453 = vpack.c.bf16 %v6434, %v6433
    %v6454 = vpack.c.bf16 %v6436, %v6435
    %v6455 = vpack.c.bf16 %v6438, %v6437
    %v6456 = vpack.c.bf16 %v6440, %v6439
    %v6457 = vpack.c.bf16 %v6442, %v6441
    %v6458 = vpack.c.bf16 %v6444, %v6443
    %v6459 = vpack.c.bf16 %v6446, %v6445
    %v6460 = vpack.c.bf16 %v6448, %v6447
    %v6461 = vld [vmem:[%s15] sm:$0xf]
    %v6462 = vld [vmem:[%s15 + $0x4] sm:$0xf]
    %v6463 = vld [vmem:[%s15 + $0x8] sm:$0xf]
    %v6464 = vld [vmem:[%s16] sm:$0x1]
    %v6466 = vperm.slane %v6464, 0
    %v6471 = vunpack.c.l.b16 %v6461
    %v6472 = vunpack.c.l.b16 %v6462
    %v6473 = vunpack.c.l.b16 %v6463
    %v6474 = vpack.c.b16 %v6472, %v6471
    %v6475 = vpack.c.b16 %v6473, %v6473
    %v6478 = vsel %vm2020, %v6449, 0
    %v6481 = vsel %vm2020, %v6450, 0
    %v6484 = vsel %vm2020, %v6451, 0
    %v6487 = vsel %vm2020, %v6452, 0
    %v6490 = vsel %vm2020, %v6453, 0
    %v6493 = vsel %vm2020, %v6454, 0
    %v6496 = vsel %vm2020, %v6455, 0
    %v6499 = vsel %vm2020, %v6456, 0
    %v6502 = vsel %vm2020, %v6457, 0
    %v6505 = vsel %vm2020, %v6458, 0
    %v6508 = vsel %vm2020, %v6459, 0
    %v6511 = vsel %vm2020, %v6460, 0
    %v6514 = vsel %vm2057, %v6475, 0
    %6516 = vmatpush.bf16.msra.mxu0 0
    %6517 = vmatpush.bf16.msra.mxu0 0
    %6518 = vmatpush.bf16.msra.mxu0 0
    %6519 = vmatpush.bf16.msra.mxu0 0
    %6520 = vmatpush.bf16.msra.mxu0 0
    %6521 = vmatpush.bf16.msra.mxu0 0
    %6522 = vmatpush.bf16.msra.mxu0 %v6514
    %6523 = vmatpush.bf16.msra.mxu0 %v6474
    %6524 = vmatmul.bf16.gmra.mxu0 %v6478
    %v6525 = vpop.f32.mrf.mxu0
    %v6526 = vadd.f32 %v6466, %v6525
    %v6527 = vpop.f32.mrf.mxu0
    %v6528 = vadd.f32 %v6466, %v6527
    %6529 = vmatmul.bf16.gmra.mxu0 %v6481
    %v6530 = vpop.f32.mrf.mxu0
    %v6531 = vadd.f32 %v6466, %v6530
    %v6532 = vpop.f32.mrf.mxu0
    %v6533 = vadd.f32 %v6466, %v6532
    %6534 = vmatmul.bf16.gmra.mxu0 %v6484
    %v6535 = vpop.f32.mrf.mxu0
    %v6536 = vadd.f32 %v6466, %v6535
    %v6537 = vpop.f32.mrf.mxu0
    %v6538 = vadd.f32 %v6466, %v6537
    %6539 = vmatmul.bf16.gmra.mxu0 %v6487
    %v6540 = vpop.f32.mrf.mxu0
    %v6541 = vadd.f32 %v6466, %v6540
    %v6542 = vpop.f32.mrf.mxu0
    %v6543 = vadd.f32 %v6466, %v6542
    %6544 = vmatmul.bf16.gmra.mxu0 %v6490
    %v6545 = vpop.f32.mrf.mxu0
    %v6546 = vadd.f32 %v6466, %v6545
    %v6547 = vpop.f32.mrf.mxu0
    %v6548 = vadd.f32 %v6466, %v6547
    %6549 = vmatmul.bf16.gmra.mxu0 %v6493
    %v6550 = vpop.f32.mrf.mxu0
    %v6551 = vadd.f32 %v6466, %v6550
    %v6552 = vpop.f32.mrf.mxu0
    %v6553 = vadd.f32 %v6466, %v6552
    %6554 = vmatmul.bf16.gmra.mxu0 %v6496
    %v6555 = vpop.f32.mrf.mxu0
    %v6556 = vadd.f32 %v6466, %v6555
    %v6557 = vpop.f32.mrf.mxu0
    %v6558 = vadd.f32 %v6466, %v6557
    %6559 = vmatmul.bf16.gmra.mxu0 %v6499
    %v6560 = vpop.f32.mrf.mxu0
    %v6561 = vadd.f32 %v6466, %v6560
    %v6562 = vpop.f32.mrf.mxu0
    %v6563 = vadd.f32 %v6466, %v6562
    %6564 = vmatmul.bf16.gmra.mxu0 %v6502
    %v6565 = vpop.f32.mrf.mxu0
    %v6566 = vadd.f32 %v6466, %v6565
    %v6567 = vpop.f32.mrf.mxu0
    %v6568 = vadd.f32 %v6466, %v6567
    %6569 = vmatmul.bf16.gmra.mxu0 %v6505
    %v6570 = vpop.f32.mrf.mxu0
    %v6571 = vadd.f32 %v6466, %v6570
    %v6572 = vpop.f32.mrf.mxu0
    %v6573 = vadd.f32 %v6466, %v6572
    %6574 = vmatmul.bf16.gmra.mxu0 %v6508
    %v6575 = vpop.f32.mrf.mxu0
    %v6576 = vadd.f32 %v6466, %v6575
    %v6577 = vpop.f32.mrf.mxu0
    %v6578 = vadd.f32 %v6466, %v6577
    %6579 = vmatmul.bf16.gmra.mxu0 %v6511
    %v6580 = vpop.f32.mrf.mxu0
    %v6581 = vadd.f32 %v6466, %v6580
    %v6582 = vpop.f32.mrf.mxu0
    %v6583 = vadd.f32 %v6466, %v6582
    %6584 = vdwg.mxu0
    %6585 = vrot.lane.b32.xlu0 %v6089, 112
    %v6586 = vpop.permute.xlu0 %6585
    %6587 = vrot.lane.b32.xlu0 %v6090, 112
    %v6588 = vpop.permute.xlu0 %6587
    %6589 = vrot.lane.b32.xlu0 %v6091, 112
    %v6590 = vpop.permute.xlu0 %6589
    %6591 = vrot.lane.b32.xlu0 %v6092, 112
    %v6592 = vpop.permute.xlu0 %6591
    %6593 = vrot.lane.b32.xlu0 %v6093, 112
    %v6594 = vpop.permute.xlu0 %6593
    %6595 = vrot.lane.b32.xlu0 %v6094, 112
    %v6596 = vpop.permute.xlu0 %6595
    %6597 = vrot.lane.b32.xlu0 %v6095, 112
    %v6598 = vpop.permute.xlu0 %6597
    %6599 = vrot.lane.b32.xlu0 %v6096, 112
    %v6600 = vpop.permute.xlu0 %6599
    %6601 = vrot.lane.b32.xlu0 %v6097, 112
    %v6602 = vpop.permute.xlu0 %6601
    %6603 = vrot.lane.b32.xlu0 %v6098, 112
    %v6604 = vpop.permute.xlu0 %6603
    %6605 = vrot.lane.b32.xlu0 %v6099, 112
    %v6606 = vpop.permute.xlu0 %6605
    %6607 = vrot.lane.b32.xlu0 %v6100, 112
    %v6608 = vpop.permute.xlu0 %6607
    %6609 = vrot.lane.b32.xlu0 %v6101, 112
    %v6610 = vpop.permute.xlu0 %6609
    %6611 = vrot.lane.b32.xlu0 %v6102, 112
    %v6612 = vpop.permute.xlu0 %6611
    %6613 = vrot.lane.b32.xlu0 %v6103, 112
    %v6614 = vpop.permute.xlu0 %6613
    %6615 = vrot.lane.b32.xlu0 %v6104, 112
    %v6616 = vpop.permute.xlu0 %6615
    %6617 = vrot.lane.b32.xlu0 %v6105, 112
    %v6618 = vpop.permute.xlu0 %6617
    %6619 = vrot.lane.b32.xlu0 %v6106, 112
    %v6620 = vpop.permute.xlu0 %6619
    %6621 = vrot.lane.b32.xlu0 %v6107, 112
    %v6622 = vpop.permute.xlu0 %6621
    %6623 = vrot.lane.b32.xlu0 %v6108, 112
    %v6624 = vpop.permute.xlu0 %6623
    %6625 = vrot.lane.b32.xlu0 %v6109, 112
    %v6626 = vpop.permute.xlu0 %6625
    %6627 = vrot.lane.b32.xlu0 %v6110, 112
    %v6628 = vpop.permute.xlu0 %6627
    %6629 = vrot.lane.b32.xlu0 %v6111, 112
    %v6630 = vpop.permute.xlu0 %6629
    %6631 = vrot.lane.b32.xlu0 %v6112, 112
    %v6632 = vpop.permute.xlu0 %6631
    %v6657 = vrot.slane %v6586, 6
    %v6658 = vrot.slane %v6588, 6
    %v6659 = vrot.slane %v6590, 6
    %v6660 = vrot.slane %v6592, 6
    %v6661 = vrot.slane %v6594, 6
    %v6662 = vrot.slane %v6596, 6
    %v6663 = vrot.slane %v6598, 6
    %v6664 = vrot.slane %v6600, 6
    %v6665 = vrot.slane %v6602, 6
    %v6666 = vrot.slane %v6604, 6
    %v6667 = vrot.slane %v6606, 6
    %v6668 = vrot.slane %v6608, 6
    %v6669 = vrot.slane %v6610, 6
    %v6670 = vrot.slane %v6612, 6
    %v6671 = vrot.slane %v6614, 6
    %v6672 = vrot.slane %v6616, 6
    %v6673 = vrot.slane %v6618, 6
    %v6674 = vrot.slane %v6620, 6
    %v6675 = vrot.slane %v6622, 6
    %v6676 = vrot.slane %v6624, 6
    %v6677 = vrot.slane %v6626, 6
    %v6678 = vrot.slane %v6628, 6
    %v6679 = vrot.slane %v6630, 6
    %v6680 = vrot.slane %v6632, 6
    %v6681 = vsel %vm2226, %v6679, %v6680
    %v6682 = vsel %vm2226, %v6678, %v6679
    %v6683 = vsel %vm2226, %v6677, %v6678
    %v6684 = vsel %vm2226, %v6676, %v6677
    %v6685 = vsel %vm2226, %v6675, %v6676
    %v6686 = vsel %vm2226, %v6674, %v6675
    %v6687 = vsel %vm2226, %v6673, %v6674
    %v6688 = vsel %vm2226, %v6672, %v6673
    %v6689 = vsel %vm2226, %v6671, %v6672
    %v6690 = vsel %vm2226, %v6670, %v6671
    %v6691 = vsel %vm2226, %v6669, %v6670
    %v6692 = vsel %vm2226, %v6668, %v6669
    %v6693 = vsel %vm2226, %v6667, %v6668
    %v6694 = vsel %vm2226, %v6666, %v6667
    %v6695 = vsel %vm2226, %v6665, %v6666
    %v6696 = vsel %vm2226, %v6664, %v6665
    %v6697 = vsel %vm2226, %v6663, %v6664
    %v6698 = vsel %vm2226, %v6662, %v6663
    %v6699 = vsel %vm2226, %v6661, %v6662
    %v6700 = vsel %vm2226, %v6660, %v6661
    %v6701 = vsel %vm2226, %v6659, %v6660
    %v6702 = vsel %vm2226, %v6658, %v6659
    %v6703 = vsel %vm2226, %v6657, %v6658
    %v6704 = vsel %vm2226, %v6680, %v6657
    %v6705 = vrot.slane %v6586, 7
    %v6706 = vrot.slane %v6588, 7
    %v6707 = vrot.slane %v6590, 7
    %v6708 = vrot.slane %v6592, 7
    %v6709 = vrot.slane %v6594, 7
    %v6710 = vrot.slane %v6596, 7
    %v6711 = vrot.slane %v6598, 7
    %v6712 = vrot.slane %v6600, 7
    %v6713 = vrot.slane %v6602, 7
    %v6714 = vrot.slane %v6604, 7
    %v6715 = vrot.slane %v6606, 7
    %v6716 = vrot.slane %v6608, 7
    %v6717 = vrot.slane %v6610, 7
    %v6718 = vrot.slane %v6612, 7
    %v6719 = vrot.slane %v6614, 7
    %v6720 = vrot.slane %v6616, 7
    %v6721 = vrot.slane %v6618, 7
    %v6722 = vrot.slane %v6620, 7
    %v6723 = vrot.slane %v6622, 7
    %v6724 = vrot.slane %v6624, 7
    %v6725 = vrot.slane %v6626, 7
    %v6726 = vrot.slane %v6628, 7
    %v6727 = vrot.slane %v6630, 7
    %v6728 = vrot.slane %v6632, 7
    %v6729 = vsel %vm1097, %v6727, %v6728
    %v6730 = vsel %vm1097, %v6726, %v6727
    %v6731 = vsel %vm1097, %v6725, %v6726
    %v6732 = vsel %vm1097, %v6724, %v6725
    %v6733 = vsel %vm1097, %v6723, %v6724
    %v6734 = vsel %vm1097, %v6722, %v6723
    %v6735 = vsel %vm1097, %v6721, %v6722
    %v6736 = vsel %vm1097, %v6720, %v6721
    %v6737 = vsel %vm1097, %v6719, %v6720
    %v6738 = vsel %vm1097, %v6718, %v6719
    %v6739 = vsel %vm1097, %v6717, %v6718
    %v6740 = vsel %vm1097, %v6716, %v6717
    %v6741 = vsel %vm1097, %v6715, %v6716
    %v6742 = vsel %vm1097, %v6714, %v6715
    %v6743 = vsel %vm1097, %v6713, %v6714
    %v6744 = vsel %vm1097, %v6712, %v6713
    %v6745 = vsel %vm1097, %v6711, %v6712
    %v6746 = vsel %vm1097, %v6710, %v6711
    %v6747 = vsel %vm1097, %v6709, %v6710
    %v6748 = vsel %vm1097, %v6708, %v6709
    %v6749 = vsel %vm1097, %v6707, %v6708
    %v6750 = vsel %vm1097, %v6706, %v6707
    %v6751 = vsel %vm1097, %v6705, %v6706
    %v6752 = vsel %vm1097, %v6728, %v6705
    %v6753 = vrot.slane %v6586, 1
    %v6754 = vrot.slane %v6588, 1
    %v6755 = vrot.slane %v6590, 1
    %v6756 = vrot.slane %v6592, 1
    %v6757 = vrot.slane %v6594, 1
    %v6758 = vrot.slane %v6596, 1
    %v6759 = vrot.slane %v6598, 1
    %v6760 = vrot.slane %v6600, 1
    %v6761 = vrot.slane %v6602, 1
    %v6762 = vrot.slane %v6604, 1
    %v6763 = vrot.slane %v6606, 1
    %v6764 = vrot.slane %v6608, 1
    %v6765 = vrot.slane %v6610, 1
    %v6766 = vrot.slane %v6612, 1
    %v6767 = vrot.slane %v6614, 1
    %v6768 = vrot.slane %v6616, 1
    %v6769 = vrot.slane %v6618, 1
    %v6770 = vrot.slane %v6620, 1
    %v6771 = vrot.slane %v6622, 1
    %v6772 = vrot.slane %v6624, 1
    %v6773 = vrot.slane %v6626, 1
    %v6774 = vrot.slane %v6628, 1
    %v6775 = vrot.slane %v6630, 1
    %v6776 = vrot.slane %v6632, 1
    %v6777 = vsel %vm1146, %v6775, %v6776
    %v6778 = vsel %vm1146, %v6774, %v6775
    %v6779 = vsel %vm1146, %v6773, %v6774
    %v6780 = vsel %vm1146, %v6772, %v6773
    %v6781 = vsel %vm1146, %v6771, %v6772
    %v6782 = vsel %vm1146, %v6770, %v6771
    %v6783 = vsel %vm1146, %v6769, %v6770
    %v6784 = vsel %vm1146, %v6768, %v6769
    %v6785 = vsel %vm1146, %v6767, %v6768
    %v6786 = vsel %vm1146, %v6766, %v6767
    %v6787 = vsel %vm1146, %v6765, %v6766
    %v6788 = vsel %vm1146, %v6764, %v6765
    %v6789 = vsel %vm1146, %v6763, %v6764
    %v6790 = vsel %vm1146, %v6762, %v6763
    %v6791 = vsel %vm1146, %v6761, %v6762
    %v6792 = vsel %vm1146, %v6760, %v6761
    %v6793 = vsel %vm1146, %v6759, %v6760
    %v6794 = vsel %vm1146, %v6758, %v6759
    %v6795 = vsel %vm1146, %v6757, %v6758
    %v6796 = vsel %vm1146, %v6756, %v6757
    %v6797 = vsel %vm1146, %v6755, %v6756
    %v6798 = vsel %vm1146, %v6754, %v6755
    %v6799 = vsel %vm1146, %v6753, %v6754
    %v6800 = vsel %vm1146, %v6776, %v6753
    %v6801 = vrot.slane %v6586, 2
    %v6802 = vrot.slane %v6588, 2
    %v6803 = vrot.slane %v6590, 2
    %v6804 = vrot.slane %v6592, 2
    %v6805 = vrot.slane %v6594, 2
    %v6806 = vrot.slane %v6596, 2
    %v6807 = vrot.slane %v6598, 2
    %v6808 = vrot.slane %v6600, 2
    %v6809 = vrot.slane %v6602, 2
    %v6810 = vrot.slane %v6604, 2
    %v6811 = vrot.slane %v6606, 2
    %v6812 = vrot.slane %v6608, 2
    %v6813 = vrot.slane %v6610, 2
    %v6814 = vrot.slane %v6612, 2
    %v6815 = vrot.slane %v6614, 2
    %v6816 = vrot.slane %v6616, 2
    %v6817 = vrot.slane %v6618, 2
    %v6818 = vrot.slane %v6620, 2
    %v6819 = vrot.slane %v6622, 2
    %v6820 = vrot.slane %v6624, 2
    %v6821 = vrot.slane %v6626, 2
    %v6822 = vrot.slane %v6628, 2
    %v6823 = vrot.slane %v6630, 2
    %v6824 = vrot.slane %v6632, 2
    %v6825 = vsel %vm2371, %v6823, %v6824
    %v6826 = vsel %vm2371, %v6822, %v6823
    %v6827 = vsel %vm2371, %v6821, %v6822
    %v6828 = vsel %vm2371, %v6820, %v6821
    %v6829 = vsel %vm2371, %v6819, %v6820
    %v6830 = vsel %vm2371, %v6818, %v6819
    %v6831 = vsel %vm2371, %v6817, %v6818
    %v6832 = vsel %vm2371, %v6816, %v6817
    %v6833 = vsel %vm2371, %v6815, %v6816
    %v6834 = vsel %vm2371, %v6814, %v6815
    %v6835 = vsel %vm2371, %v6813, %v6814
    %v6836 = vsel %vm2371, %v6812, %v6813
    %v6837 = vsel %vm2371, %v6811, %v6812
    %v6838 = vsel %vm2371, %v6810, %v6811
    %v6839 = vsel %vm2371, %v6809, %v6810
    %v6840 = vsel %vm2371, %v6808, %v6809
    %v6841 = vsel %vm2371, %v6807, %v6808
    %v6842 = vsel %vm2371, %v6806, %v6807
    %v6843 = vsel %vm2371, %v6805, %v6806
    %v6844 = vsel %vm2371, %v6804, %v6805
    %v6845 = vsel %vm2371, %v6803, %v6804
    %v6846 = vsel %vm2371, %v6802, %v6803
    %v6847 = vsel %vm2371, %v6801, %v6802
    %v6848 = vsel %vm2371, %v6824, %v6801
    %6873 = vrot.lane.b32.xlu0 %v6752, 8
    %v6874 = vpop.permute.xlu0 %6873
    %6875 = vrot.lane.b32.xlu0 %v6751, 8
    %v6876 = vpop.permute.xlu0 %6875
    %6877 = vrot.lane.b32.xlu0 %v6750, 8
    %v6878 = vpop.permute.xlu0 %6877
    %6879 = vrot.lane.b32.xlu0 %v6749, 8
    %v6880 = vpop.permute.xlu0 %6879
    %6881 = vrot.lane.b32.xlu0 %v6748, 8
    %v6882 = vpop.permute.xlu0 %6881
    %6883 = vrot.lane.b32.xlu0 %v6747, 8
    %v6884 = vpop.permute.xlu0 %6883
    %6885 = vrot.lane.b32.xlu0 %v6746, 8
    %v6886 = vpop.permute.xlu0 %6885
    %6887 = vrot.lane.b32.xlu0 %v6745, 8
    %v6888 = vpop.permute.xlu0 %6887
    %6889 = vrot.lane.b32.xlu0 %v6744, 8
    %v6890 = vpop.permute.xlu0 %6889
    %6891 = vrot.lane.b32.xlu0 %v6743, 8
    %v6892 = vpop.permute.xlu0 %6891
    %6893 = vrot.lane.b32.xlu0 %v6742, 8
    %v6894 = vpop.permute.xlu0 %6893
    %6895 = vrot.lane.b32.xlu0 %v6741, 8
    %v6896 = vpop.permute.xlu0 %6895
    %6897 = vrot.lane.b32.xlu0 %v6740, 8
    %v6898 = vpop.permute.xlu0 %6897
    %6899 = vrot.lane.b32.xlu0 %v6739, 8
    %v6900 = vpop.permute.xlu0 %6899
    %6901 = vrot.lane.b32.xlu0 %v6738, 8
    %v6902 = vpop.permute.xlu0 %6901
    %6903 = vrot.lane.b32.xlu0 %v6737, 8
    %v6904 = vpop.permute.xlu0 %6903
    %6905 = vrot.lane.b32.xlu0 %v6736, 8
    %v6906 = vpop.permute.xlu0 %6905
    %6907 = vrot.lane.b32.xlu0 %v6735, 8
    %v6908 = vpop.permute.xlu0 %6907
    %6909 = vrot.lane.b32.xlu0 %v6734, 8
    %v6910 = vpop.permute.xlu0 %6909
    %6911 = vrot.lane.b32.xlu0 %v6733, 8
    %v6912 = vpop.permute.xlu0 %6911
    %6913 = vrot.lane.b32.xlu0 %v6732, 8
    %v6914 = vpop.permute.xlu0 %6913
    %6915 = vrot.lane.b32.xlu0 %v6731, 8
    %v6916 = vpop.permute.xlu0 %6915
    %6917 = vrot.lane.b32.xlu0 %v6730, 8
    %v6918 = vpop.permute.xlu0 %6917
    %6919 = vrot.lane.b32.xlu0 %v6729, 8
    %v6920 = vpop.permute.xlu0 %6919
    %6969 = vrot.lane.b32.xlu0 %v6799, 24
    %v6970 = vpop.permute.xlu0 %6969
    %6971 = vrot.lane.b32.xlu0 %v6798, 24
    %v6972 = vpop.permute.xlu0 %6971
    %6973 = vrot.lane.b32.xlu0 %v6797, 24
    %v6974 = vpop.permute.xlu0 %6973
    %6975 = vrot.lane.b32.xlu0 %v6796, 24
    %v6976 = vpop.permute.xlu0 %6975
    %6977 = vrot.lane.b32.xlu0 %v6795, 24
    %v6978 = vpop.permute.xlu0 %6977
    %6979 = vrot.lane.b32.xlu0 %v6794, 24
    %v6980 = vpop.permute.xlu0 %6979
    %6981 = vrot.lane.b32.xlu0 %v6793, 24
    %v6982 = vpop.permute.xlu0 %6981
    %6983 = vrot.lane.b32.xlu0 %v6792, 24
    %v6984 = vpop.permute.xlu0 %6983
    %6985 = vrot.lane.b32.xlu0 %v6791, 24
    %v6986 = vpop.permute.xlu0 %6985
    %6987 = vrot.lane.b32.xlu0 %v6790, 24
    %v6988 = vpop.permute.xlu0 %6987
    %6989 = vrot.lane.b32.xlu0 %v6789, 24
    %v6990 = vpop.permute.xlu0 %6989
    %6991 = vrot.lane.b32.xlu0 %v6788, 24
    %v6992 = vpop.permute.xlu0 %6991
    %6993 = vrot.lane.b32.xlu0 %v6787, 24
    %v6994 = vpop.permute.xlu0 %6993
    %6995 = vrot.lane.b32.xlu0 %v6786, 24
    %v6996 = vpop.permute.xlu0 %6995
    %6997 = vrot.lane.b32.xlu0 %v6785, 24
    %v6998 = vpop.permute.xlu0 %6997
    %6999 = vrot.lane.b32.xlu0 %v6784, 24
    %v7000 = vpop.permute.xlu0 %6999
    %7001 = vrot.lane.b32.xlu0 %v6783, 24
    %v7002 = vpop.permute.xlu0 %7001
    %7003 = vrot.lane.b32.xlu0 %v6782, 24
    %v7004 = vpop.permute.xlu0 %7003
    %7005 = vrot.lane.b32.xlu0 %v6781, 24
    %v7006 = vpop.permute.xlu0 %7005
    %7007 = vrot.lane.b32.xlu0 %v6780, 24
    %v7008 = vpop.permute.xlu0 %7007
    %7009 = vrot.lane.b32.xlu0 %v6779, 24
    %v7010 = vpop.permute.xlu0 %7009
    %7011 = vrot.lane.b32.xlu0 %v6778, 24
    %v7012 = vpop.permute.xlu0 %7011
    %7013 = vrot.lane.b32.xlu0 %v6777, 24
    %v7014 = vpop.permute.xlu0 %7013
    %7015 = vrot.lane.b32.xlu0 %v6800, 24
    %v7016 = vpop.permute.xlu0 %7015
    %7065 = vrot.lane.b32.xlu0 %v6847, 32
    %v7066 = vpop.permute.xlu0 %7065
    %7067 = vrot.lane.b32.xlu0 %v6846, 32
    %v7068 = vpop.permute.xlu0 %7067
    %7069 = vrot.lane.b32.xlu0 %v6845, 32
    %v7070 = vpop.permute.xlu0 %7069
    %7071 = vrot.lane.b32.xlu0 %v6844, 32
    %v7072 = vpop.permute.xlu0 %7071
    %7073 = vrot.lane.b32.xlu0 %v6843, 32
    %v7074 = vpop.permute.xlu0 %7073
    %7075 = vrot.lane.b32.xlu0 %v6842, 32
    %v7076 = vpop.permute.xlu0 %7075
    %7077 = vrot.lane.b32.xlu0 %v6841, 32
    %v7078 = vpop.permute.xlu0 %7077
    %7079 = vrot.lane.b32.xlu0 %v6840, 32
    %v7080 = vpop.permute.xlu0 %7079
    %7081 = vrot.lane.b32.xlu0 %v6839, 32
    %v7082 = vpop.permute.xlu0 %7081
    %7083 = vrot.lane.b32.xlu0 %v6838, 32
    %v7084 = vpop.permute.xlu0 %7083
    %7085 = vrot.lane.b32.xlu0 %v6837, 32
    %v7086 = vpop.permute.xlu0 %7085
    %7087 = vrot.lane.b32.xlu0 %v6836, 32
    %v7088 = vpop.permute.xlu0 %7087
    %7089 = vrot.lane.b32.xlu0 %v6835, 32
    %v7090 = vpop.permute.xlu0 %7089
    %7091 = vrot.lane.b32.xlu0 %v6834, 32
    %v7092 = vpop.permute.xlu0 %7091
    %7093 = vrot.lane.b32.xlu0 %v6833, 32
    %v7094 = vpop.permute.xlu0 %7093
    %7095 = vrot.lane.b32.xlu0 %v6832, 32
    %v7096 = vpop.permute.xlu0 %7095
    %7097 = vrot.lane.b32.xlu0 %v6831, 32
    %v7098 = vpop.permute.xlu0 %7097
    %7099 = vrot.lane.b32.xlu0 %v6830, 32
    %v7100 = vpop.permute.xlu0 %7099
    %7101 = vrot.lane.b32.xlu0 %v6829, 32
    %v7102 = vpop.permute.xlu0 %7101
    %7103 = vrot.lane.b32.xlu0 %v6828, 32
    %v7104 = vpop.permute.xlu0 %7103
    %7105 = vrot.lane.b32.xlu0 %v6827, 32
    %v7106 = vpop.permute.xlu0 %7105
    %7107 = vrot.lane.b32.xlu0 %v6826, 32
    %v7108 = vpop.permute.xlu0 %7107
    %7109 = vrot.lane.b32.xlu0 %v6825, 32
    %v7110 = vpop.permute.xlu0 %7109
    %7111 = vrot.lane.b32.xlu0 %v6848, 32
    %v7112 = vpop.permute.xlu0 %7111
    %v7137 = vsel %vm1943, %v6704, %v6874
    %v7138 = vsel %vm1943, %v6703, %v6876
    %v7139 = vsel %vm1943, %v6702, %v6878
    %v7140 = vsel %vm1943, %v6701, %v6880
    %v7141 = vsel %vm1943, %v6700, %v6882
    %v7142 = vsel %vm1943, %v6699, %v6884
    %v7143 = vsel %vm1943, %v6698, %v6886
    %v7144 = vsel %vm1943, %v6697, %v6888
    %v7145 = vsel %vm1943, %v6696, %v6890
    %v7146 = vsel %vm1943, %v6695, %v6892
    %v7147 = vsel %vm1943, %v6694, %v6894
    %v7148 = vsel %vm1943, %v6693, %v6896
    %v7149 = vsel %vm1943, %v6692, %v6898
    %v7150 = vsel %vm1943, %v6691, %v6900
    %v7151 = vsel %vm1943, %v6690, %v6902
    %v7152 = vsel %vm1943, %v6689, %v6904
    %v7153 = vsel %vm1943, %v6688, %v6906
    %v7154 = vsel %vm1943, %v6687, %v6908
    %v7155 = vsel %vm1943, %v6686, %v6910
    %v7156 = vsel %vm1943, %v6685, %v6912
    %v7157 = vsel %vm1943, %v6684, %v6914
    %v7158 = vsel %vm1943, %v6683, %v6916
    %v7159 = vsel %vm1943, %v6682, %v6918
    %v7160 = vsel %vm1943, %v6681, %v6920
    %v7161 = vsel %vm1363, %v7137, %v6089
    %v7162 = vsel %vm1363, %v7138, %v6090
    %v7163 = vsel %vm1363, %v7139, %v6091
    %v7164 = vsel %vm1363, %v7140, %v6092
    %v7165 = vsel %vm1363, %v7141, %v6093
    %v7166 = vsel %vm1363, %v7142, %v6094
    %v7167 = vsel %vm1363, %v7143, %v6095
    %v7168 = vsel %vm1363, %v7144, %v6096
    %v7169 = vsel %vm1363, %v7145, %v6097
    %v7170 = vsel %vm1363, %v7146, %v6098
    %v7171 = vsel %vm1363, %v7147, %v6099
    %v7172 = vsel %vm1363, %v7148, %v6100
    %v7173 = vsel %vm1363, %v7149, %v6101
    %v7174 = vsel %vm1363, %v7150, %v6102
    %v7175 = vsel %vm1363, %v7151, %v6103
    %v7176 = vsel %vm1363, %v7152, %v6104
    %v7177 = vsel %vm1363, %v7153, %v6105
    %v7178 = vsel %vm1363, %v7154, %v6106
    %v7179 = vsel %vm1363, %v7155, %v6107
    %v7180 = vsel %vm1363, %v7156, %v6108
    %v7181 = vsel %vm1363, %v7157, %v6109
    %v7182 = vsel %vm1363, %v7158, %v6110
    %v7183 = vsel %vm1363, %v7159, %v6111
    %v7184 = vsel %vm1363, %v7160, %v6112
    %v7185 = vsel %vm2020, %v7161, %v6970
    %v7186 = vsel %vm2020, %v7162, %v6972
    %v7187 = vsel %vm2020, %v7163, %v6974
    %v7188 = vsel %vm2020, %v7164, %v6976
    %v7189 = vsel %vm2020, %v7165, %v6978
    %v7190 = vsel %vm2020, %v7166, %v6980
    %v7191 = vsel %vm2020, %v7167, %v6982
    %v7192 = vsel %vm2020, %v7168, %v6984
    %v7193 = vsel %vm2020, %v7169, %v6986
    %v7194 = vsel %vm2020, %v7170, %v6988
    %v7195 = vsel %vm2020, %v7171, %v6990
    %v7196 = vsel %vm2020, %v7172, %v6992
    %v7197 = vsel %vm2020, %v7173, %v6994
    %v7198 = vsel %vm2020, %v7174, %v6996
    %v7199 = vsel %vm2020, %v7175, %v6998
    %v7200 = vsel %vm2020, %v7176, %v7000
    %v7201 = vsel %vm2020, %v7177, %v7002
    %v7202 = vsel %vm2020, %v7178, %v7004
    %v7203 = vsel %vm2020, %v7179, %v7006
    %v7204 = vsel %vm2020, %v7180, %v7008
    %v7205 = vsel %vm2020, %v7181, %v7010
    %v7206 = vsel %vm2020, %v7182, %v7012
    %v7207 = vsel %vm2020, %v7183, %v7014
    %v7208 = vsel %vm2020, %v7184, %v7016
    %v7209 = vsel %vm1388, %v7185, %v7066
    %v7210 = vsel %vm1388, %v7186, %v7068
    %v7211 = vsel %vm1388, %v7187, %v7070
    %v7212 = vsel %vm1388, %v7188, %v7072
    %v7213 = vsel %vm1388, %v7189, %v7074
    %v7214 = vsel %vm1388, %v7190, %v7076
    %v7215 = vsel %vm1388, %v7191, %v7078
    %v7216 = vsel %vm1388, %v7192, %v7080
    %v7217 = vsel %vm1388, %v7193, %v7082
    %v7218 = vsel %vm1388, %v7194, %v7084
    %v7219 = vsel %vm1388, %v7195, %v7086
    %v7220 = vsel %vm1388, %v7196, %v7088
    %v7221 = vsel %vm1388, %v7197, %v7090
    %v7222 = vsel %vm1388, %v7198, %v7092
    %v7223 = vsel %vm1388, %v7199, %v7094
    %v7224 = vsel %vm1388, %v7200, %v7096
    %v7225 = vsel %vm1388, %v7201, %v7098
    %v7226 = vsel %vm1388, %v7202, %v7100
    %v7227 = vsel %vm1388, %v7203, %v7102
    %v7228 = vsel %vm1388, %v7204, %v7104
    %v7229 = vsel %vm1388, %v7205, %v7106
    %v7230 = vsel %vm1388, %v7206, %v7108
    %v7231 = vsel %vm1388, %v7207, %v7110
    %v7232 = vsel %vm1388, %v7208, %v7112
    %v7233 = vpack.c.bf16 %v7210, %v7209
    %v7234 = vpack.c.bf16 %v7212, %v7211
    %v7235 = vpack.c.bf16 %v7214, %v7213
    %v7236 = vpack.c.bf16 %v7216, %v7215
    %v7237 = vpack.c.bf16 %v7218, %v7217
    %v7238 = vpack.c.bf16 %v7220, %v7219
    %v7239 = vpack.c.bf16 %v7222, %v7221
    %v7240 = vpack.c.bf16 %v7224, %v7223
    %v7241 = vpack.c.bf16 %v7226, %v7225
    %v7242 = vpack.c.bf16 %v7228, %v7227
    %v7243 = vpack.c.bf16 %v7230, %v7229
    %v7244 = vpack.c.bf16 %v7232, %v7231
    %v7245 = vld [vmem:[%s17] sm:$0xf]
    %v7246 = vld [vmem:[%s17 + $0x4] sm:$0xf]
    %v7247 = vld [vmem:[%s17 + $0x8] sm:$0xf]
    %v7248 = vld [vmem:[%s17 + $0xc] sm:$0xf]
    %v7249 = vld [vmem:[%s17 + $0x10] sm:$0xf]
    %v7250 = vld [vmem:[%s18] sm:$0x1]
    %v7252 = vperm.slane %v7250, 0
    %v7259 = vunpack.c.l.b16 %v7245
    %v7260 = vunpack.c.l.b16 %v7246
    %v7261 = vunpack.c.l.b16 %v7247
    %v7262 = vunpack.c.l.b16 %v7248
    %v7263 = vunpack.c.l.b16 %v7249
    %v7264 = vpack.c.b16 %v7260, %v7259
    %v7265 = vpack.c.b16 %v7262, %v7261
    %v7266 = vpack.c.b16 %v7263, %v7263
    %v7270 = vsel %vm2816, %v7233, 0
    %v7273 = vsel %vm2816, %v7234, 0
    %v7276 = vsel %vm2816, %v7235, 0
    %v7279 = vsel %vm2816, %v7236, 0
    %v7282 = vsel %vm2816, %v7237, 0
    %v7285 = vsel %vm2816, %v7238, 0
    %v7288 = vsel %vm2816, %v7239, 0
    %v7291 = vsel %vm2816, %v7240, 0
    %v7294 = vsel %vm2816, %v7241, 0
    %v7297 = vsel %vm2816, %v7242, 0
    %v7300 = vsel %vm2816, %v7243, 0
    %v7303 = vsel %vm2816, %v7244, 0
    %v7306 = vsel %vm2057, %v7266, 0
    %7308 = vmatpush.bf16.msra.mxu0 0
    %7309 = vmatpush.bf16.msra.mxu0 0
    %7310 = vmatpush.bf16.msra.mxu0 0
    %7311 = vmatpush.bf16.msra.mxu0 0
    %7312 = vmatpush.bf16.msra.mxu0 0
    %7313 = vmatpush.bf16.msra.mxu0 %v7306
    %7314 = vmatpush.bf16.msra.mxu0 %v7265
    %7315 = vmatpush.bf16.msra.mxu0 %v7264
    %7316 = vmatmul.bf16.gmra.mxu0 %v7270
    %v7317 = vpop.f32.mrf.mxu0
    %v7318 = vadd.f32 %v7252, %v7317
    %v7319 = vpop.f32.mrf.mxu0
    %v7320 = vadd.f32 %v7252, %v7319
    %7321 = vmatmul.bf16.gmra.mxu0 %v7273
    %v7322 = vpop.f32.mrf.mxu0
    %v7323 = vadd.f32 %v7252, %v7322
    %v7324 = vpop.f32.mrf.mxu0
    %v7325 = vadd.f32 %v7252, %v7324
    %7326 = vmatmul.bf16.gmra.mxu0 %v7276
    %v7327 = vpop.f32.mrf.mxu0
    %v7328 = vadd.f32 %v7252, %v7327
    %v7329 = vpop.f32.mrf.mxu0
    %v7330 = vadd.f32 %v7252, %v7329
    %7331 = vmatmul.bf16.gmra.mxu0 %v7279
    %v7332 = vpop.f32.mrf.mxu0
    %v7333 = vadd.f32 %v7252, %v7332
    %v7334 = vpop.f32.mrf.mxu0
    %v7335 = vadd.f32 %v7252, %v7334
    %7336 = vmatmul.bf16.gmra.mxu0 %v7282
    %v7337 = vpop.f32.mrf.mxu0
    %v7338 = vadd.f32 %v7252, %v7337
    %v7339 = vpop.f32.mrf.mxu0
    %v7340 = vadd.f32 %v7252, %v7339
    %7341 = vmatmul.bf16.gmra.mxu0 %v7285
    %v7342 = vpop.f32.mrf.mxu0
    %v7343 = vadd.f32 %v7252, %v7342
    %v7344 = vpop.f32.mrf.mxu0
    %v7345 = vadd.f32 %v7252, %v7344
    %7346 = vmatmul.bf16.gmra.mxu0 %v7288
    %v7347 = vpop.f32.mrf.mxu0
    %v7348 = vadd.f32 %v7252, %v7347
    %v7349 = vpop.f32.mrf.mxu0
    %v7350 = vadd.f32 %v7252, %v7349
    %7351 = vmatmul.bf16.gmra.mxu0 %v7291
    %v7352 = vpop.f32.mrf.mxu0
    %v7353 = vadd.f32 %v7252, %v7352
    %v7354 = vpop.f32.mrf.mxu0
    %v7355 = vadd.f32 %v7252, %v7354
    %7356 = vmatmul.bf16.gmra.mxu0 %v7294
    %v7357 = vpop.f32.mrf.mxu0
    %v7358 = vadd.f32 %v7252, %v7357
    %v7359 = vpop.f32.mrf.mxu0
    %v7360 = vadd.f32 %v7252, %v7359
    %7361 = vmatmul.bf16.gmra.mxu0 %v7297
    %v7362 = vpop.f32.mrf.mxu0
    %v7363 = vadd.f32 %v7252, %v7362
    %v7364 = vpop.f32.mrf.mxu0
    %v7365 = vadd.f32 %v7252, %v7364
    %7366 = vmatmul.bf16.gmra.mxu0 %v7300
    %v7367 = vpop.f32.mrf.mxu0
    %v7368 = vadd.f32 %v7252, %v7367
    %v7369 = vpop.f32.mrf.mxu0
    %v7370 = vadd.f32 %v7252, %v7369
    %7371 = vmatmul.bf16.gmra.mxu0 %v7303
    %v7372 = vpop.f32.mrf.mxu0
    %v7373 = vadd.f32 %v7252, %v7372
    %v7374 = vpop.f32.mrf.mxu0
    %v7375 = vadd.f32 %v7252, %v7374
    %7376 = vdwg.mxu0
    %7401 = vrot.lane.b32.xlu0 %v6526, 8
    %v7402 = vpop.permute.xlu0 %7401
    %7403 = vrot.lane.b32.xlu0 %v6528, 8
    %v7404 = vpop.permute.xlu0 %7403
    %7405 = vrot.lane.b32.xlu0 %v6531, 8
    %v7406 = vpop.permute.xlu0 %7405
    %7407 = vrot.lane.b32.xlu0 %v6533, 8
    %v7408 = vpop.permute.xlu0 %7407
    %7409 = vrot.lane.b32.xlu0 %v6536, 8
    %v7410 = vpop.permute.xlu0 %7409
    %7411 = vrot.lane.b32.xlu0 %v6538, 8
    %v7412 = vpop.permute.xlu0 %7411
    %7413 = vrot.lane.b32.xlu0 %v6541, 8
    %v7414 = vpop.permute.xlu0 %7413
    %7415 = vrot.lane.b32.xlu0 %v6543, 8
    %v7416 = vpop.permute.xlu0 %7415
    %7417 = vrot.lane.b32.xlu0 %v6546, 8
    %v7418 = vpop.permute.xlu0 %7417
    %7419 = vrot.lane.b32.xlu0 %v6548, 8
    %v7420 = vpop.permute.xlu0 %7419
    %7421 = vrot.lane.b32.xlu0 %v6551, 8
    %v7422 = vpop.permute.xlu0 %7421
    %7423 = vrot.lane.b32.xlu0 %v6553, 8
    %v7424 = vpop.permute.xlu0 %7423
    %7425 = vrot.lane.b32.xlu0 %v6556, 8
    %v7426 = vpop.permute.xlu0 %7425
    %7427 = vrot.lane.b32.xlu0 %v6558, 8
    %v7428 = vpop.permute.xlu0 %7427
    %7429 = vrot.lane.b32.xlu0 %v6561, 8
    %v7430 = vpop.permute.xlu0 %7429
    %7431 = vrot.lane.b32.xlu0 %v6563, 8
    %v7432 = vpop.permute.xlu0 %7431
    %7433 = vrot.lane.b32.xlu0 %v6566, 8
    %v7434 = vpop.permute.xlu0 %7433
    %7435 = vrot.lane.b32.xlu0 %v6568, 8
    %v7436 = vpop.permute.xlu0 %7435
    %7437 = vrot.lane.b32.xlu0 %v6571, 8
    %v7438 = vpop.permute.xlu0 %7437
    %7439 = vrot.lane.b32.xlu0 %v6573, 8
    %v7440 = vpop.permute.xlu0 %7439
    %7441 = vrot.lane.b32.xlu0 %v6576, 8
    %v7442 = vpop.permute.xlu0 %7441
    %7443 = vrot.lane.b32.xlu0 %v6578, 8
    %v7444 = vpop.permute.xlu0 %7443
    %7445 = vrot.lane.b32.xlu0 %v6581, 8
    %v7446 = vpop.permute.xlu0 %7445
    %7447 = vrot.lane.b32.xlu0 %v6583, 8
    %v7448 = vpop.permute.xlu0 %7447
    %7497 = vrot.lane.b32.xlu0 %v7318, 16
    %v7498 = vpop.permute.xlu0 %7497
    %7499 = vrot.lane.b32.xlu0 %v7320, 16
    %v7500 = vpop.permute.xlu0 %7499
    %7501 = vrot.lane.b32.xlu0 %v7323, 16
    %v7502 = vpop.permute.xlu0 %7501
    %7503 = vrot.lane.b32.xlu0 %v7325, 16
    %v7504 = vpop.permute.xlu0 %7503
    %7505 = vrot.lane.b32.xlu0 %v7328, 16
    %v7506 = vpop.permute.xlu0 %7505
    %7507 = vrot.lane.b32.xlu0 %v7330, 16
    %v7508 = vpop.permute.xlu0 %7507
    %7509 = vrot.lane.b32.xlu0 %v7333, 16
    %v7510 = vpop.permute.xlu0 %7509
    %7511 = vrot.lane.b32.xlu0 %v7335, 16
    %v7512 = vpop.permute.xlu0 %7511
    %7513 = vrot.lane.b32.xlu0 %v7338, 16
    %v7514 = vpop.permute.xlu0 %7513
    %7515 = vrot.lane.b32.xlu0 %v7340, 16
    %v7516 = vpop.permute.xlu0 %7515
    %7517 = vrot.lane.b32.xlu0 %v7343, 16
    %v7518 = vpop.permute.xlu0 %7517
    %7519 = vrot.lane.b32.xlu0 %v7345, 16
    %v7520 = vpop.permute.xlu0 %7519
    %7521 = vrot.lane.b32.xlu0 %v7348, 16
    %v7522 = vpop.permute.xlu0 %7521
    %7523 = vrot.lane.b32.xlu0 %v7350, 16
    %v7524 = vpop.permute.xlu0 %7523
    %7525 = vrot.lane.b32.xlu0 %v7353, 16
    %v7526 = vpop.permute.xlu0 %7525
    %7527 = vrot.lane.b32.xlu0 %v7355, 16
    %v7528 = vpop.permute.xlu0 %7527
    %7529 = vrot.lane.b32.xlu0 %v7358, 16
    %v7530 = vpop.permute.xlu0 %7529
    %7531 = vrot.lane.b32.xlu0 %v7360, 16
    %v7532 = vpop.permute.xlu0 %7531
    %7533 = vrot.lane.b32.xlu0 %v7363, 16
    %v7534 = vpop.permute.xlu0 %7533
    %7535 = vrot.lane.b32.xlu0 %v7365, 16
    %v7536 = vpop.permute.xlu0 %7535
    %7537 = vrot.lane.b32.xlu0 %v7368, 16
    %v7538 = vpop.permute.xlu0 %7537
    %7539 = vrot.lane.b32.xlu0 %v7370, 16
    %v7540 = vpop.permute.xlu0 %7539
    %7541 = vrot.lane.b32.xlu0 %v7373, 16
    %v7542 = vpop.permute.xlu0 %7541
    %7543 = vrot.lane.b32.xlu0 %v7375, 16
    %v7544 = vpop.permute.xlu0 %7543
    %v7569 = vsel %vm1943, %v6017, %v7402
    %v7570 = vsel %vm1943, %v6018, %v7404
    %v7571 = vsel %vm1943, %v6019, %v7406
    %v7572 = vsel %vm1943, %v6020, %v7408
    %v7573 = vsel %vm1943, %v6021, %v7410
    %v7574 = vsel %vm1943, %v6022, %v7412
    %v7575 = vsel %vm1943, %v6023, %v7414
    %v7576 = vsel %vm1943, %v6024, %v7416
    %v7577 = vsel %vm1943, %v6025, %v7418
    %v7578 = vsel %vm1943, %v6026, %v7420
    %v7579 = vsel %vm1943, %v6027, %v7422
    %v7580 = vsel %vm1943, %v6028, %v7424
    %v7581 = vsel %vm1943, %v6029, %v7426
    %v7582 = vsel %vm1943, %v6030, %v7428
    %v7583 = vsel %vm1943, %v6031, %v7430
    %v7584 = vsel %vm1943, %v6032, %v7432
    %v7585 = vsel %vm1943, %v6033, %v7434
    %v7586 = vsel %vm1943, %v6034, %v7436
    %v7587 = vsel %vm1943, %v6035, %v7438
    %v7588 = vsel %vm1943, %v6036, %v7440
    %v7589 = vsel %vm1943, %v6037, %v7442
    %v7590 = vsel %vm1943, %v6038, %v7444
    %v7591 = vsel %vm1943, %v6039, %v7446
    %v7592 = vsel %vm1943, %v6040, %v7448
    %v7593 = vsel %vm1363, %v7569, %v7498
    %v7594 = vsel %vm1363, %v7570, %v7500
    %v7595 = vsel %vm1363, %v7571, %v7502
    %v7596 = vsel %vm1363, %v7572, %v7504
    %v7597 = vsel %vm1363, %v7573, %v7506
    %v7598 = vsel %vm1363, %v7574, %v7508
    %v7599 = vsel %vm1363, %v7575, %v7510
    %v7600 = vsel %vm1363, %v7576, %v7512
    %v7601 = vsel %vm1363, %v7577, %v7514
    %v7602 = vsel %vm1363, %v7578, %v7516
    %v7603 = vsel %vm1363, %v7579, %v7518
    %v7604 = vsel %vm1363, %v7580, %v7520
    %v7605 = vsel %vm1363, %v7581, %v7522
    %v7606 = vsel %vm1363, %v7582, %v7524
    %v7607 = vsel %vm1363, %v7583, %v7526
    %v7608 = vsel %vm1363, %v7584, %v7528
    %v7609 = vsel %vm1363, %v7585, %v7530
    %v7610 = vsel %vm1363, %v7586, %v7532
    %v7611 = vsel %vm1363, %v7587, %v7534
    %v7612 = vsel %vm1363, %v7588, %v7536
    %v7613 = vsel %vm1363, %v7589, %v7538
    %v7614 = vsel %vm1363, %v7590, %v7540
    %v7615 = vsel %vm1363, %v7591, %v7542
    %v7616 = vsel %vm1363, %v7592, %v7544
    %v7617 = vsel %vm2020, %v7593, %v6017
    %v7618 = vsel %vm2020, %v7594, %v6018
    %v7619 = vsel %vm2020, %v7595, %v6019
    %v7620 = vsel %vm2020, %v7596, %v6020
    %v7621 = vsel %vm2020, %v7597, %v6021
    %v7622 = vsel %vm2020, %v7598, %v6022
    %v7623 = vsel %vm2020, %v7599, %v6023
    %v7624 = vsel %vm2020, %v7600, %v6024
    %v7625 = vsel %vm2020, %v7601, %v6025
    %v7626 = vsel %vm2020, %v7602, %v6026
    %v7627 = vsel %vm2020, %v7603, %v6027
    %v7628 = vsel %vm2020, %v7604, %v6028
    %v7629 = vsel %vm2020, %v7605, %v6029
    %v7630 = vsel %vm2020, %v7606, %v6030
    %v7631 = vsel %vm2020, %v7607, %v6031
    %v7632 = vsel %vm2020, %v7608, %v6032
    %v7633 = vsel %vm2020, %v7609, %v6033
    %v7634 = vsel %vm2020, %v7610, %v6034
    %v7635 = vsel %vm2020, %v7611, %v6035
    %v7636 = vsel %vm2020, %v7612, %v6036
    %v7637 = vsel %vm2020, %v7613, %v6037
    %v7638 = vsel %vm2020, %v7614, %v6038
    %v7639 = vsel %vm2020, %v7615, %v6039
    %v7640 = vsel %vm2020, %v7616, %v6040
    %vm7641 = vcmp.gt.f32.partialorder %v7617, 0.0
    %vm7642 = vcmp.gt.f32.partialorder %v7618, 0.0
    %vm7643 = vcmp.gt.f32.partialorder %v7619, 0.0
    %vm7644 = vcmp.gt.f32.partialorder %v7620, 0.0
    %vm7645 = vcmp.gt.f32.partialorder %v7621, 0.0
    %vm7646 = vcmp.gt.f32.partialorder %v7622, 0.0
    %vm7647 = vcmp.gt.f32.partialorder %v7623, 0.0
    %vm7648 = vcmp.gt.f32.partialorder %v7624, 0.0
    %vm7649 = vcmp.gt.f32.partialorder %v7625, 0.0
    %vm7650 = vcmp.gt.f32.partialorder %v7626, 0.0
    %vm7651 = vcmp.gt.f32.partialorder %v7627, 0.0
    %vm7652 = vcmp.gt.f32.partialorder %v7628, 0.0
    %vm7653 = vcmp.gt.f32.partialorder %v7629, 0.0
    %vm7654 = vcmp.gt.f32.partialorder %v7630, 0.0
    %vm7655 = vcmp.gt.f32.partialorder %v7631, 0.0
    %vm7656 = vcmp.gt.f32.partialorder %v7632, 0.0
    %vm7657 = vcmp.gt.f32.partialorder %v7633, 0.0
    %vm7658 = vcmp.gt.f32.partialorder %v7634, 0.0
    %vm7659 = vcmp.gt.f32.partialorder %v7635, 0.0
    %vm7660 = vcmp.gt.f32.partialorder %v7636, 0.0
    %vm7661 = vcmp.gt.f32.partialorder %v7637, 0.0
    %vm7662 = vcmp.gt.f32.partialorder %v7638, 0.0
    %vm7663 = vcmp.gt.f32.partialorder %v7639, 0.0
    %vm7664 = vcmp.gt.f32.partialorder %v7640, 0.0
    %v7665 = vmul.f32 %v7617, 0.01
    %v7666 = vmul.f32 %v7618, 0.01
    %v7667 = vmul.f32 %v7619, 0.01
    %v7668 = vmul.f32 %v7620, 0.01
    %v7669 = vmul.f32 %v7621, 0.01
    %v7670 = vmul.f32 %v7622, 0.01
    %v7671 = vmul.f32 %v7623, 0.01
    %v7672 = vmul.f32 %v7624, 0.01
    %v7673 = vmul.f32 %v7625, 0.01
    %v7674 = vmul.f32 %v7626, 0.01
    %v7675 = vmul.f32 %v7627, 0.01
    %v7676 = vmul.f32 %v7628, 0.01
    %v7677 = vmul.f32 %v7629, 0.01
    %v7678 = vmul.f32 %v7630, 0.01
    %v7679 = vmul.f32 %v7631, 0.01
    %v7680 = vmul.f32 %v7632, 0.01
    %v7681 = vmul.f32 %v7633, 0.01
    %v7682 = vmul.f32 %v7634, 0.01
    %v7683 = vmul.f32 %v7635, 0.01
    %v7684 = vmul.f32 %v7636, 0.01
    %v7685 = vmul.f32 %v7637, 0.01
    %v7686 = vmul.f32 %v7638, 0.01
    %v7687 = vmul.f32 %v7639, 0.01
    %v7688 = vmul.f32 %v7640, 0.01
    %v7689 = vsel %vm7641, %v7617, %v7665
    %v7690 = vsel %vm7642, %v7618, %v7666
    %v7691 = vsel %vm7643, %v7619, %v7667
    %v7692 = vsel %vm7644, %v7620, %v7668
    %v7693 = vsel %vm7645, %v7621, %v7669
    %v7694 = vsel %vm7646, %v7622, %v7670
    %v7695 = vsel %vm7647, %v7623, %v7671
    %v7696 = vsel %vm7648, %v7624, %v7672
    %v7697 = vsel %vm7649, %v7625, %v7673
    %v7698 = vsel %vm7650, %v7626, %v7674
    %v7699 = vsel %vm7651, %v7627, %v7675
    %v7700 = vsel %vm7652, %v7628, %v7676
    %v7701 = vsel %vm7653, %v7629, %v7677
    %v7702 = vsel %vm7654, %v7630, %v7678
    %v7703 = vsel %vm7655, %v7631, %v7679
    %v7704 = vsel %vm7656, %v7632, %v7680
    %v7705 = vsel %vm7657, %v7633, %v7681
    %v7706 = vsel %vm7658, %v7634, %v7682
    %v7707 = vsel %vm7659, %v7635, %v7683
    %v7708 = vsel %vm7660, %v7636, %v7684
    %v7709 = vsel %vm7661, %v7637, %v7685
    %v7710 = vsel %vm7662, %v7638, %v7686
    %v7711 = vsel %vm7663, %v7639, %v7687
    %v7712 = vsel %vm7664, %v7640, %v7688
    %vm7713 = vcmp.eq.s32.totalorder %v977, 1
    %vm7714 = vcmp.eq.s32.totalorder %v978, 1
    %vm7715 = vcmp.eq.s32.totalorder %v979, 1
    %vm7716 = vcmp.eq.s32.totalorder %v980, 1
    %vm7717 = vcmp.eq.s32.totalorder %v981, 1
    %vm7718 = vcmp.eq.s32.totalorder %v982, 1
    %vm7719 = vcmp.eq.s32.totalorder %v983, 1
    %vm7720 = vcmp.eq.s32.totalorder %v984, 1
    %vm7721 = vcmp.eq.s32.totalorder %v985, 1
    %vm7722 = vcmp.eq.s32.totalorder %v986, 1
    %vm7723 = vcmp.eq.s32.totalorder %v987, 1
    %vm7724 = vcmp.eq.s32.totalorder %v988, 1
    %vm7725 = vcmp.eq.s32.totalorder %v989, 1
    %vm7726 = vcmp.eq.s32.totalorder %v990, 1
    %vm7727 = vcmp.eq.s32.totalorder %v991, 1
    %vm7728 = vcmp.eq.s32.totalorder %v992, 1
    %vm7729 = vcmp.eq.s32.totalorder %v993, 1
    %vm7730 = vcmp.eq.s32.totalorder %v994, 1
    %vm7731 = vcmp.eq.s32.totalorder %v995, 1
    %vm7732 = vcmp.eq.s32.totalorder %v996, 1
    %vm7733 = vcmp.eq.s32.totalorder %v997, 1
    %vm7734 = vcmp.eq.s32.totalorder %v998, 1
    %vm7735 = vcmp.eq.s32.totalorder %v999, 1
    %vm7736 = vcmp.eq.s32.totalorder %v1000, 1
    %v7737 = vsel %vm7713, %v7689, -3e+38
    %v7738 = vsel %vm7714, %v7690, -3e+38
    %v7739 = vsel %vm7715, %v7691, -3e+38
    %v7740 = vsel %vm7716, %v7692, -3e+38
    %v7741 = vsel %vm7717, %v7693, -3e+38
    %v7742 = vsel %vm7718, %v7694, -3e+38
    %v7743 = vsel %vm7719, %v7695, -3e+38
    %v7744 = vsel %vm7720, %v7696, -3e+38
    %v7745 = vsel %vm7721, %v7697, -3e+38
    %v7746 = vsel %vm7722, %v7698, -3e+38
    %v7747 = vsel %vm7723, %v7699, -3e+38
    %v7748 = vsel %vm7724, %v7700, -3e+38
    %v7749 = vsel %vm7725, %v7701, -3e+38
    %v7750 = vsel %vm7726, %v7702, -3e+38
    %v7751 = vsel %vm7727, %v7703, -3e+38
    %v7752 = vsel %vm7728, %v7704, -3e+38
    %v7753 = vsel %vm7729, %v7705, -3e+38
    %v7754 = vsel %vm7730, %v7706, -3e+38
    %v7755 = vsel %vm7731, %v7707, -3e+38
    %v7756 = vsel %vm7732, %v7708, -3e+38
    %v7757 = vsel %vm7733, %v7709, -3e+38
    %v7758 = vsel %vm7734, %v7710, -3e+38
    %v7759 = vsel %vm7735, %v7711, -3e+38
    %v7760 = vsel %vm7736, %v7712, -3e+38
    %v7761 = vsel %vm1388, %v7737, -inf
    %v7762 = vsel %vm1388, %v7738, -inf
    %v7763 = vmax.f32 %v7761, %v7762
    %v7764 = vsel %vm1388, %v7739, -inf
    %v7765 = vmax.f32 %v7763, %v7764
    %v7766 = vrot.slane %v7765, 4
    %v7767 = vmax.f32 %v7765, %v7766
    %v7768 = vrot.slane %v7767, 2
    %v7769 = vmax.f32 %v7767, %v7768
    %v7770 = vrot.slane %v7769, 1
    %v7771 = vmax.f32 %v7769, %v7770
    %v7772 = vsel %vm1388, %v7740, -inf
    %v7773 = vsel %vm1388, %v7741, -inf
    %v7774 = vmax.f32 %v7772, %v7773
    %v7775 = vsel %vm1388, %v7742, -inf
    %v7776 = vmax.f32 %v7774, %v7775
    %v7777 = vrot.slane %v7776, 4
    %v7778 = vmax.f32 %v7776, %v7777
    %v7779 = vrot.slane %v7778, 2
    %v7780 = vmax.f32 %v7778, %v7779
    %v7781 = vrot.slane %v7780, 1
    %v7782 = vmax.f32 %v7780, %v7781
    %v7783 = vsel %vm1388, %v7743, -inf
    %v7784 = vsel %vm1388, %v7744, -inf
    %v7785 = vmax.f32 %v7783, %v7784
    %v7786 = vsel %vm1388, %v7745, -inf
    %v7787 = vmax.f32 %v7785, %v7786
    %v7788 = vrot.slane %v7787, 4
    %v7789 = vmax.f32 %v7787, %v7788
    %v7790 = vrot.slane %v7789, 2
    %v7791 = vmax.f32 %v7789, %v7790
    %v7792 = vrot.slane %v7791, 1
    %v7793 = vmax.f32 %v7791, %v7792
    %v7794 = vsel %vm1388, %v7746, -inf
    %v7795 = vsel %vm1388, %v7747, -inf
    %v7796 = vmax.f32 %v7794, %v7795
    %v7797 = vsel %vm1388, %v7748, -inf
    %v7798 = vmax.f32 %v7796, %v7797
    %v7799 = vrot.slane %v7798, 4
    %v7800 = vmax.f32 %v7798, %v7799
    %v7801 = vrot.slane %v7800, 2
    %v7802 = vmax.f32 %v7800, %v7801
    %v7803 = vrot.slane %v7802, 1
    %v7804 = vmax.f32 %v7802, %v7803
    %v7805 = vsel %vm1388, %v7749, -inf
    %v7806 = vsel %vm1388, %v7750, -inf
    %v7807 = vmax.f32 %v7805, %v7806
    %v7808 = vsel %vm1388, %v7751, -inf
    %v7809 = vmax.f32 %v7807, %v7808
    %v7810 = vrot.slane %v7809, 4
    %v7811 = vmax.f32 %v7809, %v7810
    %v7812 = vrot.slane %v7811, 2
    %v7813 = vmax.f32 %v7811, %v7812
    %v7814 = vrot.slane %v7813, 1
    %v7815 = vmax.f32 %v7813, %v7814
    %v7816 = vsel %vm1388, %v7752, -inf
    %v7817 = vsel %vm1388, %v7753, -inf
    %v7818 = vmax.f32 %v7816, %v7817
    %v7819 = vsel %vm1388, %v7754, -inf
    %v7820 = vmax.f32 %v7818, %v7819
    %v7821 = vrot.slane %v7820, 4
    %v7822 = vmax.f32 %v7820, %v7821
    %v7823 = vrot.slane %v7822, 2
    %v7824 = vmax.f32 %v7822, %v7823
    %v7825 = vrot.slane %v7824, 1
    %v7826 = vmax.f32 %v7824, %v7825
    %v7827 = vsel %vm1388, %v7755, -inf
    %v7828 = vsel %vm1388, %v7756, -inf
    %v7829 = vmax.f32 %v7827, %v7828
    %v7830 = vsel %vm1388, %v7757, -inf
    %v7831 = vmax.f32 %v7829, %v7830
    %v7832 = vrot.slane %v7831, 4
    %v7833 = vmax.f32 %v7831, %v7832
    %v7834 = vrot.slane %v7833, 2
    %v7835 = vmax.f32 %v7833, %v7834
    %v7836 = vrot.slane %v7835, 1
    %v7837 = vmax.f32 %v7835, %v7836
    %v7838 = vsel %vm1388, %v7758, -inf
    %v7839 = vsel %vm1388, %v7759, -inf
    %v7840 = vmax.f32 %v7838, %v7839
    %v7841 = vsel %vm1388, %v7760, -inf
    %v7842 = vmax.f32 %v7840, %v7841
    %v7843 = vrot.slane %v7842, 4
    %v7844 = vmax.f32 %v7842, %v7843
    %v7845 = vrot.slane %v7844, 2
    %v7846 = vmax.f32 %v7844, %v7845
    %v7847 = vrot.slane %v7846, 1
    %v7848 = vmax.f32 %v7846, %v7847
    %vm7857 = vcmask 1041409
    %v7858 = vsel %vm7857, %v7782, %v7771
    %vm7859 = vcmask 1042434
    %v7860 = vsel %vm7859, %v7793, %v7858
    %vm7861 = vcmask 1043459
    %v7862 = vsel %vm7861, %v7804, %v7860
    %vm7863 = vcmask 1044484
    %v7864 = vsel %vm7863, %v7815, %v7862
    %vm7865 = vcmask 1045509
    %v7866 = vsel %vm7865, %v7826, %v7864
    %vm7867 = vcmask 1046534
    %v7868 = vsel %vm7867, %v7837, %v7866
    %vm7869 = vcmask 1047559
    %v7870 = vsel %vm7869, %v7848, %v7868
    %7872 = vst.msk [vmem:[#allocation2] sm:$0xff] %vm1388, %v7870
    // Predicated region
    $region78: #{tpu_custom_call.1} parent=1 // pred_check
      _
    $region79: #{tpu_custom_call.1} parent=1 // pred_check_branch
      %7874 = sbr.rel (0) target = $region81
    $region80: #{tpu_custom_call.1} parent=1 // pred_region
      %7876 = vsyncadd [#allocation3], 0
      %s7878 = sshll.u32 [#allocation2], 4
      %s7879 = int_to_ptr.vmem [resolvable:$true] %s7878
      %s7880 = sshll.u32 %s19, 4
      %s7881 = int_to_ptr.hbm [resolvable:$true] %s7880
      %7883 = dma.vmem_to_hbm [thread:$0]  %s7879, 128, %s7881, [#allocation3]
    $region81: #{tpu_custom_call.1} parent=1 // pred_fallthru
      _
    // Predicated region
    $region82: #{tpu_custom_call.1} parent=1 // pred_check
      _
    $region83: #{tpu_custom_call.1} parent=1 // pred_check_branch
      %7885 = sbr.rel (0) target = $region85
    $region84: #{tpu_custom_call.1} parent=1 // pred_region
      %7887 = dma.done [#allocation3], 128
    $region85: #{tpu_custom_call.1} parent=1 // pred_fallthru
      _
    %7888 = vsyncpa [#allocation3], 1

</llo_original>
